<compile_context>
chip_gen: v7x
topology: tpu7x:2x2x1
jax: 0.10.0
libtpu: 0.0.40
codegen_flags: <defaults>
</compile_context>

<pallas_src>
import math
from functools import partial

import jax
import jax.numpy as jnp
from jax.experimental import pallas as pl
from jax.experimental.pallas import tpu as pltpu

HT_MIN, HT_MAX = 0.0, 20.0  # deepspeech Hardtanh(0, 20)


# ----------------------------------------------------------------------------
# Fused Conv2d (+ optional Hardtanh) + time-mask kernel
# ----------------------------------------------------------------------------
def _conv_fused_kernel(seq_ref, x_ref, w_ref, bias_ref, tidx_ref, out_ref,
                       patches_ref, *, c_in, kh, kw, sh, sw, h_out, t_out,
                       fuse_hardtanh):
    """One batch element:
       in-kernel im2col -> one bf16 MXU dot -> bias (+hardtanh) + time mask."""
    b = pl.program_id(0)

    # -------- in-kernel im2col into a (K, M) f32 VMEM scratch ---------------
    # x_ref: (sw, C_in, Hp, Bt) -- input already split into `sw` phases along
    # the (padded) time axis, so every copy below is a contiguous lane row.
    for ci in range(c_in):
        for i in range(kh):
            for j in range(kw):
                row = (ci * kh + i) * kw + j          # PyTorch weight ordering
                pt, qj = j % sw, j // sw              # time phase / offset
                for ho in range(h_out):
                    patches_ref[row, pl.ds(ho * t_out, t_out)] = x_ref[
                        pt, ci, sh * ho + i, pl.ds(qj, t_out)]

    # -------- single MXU matmul: bf16 operands, f32 accumulation ------------
    acc = jnp.dot(w_ref[...],                               # (C_out, K) bf16
                  patches_ref[...].astype(jnp.bfloat16),    # (K, M)    bf16
                  preferred_element_type=jnp.float32)       # (C_out, M) f32
    acc = acc + bias_ref[...]                               # (C_out, 1)

    # -------- fused Hardtanh(0, 20) (clip of a masked zero is still zero) ---
    if fuse_hardtanh:
        acc = jnp.clip(acc, HT_MIN, HT_MAX)

    # -------- time mask: zero every column whose time index >= seq_len[b] ---
    length = seq_ref[b]                                     # scalar (SMEM)
    acc = jnp.where(tidx_ref[...] < length, acc, 0.0)       # (1, M) broadcast
    out_ref[...] = acc.astype(out_ref.dtype)


def conv2d_masked(x, seq_lengths, weight, bias, stride, padding,
                  fuse_hardtanh=False):
    """Conv2d (+ optionally fused Hardtanh) + seq-length update + time mask.

    x: (B, C_in, H, T) NCHW. Returns (y_nchw, new_seq_lengths); layers chain
    with no inter-layer transposes (the output reshape is a pure reshape).
    """
    B, C_in, H, T = x.shape
    C_out, _, kh, kw = weight.shape
    sh, sw = stride
    ph, pw = padding
    Hp, Tp = H + 2 * ph, T + 2 * pw
    h_out = (Hp - kh) // sh + 1
    t_out = (Tp - kw) // sw + 1
    M = h_out * t_out
    K = C_in * kh * kw

    # MaskCNN._get_sequence_lengths for Conv2d, exact integer arithmetic
    # (numerator is non-negative, so floor == PyTorch's truncation).
    new_seq = (seq_lengths.astype(jnp.int32) + 2 * pw - (kw - 1) - 1) // sw + 1

    # Pad, then split the padded time axis into `sw` phases so every in-kernel
    # im2col read is contiguous (stride handled on the host at ~1x input bytes).
    Bt = -(-Tp // sw)                                        # ceil(Tp / sw)
    xp = jnp.pad(x, ((0, 0), (0, 0), (ph, ph), (pw, pw + sw * Bt - Tp)))
    xph = xp.reshape(B, C_in, Hp, Bt, sw).transpose(0, 4, 1, 2, 3)
    # xph: (B, sw, C_in, Hp, Bt); for stride-1 convs this is just a reshape.

    w2 = weight.reshape(C_out, K).astype(jnp.bfloat16)       # bf16 MXU operand
    bias2 = bias.reshape(C_out, 1).astype(jnp.float32)
    # column m of the (C_out, M) result has time index m % t_out; precompute it
    # instead of doing a per-element modulo in the kernel epilogue.
    t_idx = jnp.tile(jnp.arange(t_out, dtype=jnp.int32), h_out).reshape(1, M)

    grid_spec = pltpu.PrefetchScalarGridSpec(
        num_scalar_prefetch=1,                               # new_seq -> SMEM
        grid=(B,),
        in_specs=[
            pl.BlockSpec((None, sw, C_in, Hp, Bt), lambda b, seq: (b, 0, 0, 0, 0)),
            pl.BlockSpec((C_out, K), lambda b, seq: (0, 0)),
            pl.BlockSpec((C_out, 1), lambda b, seq: (0, 0)),
            pl.BlockSpec((1, M), lambda b, seq: (0, 0)),
        ],
        out_specs=pl.BlockSpec((None, C_out, M), lambda b, seq: (b, 0, 0)),
        scratch_shapes=[pltpu.VMEM((K, M), jnp.float32)],
    )
    out = pl.pallas_call(
        partial(_conv_fused_kernel, c_in=C_in, kh=kh, kw=kw, sh=sh, sw=sw,
                h_out=h_out, t_out=t_out, fuse_hardtanh=fuse_hardtanh),
        out_shape=jax.ShapeDtypeStruct((B, C_out, M), jnp.float32),
        grid_spec=grid_spec,
        # batch axis is independent -> "parallel" (v7x: shard over 2 TCs).
        compiler_params=pltpu.CompilerParams(dimension_semantics=("parallel",)),
    )(new_seq, xph, w2, bias2, t_idx)

    # (B, C_out, h_out*t_out) -> NCHW is a pure reshape (h-major, t-minor).
    return out.reshape(B, C_out, h_out, t_out), new_seq


# ----------------------------------------------------------------------------
# Standalone Hardtanh + mask (only used when a Hardtanh is NOT fused into the
# preceding conv; lane-dense 2D (C*H, T) view instead of a 4D block).
# ----------------------------------------------------------------------------
def _hardtanh_mask_kernel(seq_ref, x_ref, out_ref):
    b = pl.program_id(0)
    x = jnp.clip(x_ref[...], HT_MIN, HT_MAX)                 # (C*H, T)
    t = jax.lax.broadcasted_iota(jnp.int32, x.shape, 1)
    out_ref[...] = jnp.where(t < seq_ref[b], x, 0.0)


def hardtanh_masked(x, seq_lengths):
    B, C, H, T = x.shape
    x2 = x.reshape(B, C * H, T)
    grid_spec = pltpu.PrefetchScalarGridSpec(
        num_scalar_prefetch=1,
        grid=(B,),
        in_specs=[pl.BlockSpec((None, C * H, T), lambda b, seq: (b, 0, 0))],
        out_specs=pl.BlockSpec((None, C * H, T), lambda b, seq: (b, 0, 0)),
    )
    y2 = pl.pallas_call(
        _hardtanh_mask_kernel,
        out_shape=jax.ShapeDtypeStruct((B, C * H, T), jnp.float32),
        grid_spec=grid_spec,
        compiler_params=pltpu.CompilerParams(dimension_semantics=("parallel",)),
    )(seq_lengths.astype(jnp.int32), x2)
    return y2.reshape(B, C, H, T)


# ----------------------------------------------------------------------------
# MaskCNN.forward equivalent (fuses conv + following hardtanh when possible)
# ----------------------------------------------------------------------------
def mask_cnn_forward(x, seq_lengths, layers):
    seq_lengths = seq_lengths.astype(jnp.int32)
    out = x
    i = 0
    while i < len(layers):
        layer = layers[i]
        if layer["type"] == "conv2d":
            fuse = (i + 1 < len(layers) and layers[i + 1]["type"] == "hardtanh")
            out, seq_lengths = conv2d_masked(
                out, seq_lengths, layer["weight"], layer["bias"],
                layer["stride"], layer["padding"], fuse_hardtanh=fuse)
            i += 2 if fuse else 1
        elif layer["type"] == "hardtanh":
            out = hardtanh_masked(out, seq_lengths)
            i += 1
        else:
            raise ValueError(f"unsupported layer {layer['type']}")
        # TODO(synk): nn.MaxPool2d branch (seq_lengths >>= 1) is not part of
        # this synthetic sequential; it would be one more small masked kernel.
    return out, seq_lengths


# ----------------------------------------------------------------------------
# Deterministic parameter construction + demo run
# ----------------------------------------------------------------------------
def _init_conv_params(key, c_out, c_in, kh, kw):
    kw_, kb_ = jax.random.split(key)
    fan_in = c_in * kh * kw
    bound = 1.0 / math.sqrt(fan_in)
    w = jax.random.uniform(kw_, (c_out, c_in, kh, kw), jnp.float32, -bound, bound)
    b = jax.random.uniform(kb_, (c_out,), jnp.float32, -bound, bound)
    return w, b


if __name__ == "__main__":
    key = jax.random.PRNGKey(0)
    k_x, k_c1, k_c2 = jax.random.split(key, 3)

    # Input: (batch, channel, hidden_dim, seq_len) == (B, C, H, T)
    B, C, H, T = 2, 4, 16, 16
    x = jax.random.normal(k_x, (B, C, H, T), jnp.float32)
    seq_lengths = jnp.array([16, 11], dtype=jnp.int32)

    w1, b1 = _init_conv_params(k_c1, 8, C, 3, 3)   # Conv2d(4->8, k3, s2, p1)
    w2, b2 = _init_conv_params(k_c2, 8, 8, 3, 3)   # Conv2d(8->8, k3, s1, p1)

    layers = [
        {"type": "conv2d", "weight": w1, "bias": b1, "stride": (2, 2), "padding": (1, 1)},
        {"type": "hardtanh"},
        {"type": "conv2d", "weight": w2, "bias": b2, "stride": (1, 1), "padding": (1, 1)},
        {"type": "hardtanh"},
    ]

    out, out_lens = mask_cnn_forward(x, seq_lengths, layers)
    out = jax.block_until_ready(out)
    out_lens = jax.block_until_ready(out_lens)

    # ---- sanity checks ------------------------------------------------------
    assert out.shape == (B, 8, 8, 8), out.shape
    assert int(out_lens[0]) == 8 and int(out_lens[1]) == 6, out_lens
    tail = out[1, :, :, int(out_lens[1]):]
    assert bool(jnp.all(tail == 0.0))           # masked tail must be exact zeros

    # pure-JAX reference with identical MaskCNN semantics (bf16 matmul in the
    # kernel -> generous tolerance).
    def _ref_forward(x, seq):
        def conv(x, w, b, s, p):
            y = jax.lax.conv_general_dilated(
                x, w, window_strides=s,
                padding=[(p[0], p[0]), (p[1], p[1])],
                dimension_numbers=("NCHW", "OIHW", "NCHW"))
            return y + b.reshape(1, -1, 1, 1)

        def mask(y, s):
            t = jnp.arange(y.shape[-1])
            return jnp.where(t[None, None, None, :] < s[:, None, None, None], y, 0.0)

        seq = seq.astype(jnp.int32)
        y = conv(x, w1, b1, (2, 2), (1, 1)); seq = (seq + 2 - 2 - 1) // 2 + 1
        y = mask(y, seq)
        y = mask(jnp.clip(y, 0.0, 20.0), seq)
        y = conv(y, w2, b2, (1, 1), (1, 1)); seq = (seq + 2 - 2 - 1) // 1 + 1
        y = mask(y, seq)
        y = mask(jnp.clip(y, 0.0, 20.0), seq)
        return y, seq

    ref, ref_lens = _ref_forward(x, seq_lengths)
    assert bool(jnp.all(ref_lens == out_lens))
    max_err = float(jnp.max(jnp.abs(out - ref)))
    assert max_err < 0.15, max_err

    print("KERNEL_OK")
</pallas_src>

<mosaic_0001>
module attributes {stable_mosaic.version = 11 : i64} {
  func.func @_conv_fused_kernel(%arg0: i32, %arg1: memref<2xi32, #tpu.memory_space<smem>>, %arg2: memref<1x2x4x18x9xf32, #tpu.memory_space<vmem>>, %arg3: memref<8x36xbf16, #tpu.memory_space<vmem>>, %arg4: memref<8x1xf32, #tpu.memory_space<vmem>>, %arg5: memref<1x64xi32, #tpu.memory_space<vmem>>, %arg6: memref<1x8x64xf32, #tpu.memory_space<vmem>>, %arg7: memref<36x64xf32, #tpu.memory_space<vmem>>) attributes {dimension_semantics = [#tpu.dimension_semantics<parallel>], iteration_bounds = array<i64: 2>, scalar_prefetch = 1 : i64, scratch_operands = 1 : i64, tpu.core_type = #tpu.core_type<tc>, window_params = [{transform_indices = @transform_0, window_bounds = array<i64: 1, 2, 4, 18, 9>}, {pipeline_mode = #tpu.pipeline_mode<synchronous>, transform_indices = @transform_1, window_bounds = array<i64: 8, 36>}, {pipeline_mode = #tpu.pipeline_mode<synchronous>, transform_indices = @transform_2, window_bounds = array<i64: 8, 1>}, {pipeline_mode = #tpu.pipeline_mode<synchronous>, transform_indices = @transform_3, window_bounds = array<i64: 1, 64>}, {transform_indices = @transform_4, window_bounds = array<i64: 1, 8, 64>}]} {
    %c0 = arith.constant 0 : index
    %c0_0 = arith.constant 0 : index
    %c0_1 = arith.constant 0 : index
    %c0_2 = arith.constant 0 : index
    %c0_3 = arith.constant 0 : index
    %0 = vector.load %arg2[%c0, %c0_0, %c0_1, %c0_2, %c0_3] : memref<1x2x4x18x9xf32, #tpu.memory_space<vmem>>, vector<1x1x1x1x8xf32>
    %1 = vector.shape_cast %0 : vector<1x1x1x1x8xf32> to vector<8xf32>
    %c0_4 = arith.constant 0 : index
    %c0_5 = arith.constant 0 : index
    %2 = vector.load %arg7[%c0_4, %c0_5] : memref<36x64xf32, #tpu.memory_space<vmem>>, vector<1x8xf32>
    %3 = vector.shape_cast %2 : vector<1x8xf32> to vector<8xf32>
    %4 = vector.shape_cast %1 : vector<8xf32> to vector<1x8xf32>
    tpu.vector_store %arg7[%c0_4, %c0_5], %4 {strides = array<i32>} : memref<36x64xf32, #tpu.memory_space<vmem>>, vector<1x8xf32>,
    %c0_6 = arith.constant 0 : index
    %c0_7 = arith.constant 0 : index
    %c0_8 = arith.constant 0 : index
    %c2 = arith.constant 2 : index
    %c0_9 = arith.constant 0 : index
    %5 = vector.load %arg2[%c0_6, %c0_7, %c0_8, %c2, %c0_9] : memref<1x2x4x18x9xf32, #tpu.memory_space<vmem>>, vector<1x1x1x1x8xf32>
    %6 = vector.shape_cast %5 : vector<1x1x1x1x8xf32> to vector<8xf32>
    %c0_10 = arith.constant 0 : index
    %c8 = arith.constant 8 : index
    %7 = vector.load %arg7[%c0_10, %c8] : memref<36x64xf32, #tpu.memory_space<vmem>>, vector<1x8xf32>
    %8 = vector.shape_cast %7 : vector<1x8xf32> to vector<8xf32>
    %9 = vector.shape_cast %6 : vector<8xf32> to vector<1x8xf32>
    tpu.vector_store %arg7[%c0_10, %c8], %9 {strides = array<i32>} : memref<36x64xf32, #tpu.memory_space<vmem>>, vector<1x8xf32>,
    %c0_11 = arith.constant 0 : index
    %c0_12 = arith.constant 0 : index
    %c0_13 = arith.constant 0 : index
    %c4 = arith.constant 4 : index
    %c0_14 = arith.constant 0 : index
    %10 = vector.load %arg2[%c0_11, %c0_12, %c0_13, %c4, %c0_14] : memref<1x2x4x18x9xf32, #tpu.memory_space<vmem>>, vector<1x1x1x1x8xf32>
    %11 = vector.shape_cast %10 : vector<1x1x1x1x8xf32> to vector<8xf32>
    %c0_15 = arith.constant 0 : index
    %c16 = arith.constant 16 : index
    %12 = vector.load %arg7[%c0_15, %c16] : memref<36x64xf32, #tpu.memory_space<vmem>>, vector<1x8xf32>
    %13 = vector.shape_cast %12 : vector<1x8xf32> to vector<8xf32>
    %14 = vector.shape_cast %11 : vector<8xf32> to vector<1x8xf32>
    tpu.vector_store %arg7[%c0_15, %c16], %14 {strides = array<i32>} : memref<36x64xf32, #tpu.memory_space<vmem>>, vector<1x8xf32>,
    %c0_16 = arith.constant 0 : index
    %c0_17 = arith.constant 0 : index
    %c0_18 = arith.constant 0 : index
    %c6 = arith.constant 6 : index
    %c0_19 = arith.constant 0 : index
    %15 = vector.load %arg2[%c0_16, %c0_17, %c0_18, %c6, %c0_19] : memref<1x2x4x18x9xf32, #tpu.memory_space<vmem>>, vector<1x1x1x1x8xf32>
    %16 = vector.shape_cast %15 : vector<1x1x1x1x8xf32> to vector<8xf32>
    %c0_20 = arith.constant 0 : index
    %c24 = arith.constant 24 : index
    %17 = vector.load %arg7[%c0_20, %c24] : memref<36x64xf32, #tpu.memory_space<vmem>>, vector<1x8xf32>
    %18 = vector.shape_cast %17 : vector<1x8xf32> to vector<8xf32>
    %19 = vector.shape_cast %16 : vector<8xf32> to vector<1x8xf32>
    tpu.vector_store %arg7[%c0_20, %c24], %19 {strides = array<i32>} : memref<36x64xf32, #tpu.memory_space<vmem>>, vector<1x8xf32>,
    %c0_21 = arith.constant 0 : index
    %c0_22 = arith.constant 0 : index
    %c0_23 = arith.constant 0 : index
    %c8_24 = arith.constant 8 : index
    %c0_25 = arith.constant 0 : index
    %20 = vector.load %arg2[%c0_21, %c0_22, %c0_23, %c8_24, %c0_25] : memref<1x2x4x18x9xf32, #tpu.memory_space<vmem>>, vector<1x1x1x1x8xf32>
    %21 = vector.shape_cast %20 : vector<1x1x1x1x8xf32> to vector<8xf32>
    %c0_26 = arith.constant 0 : index
    %c32 = arith.constant 32 : index
    %22 = vector.load %arg7[%c0_26, %c32] : memref<36x64xf32, #tpu.memory_space<vmem>>, vector<1x8xf32>
    %23 = vector.shape_cast %22 : vector<1x8xf32> to vector<8xf32>
    %24 = vector.shape_cast %21 : vector<8xf32> to vector<1x8xf32>
    tpu.vector_store %arg7[%c0_26, %c32], %24 {strides = array<i32>} : memref<36x64xf32, #tpu.memory_space<vmem>>, vector<1x8xf32>,
    %c0_27 = arith.constant 0 : index
    %c0_28 = arith.constant 0 : index
    %c0_29 = arith.constant 0 : index
    %c10 = arith.constant 10 : index
    %c0_30 = arith.constant 0 : index
    %25 = vector.load %arg2[%c0_27, %c0_28, %c0_29, %c10, %c0_30] : memref<1x2x4x18x9xf32, #tpu.memory_space<vmem>>, vector<1x1x1x1x8xf32>
    %26 = vector.shape_cast %25 : vector<1x1x1x1x8xf32> to vector<8xf32>
    %c0_31 = arith.constant 0 : index
    %c40 = arith.constant 40 : index
    %27 = vector.load %arg7[%c0_31, %c40] : memref<36x64xf32, #tpu.memory_space<vmem>>, vector<1x8xf32>
    %28 = vector.shape_cast %27 : vector<1x8xf32> to vector<8xf32>
    %29 = vector.shape_cast %26 : vector<8xf32> to vector<1x8xf32>
    tpu.vector_store %arg7[%c0_31, %c40], %29 {strides = array<i32>} : memref<36x64xf32, #tpu.memory_space<vmem>>, vector<1x8xf32>,
    %c0_32 = arith.constant 0 : index
    %c0_33 = arith.constant 0 : index
    %c0_34 = arith.constant 0 : index
    %c12 = arith.constant 12 : index
    %c0_35 = arith.constant 0 : index
    %30 = vector.load %arg2[%c0_32, %c0_33, %c0_34, %c12, %c0_35] : memref<1x2x4x18x9xf32, #tpu.memory_space<vmem>>, vector<1x1x1x1x8xf32>
    %31 = vector.shape_cast %30 : vector<1x1x1x1x8xf32> to vector<8xf32>
    %c0_36 = arith.constant 0 : index
    %c48 = arith.constant 48 : index
    %32 = vector.load %arg7[%c0_36, %c48] : memref<36x64xf32, #tpu.memory_space<vmem>>, vector<1x8xf32>
    %33 = vector.shape_cast %32 : vector<1x8xf32> to vector<8xf32>
    %34 = vector.shape_cast %31 : vector<8xf32> to vector<1x8xf32>
    tpu.vector_store %arg7[%c0_36, %c48], %34 {strides = array<i32>} : memref<36x64xf32, #tpu.memory_space<vmem>>, vector<1x8xf32>,
    %c0_37 = arith.constant 0 : index
    %c0_38 = arith.constant 0 : index
    %c0_39 = arith.constant 0 : index
    %c14 = arith.constant 14 : index
    %c0_40 = arith.constant 0 : index
    %35 = vector.load %arg2[%c0_37, %c0_38, %c0_39, %c14, %c0_40] : memref<1x2x4x18x9xf32, #tpu.memory_space<vmem>>, vector<1x1x1x1x8xf32>
    %36 = vector.shape_cast %35 : vector<1x1x1x1x8xf32> to vector<8xf32>
    %c0_41 = arith.constant 0 : index
    %c56 = arith.constant 56 : index
    %37 = vector.load %arg7[%c0_41, %c56] : memref<36x64xf32, #tpu.memory_space<vmem>>, vector<1x8xf32>
    %38 = vector.shape_cast %37 : vector<1x8xf32> to vector<8xf32>
    %39 = vector.shape_cast %36 : vector<8xf32> to vector<1x8xf32>
    tpu.vector_store %arg7[%c0_41, %c56], %39 {strides = array<i32>} : memref<36x64xf32, #tpu.memory_space<vmem>>, vector<1x8xf32>,
    %c0_42 = arith.constant 0 : index
    %c1 = arith.constant 1 : index
    %c0_43 = arith.constant 0 : index
    %c0_44 = arith.constant 0 : index
    %c0_45 = arith.constant 0 : index
    %40 = vector.load %arg2[%c0_42, %c1, %c0_43, %c0_44, %c0_45] : memref<1x2x4x18x9xf32, #tpu.memory_space<vmem>>, vector<1x1x1x1x8xf32>
    %41 = vector.shape_cast %40 : vector<1x1x1x1x8xf32> to vector<8xf32>
    %c1_46 = arith.constant 1 : index
    %c0_47 = arith.constant 0 : index
    %42 = vector.load %arg7[%c1_46, %c0_47] : memref<36x64xf32, #tpu.memory_space<vmem>>, vector<1x8xf32>
    %43 = vector.shape_cast %42 : vector<1x8xf32> to vector<8xf32>
    %44 = vector.shape_cast %41 : vector<8xf32> to vector<1x8xf32>
    tpu.vector_store %arg7[%c1_46, %c0_47], %44 {strides = array<i32>} : memref<36x64xf32, #tpu.memory_space<vmem>>, vector<1x8xf32>,
    %c0_48 = arith.constant 0 : index
    %c1_49 = arith.constant 1 : index
    %c0_50 = arith.constant 0 : index
    %c2_51 = arith.constant 2 : index
    %c0_52 = arith.constant 0 : index
    %45 = vector.load %arg2[%c0_48, %c1_49, %c0_50, %c2_51, %c0_52] : memref<1x2x4x18x9xf32, #tpu.memory_space<vmem>>, vector<1x1x1x1x8xf32>
    %46 = vector.shape_cast %45 : vector<1x1x1x1x8xf32> to vector<8xf32>
    %c1_53 = arith.constant 1 : index
    %c8_54 = arith.constant 8 : index
    %47 = vector.load %arg7[%c1_53, %c8_54] : memref<36x64xf32, #tpu.memory_space<vmem>>, vector<1x8xf32>
    %48 = vector.shape_cast %47 : vector<1x8xf32> to vector<8xf32>
    %49 = vector.shape_cast %46 : vector<8xf32> to vector<1x8xf32>
    tpu.vector_store %arg7[%c1_53, %c8_54], %49 {strides = array<i32>} : memref<36x64xf32, #tpu.memory_space<vmem>>, vector<1x8xf32>,
    %c0_55 = arith.constant 0 : index
    %c1_56 = arith.constant 1 : index
    %c0_57 = arith.constant 0 : index
    %c4_58 = arith.constant 4 : index
    %c0_59 = arith.constant 0 : index
    %50 = vector.load %arg2[%c0_55, %c1_56, %c0_57, %c4_58, %c0_59] : memref<1x2x4x18x9xf32, #tpu.memory_space<vmem>>, vector<1x1x1x1x8xf32>
    %51 = vector.shape_cast %50 : vector<1x1x1x1x8xf32> to vector<8xf32>
    %c1_60 = arith.constant 1 : index
    %c16_61 = arith.constant 16 : index
    %52 = vector.load %arg7[%c1_60, %c16_61] : memref<36x64xf32, #tpu.memory_space<vmem>>, vector<1x8xf32>
    %53 = vector.shape_cast %52 : vector<1x8xf32> to vector<8xf32>
    %54 = vector.shape_cast %51 : vector<8xf32> to vector<1x8xf32>
    tpu.vector_store %arg7[%c1_60, %c16_61], %54 {strides = array<i32>} : memref<36x64xf32, #tpu.memory_space<vmem>>, vector<1x8xf32>,
    %c0_62 = arith.constant 0 : index
    %c1_63 = arith.constant 1 : index
    %c0_64 = arith.constant 0 : index
    %c6_65 = arith.constant 6 : index
    %c0_66 = arith.constant 0 : index
    %55 = vector.load %arg2[%c0_62, %c1_63, %c0_64, %c6_65, %c0_66] : memref<1x2x4x18x9xf32, #tpu.memory_space<vmem>>, vector<1x1x1x1x8xf32>
    %56 = vector.shape_cast %55 : vector<1x1x1x1x8xf32> to vector<8xf32>
    %c1_67 = arith.constant 1 : index
    %c24_68 = arith.constant 24 : index
    %57 = vector.load %arg7[%c1_67, %c24_68] : memref<36x64xf32, #tpu.memory_space<vmem>>, vector<1x8xf32>
    %58 = vector.shape_cast %57 : vector<1x8xf32> to vector<8xf32>
    %59 = vector.shape_cast %56 : vector<8xf32> to vector<1x8xf32>
    tpu.vector_store %arg7[%c1_67, %c24_68], %59 {strides = array<i32>} : memref<36x64xf32, #tpu.memory_space<vmem>>, vector<1x8xf32>,
    %c0_69 = arith.constant 0 : index
    %c1_70 = arith.constant 1 : index
    %c0_71 = arith.constant 0 : index
    %c8_72 = arith.constant 8 : index
    %c0_73 = arith.constant 0 : index
    %60 = vector.load %arg2[%c0_69, %c1_70, %c0_71, %c8_72, %c0_73] : memref<1x2x4x18x9xf32, #tpu.memory_space<vmem>>, vector<1x1x1x1x8xf32>
    %61 = vector.shape_cast %60 : vector<1x1x1x1x8xf32> to vector<8xf32>
    %c1_74 = arith.constant 1 : index
    %c32_75 = arith.constant 32 : index
    %62 = vector.load %arg7[%c1_74, %c32_75] : memref<36x64xf32, #tpu.memory_space<vmem>>, vector<1x8xf32>
    %63 = vector.shape_cast %62 : vector<1x8xf32> to vector<8xf32>
    %64 = vector.shape_cast %61 : vector<8xf32> to vector<1x8xf32>
    tpu.vector_store %arg7[%c1_74, %c32_75], %64 {strides = array<i32>} : memref<36x64xf32, #tpu.memory_space<vmem>>, vector<1x8xf32>,
    %c0_76 = arith.constant 0 : index
    %c1_77 = arith.constant 1 : index
    %c0_78 = arith.constant 0 : index
    %c10_79 = arith.constant 10 : index
    %c0_80 = arith.constant 0 : index
    %65 = vector.load %arg2[%c0_76, %c1_77, %c0_78, %c10_79, %c0_80] : memref<1x2x4x18x9xf32, #tpu.memory_space<vmem>>, vector<1x1x1x1x8xf32>
    %66 = vector.shape_cast %65 : vector<1x1x1x1x8xf32> to vector<8xf32>
    %c1_81 = arith.constant 1 : index
    %c40_82 = arith.constant 40 : index
    %67 = vector.load %arg7[%c1_81, %c40_82] : memref<36x64xf32, #tpu.memory_space<vmem>>, vector<1x8xf32>
    %68 = vector.shape_cast %67 : vector<1x8xf32> to vector<8xf32>
    %69 = vector.shape_cast %66 : vector<8xf32> to vector<1x8xf32>
    tpu.vector_store %arg7[%c1_81, %c40_82], %69 {strides = array<i32>} : memref<36x64xf32, #tpu.memory_space<vmem>>, vector<1x8xf32>,
    %c0_83 = arith.constant 0 : index
    %c1_84 = arith.constant 1 : index
    %c0_85 = arith.constant 0 : index
    %c12_86 = arith.constant 12 : index
    %c0_87 = arith.constant 0 : index
    %70 = vector.load %arg2[%c0_83, %c1_84, %c0_85, %c12_86, %c0_87] : memref<1x2x4x18x9xf32, #tpu.memory_space<vmem>>, vector<1x1x1x1x8xf32>
    %71 = vector.shape_cast %70 : vector<1x1x1x1x8xf32> to vector<8xf32>
    %c1_88 = arith.constant 1 : index
    %c48_89 = arith.constant 48 : index
    %72 = vector.load %arg7[%c1_88, %c48_89] : memref<36x64xf32, #tpu.memory_space<vmem>>, vector<1x8xf32>
    %73 = vector.shape_cast %72 : vector<1x8xf32> to vector<8xf32>
    %74 = vector.shape_cast %71 : vector<8xf32> to vector<1x8xf32>
    tpu.vector_store %arg7[%c1_88, %c48_89], %74 {strides = array<i32>} : memref<36x64xf32, #tpu.memory_space<vmem>>, vector<1x8xf32>,
    %c0_90 = arith.constant 0 : index
    %c1_91 = arith.constant 1 : index
    %c0_92 = arith.constant 0 : index
    %c14_93 = arith.constant 14 : index
    %c0_94 = arith.constant 0 : index
    %75 = vector.load %arg2[%c0_90, %c1_91, %c0_92, %c14_93, %c0_94] : memref<1x2x4x18x9xf32, #tpu.memory_space<vmem>>, vector<1x1x1x1x8xf32>
    %76 = vector.shape_cast %75 : vector<1x1x1x1x8xf32> to vector<8xf32>
    %c1_95 = arith.constant 1 : index
    %c56_96 = arith.constant 56 : index
    %77 = vector.load %arg7[%c1_95, %c56_96] : memref<36x64xf32, #tpu.memory_space<vmem>>, vector<1x8xf32>
    %78 = vector.shape_cast %77 : vector<1x8xf32> to vector<8xf32>
    %79 = vector.shape_cast %76 : vector<8xf32> to vector<1x8xf32>
    tpu.vector_store %arg7[%c1_95, %c56_96], %79 {strides = array<i32>} : memref<36x64xf32, #tpu.memory_space<vmem>>, vector<1x8xf32>,
    %c0_97 = arith.constant 0 : index
    %c0_98 = arith.constant 0 : index
    %c0_99 = arith.constant 0 : index
    %c0_100 = arith.constant 0 : index
    %c1_101 = arith.constant 1 : index
    %80 = vector.load %arg2[%c0_97, %c0_98, %c0_99, %c0_100, %c1_101] : memref<1x2x4x18x9xf32, #tpu.memory_space<vmem>>, vector<1x1x1x1x8xf32>
    %81 = vector.shape_cast %80 : vector<1x1x1x1x8xf32> to vector<8xf32>
    %c2_102 = arith.constant 2 : index
    %c0_103 = arith.constant 0 : index
    %82 = vector.load %arg7[%c2_102, %c0_103] : memref<36x64xf32, #tpu.memory_space<vmem>>, vector<1x8xf32>
    %83 = vector.shape_cast %82 : vector<1x8xf32> to vector<8xf32>
    %84 = vector.shape_cast %81 : vector<8xf32> to vector<1x8xf32>
    tpu.vector_store %arg7[%c2_102, %c0_103], %84 {strides = array<i32>} : memref<36x64xf32, #tpu.memory_space<vmem>>, vector<1x8xf32>,
    %c0_104 = arith.constant 0 : index
    %c0_105 = arith.constant 0 : index
    %c0_106 = arith.constant 0 : index
    %c2_107 = arith.constant 2 : index
    %c1_108 = arith.constant 1 : index
    %85 = vector.load %arg2[%c0_104, %c0_105, %c0_106, %c2_107, %c1_108] : memref<1x2x4x18x9xf32, #tpu.memory_space<vmem>>, vector<1x1x1x1x8xf32>
    %86 = vector.shape_cast %85 : vector<1x1x1x1x8xf32> to vector<8xf32>
    %c2_109 = arith.constant 2 : index
    %c8_110 = arith.constant 8 : index
    %87 = vector.load %arg7[%c2_109, %c8_110] : memref<36x64xf32, #tpu.memory_space<vmem>>, vector<1x8xf32>
    %88 = vector.shape_cast %87 : vector<1x8xf32> to vector<8xf32>
    %89 = vector.shape_cast %86 : vector<8xf32> to vector<1x8xf32>
    tpu.vector_store %arg7[%c2_109, %c8_110], %89 {strides = array<i32>} : memref<36x64xf32, #tpu.memory_space<vmem>>, vector<1x8xf32>,
    %c0_111 = arith.constant 0 : index
    %c0_112 = arith.constant 0 : index
    %c0_113 = arith.constant 0 : index
    %c4_114 = arith.constant 4 : index
    %c1_115 = arith.constant 1 : index
    %90 = vector.load %arg2[%c0_111, %c0_112, %c0_113, %c4_114, %c1_115] : memref<1x2x4x18x9xf32, #tpu.memory_space<vmem>>, vector<1x1x1x1x8xf32>
    %91 = vector.shape_cast %90 : vector<1x1x1x1x8xf32> to vector<8xf32>
    %c2_116 = arith.constant 2 : index
    %c16_117 = arith.constant 16 : index
    %92 = vector.load %arg7[%c2_116, %c16_117] : memref<36x64xf32, #tpu.memory_space<vmem>>, vector<1x8xf32>
    %93 = vector.shape_cast %92 : vector<1x8xf32> to vector<8xf32>
    %94 = vector.shape_cast %91 : vector<8xf32> to vector<1x8xf32>
    tpu.vector_store %arg7[%c2_116, %c16_117], %94 {strides = array<i32>} : memref<36x64xf32, #tpu.memory_space<vmem>>, vector<1x8xf32>,
    %c0_118 = arith.constant 0 : index
    %c0_119 = arith.constant 0 : index
    %c0_120 = arith.constant 0 : index
    %c6_121 = arith.constant 6 : index
    %c1_122 = arith.constant 1 : index
    %95 = vector.load %arg2[%c0_118, %c0_119, %c0_120, %c6_121, %c1_122] : memref<1x2x4x18x9xf32, #tpu.memory_space<vmem>>, vector<1x1x1x1x8xf32>
    %96 = vector.shape_cast %95 : vector<1x1x1x1x8xf32> to vector<8xf32>
    %c2_123 = arith.constant 2 : index
    %c24_124 = arith.constant 24 : index
    %97 = vector.load %arg7[%c2_123, %c24_124] : memref<36x64xf32, #tpu.memory_space<vmem>>, vector<1x8xf32>
    %98 = vector.shape_cast %97 : vector<1x8xf32> to vector<8xf32>
    %99 = vector.shape_cast %96 : vector<8xf32> to vector<1x8xf32>
    tpu.vector_store %arg7[%c2_123, %c24_124], %99 {strides = array<i32>} : memref<36x64xf32, #tpu.memory_space<vmem>>, vector<1x8xf32>,
    %c0_125 = arith.constant 0 : index
    %c0_126 = arith.constant 0 : index
    %c0_127 = arith.constant 0 : index
    %c8_128 = arith.constant 8 : index
    %c1_129 = arith.constant 1 : index
    %100 = vector.load %arg2[%c0_125, %c0_126, %c0_127, %c8_128, %c1_129] : memref<1x2x4x18x9xf32, #tpu.memory_space<vmem>>, vector<1x1x1x1x8xf32>
    %101 = vector.shape_cast %100 : vector<1x1x1x1x8xf32> to vector<8xf32>
    %c2_130 = arith.constant 2 : index
    %c32_131 = arith.constant 32 : index
    %102 = vector.load %arg7[%c2_130, %c32_131] : memref<36x64xf32, #tpu.memory_space<vmem>>, vector<1x8xf32>
    %103 = vector.shape_cast %102 : vector<1x8xf32> to vector<8xf32>
    %104 = vector.shape_cast %101 : vector<8xf32> to vector<1x8xf32>
    tpu.vector_store %arg7[%c2_130, %c32_131], %104 {strides = array<i32>} : memref<36x64xf32, #tpu.memory_space<vmem>>, vector<1x8xf32>,
    %c0_132 = arith.constant 0 : index
    %c0_133 = arith.constant 0 : index
    %c0_134 = arith.constant 0 : index
    %c10_135 = arith.constant 10 : index
    %c1_136 = arith.constant 1 : index
    %105 = vector.load %arg2[%c0_132, %c0_133, %c0_134, %c10_135, %c1_136] : memref<1x2x4x18x9xf32, #tpu.memory_space<vmem>>, vector<1x1x1x1x8xf32>
    %106 = vector.shape_cast %105 : vector<1x1x1x1x8xf32> to vector<8xf32>
    %c2_137 = arith.constant 2 : index
    %c40_138 = arith.constant 40 : index
    %107 = vector.load %arg7[%c2_137, %c40_138] : memref<36x64xf32, #tpu.memory_space<vmem>>, vector<1x8xf32>
    %108 = vector.shape_cast %107 : vector<1x8xf32> to vector<8xf32>
    %109 = vector.shape_cast %106 : vector<8xf32> to vector<1x8xf32>
    tpu.vector_store %arg7[%c2_137, %c40_138], %109 {strides = array<i32>} : memref<36x64xf32, #tpu.memory_space<vmem>>, vector<1x8xf32>,
    %c0_139 = arith.constant 0 : index
    %c0_140 = arith.constant 0 : index
    %c0_141 = arith.constant 0 : index
    %c12_142 = arith.constant 12 : index
    %c1_143 = arith.constant 1 : index
    %110 = vector.load %arg2[%c0_139, %c0_140, %c0_141, %c12_142, %c1_143] : memref<1x2x4x18x9xf32, #tpu.memory_space<vmem>>, vector<1x1x1x1x8xf32>
    %111 = vector.shape_cast %110 : vector<1x1x1x1x8xf32> to vector<8xf32>
    %c2_144 = arith.constant 2 : index
    %c48_145 = arith.constant 48 : index
    %112 = vector.load %arg7[%c2_144, %c48_145] : memref<36x64xf32, #tpu.memory_space<vmem>>, vector<1x8xf32>
    %113 = vector.shape_cast %112 : vector<1x8xf32> to vector<8xf32>
    %114 = vector.shape_cast %111 : vector<8xf32> to vector<1x8xf32>
    tpu.vector_store %arg7[%c2_144, %c48_145], %114 {strides = array<i32>} : memref<36x64xf32, #tpu.memory_space<vmem>>, vector<1x8xf32>,
    %c0_146 = arith.constant 0 : index
    %c0_147 = arith.constant 0 : index
    %c0_148 = arith.constant 0 : index
    %c14_149 = arith.constant 14 : index
    %c1_150 = arith.constant 1 : index
    %115 = vector.load %arg2[%c0_146, %c0_147, %c0_148, %c14_149, %c1_150] : memref<1x2x4x18x9xf32, #tpu.memory_space<vmem>>, vector<1x1x1x1x8xf32>
    %116 = vector.shape_cast %115 : vector<1x1x1x1x8xf32> to vector<8xf32>
    %c2_151 = arith.constant 2 : index
    %c56_152 = arith.constant 56 : index
    %117 = vector.load %arg7[%c2_151, %c56_152] : memref<36x64xf32, #tpu.memory_space<vmem>>, vector<1x8xf32>
    %118 = vector.shape_cast %117 : vector<1x8xf32> to vector<8xf32>
    %119 = vector.shape_cast %116 : vector<8xf32> to vector<1x8xf32>
    tpu.vector_store %arg7[%c2_151, %c56_152], %119 {strides = array<i32>} : memref<36x64xf32, #tpu.memory_space<vmem>>, vector<1x8xf32>,
    %c0_153 = arith.constant 0 : index
    %c0_154 = arith.constant 0 : index
    %c0_155 = arith.constant 0 : index
    %c1_156 = arith.constant 1 : index
    %c0_157 = arith.constant 0 : index
    %120 = vector.load %arg2[%c0_153, %c0_154, %c0_155, %c1_156, %c0_157] : memref<1x2x4x18x9xf32, #tpu.memory_space<vmem>>, vector<1x1x1x1x8xf32>
    %121 = vector.shape_cast %120 : vector<1x1x1x1x8xf32> to vector<8xf32>
    %c3 = arith.constant 3 : index
    %c0_158 = arith.constant 0 : index
    %122 = vector.load %arg7[%c3, %c0_158] : memref<36x64xf32, #tpu.memory_space<vmem>>, vector<1x8xf32>
    %123 = vector.shape_cast %122 : vector<1x8xf32> to vector<8xf32>
    %124 = vector.shape_cast %121 : vector<8xf32> to vector<1x8xf32>
    tpu.vector_store %arg7[%c3, %c0_158], %124 {strides = array<i32>} : memref<36x64xf32, #tpu.memory_space<vmem>>, vector<1x8xf32>,
    %c0_159 = arith.constant 0 : index
    %c0_160 = arith.constant 0 : index
    %c0_161 = arith.constant 0 : index
    %c3_162 = arith.constant 3 : index
    %c0_163 = arith.constant 0 : index
    %125 = vector.load %arg2[%c0_159, %c0_160, %c0_161, %c3_162, %c0_163] : memref<1x2x4x18x9xf32, #tpu.memory_space<vmem>>, vector<1x1x1x1x8xf32>
    %126 = vector.shape_cast %125 : vector<1x1x1x1x8xf32> to vector<8xf32>
    %c3_164 = arith.constant 3 : index
    %c8_165 = arith.constant 8 : index
    %127 = vector.load %arg7[%c3_164, %c8_165] : memref<36x64xf32, #tpu.memory_space<vmem>>, vector<1x8xf32>
    %128 = vector.shape_cast %127 : vector<1x8xf32> to vector<8xf32>
    %129 = vector.shape_cast %126 : vector<8xf32> to vector<1x8xf32>
    tpu.vector_store %arg7[%c3_164, %c8_165], %129 {strides = array<i32>} : memref<36x64xf32, #tpu.memory_space<vmem>>, vector<1x8xf32>,
    %c0_166 = arith.constant 0 : index
    %c0_167 = arith.constant 0 : index
    %c0_168 = arith.constant 0 : index
    %c5 = arith.constant 5 : index
    %c0_169 = arith.constant 0 : index
    %130 = vector.load %arg2[%c0_166, %c0_167, %c0_168, %c5, %c0_169] : memref<1x2x4x18x9xf32, #tpu.memory_space<vmem>>, vector<1x1x1x1x8xf32>
    %131 = vector.shape_cast %130 : vector<1x1x1x1x8xf32> to vector<8xf32>
    %c3_170 = arith.constant 3 : index
    %c16_171 = arith.constant 16 : index
    %132 = vector.load %arg7[%c3_170, %c16_171] : memref<36x64xf32, #tpu.memory_space<vmem>>, vector<1x8xf32>
    %133 = vector.shape_cast %132 : vector<1x8xf32> to vector<8xf32>
    %134 = vector.shape_cast %131 : vector<8xf32> to vector<1x8xf32>
    tpu.vector_store %arg7[%c3_170, %c16_171], %134 {strides = array<i32>} : memref<36x64xf32, #tpu.memory_space<vmem>>, vector<1x8xf32>,
    %c0_172 = arith.constant 0 : index
    %c0_173 = arith.constant 0 : index
    %c0_174 = arith.constant 0 : index
    %c7 = arith.constant 7 : index
    %c0_175 = arith.constant 0 : index
    %135 = vector.load %arg2[%c0_172, %c0_173, %c0_174, %c7, %c0_175] : memref<1x2x4x18x9xf32, #tpu.memory_space<vmem>>, vector<1x1x1x1x8xf32>
    %136 = vector.shape_cast %135 : vector<1x1x1x1x8xf32> to vector<8xf32>
    %c3_176 = arith.constant 3 : index
    %c24_177 = arith.constant 24 : index
    %137 = vector.load %arg7[%c3_176, %c24_177] : memref<36x64xf32, #tpu.memory_space<vmem>>, vector<1x8xf32>
    %138 = vector.shape_cast %137 : vector<1x8xf32> to vector<8xf32>
    %139 = vector.shape_cast %136 : vector<8xf32> to vector<1x8xf32>
    tpu.vector_store %arg7[%c3_176, %c24_177], %139 {strides = array<i32>} : memref<36x64xf32, #tpu.memory_space<vmem>>, vector<1x8xf32>,
    %c0_178 = arith.constant 0 : index
    %c0_179 = arith.constant 0 : index
    %c0_180 = arith.constant 0 : index
    %c9 = arith.constant 9 : index
    %c0_181 = arith.constant 0 : index
    %140 = vector.load %arg2[%c0_178, %c0_179, %c0_180, %c9, %c0_181] : memref<1x2x4x18x9xf32, #tpu.memory_space<vmem>>, vector<1x1x1x1x8xf32>
    %141 = vector.shape_cast %140 : vector<1x1x1x1x8xf32> to vector<8xf32>
    %c3_182 = arith.constant 3 : index
    %c32_183 = arith.constant 32 : index
    %142 = vector.load %arg7[%c3_182, %c32_183] : memref<36x64xf32, #tpu.memory_space<vmem>>, vector<1x8xf32>
    %143 = vector.shape_cast %142 : vector<1x8xf32> to vector<8xf32>
    %144 = vector.shape_cast %141 : vector<8xf32> to vector<1x8xf32>
    tpu.vector_store %arg7[%c3_182, %c32_183], %144 {strides = array<i32>} : memref<36x64xf32, #tpu.memory_space<vmem>>, vector<1x8xf32>,
    %c0_184 = arith.constant 0 : index
    %c0_185 = arith.constant 0 : index
    %c0_186 = arith.constant 0 : index
    %c11 = arith.constant 11 : index
    %c0_187 = arith.constant 0 : index
    %145 = vector.load %arg2[%c0_184, %c0_185, %c0_186, %c11, %c0_187] : memref<1x2x4x18x9xf32, #tpu.memory_space<vmem>>, vector<1x1x1x1x8xf32>
    %146 = vector.shape_cast %145 : vector<1x1x1x1x8xf32> to vector<8xf32>
    %c3_188 = arith.constant 3 : index
    %c40_189 = arith.constant 40 : index
    %147 = vector.load %arg7[%c3_188, %c40_189] : memref<36x64xf32, #tpu.memory_space<vmem>>, vector<1x8xf32>
    %148 = vector.shape_cast %147 : vector<1x8xf32> to vector<8xf32>
    %149 = vector.shape_cast %146 : vector<8xf32> to vector<1x8xf32>
    tpu.vector_store %arg7[%c3_188, %c40_189], %149 {strides = array<i32>} : memref<36x64xf32, #tpu.memory_space<vmem>>, vector<1x8xf32>,
    %c0_190 = arith.constant 0 : index
    %c0_191 = arith.constant 0 : index
    %c0_192 = arith.constant 0 : index
    %c13 = arith.constant 13 : index
    %c0_193 = arith.constant 0 : index
    %150 = vector.load %arg2[%c0_190, %c0_191, %c0_192, %c13, %c0_193] : memref<1x2x4x18x9xf32, #tpu.memory_space<vmem>>, vector<1x1x1x1x8xf32>
    %151 = vector.shape_cast %150 : vector<1x1x1x1x8xf32> to vector<8xf32>
    %c3_194 = arith.constant 3 : index
    %c48_195 = arith.constant 48 : index
    %152 = vector.load %arg7[%c3_194, %c48_195] : memref<36x64xf32, #tpu.memory_space<vmem>>, vector<1x8xf32>
    %153 = vector.shape_cast %152 : vector<1x8xf32> to vector<8xf32>
    %154 = vector.shape_cast %151 : vector<8xf32> to vector<1x8xf32>
    tpu.vector_store %arg7[%c3_194, %c48_195], %154 {strides = array<i32>} : memref<36x64xf32, #tpu.memory_space<vmem>>, vector<1x8xf32>,
    %c0_196 = arith.constant 0 : index
    %c0_197 = arith.constant 0 : index
    %c0_198 = arith.constant 0 : index
    %c15 = arith.constant 15 : index
    %c0_199 = arith.constant 0 : index
    %155 = vector.load %arg2[%c0_196, %c0_197, %c0_198, %c15, %c0_199] : memref<1x2x4x18x9xf32, #tpu.memory_space<vmem>>, vector<1x1x1x1x8xf32>
    %156 = vector.shape_cast %155 : vector<1x1x1x1x8xf32> to vector<8xf32>
    %c3_200 = arith.constant 3 : index
    %c56_201 = arith.constant 56 : index
    %157 = vector.load %arg7[%c3_200, %c56_201] : memref<36x64xf32, #tpu.memory_space<vmem>>, vector<1x8xf32>
    %158 = vector.shape_cast %157 : vector<1x8xf32> to vector<8xf32>
    %159 = vector.shape_cast %156 : vector<8xf32> to vector<1x8xf32>
    tpu.vector_store %arg7[%c3_200, %c56_201], %159 {strides = array<i32>} : memref<36x64xf32, #tpu.memory_space<vmem>>, vector<1x8xf32>,
    %c0_202 = arith.constant 0 : index
    %c1_203 = arith.constant 1 : index
    %c0_204 = arith.constant 0 : index
    %c1_205 = arith.constant 1 : index
    %c0_206 = arith.constant 0 : index
    %160 = vector.load %arg2[%c0_202, %c1_203, %c0_204, %c1_205, %c0_206] : memref<1x2x4x18x9xf32, #tpu.memory_space<vmem>>, vector<1x1x1x1x8xf32>
    %161 = vector.shape_cast %160 : vector<1x1x1x1x8xf32> to vector<8xf32>
    %c4_207 = arith.constant 4 : index
    %c0_208 = arith.constant 0 : index
    %162 = vector.load %arg7[%c4_207, %c0_208] : memref<36x64xf32, #tpu.memory_space<vmem>>, vector<1x8xf32>
    %163 = vector.shape_cast %162 : vector<1x8xf32> to vector<8xf32>
    %164 = vector.shape_cast %161 : vector<8xf32> to vector<1x8xf32>
    tpu.vector_store %arg7[%c4_207, %c0_208], %164 {strides = array<i32>} : memref<36x64xf32, #tpu.memory_space<vmem>>, vector<1x8xf32>,
    %c0_209 = arith.constant 0 : index
    %c1_210 = arith.constant 1 : index
    %c0_211 = arith.constant 0 : index
    %c3_212 = arith.constant 3 : index
    %c0_213 = arith.constant 0 : index
    %165 = vector.load %arg2[%c0_209, %c1_210, %c0_211, %c3_212, %c0_213] : memref<1x2x4x18x9xf32, #tpu.memory_space<vmem>>, vector<1x1x1x1x8xf32>
    %166 = vector.shape_cast %165 : vector<1x1x1x1x8xf32> to vector<8xf32>
    %c4_214 = arith.constant 4 : index
    %c8_215 = arith.constant 8 : index
    %167 = vector.load %arg7[%c4_214, %c8_215] : memref<36x64xf32, #tpu.memory_space<vmem>>, vector<1x8xf32>
    %168 = vector.shape_cast %167 : vector<1x8xf32> to vector<8xf32>
    %169 = vector.shape_cast %166 : vector<8xf32> to vector<1x8xf32>
    tpu.vector_store %arg7[%c4_214, %c8_215], %169 {strides = array<i32>} : memref<36x64xf32, #tpu.memory_space<vmem>>, vector<1x8xf32>,
    %c0_216 = arith.constant 0 : index
    %c1_217 = arith.constant 1 : index
    %c0_218 = arith.constant 0 : index
    %c5_219 = arith.constant 5 : index
    %c0_220 = arith.constant 0 : index
    %170 = vector.load %arg2[%c0_216, %c1_217, %c0_218, %c5_219, %c0_220] : memref<1x2x4x18x9xf32, #tpu.memory_space<vmem>>, vector<1x1x1x1x8xf32>
    %171 = vector.shape_cast %170 : vector<1x1x1x1x8xf32> to vector<8xf32>
    %c4_221 = arith.constant 4 : index
    %c16_222 = arith.constant 16 : index
    %172 = vector.load %arg7[%c4_221, %c16_222] : memref<36x64xf32, #tpu.memory_space<vmem>>, vector<1x8xf32>
    %173 = vector.shape_cast %172 : vector<1x8xf32> to vector<8xf32>
    %174 = vector.shape_cast %171 : vector<8xf32> to vector<1x8xf32>
    tpu.vector_store %arg7[%c4_221, %c16_222], %174 {strides = array<i32>} : memref<36x64xf32, #tpu.memory_space<vmem>>, vector<1x8xf32>,
    %c0_223 = arith.constant 0 : index
    %c1_224 = arith.constant 1 : index
    %c0_225 = arith.constant 0 : index
    %c7_226 = arith.constant 7 : index
    %c0_227 = arith.constant 0 : index
    %175 = vector.load %arg2[%c0_223, %c1_224, %c0_225, %c7_226, %c0_227] : memref<1x2x4x18x9xf32, #tpu.memory_space<vmem>>, vector<1x1x1x1x8xf32>
    %176 = vector.shape_cast %175 : vector<1x1x1x1x8xf32> to vector<8xf32>
    %c4_228 = arith.constant 4 : index
    %c24_229 = arith.constant 24 : index
    %177 = vector.load %arg7[%c4_228, %c24_229] : memref<36x64xf32, #tpu.memory_space<vmem>>, vector<1x8xf32>
    %178 = vector.shape_cast %177 : vector<1x8xf32> to vector<8xf32>
    %179 = vector.shape_cast %176 : vector<8xf32> to vector<1x8xf32>
    tpu.vector_store %arg7[%c4_228, %c24_229], %179 {strides = array<i32>} : memref<36x64xf32, #tpu.memory_space<vmem>>, vector<1x8xf32>,
    %c0_230 = arith.constant 0 : index
    %c1_231 = arith.constant 1 : index
    %c0_232 = arith.constant 0 : index
    %c9_233 = arith.constant 9 : index
    %c0_234 = arith.constant 0 : index
    %180 = vector.load %arg2[%c0_230, %c1_231, %c0_232, %c9_233, %c0_234] : memref<1x2x4x18x9xf32, #tpu.memory_space<vmem>>, vector<1x1x1x1x8xf32>
    %181 = vector.shape_cast %180 : vector<1x1x1x1x8xf32> to vector<8xf32>
    %c4_235 = arith.constant 4 : index
    %c32_236 = arith.constant 32 : index
    %182 = vector.load %arg7[%c4_235, %c32_236] : memref<36x64xf32, #tpu.memory_space<vmem>>, vector<1x8xf32>
    %183 = vector.shape_cast %182 : vector<1x8xf32> to vector<8xf32>
    %184 = vector.shape_cast %181 : vector<8xf32> to vector<1x8xf32>
    tpu.vector_store %arg7[%c4_235, %c32_236], %184 {strides = array<i32>} : memref<36x64xf32, #tpu.memory_space<vmem>>, vector<1x8xf32>,
    %c0_237 = arith.constant 0 : index
    %c1_238 = arith.constant 1 : index
    %c0_239 = arith.constant 0 : index
    %c11_240 = arith.constant 11 : index
    %c0_241 = arith.constant 0 : index
    %185 = vector.load %arg2[%c0_237, %c1_238, %c0_239, %c11_240, %c0_241] : memref<1x2x4x18x9xf32, #tpu.memory_space<vmem>>, vector<1x1x1x1x8xf32>
    %186 = vector.shape_cast %185 : vector<1x1x1x1x8xf32> to vector<8xf32>
    %c4_242 = arith.constant 4 : index
    %c40_243 = arith.constant 40 : index
    %187 = vector.load %arg7[%c4_242, %c40_243] : memref<36x64xf32, #tpu.memory_space<vmem>>, vector<1x8xf32>
    %188 = vector.shape_cast %187 : vector<1x8xf32> to vector<8xf32>
    %189 = vector.shape_cast %186 : vector<8xf32> to vector<1x8xf32>
    tpu.vector_store %arg7[%c4_242, %c40_243], %189 {strides = array<i32>} : memref<36x64xf32, #tpu.memory_space<vmem>>, vector<1x8xf32>,
    %c0_244 = arith.constant 0 : index
    %c1_245 = arith.constant 1 : index
    %c0_246 = arith.constant 0 : index
    %c13_247 = arith.constant 13 : index
    %c0_248 = arith.constant 0 : index
    %190 = vector.load %arg2[%c0_244, %c1_245, %c0_246, %c13_247, %c0_248] : memref<1x2x4x18x9xf32, #tpu.memory_space<vmem>>, vector<1x1x1x1x8xf32>
    %191 = vector.shape_cast %190 : vector<1x1x1x1x8xf32> to vector<8xf32>
    %c4_249 = arith.constant 4 : index
    %c48_250 = arith.constant 48 : index
    %192 = vector.load %arg7[%c4_249, %c48_250] : memref<36x64xf32, #tpu.memory_space<vmem>>, vector<1x8xf32>
    %193 = vector.shape_cast %192 : vector<1x8xf32> to vector<8xf32>
    %194 = vector.shape_cast %191 : vector<8xf32> to vector<1x8xf32>
    tpu.vector_store %arg7[%c4_249, %c48_250], %194 {strides = array<i32>} : memref<36x64xf32, #tpu.memory_space<vmem>>, vector<1x8xf32>,
    %c0_251 = arith.constant 0 : index
    %c1_252 = arith.constant 1 : index
    %c0_253 = arith.constant 0 : index
    %c15_254 = arith.constant 15 : index
    %c0_255 = arith.constant 0 : index
    %195 = vector.load %arg2[%c0_251, %c1_252, %c0_253, %c15_254, %c0_255] : memref<1x2x4x18x9xf32, #tpu.memory_space<vmem>>, vector<1x1x1x1x8xf32>
    %196 = vector.shape_cast %195 : vector<1x1x1x1x8xf32> to vector<8xf32>
    %c4_256 = arith.constant 4 : index
    %c56_257 = arith.constant 56 : index
    %197 = vector.load %arg7[%c4_256, %c56_257] : memref<36x64xf32, #tpu.memory_space<vmem>>, vector<1x8xf32>
    %198 = vector.shape_cast %197 : vector<1x8xf32> to vector<8xf32>
    %199 = vector.shape_cast %196 : vector<8xf32> to vector<1x8xf32>
    tpu.vector_store %arg7[%c4_256, %c56_257], %199 {strides = array<i32>} : memref<36x64xf32, #tpu.memory_space<vmem>>, vector<1x8xf32>,
    %c0_258 = arith.constant 0 : index
    %c0_259 = arith.constant 0 : index
    %c0_260 = arith.constant 0 : index
    %c1_261 = arith.constant 1 : index
    %c1_262 = arith.constant 1 : index
    %200 = vector.load %arg2[%c0_258, %c0_259, %c0_260, %c1_261, %c1_262] : memref<1x2x4x18x9xf32, #tpu.memory_space<vmem>>, vector<1x1x1x1x8xf32>
    %201 = vector.shape_cast %200 : vector<1x1x1x1x8xf32> to vector<8xf32>
    %c5_263 = arith.constant 5 : index
    %c0_264 = arith.constant 0 : index
    %202 = vector.load %arg7[%c5_263, %c0_264] : memref<36x64xf32, #tpu.memory_space<vmem>>, vector<1x8xf32>
    %203 = vector.shape_cast %202 : vector<1x8xf32> to vector<8xf32>
    %204 = vector.shape_cast %201 : vector<8xf32> to vector<1x8xf32>
    tpu.vector_store %arg7[%c5_263, %c0_264], %204 {strides = array<i32>} : memref<36x64xf32, #tpu.memory_space<vmem>>, vector<1x8xf32>,
    %c0_265 = arith.constant 0 : index
    %c0_266 = arith.constant 0 : index
    %c0_267 = arith.constant 0 : index
    %c3_268 = arith.constant 3 : index
    %c1_269 = arith.constant 1 : index
    %205 = vector.load %arg2[%c0_265, %c0_266, %c0_267, %c3_268, %c1_269] : memref<1x2x4x18x9xf32, #tpu.memory_space<vmem>>, vector<1x1x1x1x8xf32>
    %206 = vector.shape_cast %205 : vector<1x1x1x1x8xf32> to vector<8xf32>
    %c5_270 = arith.constant 5 : index
    %c8_271 = arith.constant 8 : index
    %207 = vector.load %arg7[%c5_270, %c8_271] : memref<36x64xf32, #tpu.memory_space<vmem>>, vector<1x8xf32>
    %208 = vector.shape_cast %207 : vector<1x8xf32> to vector<8xf32>
    %209 = vector.shape_cast %206 : vector<8xf32> to vector<1x8xf32>
    tpu.vector_store %arg7[%c5_270, %c8_271], %209 {strides = array<i32>} : memref<36x64xf32, #tpu.memory_space<vmem>>, vector<1x8xf32>,
    %c0_272 = arith.constant 0 : index
    %c0_273 = arith.constant 0 : index
    %c0_274 = arith.constant 0 : index
    %c5_275 = arith.constant 5 : index
    %c1_276 = arith.constant 1 : index
    %210 = vector.load %arg2[%c0_272, %c0_273, %c0_274, %c5_275, %c1_276] : memref<1x2x4x18x9xf32, #tpu.memory_space<vmem>>, vector<1x1x1x1x8xf32>
    %211 = vector.shape_cast %210 : vector<1x1x1x1x8xf32> to vector<8xf32>
    %c5_277 = arith.constant 5 : index
    %c16_278 = arith.constant 16 : index
    %212 = vector.load %arg7[%c5_277, %c16_278] : memref<36x64xf32, #tpu.memory_space<vmem>>, vector<1x8xf32>
    %213 = vector.shape_cast %212 : vector<1x8xf32> to vector<8xf32>
    %214 = vector.shape_cast %211 : vector<8xf32> to vector<1x8xf32>
    tpu.vector_store %arg7[%c5_277, %c16_278], %214 {strides = array<i32>} : memref<36x64xf32, #tpu.memory_space<vmem>>, vector<1x8xf32>,
    %c0_279 = arith.constant 0 : index
    %c0_280 = arith.constant 0 : index
    %c0_281 = arith.constant 0 : index
    %c7_282 = arith.constant 7 : index
    %c1_283 = arith.constant 1 : index
    %215 = vector.load %arg2[%c0_279, %c0_280, %c0_281, %c7_282, %c1_283] : memref<1x2x4x18x9xf32, #tpu.memory_space<vmem>>, vector<1x1x1x1x8xf32>
    %216 = vector.shape_cast %215 : vector<1x1x1x1x8xf32> to vector<8xf32>
    %c5_284 = arith.constant 5 : index
    %c24_285 = arith.constant 24 : index
    %217 = vector.load %arg7[%c5_284, %c24_285] : memref<36x64xf32, #tpu.memory_space<vmem>>, vector<1x8xf32>
    %218 = vector.shape_cast %217 : vector<1x8xf32> to vector<8xf32>
    %219 = vector.shape_cast %216 : vector<8xf32> to vector<1x8xf32>
    tpu.vector_store %arg7[%c5_284, %c24_285], %219 {strides = array<i32>} : memref<36x64xf32, #tpu.memory_space<vmem>>, vector<1x8xf32>,
    %c0_286 = arith.constant 0 : index
    %c0_287 = arith.constant 0 : index
    %c0_288 = arith.constant 0 : index
    %c9_289 = arith.constant 9 : index
    %c1_290 = arith.constant 1 : index
    %220 = vector.load %arg2[%c0_286, %c0_287, %c0_288, %c9_289, %c1_290] : memref<1x2x4x18x9xf32, #tpu.memory_space<vmem>>, vector<1x1x1x1x8xf32>
    %221 = vector.shape_cast %220 : vector<1x1x1x1x8xf32> to vector<8xf32>
    %c5_291 = arith.constant 5 : index
    %c32_292 = arith.constant 32 : index
    %222 = vector.load %arg7[%c5_291, %c32_292] : memref<36x64xf32, #tpu.memory_space<vmem>>, vector<1x8xf32>
    %223 = vector.shape_cast %222 : vector<1x8xf32> to vector<8xf32>
    %224 = vector.shape_cast %221 : vector<8xf32> to vector<1x8xf32>
    tpu.vector_store %arg7[%c5_291, %c32_292], %224 {strides = array<i32>} : memref<36x64xf32, #tpu.memory_space<vmem>>, vector<1x8xf32>,
    %c0_293 = arith.constant 0 : index
    %c0_294 = arith.constant 0 : index
    %c0_295 = arith.constant 0 : index
    %c11_296 = arith.constant 11 : index
    %c1_297 = arith.constant 1 : index
    %225 = vector.load %arg2[%c0_293, %c0_294, %c0_295, %c11_296, %c1_297] : memref<1x2x4x18x9xf32, #tpu.memory_space<vmem>>, vector<1x1x1x1x8xf32>
    %226 = vector.shape_cast %225 : vector<1x1x1x1x8xf32> to vector<8xf32>
    %c5_298 = arith.constant 5 : index
    %c40_299 = arith.constant 40 : index
    %227 = vector.load %arg7[%c5_298, %c40_299] : memref<36x64xf32, #tpu.memory_space<vmem>>, vector<1x8xf32>
    %228 = vector.shape_cast %227 : vector<1x8xf32> to vector<8xf32>
    %229 = vector.shape_cast %226 : vector<8xf32> to vector<1x8xf32>
    tpu.vector_store %arg7[%c5_298, %c40_299], %229 {strides = array<i32>} : memref<36x64xf32, #tpu.memory_space<vmem>>, vector<1x8xf32>,
    %c0_300 = arith.constant 0 : index
    %c0_301 = arith.constant 0 : index
    %c0_302 = arith.constant 0 : index
    %c13_303 = arith.constant 13 : index
    %c1_304 = arith.constant 1 : index
    %230 = vector.load %arg2[%c0_300, %c0_301, %c0_302, %c13_303, %c1_304] : memref<1x2x4x18x9xf32, #tpu.memory_space<vmem>>, vector<1x1x1x1x8xf32>
    %231 = vector.shape_cast %230 : vector<1x1x1x1x8xf32> to vector<8xf32>
    %c5_305 = arith.constant 5 : index
    %c48_306 = arith.constant 48 : index
    %232 = vector.load %arg7[%c5_305, %c48_306] : memref<36x64xf32, #tpu.memory_space<vmem>>, vector<1x8xf32>
    %233 = vector.shape_cast %232 : vector<1x8xf32> to vector<8xf32>
    %234 = vector.shape_cast %231 : vector<8xf32> to vector<1x8xf32>
    tpu.vector_store %arg7[%c5_305, %c48_306], %234 {strides = array<i32>} : memref<36x64xf32, #tpu.memory_space<vmem>>, vector<1x8xf32>,
    %c0_307 = arith.constant 0 : index
    %c0_308 = arith.constant 0 : index
    %c0_309 = arith.constant 0 : index
    %c15_310 = arith.constant 15 : index
    %c1_311 = arith.constant 1 : index
    %235 = vector.load %arg2[%c0_307, %c0_308, %c0_309, %c15_310, %c1_311] : memref<1x2x4x18x9xf32, #tpu.memory_space<vmem>>, vector<1x1x1x1x8xf32>
    %236 = vector.shape_cast %235 : vector<1x1x1x1x8xf32> to vector<8xf32>
    %c5_312 = arith.constant 5 : index
    %c56_313 = arith.constant 56 : index
    %237 = vector.load %arg7[%c5_312, %c56_313] : memref<36x64xf32, #tpu.memory_space<vmem>>, vector<1x8xf32>
    %238 = vector.shape_cast %237 : vector<1x8xf32> to vector<8xf32>
    %239 = vector.shape_cast %236 : vector<8xf32> to vector<1x8xf32>
    tpu.vector_store %arg7[%c5_312, %c56_313], %239 {strides = array<i32>} : memref<36x64xf32, #tpu.memory_space<vmem>>, vector<1x8xf32>,
    %c0_314 = arith.constant 0 : index
    %c0_315 = arith.constant 0 : index
    %c0_316 = arith.constant 0 : index
    %c2_317 = arith.constant 2 : index
    %c0_318 = arith.constant 0 : index
    %240 = vector.load %arg2[%c0_314, %c0_315, %c0_316, %c2_317, %c0_318] : memref<1x2x4x18x9xf32, #tpu.memory_space<vmem>>, vector<1x1x1x1x8xf32>
    %241 = vector.shape_cast %240 : vector<1x1x1x1x8xf32> to vector<8xf32>
    %c6_319 = arith.constant 6 : index
    %c0_320 = arith.constant 0 : index
    %242 = vector.load %arg7[%c6_319, %c0_320] : memref<36x64xf32, #tpu.memory_space<vmem>>, vector<1x8xf32>
    %243 = vector.shape_cast %242 : vector<1x8xf32> to vector<8xf32>
    %244 = vector.shape_cast %241 : vector<8xf32> to vector<1x8xf32>
    tpu.vector_store %arg7[%c6_319, %c0_320], %244 {strides = array<i32>} : memref<36x64xf32, #tpu.memory_space<vmem>>, vector<1x8xf32>,
    %c0_321 = arith.constant 0 : index
    %c0_322 = arith.constant 0 : index
    %c0_323 = arith.constant 0 : index
    %c4_324 = arith.constant 4 : index
    %c0_325 = arith.constant 0 : index
    %245 = vector.load %arg2[%c0_321, %c0_322, %c0_323, %c4_324, %c0_325] : memref<1x2x4x18x9xf32, #tpu.memory_space<vmem>>, vector<1x1x1x1x8xf32>
    %246 = vector.shape_cast %245 : vector<1x1x1x1x8xf32> to vector<8xf32>
    %c6_326 = arith.constant 6 : index
    %c8_327 = arith.constant 8 : index
    %247 = vector.load %arg7[%c6_326, %c8_327] : memref<36x64xf32, #tpu.memory_space<vmem>>, vector<1x8xf32>
    %248 = vector.shape_cast %247 : vector<1x8xf32> to vector<8xf32>
    %249 = vector.shape_cast %246 : vector<8xf32> to vector<1x8xf32>
    tpu.vector_store %arg7[%c6_326, %c8_327], %249 {strides = array<i32>} : memref<36x64xf32, #tpu.memory_space<vmem>>, vector<1x8xf32>,
    %c0_328 = arith.constant 0 : index
    %c0_329 = arith.constant 0 : index
    %c0_330 = arith.constant 0 : index
    %c6_331 = arith.constant 6 : index
    %c0_332 = arith.constant 0 : index
    %250 = vector.load %arg2[%c0_328, %c0_329, %c0_330, %c6_331, %c0_332] : memref<1x2x4x18x9xf32, #tpu.memory_space<vmem>>, vector<1x1x1x1x8xf32>
    %251 = vector.shape_cast %250 : vector<1x1x1x1x8xf32> to vector<8xf32>
    %c6_333 = arith.constant 6 : index
    %c16_334 = arith.constant 16 : index
    %252 = vector.load %arg7[%c6_333, %c16_334] : memref<36x64xf32, #tpu.memory_space<vmem>>, vector<1x8xf32>
    %253 = vector.shape_cast %252 : vector<1x8xf32> to vector<8xf32>
    %254 = vector.shape_cast %251 : vector<8xf32> to vector<1x8xf32>
    tpu.vector_store %arg7[%c6_333, %c16_334], %254 {strides = array<i32>} : memref<36x64xf32, #tpu.memory_space<vmem>>, vector<1x8xf32>,
    %c0_335 = arith.constant 0 : index
    %c0_336 = arith.constant 0 : index
    %c0_337 = arith.constant 0 : index
    %c8_338 = arith.constant 8 : index
    %c0_339 = arith.constant 0 : index
    %255 = vector.load %arg2[%c0_335, %c0_336, %c0_337, %c8_338, %c0_339] : memref<1x2x4x18x9xf32, #tpu.memory_space<vmem>>, vector<1x1x1x1x8xf32>
    %256 = vector.shape_cast %255 : vector<1x1x1x1x8xf32> to vector<8xf32>
    %c6_340 = arith.constant 6 : index
    %c24_341 = arith.constant 24 : index
    %257 = vector.load %arg7[%c6_340, %c24_341] : memref<36x64xf32, #tpu.memory_space<vmem>>, vector<1x8xf32>
    %258 = vector.shape_cast %257 : vector<1x8xf32> to vector<8xf32>
    %259 = vector.shape_cast %256 : vector<8xf32> to vector<1x8xf32>
    tpu.vector_store %arg7[%c6_340, %c24_341], %259 {strides = array<i32>} : memref<36x64xf32, #tpu.memory_space<vmem>>, vector<1x8xf32>,
    %c0_342 = arith.constant 0 : index
    %c0_343 = arith.constant 0 : index
    %c0_344 = arith.constant 0 : index
    %c10_345 = arith.constant 10 : index
    %c0_346 = arith.constant 0 : index
    %260 = vector.load %arg2[%c0_342, %c0_343, %c0_344, %c10_345, %c0_346] : memref<1x2x4x18x9xf32, #tpu.memory_space<vmem>>, vector<1x1x1x1x8xf32>
    %261 = vector.shape_cast %260 : vector<1x1x1x1x8xf32> to vector<8xf32>
    %c6_347 = arith.constant 6 : index
    %c32_348 = arith.constant 32 : index
    %262 = vector.load %arg7[%c6_347, %c32_348] : memref<36x64xf32, #tpu.memory_space<vmem>>, vector<1x8xf32>
    %263 = vector.shape_cast %262 : vector<1x8xf32> to vector<8xf32>
    %264 = vector.shape_cast %261 : vector<8xf32> to vector<1x8xf32>
    tpu.vector_store %arg7[%c6_347, %c32_348], %264 {strides = array<i32>} : memref<36x64xf32, #tpu.memory_space<vmem>>, vector<1x8xf32>,
    %c0_349 = arith.constant 0 : index
    %c0_350 = arith.constant 0 : index
    %c0_351 = arith.constant 0 : index
    %c12_352 = arith.constant 12 : index
    %c0_353 = arith.constant 0 : index
    %265 = vector.load %arg2[%c0_349, %c0_350, %c0_351, %c12_352, %c0_353] : memref<1x2x4x18x9xf32, #tpu.memory_space<vmem>>, vector<1x1x1x1x8xf32>
    %266 = vector.shape_cast %265 : vector<1x1x1x1x8xf32> to vector<8xf32>
    %c6_354 = arith.constant 6 : index
    %c40_355 = arith.constant 40 : index
    %267 = vector.load %arg7[%c6_354, %c40_355] : memref<36x64xf32, #tpu.memory_space<vmem>>, vector<1x8xf32>
    %268 = vector.shape_cast %267 : vector<1x8xf32> to vector<8xf32>
    %269 = vector.shape_cast %266 : vector<8xf32> to vector<1x8xf32>
    tpu.vector_store %arg7[%c6_354, %c40_355], %269 {strides = array<i32>} : memref<36x64xf32, #tpu.memory_space<vmem>>, vector<1x8xf32>,
    %c0_356 = arith.constant 0 : index
    %c0_357 = arith.constant 0 : index
    %c0_358 = arith.constant 0 : index
    %c14_359 = arith.constant 14 : index
    %c0_360 = arith.constant 0 : index
    %270 = vector.load %arg2[%c0_356, %c0_357, %c0_358, %c14_359, %c0_360] : memref<1x2x4x18x9xf32, #tpu.memory_space<vmem>>, vector<1x1x1x1x8xf32>
    %271 = vector.shape_cast %270 : vector<1x1x1x1x8xf32> to vector<8xf32>
    %c6_361 = arith.constant 6 : index
    %c48_362 = arith.constant 48 : index
    %272 = vector.load %arg7[%c6_361, %c48_362] : memref<36x64xf32, #tpu.memory_space<vmem>>, vector<1x8xf32>
    %273 = vector.shape_cast %272 : vector<1x8xf32> to vector<8xf32>
    %274 = vector.shape_cast %271 : vector<8xf32> to vector<1x8xf32>
    tpu.vector_store %arg7[%c6_361, %c48_362], %274 {strides = array<i32>} : memref<36x64xf32, #tpu.memory_space<vmem>>, vector<1x8xf32>,
    %c0_363 = arith.constant 0 : index
    %c0_364 = arith.constant 0 : index
    %c0_365 = arith.constant 0 : index
    %c16_366 = arith.constant 16 : index
    %c0_367 = arith.constant 0 : index
    %275 = vector.load %arg2[%c0_363, %c0_364, %c0_365, %c16_366, %c0_367] : memref<1x2x4x18x9xf32, #tpu.memory_space<vmem>>, vector<1x1x1x1x8xf32>
    %276 = vector.shape_cast %275 : vector<1x1x1x1x8xf32> to vector<8xf32>
    %c6_368 = arith.constant 6 : index
    %c56_369 = arith.constant 56 : index
    %277 = vector.load %arg7[%c6_368, %c56_369] : memref<36x64xf32, #tpu.memory_space<vmem>>, vector<1x8xf32>
    %278 = vector.shape_cast %277 : vector<1x8xf32> to vector<8xf32>
    %279 = vector.shape_cast %276 : vector<8xf32> to vector<1x8xf32>
    tpu.vector_store %arg7[%c6_368, %c56_369], %279 {strides = array<i32>} : memref<36x64xf32, #tpu.memory_space<vmem>>, vector<1x8xf32>,
    %c0_370 = arith.constant 0 : index
    %c1_371 = arith.constant 1 : index
    %c0_372 = arith.constant 0 : index
    %c2_373 = arith.constant 2 : index
    %c0_374 = arith.constant 0 : index
    %280 = vector.load %arg2[%c0_370, %c1_371, %c0_372, %c2_373, %c0_374] : memref<1x2x4x18x9xf32, #tpu.memory_space<vmem>>, vector<1x1x1x1x8xf32>
    %281 = vector.shape_cast %280 : vector<1x1x1x1x8xf32> to vector<8xf32>
    %c7_375 = arith.constant 7 : index
    %c0_376 = arith.constant 0 : index
    %282 = vector.load %arg7[%c7_375, %c0_376] : memref<36x64xf32, #tpu.memory_space<vmem>>, vector<1x8xf32>
    %283 = vector.shape_cast %282 : vector<1x8xf32> to vector<8xf32>
    %284 = vector.shape_cast %281 : vector<8xf32> to vector<1x8xf32>
    tpu.vector_store %arg7[%c7_375, %c0_376], %284 {strides = array<i32>} : memref<36x64xf32, #tpu.memory_space<vmem>>, vector<1x8xf32>,
    %c0_377 = arith.constant 0 : index
    %c1_378 = arith.constant 1 : index
    %c0_379 = arith.constant 0 : index
    %c4_380 = arith.constant 4 : index
    %c0_381 = arith.constant 0 : index
    %285 = vector.load %arg2[%c0_377, %c1_378, %c0_379, %c4_380, %c0_381] : memref<1x2x4x18x9xf32, #tpu.memory_space<vmem>>, vector<1x1x1x1x8xf32>
    %286 = vector.shape_cast %285 : vector<1x1x1x1x8xf32> to vector<8xf32>
    %c7_382 = arith.constant 7 : index
    %c8_383 = arith.constant 8 : index
    %287 = vector.load %arg7[%c7_382, %c8_383] : memref<36x64xf32, #tpu.memory_space<vmem>>, vector<1x8xf32>
    %288 = vector.shape_cast %287 : vector<1x8xf32> to vector<8xf32>
    %289 = vector.shape_cast %286 : vector<8xf32> to vector<1x8xf32>
    tpu.vector_store %arg7[%c7_382, %c8_383], %289 {strides = array<i32>} : memref<36x64xf32, #tpu.memory_space<vmem>>, vector<1x8xf32>,
    %c0_384 = arith.constant 0 : index
    %c1_385 = arith.constant 1 : index
    %c0_386 = arith.constant 0 : index
    %c6_387 = arith.constant 6 : index
    %c0_388 = arith.constant 0 : index
    %290 = vector.load %arg2[%c0_384, %c1_385, %c0_386, %c6_387, %c0_388] : memref<1x2x4x18x9xf32, #tpu.memory_space<vmem>>, vector<1x1x1x1x8xf32>
    %291 = vector.shape_cast %290 : vector<1x1x1x1x8xf32> to vector<8xf32>
    %c7_389 = arith.constant 7 : index
    %c16_390 = arith.constant 16 : index
    %292 = vector.load %arg7[%c7_389, %c16_390] : memref<36x64xf32, #tpu.memory_space<vmem>>, vector<1x8xf32>
    %293 = vector.shape_cast %292 : vector<1x8xf32> to vector<8xf32>
    %294 = vector.shape_cast %291 : vector<8xf32> to vector<1x8xf32>
    tpu.vector_store %arg7[%c7_389, %c16_390], %294 {strides = array<i32>} : memref<36x64xf32, #tpu.memory_space<vmem>>, vector<1x8xf32>,
    %c0_391 = arith.constant 0 : index
    %c1_392 = arith.constant 1 : index
    %c0_393 = arith.constant 0 : index
    %c8_394 = arith.constant 8 : index
    %c0_395 = arith.constant 0 : index
    %295 = vector.load %arg2[%c0_391, %c1_392, %c0_393, %c8_394, %c0_395] : memref<1x2x4x18x9xf32, #tpu.memory_space<vmem>>, vector<1x1x1x1x8xf32>
    %296 = vector.shape_cast %295 : vector<1x1x1x1x8xf32> to vector<8xf32>
    %c7_396 = arith.constant 7 : index
    %c24_397 = arith.constant 24 : index
    %297 = vector.load %arg7[%c7_396, %c24_397] : memref<36x64xf32, #tpu.memory_space<vmem>>, vector<1x8xf32>
    %298 = vector.shape_cast %297 : vector<1x8xf32> to vector<8xf32>
    %299 = vector.shape_cast %296 : vector<8xf32> to vector<1x8xf32>
    tpu.vector_store %arg7[%c7_396, %c24_397], %299 {strides = array<i32>} : memref<36x64xf32, #tpu.memory_space<vmem>>, vector<1x8xf32>,
    %c0_398 = arith.constant 0 : index
    %c1_399 = arith.constant 1 : index
    %c0_400 = arith.constant 0 : index
    %c10_401 = arith.constant 10 : index
    %c0_402 = arith.constant 0 : index
    %300 = vector.load %arg2[%c0_398, %c1_399, %c0_400, %c10_401, %c0_402] : memref<1x2x4x18x9xf32, #tpu.memory_space<vmem>>, vector<1x1x1x1x8xf32>
    %301 = vector.shape_cast %300 : vector<1x1x1x1x8xf32> to vector<8xf32>
    %c7_403 = arith.constant 7 : index
    %c32_404 = arith.constant 32 : index
    %302 = vector.load %arg7[%c7_403, %c32_404] : memref<36x64xf32, #tpu.memory_space<vmem>>, vector<1x8xf32>
    %303 = vector.shape_cast %302 : vector<1x8xf32> to vector<8xf32>
    %304 = vector.shape_cast %301 : vector<8xf32> to vector<1x8xf32>
    tpu.vector_store %arg7[%c7_403, %c32_404], %304 {strides = array<i32>} : memref<36x64xf32, #tpu.memory_space<vmem>>, vector<1x8xf32>,
    %c0_405 = arith.constant 0 : index
    %c1_406 = arith.constant 1 : index
    %c0_407 = arith.constant 0 : index
    %c12_408 = arith.constant 12 : index
    %c0_409 = arith.constant 0 : index
    %305 = vector.load %arg2[%c0_405, %c1_406, %c0_407, %c12_408, %c0_409] : memref<1x2x4x18x9xf32, #tpu.memory_space<vmem>>, vector<1x1x1x1x8xf32>
    %306 = vector.shape_cast %305 : vector<1x1x1x1x8xf32> to vector<8xf32>
    %c7_410 = arith.constant 7 : index
    %c40_411 = arith.constant 40 : index
    %307 = vector.load %arg7[%c7_410, %c40_411] : memref<36x64xf32, #tpu.memory_space<vmem>>, vector<1x8xf32>
    %308 = vector.shape_cast %307 : vector<1x8xf32> to vector<8xf32>
    %309 = vector.shape_cast %306 : vector<8xf32> to vector<1x8xf32>
    tpu.vector_store %arg7[%c7_410, %c40_411], %309 {strides = array<i32>} : memref<36x64xf32, #tpu.memory_space<vmem>>, vector<1x8xf32>,
    %c0_412 = arith.constant 0 : index
    %c1_413 = arith.constant 1 : index
    %c0_414 = arith.constant 0 : index
    %c14_415 = arith.constant 14 : index
    %c0_416 = arith.constant 0 : index
    %310 = vector.load %arg2[%c0_412, %c1_413, %c0_414, %c14_415, %c0_416] : memref<1x2x4x18x9xf32, #tpu.memory_space<vmem>>, vector<1x1x1x1x8xf32>
    %311 = vector.shape_cast %310 : vector<1x1x1x1x8xf32> to vector<8xf32>
    %c7_417 = arith.constant 7 : index
    %c48_418 = arith.constant 48 : index
    %312 = vector.load %arg7[%c7_417, %c48_418] : memref<36x64xf32, #tpu.memory_space<vmem>>, vector<1x8xf32>
    %313 = vector.shape_cast %312 : vector<1x8xf32> to vector<8xf32>
    %314 = vector.shape_cast %311 : vector<8xf32> to vector<1x8xf32>
    tpu.vector_store %arg7[%c7_417, %c48_418], %314 {strides = array<i32>} : memref<36x64xf32, #tpu.memory_space<vmem>>, vector<1x8xf32>,
    %c0_419 = arith.constant 0 : index
    %c1_420 = arith.constant 1 : index
    %c0_421 = arith.constant 0 : index
    %c16_422 = arith.constant 16 : index
    %c0_423 = arith.constant 0 : index
    %315 = vector.load %arg2[%c0_419, %c1_420, %c0_421, %c16_422, %c0_423] : memref<1x2x4x18x9xf32, #tpu.memory_space<vmem>>, vector<1x1x1x1x8xf32>
    %316 = vector.shape_cast %315 : vector<1x1x1x1x8xf32> to vector<8xf32>
    %c7_424 = arith.constant 7 : index
    %c56_425 = arith.constant 56 : index
    %317 = vector.load %arg7[%c7_424, %c56_425] : memref<36x64xf32, #tpu.memory_space<vmem>>, vector<1x8xf32>
    %318 = vector.shape_cast %317 : vector<1x8xf32> to vector<8xf32>
    %319 = vector.shape_cast %316 : vector<8xf32> to vector<1x8xf32>
    tpu.vector_store %arg7[%c7_424, %c56_425], %319 {strides = array<i32>} : memref<36x64xf32, #tpu.memory_space<vmem>>, vector<1x8xf32>,
    %c0_426 = arith.constant 0 : index
    %c0_427 = arith.constant 0 : index
    %c0_428 = arith.constant 0 : index
    %c2_429 = arith.constant 2 : index
    %c1_430 = arith.constant 1 : index
    %320 = vector.load %arg2[%c0_426, %c0_427, %c0_428, %c2_429, %c1_430] : memref<1x2x4x18x9xf32, #tpu.memory_space<vmem>>, vector<1x1x1x1x8xf32>
    %321 = vector.shape_cast %320 : vector<1x1x1x1x8xf32> to vector<8xf32>
    %c8_431 = arith.constant 8 : index
    %c0_432 = arith.constant 0 : index
    %322 = vector.load %arg7[%c8_431, %c0_432] : memref<36x64xf32, #tpu.memory_space<vmem>>, vector<1x8xf32>
    %323 = vector.shape_cast %322 : vector<1x8xf32> to vector<8xf32>
    %324 = vector.shape_cast %321 : vector<8xf32> to vector<1x8xf32>
    tpu.vector_store %arg7[%c8_431, %c0_432], %324 {strides = array<i32>} : memref<36x64xf32, #tpu.memory_space<vmem>>, vector<1x8xf32>,
    %c0_433 = arith.constant 0 : index
    %c0_434 = arith.constant 0 : index
    %c0_435 = arith.constant 0 : index
    %c4_436 = arith.constant 4 : index
    %c1_437 = arith.constant 1 : index
    %325 = vector.load %arg2[%c0_433, %c0_434, %c0_435, %c4_436, %c1_437] : memref<1x2x4x18x9xf32, #tpu.memory_space<vmem>>, vector<1x1x1x1x8xf32>
    %326 = vector.shape_cast %325 : vector<1x1x1x1x8xf32> to vector<8xf32>
    %c8_438 = arith.constant 8 : index
    %c8_439 = arith.constant 8 : index
    %327 = vector.load %arg7[%c8_438, %c8_439] : memref<36x64xf32, #tpu.memory_space<vmem>>, vector<1x8xf32>
    %328 = vector.shape_cast %327 : vector<1x8xf32> to vector<8xf32>
    %329 = vector.shape_cast %326 : vector<8xf32> to vector<1x8xf32>
    tpu.vector_store %arg7[%c8_438, %c8_439], %329 {strides = array<i32>} : memref<36x64xf32, #tpu.memory_space<vmem>>, vector<1x8xf32>,
    %c0_440 = arith.constant 0 : index
    %c0_441 = arith.constant 0 : index
    %c0_442 = arith.constant 0 : index
    %c6_443 = arith.constant 6 : index
    %c1_444 = arith.constant 1 : index
    %330 = vector.load %arg2[%c0_440, %c0_441, %c0_442, %c6_443, %c1_444] : memref<1x2x4x18x9xf32, #tpu.memory_space<vmem>>, vector<1x1x1x1x8xf32>
    %331 = vector.shape_cast %330 : vector<1x1x1x1x8xf32> to vector<8xf32>
    %c8_445 = arith.constant 8 : index
    %c16_446 = arith.constant 16 : index
    %332 = vector.load %arg7[%c8_445, %c16_446] : memref<36x64xf32, #tpu.memory_space<vmem>>, vector<1x8xf32>
    %333 = vector.shape_cast %332 : vector<1x8xf32> to vector<8xf32>
    %334 = vector.shape_cast %331 : vector<8xf32> to vector<1x8xf32>
    tpu.vector_store %arg7[%c8_445, %c16_446], %334 {strides = array<i32>} : memref<36x64xf32, #tpu.memory_space<vmem>>, vector<1x8xf32>,
    %c0_447 = arith.constant 0 : index
    %c0_448 = arith.constant 0 : index
    %c0_449 = arith.constant 0 : index
    %c8_450 = arith.constant 8 : index
    %c1_451 = arith.constant 1 : index
    %335 = vector.load %arg2[%c0_447, %c0_448, %c0_449, %c8_450, %c1_451] : memref<1x2x4x18x9xf32, #tpu.memory_space<vmem>>, vector<1x1x1x1x8xf32>
    %336 = vector.shape_cast %335 : vector<1x1x1x1x8xf32> to vector<8xf32>
    %c8_452 = arith.constant 8 : index
    %c24_453 = arith.constant 24 : index
    %337 = vector.load %arg7[%c8_452, %c24_453] : memref<36x64xf32, #tpu.memory_space<vmem>>, vector<1x8xf32>
    %338 = vector.shape_cast %337 : vector<1x8xf32> to vector<8xf32>
    %339 = vector.shape_cast %336 : vector<8xf32> to vector<1x8xf32>
    tpu.vector_store %arg7[%c8_452, %c24_453], %339 {strides = array<i32>} : memref<36x64xf32, #tpu.memory_space<vmem>>, vector<1x8xf32>,
    %c0_454 = arith.constant 0 : index
    %c0_455 = arith.constant 0 : index
    %c0_456 = arith.constant 0 : index
    %c10_457 = arith.constant 10 : index
    %c1_458 = arith.constant 1 : index
    %340 = vector.load %arg2[%c0_454, %c0_455, %c0_456, %c10_457, %c1_458] : memref<1x2x4x18x9xf32, #tpu.memory_space<vmem>>, vector<1x1x1x1x8xf32>
    %341 = vector.shape_cast %340 : vector<1x1x1x1x8xf32> to vector<8xf32>
    %c8_459 = arith.constant 8 : index
    %c32_460 = arith.constant 32 : index
    %342 = vector.load %arg7[%c8_459, %c32_460] : memref<36x64xf32, #tpu.memory_space<vmem>>, vector<1x8xf32>
    %343 = vector.shape_cast %342 : vector<1x8xf32> to vector<8xf32>
    %344 = vector.shape_cast %341 : vector<8xf32> to vector<1x8xf32>
    tpu.vector_store %arg7[%c8_459, %c32_460], %344 {strides = array<i32>} : memref<36x64xf32, #tpu.memory_space<vmem>>, vector<1x8xf32>,
    %c0_461 = arith.constant 0 : index
    %c0_462 = arith.constant 0 : index
    %c0_463 = arith.constant 0 : index
    %c12_464 = arith.constant 12 : index
    %c1_465 = arith.constant 1 : index
    %345 = vector.load %arg2[%c0_461, %c0_462, %c0_463, %c12_464, %c1_465] : memref<1x2x4x18x9xf32, #tpu.memory_space<vmem>>, vector<1x1x1x1x8xf32>
    %346 = vector.shape_cast %345 : vector<1x1x1x1x8xf32> to vector<8xf32>
    %c8_466 = arith.constant 8 : index
    %c40_467 = arith.constant 40 : index
    %347 = vector.load %arg7[%c8_466, %c40_467] : memref<36x64xf32, #tpu.memory_space<vmem>>, vector<1x8xf32>
    %348 = vector.shape_cast %347 : vector<1x8xf32> to vector<8xf32>
    %349 = vector.shape_cast %346 : vector<8xf32> to vector<1x8xf32>
    tpu.vector_store %arg7[%c8_466, %c40_467], %349 {strides = array<i32>} : memref<36x64xf32, #tpu.memory_space<vmem>>, vector<1x8xf32>,
    %c0_468 = arith.constant 0 : index
    %c0_469 = arith.constant 0 : index
    %c0_470 = arith.constant 0 : index
    %c14_471 = arith.constant 14 : index
    %c1_472 = arith.constant 1 : index
    %350 = vector.load %arg2[%c0_468, %c0_469, %c0_470, %c14_471, %c1_472] : memref<1x2x4x18x9xf32, #tpu.memory_space<vmem>>, vector<1x1x1x1x8xf32>
    %351 = vector.shape_cast %350 : vector<1x1x1x1x8xf32> to vector<8xf32>
    %c8_473 = arith.constant 8 : index
    %c48_474 = arith.constant 48 : index
    %352 = vector.load %arg7[%c8_473, %c48_474] : memref<36x64xf32, #tpu.memory_space<vmem>>, vector<1x8xf32>
    %353 = vector.shape_cast %352 : vector<1x8xf32> to vector<8xf32>
    %354 = vector.shape_cast %351 : vector<8xf32> to vector<1x8xf32>
    tpu.vector_store %arg7[%c8_473, %c48_474], %354 {strides = array<i32>} : memref<36x64xf32, #tpu.memory_space<vmem>>, vector<1x8xf32>,
    %c0_475 = arith.constant 0 : index
    %c0_476 = arith.constant 0 : index
    %c0_477 = arith.constant 0 : index
    %c16_478 = arith.constant 16 : index
    %c1_479 = arith.constant 1 : index
    %355 = vector.load %arg2[%c0_475, %c0_476, %c0_477, %c16_478, %c1_479] : memref<1x2x4x18x9xf32, #tpu.memory_space<vmem>>, vector<1x1x1x1x8xf32>
    %356 = vector.shape_cast %355 : vector<1x1x1x1x8xf32> to vector<8xf32>
    %c8_480 = arith.constant 8 : index
    %c56_481 = arith.constant 56 : index
    %357 = vector.load %arg7[%c8_480, %c56_481] : memref<36x64xf32, #tpu.memory_space<vmem>>, vector<1x8xf32>
    %358 = vector.shape_cast %357 : vector<1x8xf32> to vector<8xf32>
    %359 = vector.shape_cast %356 : vector<8xf32> to vector<1x8xf32>
    tpu.vector_store %arg7[%c8_480, %c56_481], %359 {strides = array<i32>} : memref<36x64xf32, #tpu.memory_space<vmem>>, vector<1x8xf32>,
    %c0_482 = arith.constant 0 : index
    %c0_483 = arith.constant 0 : index
    %c1_484 = arith.constant 1 : index
    %c0_485 = arith.constant 0 : index
    %c0_486 = arith.constant 0 : index
    %360 = vector.load %arg2[%c0_482, %c0_483, %c1_484, %c0_485, %c0_486] : memref<1x2x4x18x9xf32, #tpu.memory_space<vmem>>, vector<1x1x1x1x8xf32>
    %361 = vector.shape_cast %360 : vector<1x1x1x1x8xf32> to vector<8xf32>
    %c9_487 = arith.constant 9 : index
    %c0_488 = arith.constant 0 : index
    %362 = vector.load %arg7[%c9_487, %c0_488] : memref<36x64xf32, #tpu.memory_space<vmem>>, vector<1x8xf32>
    %363 = vector.shape_cast %362 : vector<1x8xf32> to vector<8xf32>
    %364 = vector.shape_cast %361 : vector<8xf32> to vector<1x8xf32>
    tpu.vector_store %arg7[%c9_487, %c0_488], %364 {strides = array<i32>} : memref<36x64xf32, #tpu.memory_space<vmem>>, vector<1x8xf32>,
    %c0_489 = arith.constant 0 : index
    %c0_490 = arith.constant 0 : index
    %c1_491 = arith.constant 1 : index
    %c2_492 = arith.constant 2 : index
    %c0_493 = arith.constant 0 : index
    %365 = vector.load %arg2[%c0_489, %c0_490, %c1_491, %c2_492, %c0_493] : memref<1x2x4x18x9xf32, #tpu.memory_space<vmem>>, vector<1x1x1x1x8xf32>
    %366 = vector.shape_cast %365 : vector<1x1x1x1x8xf32> to vector<8xf32>
    %c9_494 = arith.constant 9 : index
    %c8_495 = arith.constant 8 : index
    %367 = vector.load %arg7[%c9_494, %c8_495] : memref<36x64xf32, #tpu.memory_space<vmem>>, vector<1x8xf32>
    %368 = vector.shape_cast %367 : vector<1x8xf32> to vector<8xf32>
    %369 = vector.shape_cast %366 : vector<8xf32> to vector<1x8xf32>
    tpu.vector_store %arg7[%c9_494, %c8_495], %369 {strides = array<i32>} : memref<36x64xf32, #tpu.memory_space<vmem>>, vector<1x8xf32>,
    %c0_496 = arith.constant 0 : index
    %c0_497 = arith.constant 0 : index
    %c1_498 = arith.constant 1 : index
    %c4_499 = arith.constant 4 : index
    %c0_500 = arith.constant 0 : index
    %370 = vector.load %arg2[%c0_496, %c0_497, %c1_498, %c4_499, %c0_500] : memref<1x2x4x18x9xf32, #tpu.memory_space<vmem>>, vector<1x1x1x1x8xf32>
    %371 = vector.shape_cast %370 : vector<1x1x1x1x8xf32> to vector<8xf32>
    %c9_501 = arith.constant 9 : index
    %c16_502 = arith.constant 16 : index
    %372 = vector.load %arg7[%c9_501, %c16_502] : memref<36x64xf32, #tpu.memory_space<vmem>>, vector<1x8xf32>
    %373 = vector.shape_cast %372 : vector<1x8xf32> to vector<8xf32>
    %374 = vector.shape_cast %371 : vector<8xf32> to vector<1x8xf32>
    tpu.vector_store %arg7[%c9_501, %c16_502], %374 {strides = array<i32>} : memref<36x64xf32, #tpu.memory_space<vmem>>, vector<1x8xf32>,
    %c0_503 = arith.constant 0 : index
    %c0_504 = arith.constant 0 : index
    %c1_505 = arith.constant 1 : index
    %c6_506 = arith.constant 6 : index
    %c0_507 = arith.constant 0 : index
    %375 = vector.load %arg2[%c0_503, %c0_504, %c1_505, %c6_506, %c0_507] : memref<1x2x4x18x9xf32, #tpu.memory_space<vmem>>, vector<1x1x1x1x8xf32>
    %376 = vector.shape_cast %375 : vector<1x1x1x1x8xf32> to vector<8xf32>
    %c9_508 = arith.constant 9 : index
    %c24_509 = arith.constant 24 : index
    %377 = vector.load %arg7[%c9_508, %c24_509] : memref<36x64xf32, #tpu.memory_space<vmem>>, vector<1x8xf32>
    %378 = vector.shape_cast %377 : vector<1x8xf32> to vector<8xf32>
    %379 = vector.shape_cast %376 : vector<8xf32> to vector<1x8xf32>
    tpu.vector_store %arg7[%c9_508, %c24_509], %379 {strides = array<i32>} : memref<36x64xf32, #tpu.memory_space<vmem>>, vector<1x8xf32>,
    %c0_510 = arith.constant 0 : index
    %c0_511 = arith.constant 0 : index
    %c1_512 = arith.constant 1 : index
    %c8_513 = arith.constant 8 : index
    %c0_514 = arith.constant 0 : index
    %380 = vector.load %arg2[%c0_510, %c0_511, %c1_512, %c8_513, %c0_514] : memref<1x2x4x18x9xf32, #tpu.memory_space<vmem>>, vector<1x1x1x1x8xf32>
    %381 = vector.shape_cast %380 : vector<1x1x1x1x8xf32> to vector<8xf32>
    %c9_515 = arith.constant 9 : index
    %c32_516 = arith.constant 32 : index
    %382 = vector.load %arg7[%c9_515, %c32_516] : memref<36x64xf32, #tpu.memory_space<vmem>>, vector<1x8xf32>
    %383 = vector.shape_cast %382 : vector<1x8xf32> to vector<8xf32>
    %384 = vector.shape_cast %381 : vector<8xf32> to vector<1x8xf32>
    tpu.vector_store %arg7[%c9_515, %c32_516], %384 {strides = array<i32>} : memref<36x64xf32, #tpu.memory_space<vmem>>, vector<1x8xf32>,
    %c0_517 = arith.constant 0 : index
    %c0_518 = arith.constant 0 : index
    %c1_519 = arith.constant 1 : index
    %c10_520 = arith.constant 10 : index
    %c0_521 = arith.constant 0 : index
    %385 = vector.load %arg2[%c0_517, %c0_518, %c1_519, %c10_520, %c0_521] : memref<1x2x4x18x9xf32, #tpu.memory_space<vmem>>, vector<1x1x1x1x8xf32>
    %386 = vector.shape_cast %385 : vector<1x1x1x1x8xf32> to vector<8xf32>
    %c9_522 = arith.constant 9 : index
    %c40_523 = arith.constant 40 : index
    %387 = vector.load %arg7[%c9_522, %c40_523] : memref<36x64xf32, #tpu.memory_space<vmem>>, vector<1x8xf32>
    %388 = vector.shape_cast %387 : vector<1x8xf32> to vector<8xf32>
    %389 = vector.shape_cast %386 : vector<8xf32> to vector<1x8xf32>
    tpu.vector_store %arg7[%c9_522, %c40_523], %389 {strides = array<i32>} : memref<36x64xf32, #tpu.memory_space<vmem>>, vector<1x8xf32>,
    %c0_524 = arith.constant 0 : index
    %c0_525 = arith.constant 0 : index
    %c1_526 = arith.constant 1 : index
    %c12_527 = arith.constant 12 : index
    %c0_528 = arith.constant 0 : index
    %390 = vector.load %arg2[%c0_524, %c0_525, %c1_526, %c12_527, %c0_528] : memref<1x2x4x18x9xf32, #tpu.memory_space<vmem>>, vector<1x1x1x1x8xf32>
    %391 = vector.shape_cast %390 : vector<1x1x1x1x8xf32> to vector<8xf32>
    %c9_529 = arith.constant 9 : index
    %c48_530 = arith.constant 48 : index
    %392 = vector.load %arg7[%c9_529, %c48_530] : memref<36x64xf32, #tpu.memory_space<vmem>>, vector<1x8xf32>
    %393 = vector.shape_cast %392 : vector<1x8xf32> to vector<8xf32>
    %394 = vector.shape_cast %391 : vector<8xf32> to vector<1x8xf32>
    tpu.vector_store %arg7[%c9_529, %c48_530], %394 {strides = array<i32>} : memref<36x64xf32, #tpu.memory_space<vmem>>, vector<1x8xf32>,
    %c0_531 = arith.constant 0 : index
    %c0_532 = arith.constant 0 : index
    %c1_533 = arith.constant 1 : index
    %c14_534 = arith.constant 14 : index
    %c0_535 = arith.constant 0 : index
    %395 = vector.load %arg2[%c0_531, %c0_532, %c1_533, %c14_534, %c0_535] : memref<1x2x4x18x9xf32, #tpu.memory_space<vmem>>, vector<1x1x1x1x8xf32>
    %396 = vector.shape_cast %395 : vector<1x1x1x1x8xf32> to vector<8xf32>
    %c9_536 = arith.constant 9 : index
    %c56_537 = arith.constant 56 : index
    %397 = vector.load %arg7[%c9_536, %c56_537] : memref<36x64xf32, #tpu.memory_space<vmem>>, vector<1x8xf32>
    %398 = vector.shape_cast %397 : vector<1x8xf32> to vector<8xf32>
    %399 = vector.shape_cast %396 : vector<8xf32> to vector<1x8xf32>
    tpu.vector_store %arg7[%c9_536, %c56_537], %399 {strides = array<i32>} : memref<36x64xf32, #tpu.memory_space<vmem>>, vector<1x8xf32>,
    %c0_538 = arith.constant 0 : index
    %c1_539 = arith.constant 1 : index
    %c1_540 = arith.constant 1 : index
    %c0_541 = arith.constant 0 : index
    %c0_542 = arith.constant 0 : index
    %400 = vector.load %arg2[%c0_538, %c1_539, %c1_540, %c0_541, %c0_542] : memref<1x2x4x18x9xf32, #tpu.memory_space<vmem>>, vector<1x1x1x1x8xf32>
    %401 = vector.shape_cast %400 : vector<1x1x1x1x8xf32> to vector<8xf32>
    %c10_543 = arith.constant 10 : index
    %c0_544 = arith.constant 0 : index
    %402 = vector.load %arg7[%c10_543, %c0_544] : memref<36x64xf32, #tpu.memory_space<vmem>>, vector<1x8xf32>
    %403 = vector.shape_cast %402 : vector<1x8xf32> to vector<8xf32>
    %404 = vector.shape_cast %401 : vector<8xf32> to vector<1x8xf32>
    tpu.vector_store %arg7[%c10_543, %c0_544], %404 {strides = array<i32>} : memref<36x64xf32, #tpu.memory_space<vmem>>, vector<1x8xf32>,
    %c0_545 = arith.constant 0 : index
    %c1_546 = arith.constant 1 : index
    %c1_547 = arith.constant 1 : index
    %c2_548 = arith.constant 2 : index
    %c0_549 = arith.constant 0 : index
    %405 = vector.load %arg2[%c0_545, %c1_546, %c1_547, %c2_548, %c0_549] : memref<1x2x4x18x9xf32, #tpu.memory_space<vmem>>, vector<1x1x1x1x8xf32>
    %406 = vector.shape_cast %405 : vector<1x1x1x1x8xf32> to vector<8xf32>
    %c10_550 = arith.constant 10 : index
    %c8_551 = arith.constant 8 : index
    %407 = vector.load %arg7[%c10_550, %c8_551] : memref<36x64xf32, #tpu.memory_space<vmem>>, vector<1x8xf32>
    %408 = vector.shape_cast %407 : vector<1x8xf32> to vector<8xf32>
    %409 = vector.shape_cast %406 : vector<8xf32> to vector<1x8xf32>
    tpu.vector_store %arg7[%c10_550, %c8_551], %409 {strides = array<i32>} : memref<36x64xf32, #tpu.memory_space<vmem>>, vector<1x8xf32>,
    %c0_552 = arith.constant 0 : index
    %c1_553 = arith.constant 1 : index
    %c1_554 = arith.constant 1 : index
    %c4_555 = arith.constant 4 : index
    %c0_556 = arith.constant 0 : index
    %410 = vector.load %arg2[%c0_552, %c1_553, %c1_554, %c4_555, %c0_556] : memref<1x2x4x18x9xf32, #tpu.memory_space<vmem>>, vector<1x1x1x1x8xf32>
    %411 = vector.shape_cast %410 : vector<1x1x1x1x8xf32> to vector<8xf32>
    %c10_557 = arith.constant 10 : index
    %c16_558 = arith.constant 16 : index
    %412 = vector.load %arg7[%c10_557, %c16_558] : memref<36x64xf32, #tpu.memory_space<vmem>>, vector<1x8xf32>
    %413 = vector.shape_cast %412 : vector<1x8xf32> to vector<8xf32>
    %414 = vector.shape_cast %411 : vector<8xf32> to vector<1x8xf32>
    tpu.vector_store %arg7[%c10_557, %c16_558], %414 {strides = array<i32>} : memref<36x64xf32, #tpu.memory_space<vmem>>, vector<1x8xf32>,
    %c0_559 = arith.constant 0 : index
    %c1_560 = arith.constant 1 : index
    %c1_561 = arith.constant 1 : index
    %c6_562 = arith.constant 6 : index
    %c0_563 = arith.constant 0 : index
    %415 = vector.load %arg2[%c0_559, %c1_560, %c1_561, %c6_562, %c0_563] : memref<1x2x4x18x9xf32, #tpu.memory_space<vmem>>, vector<1x1x1x1x8xf32>
    %416 = vector.shape_cast %415 : vector<1x1x1x1x8xf32> to vector<8xf32>
    %c10_564 = arith.constant 10 : index
    %c24_565 = arith.constant 24 : index
    %417 = vector.load %arg7[%c10_564, %c24_565] : memref<36x64xf32, #tpu.memory_space<vmem>>, vector<1x8xf32>
    %418 = vector.shape_cast %417 : vector<1x8xf32> to vector<8xf32>
    %419 = vector.shape_cast %416 : vector<8xf32> to vector<1x8xf32>
    tpu.vector_store %arg7[%c10_564, %c24_565], %419 {strides = array<i32>} : memref<36x64xf32, #tpu.memory_space<vmem>>, vector<1x8xf32>,
    %c0_566 = arith.constant 0 : index
    %c1_567 = arith.constant 1 : index
    %c1_568 = arith.constant 1 : index
    %c8_569 = arith.constant 8 : index
    %c0_570 = arith.constant 0 : index
    %420 = vector.load %arg2[%c0_566, %c1_567, %c1_568, %c8_569, %c0_570] : memref<1x2x4x18x9xf32, #tpu.memory_space<vmem>>, vector<1x1x1x1x8xf32>
    %421 = vector.shape_cast %420 : vector<1x1x1x1x8xf32> to vector<8xf32>
    %c10_571 = arith.constant 10 : index
    %c32_572 = arith.constant 32 : index
    %422 = vector.load %arg7[%c10_571, %c32_572] : memref<36x64xf32, #tpu.memory_space<vmem>>, vector<1x8xf32>
    %423 = vector.shape_cast %422 : vector<1x8xf32> to vector<8xf32>
    %424 = vector.shape_cast %421 : vector<8xf32> to vector<1x8xf32>
    tpu.vector_store %arg7[%c10_571, %c32_572], %424 {strides = array<i32>} : memref<36x64xf32, #tpu.memory_space<vmem>>, vector<1x8xf32>,
    %c0_573 = arith.constant 0 : index
    %c1_574 = arith.constant 1 : index
    %c1_575 = arith.constant 1 : index
    %c10_576 = arith.constant 10 : index
    %c0_577 = arith.constant 0 : index
    %425 = vector.load %arg2[%c0_573, %c1_574, %c1_575, %c10_576, %c0_577] : memref<1x2x4x18x9xf32, #tpu.memory_space<vmem>>, vector<1x1x1x1x8xf32>
    %426 = vector.shape_cast %425 : vector<1x1x1x1x8xf32> to vector<8xf32>
    %c10_578 = arith.constant 10 : index
    %c40_579 = arith.constant 40 : index
    %427 = vector.load %arg7[%c10_578, %c40_579] : memref<36x64xf32, #tpu.memory_space<vmem>>, vector<1x8xf32>
    %428 = vector.shape_cast %427 : vector<1x8xf32> to vector<8xf32>
    %429 = vector.shape_cast %426 : vector<8xf32> to vector<1x8xf32>
    tpu.vector_store %arg7[%c10_578, %c40_579], %429 {strides = array<i32>} : memref<36x64xf32, #tpu.memory_space<vmem>>, vector<1x8xf32>,
    %c0_580 = arith.constant 0 : index
    %c1_581 = arith.constant 1 : index
    %c1_582 = arith.constant 1 : index
    %c12_583 = arith.constant 12 : index
    %c0_584 = arith.constant 0 : index
    %430 = vector.load %arg2[%c0_580, %c1_581, %c1_582, %c12_583, %c0_584] : memref<1x2x4x18x9xf32, #tpu.memory_space<vmem>>, vector<1x1x1x1x8xf32>
    %431 = vector.shape_cast %430 : vector<1x1x1x1x8xf32> to vector<8xf32>
    %c10_585 = arith.constant 10 : index
    %c48_586 = arith.constant 48 : index
    %432 = vector.load %arg7[%c10_585, %c48_586] : memref<36x64xf32, #tpu.memory_space<vmem>>, vector<1x8xf32>
    %433 = vector.shape_cast %432 : vector<1x8xf32> to vector<8xf32>
    %434 = vector.shape_cast %431 : vector<8xf32> to vector<1x8xf32>
    tpu.vector_store %arg7[%c10_585, %c48_586], %434 {strides = array<i32>} : memref<36x64xf32, #tpu.memory_space<vmem>>, vector<1x8xf32>,
    %c0_587 = arith.constant 0 : index
    %c1_588 = arith.constant 1 : index
    %c1_589 = arith.constant 1 : index
    %c14_590 = arith.constant 14 : index
    %c0_591 = arith.constant 0 : index
    %435 = vector.load %arg2[%c0_587, %c1_588, %c1_589, %c14_590, %c0_591] : memref<1x2x4x18x9xf32, #tpu.memory_space<vmem>>, vector<1x1x1x1x8xf32>
    %436 = vector.shape_cast %435 : vector<1x1x1x1x8xf32> to vector<8xf32>
    %c10_592 = arith.constant 10 : index
    %c56_593 = arith.constant 56 : index
    %437 = vector.load %arg7[%c10_592, %c56_593] : memref<36x64xf32, #tpu.memory_space<vmem>>, vector<1x8xf32>
    %438 = vector.shape_cast %437 : vector<1x8xf32> to vector<8xf32>
    %439 = vector.shape_cast %436 : vector<8xf32> to vector<1x8xf32>
    tpu.vector_store %arg7[%c10_592, %c56_593], %439 {strides = array<i32>} : memref<36x64xf32, #tpu.memory_space<vmem>>, vector<1x8xf32>,
    %c0_594 = arith.constant 0 : index
    %c0_595 = arith.constant 0 : index
    %c1_596 = arith.constant 1 : index
    %c0_597 = arith.constant 0 : index
    %c1_598 = arith.constant 1 : index
    %440 = vector.load %arg2[%c0_594, %c0_595, %c1_596, %c0_597, %c1_598] : memref<1x2x4x18x9xf32, #tpu.memory_space<vmem>>, vector<1x1x1x1x8xf32>
    %441 = vector.shape_cast %440 : vector<1x1x1x1x8xf32> to vector<8xf32>
    %c11_599 = arith.constant 11 : index
    %c0_600 = arith.constant 0 : index
    %442 = vector.load %arg7[%c11_599, %c0_600] : memref<36x64xf32, #tpu.memory_space<vmem>>, vector<1x8xf32>
    %443 = vector.shape_cast %442 : vector<1x8xf32> to vector<8xf32>
    %444 = vector.shape_cast %441 : vector<8xf32> to vector<1x8xf32>
    tpu.vector_store %arg7[%c11_599, %c0_600], %444 {strides = array<i32>} : memref<36x64xf32, #tpu.memory_space<vmem>>, vector<1x8xf32>,
    %c0_601 = arith.constant 0 : index
    %c0_602 = arith.constant 0 : index
    %c1_603 = arith.constant 1 : index
    %c2_604 = arith.constant 2 : index
    %c1_605 = arith.constant 1 : index
    %445 = vector.load %arg2[%c0_601, %c0_602, %c1_603, %c2_604, %c1_605] : memref<1x2x4x18x9xf32, #tpu.memory_space<vmem>>, vector<1x1x1x1x8xf32>
    %446 = vector.shape_cast %445 : vector<1x1x1x1x8xf32> to vector<8xf32>
    %c11_606 = arith.constant 11 : index
    %c8_607 = arith.constant 8 : index
    %447 = vector.load %arg7[%c11_606, %c8_607] : memref<36x64xf32, #tpu.memory_space<vmem>>, vector<1x8xf32>
    %448 = vector.shape_cast %447 : vector<1x8xf32> to vector<8xf32>
    %449 = vector.shape_cast %446 : vector<8xf32> to vector<1x8xf32>
    tpu.vector_store %arg7[%c11_606, %c8_607], %449 {strides = array<i32>} : memref<36x64xf32, #tpu.memory_space<vmem>>, vector<1x8xf32>,
    %c0_608 = arith.constant 0 : index
    %c0_609 = arith.constant 0 : index
    %c1_610 = arith.constant 1 : index
    %c4_611 = arith.constant 4 : index
    %c1_612 = arith.constant 1 : index
    %450 = vector.load %arg2[%c0_608, %c0_609, %c1_610, %c4_611, %c1_612] : memref<1x2x4x18x9xf32, #tpu.memory_space<vmem>>, vector<1x1x1x1x8xf32>
    %451 = vector.shape_cast %450 : vector<1x1x1x1x8xf32> to vector<8xf32>
    %c11_613 = arith.constant 11 : index
    %c16_614 = arith.constant 16 : index
    %452 = vector.load %arg7[%c11_613, %c16_614] : memref<36x64xf32, #tpu.memory_space<vmem>>, vector<1x8xf32>
    %453 = vector.shape_cast %452 : vector<1x8xf32> to vector<8xf32>
    %454 = vector.shape_cast %451 : vector<8xf32> to vector<1x8xf32>
    tpu.vector_store %arg7[%c11_613, %c16_614], %454 {strides = array<i32>} : memref<36x64xf32, #tpu.memory_space<vmem>>, vector<1x8xf32>,
    %c0_615 = arith.constant 0 : index
    %c0_616 = arith.constant 0 : index
    %c1_617 = arith.constant 1 : index
    %c6_618 = arith.constant 6 : index
    %c1_619 = arith.constant 1 : index
    %455 = vector.load %arg2[%c0_615, %c0_616, %c1_617, %c6_618, %c1_619] : memref<1x2x4x18x9xf32, #tpu.memory_space<vmem>>, vector<1x1x1x1x8xf32>
    %456 = vector.shape_cast %455 : vector<1x1x1x1x8xf32> to vector<8xf32>
    %c11_620 = arith.constant 11 : index
    %c24_621 = arith.constant 24 : index
    %457 = vector.load %arg7[%c11_620, %c24_621] : memref<36x64xf32, #tpu.memory_space<vmem>>, vector<1x8xf32>
    %458 = vector.shape_cast %457 : vector<1x8xf32> to vector<8xf32>
    %459 = vector.shape_cast %456 : vector<8xf32> to vector<1x8xf32>
    tpu.vector_store %arg7[%c11_620, %c24_621], %459 {strides = array<i32>} : memref<36x64xf32, #tpu.memory_space<vmem>>, vector<1x8xf32>,
    %c0_622 = arith.constant 0 : index
    %c0_623 = arith.constant 0 : index
    %c1_624 = arith.constant 1 : index
    %c8_625 = arith.constant 8 : index
    %c1_626 = arith.constant 1 : index
    %460 = vector.load %arg2[%c0_622, %c0_623, %c1_624, %c8_625, %c1_626] : memref<1x2x4x18x9xf32, #tpu.memory_space<vmem>>, vector<1x1x1x1x8xf32>
    %461 = vector.shape_cast %460 : vector<1x1x1x1x8xf32> to vector<8xf32>
    %c11_627 = arith.constant 11 : index
    %c32_628 = arith.constant 32 : index
    %462 = vector.load %arg7[%c11_627, %c32_628] : memref<36x64xf32, #tpu.memory_space<vmem>>, vector<1x8xf32>
    %463 = vector.shape_cast %462 : vector<1x8xf32> to vector<8xf32>
    %464 = vector.shape_cast %461 : vector<8xf32> to vector<1x8xf32>
    tpu.vector_store %arg7[%c11_627, %c32_628], %464 {strides = array<i32>} : memref<36x64xf32, #tpu.memory_space<vmem>>, vector<1x8xf32>,
    %c0_629 = arith.constant 0 : index
    %c0_630 = arith.constant 0 : index
    %c1_631 = arith.constant 1 : index
    %c10_632 = arith.constant 10 : index
    %c1_633 = arith.constant 1 : index
    %465 = vector.load %arg2[%c0_629, %c0_630, %c1_631, %c10_632, %c1_633] : memref<1x2x4x18x9xf32, #tpu.memory_space<vmem>>, vector<1x1x1x1x8xf32>
    %466 = vector.shape_cast %465 : vector<1x1x1x1x8xf32> to vector<8xf32>
    %c11_634 = arith.constant 11 : index
    %c40_635 = arith.constant 40 : index
    %467 = vector.load %arg7[%c11_634, %c40_635] : memref<36x64xf32, #tpu.memory_space<vmem>>, vector<1x8xf32>
    %468 = vector.shape_cast %467 : vector<1x8xf32> to vector<8xf32>
    %469 = vector.shape_cast %466 : vector<8xf32> to vector<1x8xf32>
    tpu.vector_store %arg7[%c11_634, %c40_635], %469 {strides = array<i32>} : memref<36x64xf32, #tpu.memory_space<vmem>>, vector<1x8xf32>,
    %c0_636 = arith.constant 0 : index
    %c0_637 = arith.constant 0 : index
    %c1_638 = arith.constant 1 : index
    %c12_639 = arith.constant 12 : index
    %c1_640 = arith.constant 1 : index
    %470 = vector.load %arg2[%c0_636, %c0_637, %c1_638, %c12_639, %c1_640] : memref<1x2x4x18x9xf32, #tpu.memory_space<vmem>>, vector<1x1x1x1x8xf32>
    %471 = vector.shape_cast %470 : vector<1x1x1x1x8xf32> to vector<8xf32>
    %c11_641 = arith.constant 11 : index
    %c48_642 = arith.constant 48 : index
    %472 = vector.load %arg7[%c11_641, %c48_642] : memref<36x64xf32, #tpu.memory_space<vmem>>, vector<1x8xf32>
    %473 = vector.shape_cast %472 : vector<1x8xf32> to vector<8xf32>
    %474 = vector.shape_cast %471 : vector<8xf32> to vector<1x8xf32>
    tpu.vector_store %arg7[%c11_641, %c48_642], %474 {strides = array<i32>} : memref<36x64xf32, #tpu.memory_space<vmem>>, vector<1x8xf32>,
    %c0_643 = arith.constant 0 : index
    %c0_644 = arith.constant 0 : index
    %c1_645 = arith.constant 1 : index
    %c14_646 = arith.constant 14 : index
    %c1_647 = arith.constant 1 : index
    %475 = vector.load %arg2[%c0_643, %c0_644, %c1_645, %c14_646, %c1_647] : memref<1x2x4x18x9xf32, #tpu.memory_space<vmem>>, vector<1x1x1x1x8xf32>
    %476 = vector.shape_cast %475 : vector<1x1x1x1x8xf32> to vector<8xf32>
    %c11_648 = arith.constant 11 : index
    %c56_649 = arith.constant 56 : index
    %477 = vector.load %arg7[%c11_648, %c56_649] : memref<36x64xf32, #tpu.memory_space<vmem>>, vector<1x8xf32>
    %478 = vector.shape_cast %477 : vector<1x8xf32> to vector<8xf32>
    %479 = vector.shape_cast %476 : vector<8xf32> to vector<1x8xf32>
    tpu.vector_store %arg7[%c11_648, %c56_649], %479 {strides = array<i32>} : memref<36x64xf32, #tpu.memory_space<vmem>>, vector<1x8xf32>,
    %c0_650 = arith.constant 0 : index
    %c0_651 = arith.constant 0 : index
    %c1_652 = arith.constant 1 : index
    %c1_653 = arith.constant 1 : index
    %c0_654 = arith.constant 0 : index
    %480 = vector.load %arg2[%c0_650, %c0_651, %c1_652, %c1_653, %c0_654] : memref<1x2x4x18x9xf32, #tpu.memory_space<vmem>>, vector<1x1x1x1x8xf32>
    %481 = vector.shape_cast %480 : vector<1x1x1x1x8xf32> to vector<8xf32>
    %c12_655 = arith.constant 12 : index
    %c0_656 = arith.constant 0 : index
    %482 = vector.load %arg7[%c12_655, %c0_656] : memref<36x64xf32, #tpu.memory_space<vmem>>, vector<1x8xf32>
    %483 = vector.shape_cast %482 : vector<1x8xf32> to vector<8xf32>
    %484 = vector.shape_cast %481 : vector<8xf32> to vector<1x8xf32>
    tpu.vector_store %arg7[%c12_655, %c0_656], %484 {strides = array<i32>} : memref<36x64xf32, #tpu.memory_space<vmem>>, vector<1x8xf32>,
    %c0_657 = arith.constant 0 : index
    %c0_658 = arith.constant 0 : index
    %c1_659 = arith.constant 1 : index
    %c3_660 = arith.constant 3 : index
    %c0_661 = arith.constant 0 : index
    %485 = vector.load %arg2[%c0_657, %c0_658, %c1_659, %c3_660, %c0_661] : memref<1x2x4x18x9xf32, #tpu.memory_space<vmem>>, vector<1x1x1x1x8xf32>
    %486 = vector.shape_cast %485 : vector<1x1x1x1x8xf32> to vector<8xf32>
    %c12_662 = arith.constant 12 : index
    %c8_663 = arith.constant 8 : index
    %487 = vector.load %arg7[%c12_662, %c8_663] : memref<36x64xf32, #tpu.memory_space<vmem>>, vector<1x8xf32>
    %488 = vector.shape_cast %487 : vector<1x8xf32> to vector<8xf32>
    %489 = vector.shape_cast %486 : vector<8xf32> to vector<1x8xf32>
    tpu.vector_store %arg7[%c12_662, %c8_663], %489 {strides = array<i32>} : memref<36x64xf32, #tpu.memory_space<vmem>>, vector<1x8xf32>,
    %c0_664 = arith.constant 0 : index
    %c0_665 = arith.constant 0 : index
    %c1_666 = arith.constant 1 : index
    %c5_667 = arith.constant 5 : index
    %c0_668 = arith.constant 0 : index
    %490 = vector.load %arg2[%c0_664, %c0_665, %c1_666, %c5_667, %c0_668] : memref<1x2x4x18x9xf32, #tpu.memory_space<vmem>>, vector<1x1x1x1x8xf32>
    %491 = vector.shape_cast %490 : vector<1x1x1x1x8xf32> to vector<8xf32>
    %c12_669 = arith.constant 12 : index
    %c16_670 = arith.constant 16 : index
    %492 = vector.load %arg7[%c12_669, %c16_670] : memref<36x64xf32, #tpu.memory_space<vmem>>, vector<1x8xf32>
    %493 = vector.shape_cast %492 : vector<1x8xf32> to vector<8xf32>
    %494 = vector.shape_cast %491 : vector<8xf32> to vector<1x8xf32>
    tpu.vector_store %arg7[%c12_669, %c16_670], %494 {strides = array<i32>} : memref<36x64xf32, #tpu.memory_space<vmem>>, vector<1x8xf32>,
    %c0_671 = arith.constant 0 : index
    %c0_672 = arith.constant 0 : index
    %c1_673 = arith.constant 1 : index
    %c7_674 = arith.constant 7 : index
    %c0_675 = arith.constant 0 : index
    %495 = vector.load %arg2[%c0_671, %c0_672, %c1_673, %c7_674, %c0_675] : memref<1x2x4x18x9xf32, #tpu.memory_space<vmem>>, vector<1x1x1x1x8xf32>
    %496 = vector.shape_cast %495 : vector<1x1x1x1x8xf32> to vector<8xf32>
    %c12_676 = arith.constant 12 : index
    %c24_677 = arith.constant 24 : index
    %497 = vector.load %arg7[%c12_676, %c24_677] : memref<36x64xf32, #tpu.memory_space<vmem>>, vector<1x8xf32>
    %498 = vector.shape_cast %497 : vector<1x8xf32> to vector<8xf32>
    %499 = vector.shape_cast %496 : vector<8xf32> to vector<1x8xf32>
    tpu.vector_store %arg7[%c12_676, %c24_677], %499 {strides = array<i32>} : memref<36x64xf32, #tpu.memory_space<vmem>>, vector<1x8xf32>,
    %c0_678 = arith.constant 0 : index
    %c0_679 = arith.constant 0 : index
    %c1_680 = arith.constant 1 : index
    %c9_681 = arith.constant 9 : index
    %c0_682 = arith.constant 0 : index
    %500 = vector.load %arg2[%c0_678, %c0_679, %c1_680, %c9_681, %c0_682] : memref<1x2x4x18x9xf32, #tpu.memory_space<vmem>>, vector<1x1x1x1x8xf32>
    %501 = vector.shape_cast %500 : vector<1x1x1x1x8xf32> to vector<8xf32>
    %c12_683 = arith.constant 12 : index
    %c32_684 = arith.constant 32 : index
    %502 = vector.load %arg7[%c12_683, %c32_684] : memref<36x64xf32, #tpu.memory_space<vmem>>, vector<1x8xf32>
    %503 = vector.shape_cast %502 : vector<1x8xf32> to vector<8xf32>
    %504 = vector.shape_cast %501 : vector<8xf32> to vector<1x8xf32>
    tpu.vector_store %arg7[%c12_683, %c32_684], %504 {strides = array<i32>} : memref<36x64xf32, #tpu.memory_space<vmem>>, vector<1x8xf32>,
    %c0_685 = arith.constant 0 : index
    %c0_686 = arith.constant 0 : index
    %c1_687 = arith.constant 1 : index
    %c11_688 = arith.constant 11 : index
    %c0_689 = arith.constant 0 : index
    %505 = vector.load %arg2[%c0_685, %c0_686, %c1_687, %c11_688, %c0_689] : memref<1x2x4x18x9xf32, #tpu.memory_space<vmem>>, vector<1x1x1x1x8xf32>
    %506 = vector.shape_cast %505 : vector<1x1x1x1x8xf32> to vector<8xf32>
    %c12_690 = arith.constant 12 : index
    %c40_691 = arith.constant 40 : index
    %507 = vector.load %arg7[%c12_690, %c40_691] : memref<36x64xf32, #tpu.memory_space<vmem>>, vector<1x8xf32>
    %508 = vector.shape_cast %507 : vector<1x8xf32> to vector<8xf32>
    %509 = vector.shape_cast %506 : vector<8xf32> to vector<1x8xf32>
    tpu.vector_store %arg7[%c12_690, %c40_691], %509 {strides = array<i32>} : memref<36x64xf32, #tpu.memory_space<vmem>>, vector<1x8xf32>,
    %c0_692 = arith.constant 0 : index
    %c0_693 = arith.constant 0 : index
    %c1_694 = arith.constant 1 : index
    %c13_695 = arith.constant 13 : index
    %c0_696 = arith.constant 0 : index
    %510 = vector.load %arg2[%c0_692, %c0_693, %c1_694, %c13_695, %c0_696] : memref<1x2x4x18x9xf32, #tpu.memory_space<vmem>>, vector<1x1x1x1x8xf32>
    %511 = vector.shape_cast %510 : vector<1x1x1x1x8xf32> to vector<8xf32>
    %c12_697 = arith.constant 12 : index
    %c48_698 = arith.constant 48 : index
    %512 = vector.load %arg7[%c12_697, %c48_698] : memref<36x64xf32, #tpu.memory_space<vmem>>, vector<1x8xf32>
    %513 = vector.shape_cast %512 : vector<1x8xf32> to vector<8xf32>
    %514 = vector.shape_cast %511 : vector<8xf32> to vector<1x8xf32>
    tpu.vector_store %arg7[%c12_697, %c48_698], %514 {strides = array<i32>} : memref<36x64xf32, #tpu.memory_space<vmem>>, vector<1x8xf32>,
    %c0_699 = arith.constant 0 : index
    %c0_700 = arith.constant 0 : index
    %c1_701 = arith.constant 1 : index
    %c15_702 = arith.constant 15 : index
    %c0_703 = arith.constant 0 : index
    %515 = vector.load %arg2[%c0_699, %c0_700, %c1_701, %c15_702, %c0_703] : memref<1x2x4x18x9xf32, #tpu.memory_space<vmem>>, vector<1x1x1x1x8xf32>
    %516 = vector.shape_cast %515 : vector<1x1x1x1x8xf32> to vector<8xf32>
    %c12_704 = arith.constant 12 : index
    %c56_705 = arith.constant 56 : index
    %517 = vector.load %arg7[%c12_704, %c56_705] : memref<36x64xf32, #tpu.memory_space<vmem>>, vector<1x8xf32>
    %518 = vector.shape_cast %517 : vector<1x8xf32> to vector<8xf32>
    %519 = vector.shape_cast %516 : vector<8xf32> to vector<1x8xf32>
    tpu.vector_store %arg7[%c12_704, %c56_705], %519 {strides = array<i32>} : memref<36x64xf32, #tpu.memory_space<vmem>>, vector<1x8xf32>,
    %c0_706 = arith.constant 0 : index
    %c1_707 = arith.constant 1 : index
    %c1_708 = arith.constant 1 : index
    %c1_709 = arith.constant 1 : index
    %c0_710 = arith.constant 0 : index
    %520 = vector.load %arg2[%c0_706, %c1_707, %c1_708, %c1_709, %c0_710] : memref<1x2x4x18x9xf32, #tpu.memory_space<vmem>>, vector<1x1x1x1x8xf32>
    %521 = vector.shape_cast %520 : vector<1x1x1x1x8xf32> to vector<8xf32>
    %c13_711 = arith.constant 13 : index
    %c0_712 = arith.constant 0 : index
    %522 = vector.load %arg7[%c13_711, %c0_712] : memref<36x64xf32, #tpu.memory_space<vmem>>, vector<1x8xf32>
    %523 = vector.shape_cast %522 : vector<1x8xf32> to vector<8xf32>
    %524 = vector.shape_cast %521 : vector<8xf32> to vector<1x8xf32>
    tpu.vector_store %arg7[%c13_711, %c0_712], %524 {strides = array<i32>} : memref<36x64xf32, #tpu.memory_space<vmem>>, vector<1x8xf32>,
    %c0_713 = arith.constant 0 : index
    %c1_714 = arith.constant 1 : index
    %c1_715 = arith.constant 1 : index
    %c3_716 = arith.constant 3 : index
    %c0_717 = arith.constant 0 : index
    %525 = vector.load %arg2[%c0_713, %c1_714, %c1_715, %c3_716, %c0_717] : memref<1x2x4x18x9xf32, #tpu.memory_space<vmem>>, vector<1x1x1x1x8xf32>
    %526 = vector.shape_cast %525 : vector<1x1x1x1x8xf32> to vector<8xf32>
    %c13_718 = arith.constant 13 : index
    %c8_719 = arith.constant 8 : index
    %527 = vector.load %arg7[%c13_718, %c8_719] : memref<36x64xf32, #tpu.memory_space<vmem>>, vector<1x8xf32>
    %528 = vector.shape_cast %527 : vector<1x8xf32> to vector<8xf32>
    %529 = vector.shape_cast %526 : vector<8xf32> to vector<1x8xf32>
    tpu.vector_store %arg7[%c13_718, %c8_719], %529 {strides = array<i32>} : memref<36x64xf32, #tpu.memory_space<vmem>>, vector<1x8xf32>,
    %c0_720 = arith.constant 0 : index
    %c1_721 = arith.constant 1 : index
    %c1_722 = arith.constant 1 : index
    %c5_723 = arith.constant 5 : index
    %c0_724 = arith.constant 0 : index
    %530 = vector.load %arg2[%c0_720, %c1_721, %c1_722, %c5_723, %c0_724] : memref<1x2x4x18x9xf32, #tpu.memory_space<vmem>>, vector<1x1x1x1x8xf32>
    %531 = vector.shape_cast %530 : vector<1x1x1x1x8xf32> to vector<8xf32>
    %c13_725 = arith.constant 13 : index
    %c16_726 = arith.constant 16 : index
    %532 = vector.load %arg7[%c13_725, %c16_726] : memref<36x64xf32, #tpu.memory_space<vmem>>, vector<1x8xf32>
    %533 = vector.shape_cast %532 : vector<1x8xf32> to vector<8xf32>
    %534 = vector.shape_cast %531 : vector<8xf32> to vector<1x8xf32>
    tpu.vector_store %arg7[%c13_725, %c16_726], %534 {strides = array<i32>} : memref<36x64xf32, #tpu.memory_space<vmem>>, vector<1x8xf32>,
    %c0_727 = arith.constant 0 : index
    %c1_728 = arith.constant 1 : index
    %c1_729 = arith.constant 1 : index
    %c7_730 = arith.constant 7 : index
    %c0_731 = arith.constant 0 : index
    %535 = vector.load %arg2[%c0_727, %c1_728, %c1_729, %c7_730, %c0_731] : memref<1x2x4x18x9xf32, #tpu.memory_space<vmem>>, vector<1x1x1x1x8xf32>
    %536 = vector.shape_cast %535 : vector<1x1x1x1x8xf32> to vector<8xf32>
    %c13_732 = arith.constant 13 : index
    %c24_733 = arith.constant 24 : index
    %537 = vector.load %arg7[%c13_732, %c24_733] : memref<36x64xf32, #tpu.memory_space<vmem>>, vector<1x8xf32>
    %538 = vector.shape_cast %537 : vector<1x8xf32> to vector<8xf32>
    %539 = vector.shape_cast %536 : vector<8xf32> to vector<1x8xf32>
    tpu.vector_store %arg7[%c13_732, %c24_733], %539 {strides = array<i32>} : memref<36x64xf32, #tpu.memory_space<vmem>>, vector<1x8xf32>,
    %c0_734 = arith.constant 0 : index
    %c1_735 = arith.constant 1 : index
    %c1_736 = arith.constant 1 : index
    %c9_737 = arith.constant 9 : index
    %c0_738 = arith.constant 0 : index
    %540 = vector.load %arg2[%c0_734, %c1_735, %c1_736, %c9_737, %c0_738] : memref<1x2x4x18x9xf32, #tpu.memory_space<vmem>>, vector<1x1x1x1x8xf32>
    %541 = vector.shape_cast %540 : vector<1x1x1x1x8xf32> to vector<8xf32>
    %c13_739 = arith.constant 13 : index
    %c32_740 = arith.constant 32 : index
    %542 = vector.load %arg7[%c13_739, %c32_740] : memref<36x64xf32, #tpu.memory_space<vmem>>, vector<1x8xf32>
    %543 = vector.shape_cast %542 : vector<1x8xf32> to vector<8xf32>
    %544 = vector.shape_cast %541 : vector<8xf32> to vector<1x8xf32>
    tpu.vector_store %arg7[%c13_739, %c32_740], %544 {strides = array<i32>} : memref<36x64xf32, #tpu.memory_space<vmem>>, vector<1x8xf32>,
    %c0_741 = arith.constant 0 : index
    %c1_742 = arith.constant 1 : index
    %c1_743 = arith.constant 1 : index
    %c11_744 = arith.constant 11 : index
    %c0_745 = arith.constant 0 : index
    %545 = vector.load %arg2[%c0_741, %c1_742, %c1_743, %c11_744, %c0_745] : memref<1x2x4x18x9xf32, #tpu.memory_space<vmem>>, vector<1x1x1x1x8xf32>
    %546 = vector.shape_cast %545 : vector<1x1x1x1x8xf32> to vector<8xf32>
    %c13_746 = arith.constant 13 : index
    %c40_747 = arith.constant 40 : index
    %547 = vector.load %arg7[%c13_746, %c40_747] : memref<36x64xf32, #tpu.memory_space<vmem>>, vector<1x8xf32>
    %548 = vector.shape_cast %547 : vector<1x8xf32> to vector<8xf32>
    %549 = vector.shape_cast %546 : vector<8xf32> to vector<1x8xf32>
    tpu.vector_store %arg7[%c13_746, %c40_747], %549 {strides = array<i32>} : memref<36x64xf32, #tpu.memory_space<vmem>>, vector<1x8xf32>,
    %c0_748 = arith.constant 0 : index
    %c1_749 = arith.constant 1 : index
    %c1_750 = arith.constant 1 : index
    %c13_751 = arith.constant 13 : index
    %c0_752 = arith.constant 0 : index
    %550 = vector.load %arg2[%c0_748, %c1_749, %c1_750, %c13_751, %c0_752] : memref<1x2x4x18x9xf32, #tpu.memory_space<vmem>>, vector<1x1x1x1x8xf32>
    %551 = vector.shape_cast %550 : vector<1x1x1x1x8xf32> to vector<8xf32>
    %c13_753 = arith.constant 13 : index
    %c48_754 = arith.constant 48 : index
    %552 = vector.load %arg7[%c13_753, %c48_754] : memref<36x64xf32, #tpu.memory_space<vmem>>, vector<1x8xf32>
    %553 = vector.shape_cast %552 : vector<1x8xf32> to vector<8xf32>
    %554 = vector.shape_cast %551 : vector<8xf32> to vector<1x8xf32>
    tpu.vector_store %arg7[%c13_753, %c48_754], %554 {strides = array<i32>} : memref<36x64xf32, #tpu.memory_space<vmem>>, vector<1x8xf32>,
    %c0_755 = arith.constant 0 : index
    %c1_756 = arith.constant 1 : index
    %c1_757 = arith.constant 1 : index
    %c15_758 = arith.constant 15 : index
    %c0_759 = arith.constant 0 : index
    %555 = vector.load %arg2[%c0_755, %c1_756, %c1_757, %c15_758, %c0_759] : memref<1x2x4x18x9xf32, #tpu.memory_space<vmem>>, vector<1x1x1x1x8xf32>
    %556 = vector.shape_cast %555 : vector<1x1x1x1x8xf32> to vector<8xf32>
    %c13_760 = arith.constant 13 : index
    %c56_761 = arith.constant 56 : index
    %557 = vector.load %arg7[%c13_760, %c56_761] : memref<36x64xf32, #tpu.memory_space<vmem>>, vector<1x8xf32>
    %558 = vector.shape_cast %557 : vector<1x8xf32> to vector<8xf32>
    %559 = vector.shape_cast %556 : vector<8xf32> to vector<1x8xf32>
    tpu.vector_store %arg7[%c13_760, %c56_761], %559 {strides = array<i32>} : memref<36x64xf32, #tpu.memory_space<vmem>>, vector<1x8xf32>,
    %c0_762 = arith.constant 0 : index
    %c0_763 = arith.constant 0 : index
    %c1_764 = arith.constant 1 : index
    %c1_765 = arith.constant 1 : index
    %c1_766 = arith.constant 1 : index
    %560 = vector.load %arg2[%c0_762, %c0_763, %c1_764, %c1_765, %c1_766] : memref<1x2x4x18x9xf32, #tpu.memory_space<vmem>>, vector<1x1x1x1x8xf32>
    %561 = vector.shape_cast %560 : vector<1x1x1x1x8xf32> to vector<8xf32>
    %c14_767 = arith.constant 14 : index
    %c0_768 = arith.constant 0 : index
    %562 = vector.load %arg7[%c14_767, %c0_768] : memref<36x64xf32, #tpu.memory_space<vmem>>, vector<1x8xf32>
    %563 = vector.shape_cast %562 : vector<1x8xf32> to vector<8xf32>
    %564 = vector.shape_cast %561 : vector<8xf32> to vector<1x8xf32>
    tpu.vector_store %arg7[%c14_767, %c0_768], %564 {strides = array<i32>} : memref<36x64xf32, #tpu.memory_space<vmem>>, vector<1x8xf32>,
    %c0_769 = arith.constant 0 : index
    %c0_770 = arith.constant 0 : index
    %c1_771 = arith.constant 1 : index
    %c3_772 = arith.constant 3 : index
    %c1_773 = arith.constant 1 : index
    %565 = vector.load %arg2[%c0_769, %c0_770, %c1_771, %c3_772, %c1_773] : memref<1x2x4x18x9xf32, #tpu.memory_space<vmem>>, vector<1x1x1x1x8xf32>
    %566 = vector.shape_cast %565 : vector<1x1x1x1x8xf32> to vector<8xf32>
    %c14_774 = arith.constant 14 : index
    %c8_775 = arith.constant 8 : index
    %567 = vector.load %arg7[%c14_774, %c8_775] : memref<36x64xf32, #tpu.memory_space<vmem>>, vector<1x8xf32>
    %568 = vector.shape_cast %567 : vector<1x8xf32> to vector<8xf32>
    %569 = vector.shape_cast %566 : vector<8xf32> to vector<1x8xf32>
    tpu.vector_store %arg7[%c14_774, %c8_775], %569 {strides = array<i32>} : memref<36x64xf32, #tpu.memory_space<vmem>>, vector<1x8xf32>,
    %c0_776 = arith.constant 0 : index
    %c0_777 = arith.constant 0 : index
    %c1_778 = arith.constant 1 : index
    %c5_779 = arith.constant 5 : index
    %c1_780 = arith.constant 1 : index
    %570 = vector.load %arg2[%c0_776, %c0_777, %c1_778, %c5_779, %c1_780] : memref<1x2x4x18x9xf32, #tpu.memory_space<vmem>>, vector<1x1x1x1x8xf32>
    %571 = vector.shape_cast %570 : vector<1x1x1x1x8xf32> to vector<8xf32>
    %c14_781 = arith.constant 14 : index
    %c16_782 = arith.constant 16 : index
    %572 = vector.load %arg7[%c14_781, %c16_782] : memref<36x64xf32, #tpu.memory_space<vmem>>, vector<1x8xf32>
    %573 = vector.shape_cast %572 : vector<1x8xf32> to vector<8xf32>
    %574 = vector.shape_cast %571 : vector<8xf32> to vector<1x8xf32>
    tpu.vector_store %arg7[%c14_781, %c16_782], %574 {strides = array<i32>} : memref<36x64xf32, #tpu.memory_space<vmem>>, vector<1x8xf32>,
    %c0_783 = arith.constant 0 : index
    %c0_784 = arith.constant 0 : index
    %c1_785 = arith.constant 1 : index
    %c7_786 = arith.constant 7 : index
    %c1_787 = arith.constant 1 : index
    %575 = vector.load %arg2[%c0_783, %c0_784, %c1_785, %c7_786, %c1_787] : memref<1x2x4x18x9xf32, #tpu.memory_space<vmem>>, vector<1x1x1x1x8xf32>
    %576 = vector.shape_cast %575 : vector<1x1x1x1x8xf32> to vector<8xf32>
    %c14_788 = arith.constant 14 : index
    %c24_789 = arith.constant 24 : index
    %577 = vector.load %arg7[%c14_788, %c24_789] : memref<36x64xf32, #tpu.memory_space<vmem>>, vector<1x8xf32>
    %578 = vector.shape_cast %577 : vector<1x8xf32> to vector<8xf32>
    %579 = vector.shape_cast %576 : vector<8xf32> to vector<1x8xf32>
    tpu.vector_store %arg7[%c14_788, %c24_789], %579 {strides = array<i32>} : memref<36x64xf32, #tpu.memory_space<vmem>>, vector<1x8xf32>,
    %c0_790 = arith.constant 0 : index
    %c0_791 = arith.constant 0 : index
    %c1_792 = arith.constant 1 : index
    %c9_793 = arith.constant 9 : index
    %c1_794 = arith.constant 1 : index
    %580 = vector.load %arg2[%c0_790, %c0_791, %c1_792, %c9_793, %c1_794] : memref<1x2x4x18x9xf32, #tpu.memory_space<vmem>>, vector<1x1x1x1x8xf32>
    %581 = vector.shape_cast %580 : vector<1x1x1x1x8xf32> to vector<8xf32>
    %c14_795 = arith.constant 14 : index
    %c32_796 = arith.constant 32 : index
    %582 = vector.load %arg7[%c14_795, %c32_796] : memref<36x64xf32, #tpu.memory_space<vmem>>, vector<1x8xf32>
    %583 = vector.shape_cast %582 : vector<1x8xf32> to vector<8xf32>
    %584 = vector.shape_cast %581 : vector<8xf32> to vector<1x8xf32>
    tpu.vector_store %arg7[%c14_795, %c32_796], %584 {strides = array<i32>} : memref<36x64xf32, #tpu.memory_space<vmem>>, vector<1x8xf32>,
    %c0_797 = arith.constant 0 : index
    %c0_798 = arith.constant 0 : index
    %c1_799 = arith.constant 1 : index
    %c11_800 = arith.constant 11 : index
    %c1_801 = arith.constant 1 : index
    %585 = vector.load %arg2[%c0_797, %c0_798, %c1_799, %c11_800, %c1_801] : memref<1x2x4x18x9xf32, #tpu.memory_space<vmem>>, vector<1x1x1x1x8xf32>
    %586 = vector.shape_cast %585 : vector<1x1x1x1x8xf32> to vector<8xf32>
    %c14_802 = arith.constant 14 : index
    %c40_803 = arith.constant 40 : index
    %587 = vector.load %arg7[%c14_802, %c40_803] : memref<36x64xf32, #tpu.memory_space<vmem>>, vector<1x8xf32>
    %588 = vector.shape_cast %587 : vector<1x8xf32> to vector<8xf32>
    %589 = vector.shape_cast %586 : vector<8xf32> to vector<1x8xf32>
    tpu.vector_store %arg7[%c14_802, %c40_803], %589 {strides = array<i32>} : memref<36x64xf32, #tpu.memory_space<vmem>>, vector<1x8xf32>,
    %c0_804 = arith.constant 0 : index
    %c0_805 = arith.constant 0 : index
    %c1_806 = arith.constant 1 : index
    %c13_807 = arith.constant 13 : index
    %c1_808 = arith.constant 1 : index
    %590 = vector.load %arg2[%c0_804, %c0_805, %c1_806, %c13_807, %c1_808] : memref<1x2x4x18x9xf32, #tpu.memory_space<vmem>>, vector<1x1x1x1x8xf32>
    %591 = vector.shape_cast %590 : vector<1x1x1x1x8xf32> to vector<8xf32>
    %c14_809 = arith.constant 14 : index
    %c48_810 = arith.constant 48 : index
    %592 = vector.load %arg7[%c14_809, %c48_810] : memref<36x64xf32, #tpu.memory_space<vmem>>, vector<1x8xf32>
    %593 = vector.shape_cast %592 : vector<1x8xf32> to vector<8xf32>
    %594 = vector.shape_cast %591 : vector<8xf32> to vector<1x8xf32>
    tpu.vector_store %arg7[%c14_809, %c48_810], %594 {strides = array<i32>} : memref<36x64xf32, #tpu.memory_space<vmem>>, vector<1x8xf32>,
    %c0_811 = arith.constant 0 : index
    %c0_812 = arith.constant 0 : index
    %c1_813 = arith.constant 1 : index
    %c15_814 = arith.constant 15 : index
    %c1_815 = arith.constant 1 : index
    %595 = vector.load %arg2[%c0_811, %c0_812, %c1_813, %c15_814, %c1_815] : memref<1x2x4x18x9xf32, #tpu.memory_space<vmem>>, vector<1x1x1x1x8xf32>
    %596 = vector.shape_cast %595 : vector<1x1x1x1x8xf32> to vector<8xf32>
    %c14_816 = arith.constant 14 : index
    %c56_817 = arith.constant 56 : index
    %597 = vector.load %arg7[%c14_816, %c56_817] : memref<36x64xf32, #tpu.memory_space<vmem>>, vector<1x8xf32>
    %598 = vector.shape_cast %597 : vector<1x8xf32> to vector<8xf32>
    %599 = vector.shape_cast %596 : vector<8xf32> to vector<1x8xf32>
    tpu.vector_store %arg7[%c14_816, %c56_817], %599 {strides = array<i32>} : memref<36x64xf32, #tpu.memory_space<vmem>>, vector<1x8xf32>,
    %c0_818 = arith.constant 0 : index
    %c0_819 = arith.constant 0 : index
    %c1_820 = arith.constant 1 : index
    %c2_821 = arith.constant 2 : index
    %c0_822 = arith.constant 0 : index
    %600 = vector.load %arg2[%c0_818, %c0_819, %c1_820, %c2_821, %c0_822] : memref<1x2x4x18x9xf32, #tpu.memory_space<vmem>>, vector<1x1x1x1x8xf32>
    %601 = vector.shape_cast %600 : vector<1x1x1x1x8xf32> to vector<8xf32>
    %c15_823 = arith.constant 15 : index
    %c0_824 = arith.constant 0 : index
    %602 = vector.load %arg7[%c15_823, %c0_824] : memref<36x64xf32, #tpu.memory_space<vmem>>, vector<1x8xf32>
    %603 = vector.shape_cast %602 : vector<1x8xf32> to vector<8xf32>
    %604 = vector.shape_cast %601 : vector<8xf32> to vector<1x8xf32>
    tpu.vector_store %arg7[%c15_823, %c0_824], %604 {strides = array<i32>} : memref<36x64xf32, #tpu.memory_space<vmem>>, vector<1x8xf32>,
    %c0_825 = arith.constant 0 : index
    %c0_826 = arith.constant 0 : index
    %c1_827 = arith.constant 1 : index
    %c4_828 = arith.constant 4 : index
    %c0_829 = arith.constant 0 : index
    %605 = vector.load %arg2[%c0_825, %c0_826, %c1_827, %c4_828, %c0_829] : memref<1x2x4x18x9xf32, #tpu.memory_space<vmem>>, vector<1x1x1x1x8xf32>
    %606 = vector.shape_cast %605 : vector<1x1x1x1x8xf32> to vector<8xf32>
    %c15_830 = arith.constant 15 : index
    %c8_831 = arith.constant 8 : index
    %607 = vector.load %arg7[%c15_830, %c8_831] : memref<36x64xf32, #tpu.memory_space<vmem>>, vector<1x8xf32>
    %608 = vector.shape_cast %607 : vector<1x8xf32> to vector<8xf32>
    %609 = vector.shape_cast %606 : vector<8xf32> to vector<1x8xf32>
    tpu.vector_store %arg7[%c15_830, %c8_831], %609 {strides = array<i32>} : memref<36x64xf32, #tpu.memory_space<vmem>>, vector<1x8xf32>,
    %c0_832 = arith.constant 0 : index
    %c0_833 = arith.constant 0 : index
    %c1_834 = arith.constant 1 : index
    %c6_835 = arith.constant 6 : index
    %c0_836 = arith.constant 0 : index
    %610 = vector.load %arg2[%c0_832, %c0_833, %c1_834, %c6_835, %c0_836] : memref<1x2x4x18x9xf32, #tpu.memory_space<vmem>>, vector<1x1x1x1x8xf32>
    %611 = vector.shape_cast %610 : vector<1x1x1x1x8xf32> to vector<8xf32>
    %c15_837 = arith.constant 15 : index
    %c16_838 = arith.constant 16 : index
    %612 = vector.load %arg7[%c15_837, %c16_838] : memref<36x64xf32, #tpu.memory_space<vmem>>, vector<1x8xf32>
    %613 = vector.shape_cast %612 : vector<1x8xf32> to vector<8xf32>
    %614 = vector.shape_cast %611 : vector<8xf32> to vector<1x8xf32>
    tpu.vector_store %arg7[%c15_837, %c16_838], %614 {strides = array<i32>} : memref<36x64xf32, #tpu.memory_space<vmem>>, vector<1x8xf32>,
    %c0_839 = arith.constant 0 : index
    %c0_840 = arith.constant 0 : index
    %c1_841 = arith.constant 1 : index
    %c8_842 = arith.constant 8 : index
    %c0_843 = arith.constant 0 : index
    %615 = vector.load %arg2[%c0_839, %c0_840, %c1_841, %c8_842, %c0_843] : memref<1x2x4x18x9xf32, #tpu.memory_space<vmem>>, vector<1x1x1x1x8xf32>
    %616 = vector.shape_cast %615 : vector<1x1x1x1x8xf32> to vector<8xf32>
    %c15_844 = arith.constant 15 : index
    %c24_845 = arith.constant 24 : index
    %617 = vector.load %arg7[%c15_844, %c24_845] : memref<36x64xf32, #tpu.memory_space<vmem>>, vector<1x8xf32>
    %618 = vector.shape_cast %617 : vector<1x8xf32> to vector<8xf32>
    %619 = vector.shape_cast %616 : vector<8xf32> to vector<1x8xf32>
    tpu.vector_store %arg7[%c15_844, %c24_845], %619 {strides = array<i32>} : memref<36x64xf32, #tpu.memory_space<vmem>>, vector<1x8xf32>,
    %c0_846 = arith.constant 0 : index
    %c0_847 = arith.constant 0 : index
    %c1_848 = arith.constant 1 : index
    %c10_849 = arith.constant 10 : index
    %c0_850 = arith.constant 0 : index
    %620 = vector.load %arg2[%c0_846, %c0_847, %c1_848, %c10_849, %c0_850] : memref<1x2x4x18x9xf32, #tpu.memory_space<vmem>>, vector<1x1x1x1x8xf32>
    %621 = vector.shape_cast %620 : vector<1x1x1x1x8xf32> to vector<8xf32>
    %c15_851 = arith.constant 15 : index
    %c32_852 = arith.constant 32 : index
    %622 = vector.load %arg7[%c15_851, %c32_852] : memref<36x64xf32, #tpu.memory_space<vmem>>, vector<1x8xf32>
    %623 = vector.shape_cast %622 : vector<1x8xf32> to vector<8xf32>
    %624 = vector.shape_cast %621 : vector<8xf32> to vector<1x8xf32>
    tpu.vector_store %arg7[%c15_851, %c32_852], %624 {strides = array<i32>} : memref<36x64xf32, #tpu.memory_space<vmem>>, vector<1x8xf32>,
    %c0_853 = arith.constant 0 : index
    %c0_854 = arith.constant 0 : index
    %c1_855 = arith.constant 1 : index
    %c12_856 = arith.constant 12 : index
    %c0_857 = arith.constant 0 : index
    %625 = vector.load %arg2[%c0_853, %c0_854, %c1_855, %c12_856, %c0_857] : memref<1x2x4x18x9xf32, #tpu.memory_space<vmem>>, vector<1x1x1x1x8xf32>
    %626 = vector.shape_cast %625 : vector<1x1x1x1x8xf32> to vector<8xf32>
    %c15_858 = arith.constant 15 : index
    %c40_859 = arith.constant 40 : index
    %627 = vector.load %arg7[%c15_858, %c40_859] : memref<36x64xf32, #tpu.memory_space<vmem>>, vector<1x8xf32>
    %628 = vector.shape_cast %627 : vector<1x8xf32> to vector<8xf32>
    %629 = vector.shape_cast %626 : vector<8xf32> to vector<1x8xf32>
    tpu.vector_store %arg7[%c15_858, %c40_859], %629 {strides = array<i32>} : memref<36x64xf32, #tpu.memory_space<vmem>>, vector<1x8xf32>,
    %c0_860 = arith.constant 0 : index
    %c0_861 = arith.constant 0 : index
    %c1_862 = arith.constant 1 : index
    %c14_863 = arith.constant 14 : index
    %c0_864 = arith.constant 0 : index
    %630 = vector.load %arg2[%c0_860, %c0_861, %c1_862, %c14_863, %c0_864] : memref<1x2x4x18x9xf32, #tpu.memory_space<vmem>>, vector<1x1x1x1x8xf32>
    %631 = vector.shape_cast %630 : vector<1x1x1x1x8xf32> to vector<8xf32>
    %c15_865 = arith.constant 15 : index
    %c48_866 = arith.constant 48 : index
    %632 = vector.load %arg7[%c15_865, %c48_866] : memref<36x64xf32, #tpu.memory_space<vmem>>, vector<1x8xf32>
    %633 = vector.shape_cast %632 : vector<1x8xf32> to vector<8xf32>
    %634 = vector.shape_cast %631 : vector<8xf32> to vector<1x8xf32>
    tpu.vector_store %arg7[%c15_865, %c48_866], %634 {strides = array<i32>} : memref<36x64xf32, #tpu.memory_space<vmem>>, vector<1x8xf32>,
    %c0_867 = arith.constant 0 : index
    %c0_868 = arith.constant 0 : index
    %c1_869 = arith.constant 1 : index
    %c16_870 = arith.constant 16 : index
    %c0_871 = arith.constant 0 : index
    %635 = vector.load %arg2[%c0_867, %c0_868, %c1_869, %c16_870, %c0_871] : memref<1x2x4x18x9xf32, #tpu.memory_space<vmem>>, vector<1x1x1x1x8xf32>
    %636 = vector.shape_cast %635 : vector<1x1x1x1x8xf32> to vector<8xf32>
    %c15_872 = arith.constant 15 : index
    %c56_873 = arith.constant 56 : index
    %637 = vector.load %arg7[%c15_872, %c56_873] : memref<36x64xf32, #tpu.memory_space<vmem>>, vector<1x8xf32>
    %638 = vector.shape_cast %637 : vector<1x8xf32> to vector<8xf32>
    %639 = vector.shape_cast %636 : vector<8xf32> to vector<1x8xf32>
    tpu.vector_store %arg7[%c15_872, %c56_873], %639 {strides = array<i32>} : memref<36x64xf32, #tpu.memory_space<vmem>>, vector<1x8xf32>,
    %c0_874 = arith.constant 0 : index
    %c1_875 = arith.constant 1 : index
    %c1_876 = arith.constant 1 : index
    %c2_877 = arith.constant 2 : index
    %c0_878 = arith.constant 0 : index
    %640 = vector.load %arg2[%c0_874, %c1_875, %c1_876, %c2_877, %c0_878] : memref<1x2x4x18x9xf32, #tpu.memory_space<vmem>>, vector<1x1x1x1x8xf32>
    %641 = vector.shape_cast %640 : vector<1x1x1x1x8xf32> to vector<8xf32>
    %c16_879 = arith.constant 16 : index
    %c0_880 = arith.constant 0 : index
    %642 = vector.load %arg7[%c16_879, %c0_880] : memref<36x64xf32, #tpu.memory_space<vmem>>, vector<1x8xf32>
    %643 = vector.shape_cast %642 : vector<1x8xf32> to vector<8xf32>
    %644 = vector.shape_cast %641 : vector<8xf32> to vector<1x8xf32>
    tpu.vector_store %arg7[%c16_879, %c0_880], %644 {strides = array<i32>} : memref<36x64xf32, #tpu.memory_space<vmem>>, vector<1x8xf32>,
    %c0_881 = arith.constant 0 : index
    %c1_882 = arith.constant 1 : index
    %c1_883 = arith.constant 1 : index
    %c4_884 = arith.constant 4 : index
    %c0_885 = arith.constant 0 : index
    %645 = vector.load %arg2[%c0_881, %c1_882, %c1_883, %c4_884, %c0_885] : memref<1x2x4x18x9xf32, #tpu.memory_space<vmem>>, vector<1x1x1x1x8xf32>
    %646 = vector.shape_cast %645 : vector<1x1x1x1x8xf32> to vector<8xf32>
    %c16_886 = arith.constant 16 : index
    %c8_887 = arith.constant 8 : index
    %647 = vector.load %arg7[%c16_886, %c8_887] : memref<36x64xf32, #tpu.memory_space<vmem>>, vector<1x8xf32>
    %648 = vector.shape_cast %647 : vector<1x8xf32> to vector<8xf32>
    %649 = vector.shape_cast %646 : vector<8xf32> to vector<1x8xf32>
    tpu.vector_store %arg7[%c16_886, %c8_887], %649 {strides = array<i32>} : memref<36x64xf32, #tpu.memory_space<vmem>>, vector<1x8xf32>,
    %c0_888 = arith.constant 0 : index
    %c1_889 = arith.constant 1 : index
    %c1_890 = arith.constant 1 : index
    %c6_891 = arith.constant 6 : index
    %c0_892 = arith.constant 0 : index
    %650 = vector.load %arg2[%c0_888, %c1_889, %c1_890, %c6_891, %c0_892] : memref<1x2x4x18x9xf32, #tpu.memory_space<vmem>>, vector<1x1x1x1x8xf32>
    %651 = vector.shape_cast %650 : vector<1x1x1x1x8xf32> to vector<8xf32>
    %c16_893 = arith.constant 16 : index
    %c16_894 = arith.constant 16 : index
    %652 = vector.load %arg7[%c16_893, %c16_894] : memref<36x64xf32, #tpu.memory_space<vmem>>, vector<1x8xf32>
    %653 = vector.shape_cast %652 : vector<1x8xf32> to vector<8xf32>
    %654 = vector.shape_cast %651 : vector<8xf32> to vector<1x8xf32>
    tpu.vector_store %arg7[%c16_893, %c16_894], %654 {strides = array<i32>} : memref<36x64xf32, #tpu.memory_space<vmem>>, vector<1x8xf32>,
    %c0_895 = arith.constant 0 : index
    %c1_896 = arith.constant 1 : index
    %c1_897 = arith.constant 1 : index
    %c8_898 = arith.constant 8 : index
    %c0_899 = arith.constant 0 : index
    %655 = vector.load %arg2[%c0_895, %c1_896, %c1_897, %c8_898, %c0_899] : memref<1x2x4x18x9xf32, #tpu.memory_space<vmem>>, vector<1x1x1x1x8xf32>
    %656 = vector.shape_cast %655 : vector<1x1x1x1x8xf32> to vector<8xf32>
    %c16_900 = arith.constant 16 : index
    %c24_901 = arith.constant 24 : index
    %657 = vector.load %arg7[%c16_900, %c24_901] : memref<36x64xf32, #tpu.memory_space<vmem>>, vector<1x8xf32>
    %658 = vector.shape_cast %657 : vector<1x8xf32> to vector<8xf32>
    %659 = vector.shape_cast %656 : vector<8xf32> to vector<1x8xf32>
    tpu.vector_store %arg7[%c16_900, %c24_901], %659 {strides = array<i32>} : memref<36x64xf32, #tpu.memory_space<vmem>>, vector<1x8xf32>,
    %c0_902 = arith.constant 0 : index
    %c1_903 = arith.constant 1 : index
    %c1_904 = arith.constant 1 : index
    %c10_905 = arith.constant 10 : index
    %c0_906 = arith.constant 0 : index
    %660 = vector.load %arg2[%c0_902, %c1_903, %c1_904, %c10_905, %c0_906] : memref<1x2x4x18x9xf32, #tpu.memory_space<vmem>>, vector<1x1x1x1x8xf32>
    %661 = vector.shape_cast %660 : vector<1x1x1x1x8xf32> to vector<8xf32>
    %c16_907 = arith.constant 16 : index
    %c32_908 = arith.constant 32 : index
    %662 = vector.load %arg7[%c16_907, %c32_908] : memref<36x64xf32, #tpu.memory_space<vmem>>, vector<1x8xf32>
    %663 = vector.shape_cast %662 : vector<1x8xf32> to vector<8xf32>
    %664 = vector.shape_cast %661 : vector<8xf32> to vector<1x8xf32>
    tpu.vector_store %arg7[%c16_907, %c32_908], %664 {strides = array<i32>} : memref<36x64xf32, #tpu.memory_space<vmem>>, vector<1x8xf32>,
    %c0_909 = arith.constant 0 : index
    %c1_910 = arith.constant 1 : index
    %c1_911 = arith.constant 1 : index
    %c12_912 = arith.constant 12 : index
    %c0_913 = arith.constant 0 : index
    %665 = vector.load %arg2[%c0_909, %c1_910, %c1_911, %c12_912, %c0_913] : memref<1x2x4x18x9xf32, #tpu.memory_space<vmem>>, vector<1x1x1x1x8xf32>
    %666 = vector.shape_cast %665 : vector<1x1x1x1x8xf32> to vector<8xf32>
    %c16_914 = arith.constant 16 : index
    %c40_915 = arith.constant 40 : index
    %667 = vector.load %arg7[%c16_914, %c40_915] : memref<36x64xf32, #tpu.memory_space<vmem>>, vector<1x8xf32>
    %668 = vector.shape_cast %667 : vector<1x8xf32> to vector<8xf32>
    %669 = vector.shape_cast %666 : vector<8xf32> to vector<1x8xf32>
    tpu.vector_store %arg7[%c16_914, %c40_915], %669 {strides = array<i32>} : memref<36x64xf32, #tpu.memory_space<vmem>>, vector<1x8xf32>,
    %c0_916 = arith.constant 0 : index
    %c1_917 = arith.constant 1 : index
    %c1_918 = arith.constant 1 : index
    %c14_919 = arith.constant 14 : index
    %c0_920 = arith.constant 0 : index
    %670 = vector.load %arg2[%c0_916, %c1_917, %c1_918, %c14_919, %c0_920] : memref<1x2x4x18x9xf32, #tpu.memory_space<vmem>>, vector<1x1x1x1x8xf32>
    %671 = vector.shape_cast %670 : vector<1x1x1x1x8xf32> to vector<8xf32>
    %c16_921 = arith.constant 16 : index
    %c48_922 = arith.constant 48 : index
    %672 = vector.load %arg7[%c16_921, %c48_922] : memref<36x64xf32, #tpu.memory_space<vmem>>, vector<1x8xf32>
    %673 = vector.shape_cast %672 : vector<1x8xf32> to vector<8xf32>
    %674 = vector.shape_cast %671 : vector<8xf32> to vector<1x8xf32>
    tpu.vector_store %arg7[%c16_921, %c48_922], %674 {strides = array<i32>} : memref<36x64xf32, #tpu.memory_space<vmem>>, vector<1x8xf32>,
    %c0_923 = arith.constant 0 : index
    %c1_924 = arith.constant 1 : index
    %c1_925 = arith.constant 1 : index
    %c16_926 = arith.constant 16 : index
    %c0_927 = arith.constant 0 : index
    %675 = vector.load %arg2[%c0_923, %c1_924, %c1_925, %c16_926, %c0_927] : memref<1x2x4x18x9xf32, #tpu.memory_space<vmem>>, vector<1x1x1x1x8xf32>
    %676 = vector.shape_cast %675 : vector<1x1x1x1x8xf32> to vector<8xf32>
    %c16_928 = arith.constant 16 : index
    %c56_929 = arith.constant 56 : index
    %677 = vector.load %arg7[%c16_928, %c56_929] : memref<36x64xf32, #tpu.memory_space<vmem>>, vector<1x8xf32>
    %678 = vector.shape_cast %677 : vector<1x8xf32> to vector<8xf32>
    %679 = vector.shape_cast %676 : vector<8xf32> to vector<1x8xf32>
    tpu.vector_store %arg7[%c16_928, %c56_929], %679 {strides = array<i32>} : memref<36x64xf32, #tpu.memory_space<vmem>>, vector<1x8xf32>,
    %c0_930 = arith.constant 0 : index
    %c0_931 = arith.constant 0 : index
    %c1_932 = arith.constant 1 : index
    %c2_933 = arith.constant 2 : index
    %c1_934 = arith.constant 1 : index
    %680 = vector.load %arg2[%c0_930, %c0_931, %c1_932, %c2_933, %c1_934] : memref<1x2x4x18x9xf32, #tpu.memory_space<vmem>>, vector<1x1x1x1x8xf32>
    %681 = vector.shape_cast %680 : vector<1x1x1x1x8xf32> to vector<8xf32>
    %c17 = arith.constant 17 : index
    %c0_935 = arith.constant 0 : index
    %682 = vector.load %arg7[%c17, %c0_935] : memref<36x64xf32, #tpu.memory_space<vmem>>, vector<1x8xf32>
    %683 = vector.shape_cast %682 : vector<1x8xf32> to vector<8xf32>
    %684 = vector.shape_cast %681 : vector<8xf32> to vector<1x8xf32>
    tpu.vector_store %arg7[%c17, %c0_935], %684 {strides = array<i32>} : memref<36x64xf32, #tpu.memory_space<vmem>>, vector<1x8xf32>,
    %c0_936 = arith.constant 0 : index
    %c0_937 = arith.constant 0 : index
    %c1_938 = arith.constant 1 : index
    %c4_939 = arith.constant 4 : index
    %c1_940 = arith.constant 1 : index
    %685 = vector.load %arg2[%c0_936, %c0_937, %c1_938, %c4_939, %c1_940] : memref<1x2x4x18x9xf32, #tpu.memory_space<vmem>>, vector<1x1x1x1x8xf32>
    %686 = vector.shape_cast %685 : vector<1x1x1x1x8xf32> to vector<8xf32>
    %c17_941 = arith.constant 17 : index
    %c8_942 = arith.constant 8 : index
    %687 = vector.load %arg7[%c17_941, %c8_942] : memref<36x64xf32, #tpu.memory_space<vmem>>, vector<1x8xf32>
    %688 = vector.shape_cast %687 : vector<1x8xf32> to vector<8xf32>
    %689 = vector.shape_cast %686 : vector<8xf32> to vector<1x8xf32>
    tpu.vector_store %arg7[%c17_941, %c8_942], %689 {strides = array<i32>} : memref<36x64xf32, #tpu.memory_space<vmem>>, vector<1x8xf32>,
    %c0_943 = arith.constant 0 : index
    %c0_944 = arith.constant 0 : index
    %c1_945 = arith.constant 1 : index
    %c6_946 = arith.constant 6 : index
    %c1_947 = arith.constant 1 : index
    %690 = vector.load %arg2[%c0_943, %c0_944, %c1_945, %c6_946, %c1_947] : memref<1x2x4x18x9xf32, #tpu.memory_space<vmem>>, vector<1x1x1x1x8xf32>
    %691 = vector.shape_cast %690 : vector<1x1x1x1x8xf32> to vector<8xf32>
    %c17_948 = arith.constant 17 : index
    %c16_949 = arith.constant 16 : index
    %692 = vector.load %arg7[%c17_948, %c16_949] : memref<36x64xf32, #tpu.memory_space<vmem>>, vector<1x8xf32>
    %693 = vector.shape_cast %692 : vector<1x8xf32> to vector<8xf32>
    %694 = vector.shape_cast %691 : vector<8xf32> to vector<1x8xf32>
    tpu.vector_store %arg7[%c17_948, %c16_949], %694 {strides = array<i32>} : memref<36x64xf32, #tpu.memory_space<vmem>>, vector<1x8xf32>,
    %c0_950 = arith.constant 0 : index
    %c0_951 = arith.constant 0 : index
    %c1_952 = arith.constant 1 : index
    %c8_953 = arith.constant 8 : index
    %c1_954 = arith.constant 1 : index
    %695 = vector.load %arg2[%c0_950, %c0_951, %c1_952, %c8_953, %c1_954] : memref<1x2x4x18x9xf32, #tpu.memory_space<vmem>>, vector<1x1x1x1x8xf32>
    %696 = vector.shape_cast %695 : vector<1x1x1x1x8xf32> to vector<8xf32>
    %c17_955 = arith.constant 17 : index
    %c24_956 = arith.constant 24 : index
    %697 = vector.load %arg7[%c17_955, %c24_956] : memref<36x64xf32, #tpu.memory_space<vmem>>, vector<1x8xf32>
    %698 = vector.shape_cast %697 : vector<1x8xf32> to vector<8xf32>
    %699 = vector.shape_cast %696 : vector<8xf32> to vector<1x8xf32>
    tpu.vector_store %arg7[%c17_955, %c24_956], %699 {strides = array<i32>} : memref<36x64xf32, #tpu.memory_space<vmem>>, vector<1x8xf32>,
    %c0_957 = arith.constant 0 : index
    %c0_958 = arith.constant 0 : index
    %c1_959 = arith.constant 1 : index
    %c10_960 = arith.constant 10 : index
    %c1_961 = arith.constant 1 : index
    %700 = vector.load %arg2[%c0_957, %c0_958, %c1_959, %c10_960, %c1_961] : memref<1x2x4x18x9xf32, #tpu.memory_space<vmem>>, vector<1x1x1x1x8xf32>
    %701 = vector.shape_cast %700 : vector<1x1x1x1x8xf32> to vector<8xf32>
    %c17_962 = arith.constant 17 : index
    %c32_963 = arith.constant 32 : index
    %702 = vector.load %arg7[%c17_962, %c32_963] : memref<36x64xf32, #tpu.memory_space<vmem>>, vector<1x8xf32>
    %703 = vector.shape_cast %702 : vector<1x8xf32> to vector<8xf32>
    %704 = vector.shape_cast %701 : vector<8xf32> to vector<1x8xf32>
    tpu.vector_store %arg7[%c17_962, %c32_963], %704 {strides = array<i32>} : memref<36x64xf32, #tpu.memory_space<vmem>>, vector<1x8xf32>,
    %c0_964 = arith.constant 0 : index
    %c0_965 = arith.constant 0 : index
    %c1_966 = arith.constant 1 : index
    %c12_967 = arith.constant 12 : index
    %c1_968 = arith.constant 1 : index
    %705 = vector.load %arg2[%c0_964, %c0_965, %c1_966, %c12_967, %c1_968] : memref<1x2x4x18x9xf32, #tpu.memory_space<vmem>>, vector<1x1x1x1x8xf32>
    %706 = vector.shape_cast %705 : vector<1x1x1x1x8xf32> to vector<8xf32>
    %c17_969 = arith.constant 17 : index
    %c40_970 = arith.constant 40 : index
    %707 = vector.load %arg7[%c17_969, %c40_970] : memref<36x64xf32, #tpu.memory_space<vmem>>, vector<1x8xf32>
    %708 = vector.shape_cast %707 : vector<1x8xf32> to vector<8xf32>
    %709 = vector.shape_cast %706 : vector<8xf32> to vector<1x8xf32>
    tpu.vector_store %arg7[%c17_969, %c40_970], %709 {strides = array<i32>} : memref<36x64xf32, #tpu.memory_space<vmem>>, vector<1x8xf32>,
    %c0_971 = arith.constant 0 : index
    %c0_972 = arith.constant 0 : index
    %c1_973 = arith.constant 1 : index
    %c14_974 = arith.constant 14 : index
    %c1_975 = arith.constant 1 : index
    %710 = vector.load %arg2[%c0_971, %c0_972, %c1_973, %c14_974, %c1_975] : memref<1x2x4x18x9xf32, #tpu.memory_space<vmem>>, vector<1x1x1x1x8xf32>
    %711 = vector.shape_cast %710 : vector<1x1x1x1x8xf32> to vector<8xf32>
    %c17_976 = arith.constant 17 : index
    %c48_977 = arith.constant 48 : index
    %712 = vector.load %arg7[%c17_976, %c48_977] : memref<36x64xf32, #tpu.memory_space<vmem>>, vector<1x8xf32>
    %713 = vector.shape_cast %712 : vector<1x8xf32> to vector<8xf32>
    %714 = vector.shape_cast %711 : vector<8xf32> to vector<1x8xf32>
    tpu.vector_store %arg7[%c17_976, %c48_977], %714 {strides = array<i32>} : memref<36x64xf32, #tpu.memory_space<vmem>>, vector<1x8xf32>,
    %c0_978 = arith.constant 0 : index
    %c0_979 = arith.constant 0 : index
    %c1_980 = arith.constant 1 : index
    %c16_981 = arith.constant 16 : index
    %c1_982 = arith.constant 1 : index
    %715 = vector.load %arg2[%c0_978, %c0_979, %c1_980, %c16_981, %c1_982] : memref<1x2x4x18x9xf32, #tpu.memory_space<vmem>>, vector<1x1x1x1x8xf32>
    %716 = vector.shape_cast %715 : vector<1x1x1x1x8xf32> to vector<8xf32>
    %c17_983 = arith.constant 17 : index
    %c56_984 = arith.constant 56 : index
    %717 = vector.load %arg7[%c17_983, %c56_984] : memref<36x64xf32, #tpu.memory_space<vmem>>, vector<1x8xf32>
    %718 = vector.shape_cast %717 : vector<1x8xf32> to vector<8xf32>
    %719 = vector.shape_cast %716 : vector<8xf32> to vector<1x8xf32>
    tpu.vector_store %arg7[%c17_983, %c56_984], %719 {strides = array<i32>} : memref<36x64xf32, #tpu.memory_space<vmem>>, vector<1x8xf32>,
    %c0_985 = arith.constant 0 : index
    %c0_986 = arith.constant 0 : index
    %c2_987 = arith.constant 2 : index
    %c0_988 = arith.constant 0 : index
    %c0_989 = arith.constant 0 : index
    %720 = vector.load %arg2[%c0_985, %c0_986, %c2_987, %c0_988, %c0_989] : memref<1x2x4x18x9xf32, #tpu.memory_space<vmem>>, vector<1x1x1x1x8xf32>
    %721 = vector.shape_cast %720 : vector<1x1x1x1x8xf32> to vector<8xf32>
    %c18 = arith.constant 18 : index
    %c0_990 = arith.constant 0 : index
    %722 = vector.load %arg7[%c18, %c0_990] : memref<36x64xf32, #tpu.memory_space<vmem>>, vector<1x8xf32>
    %723 = vector.shape_cast %722 : vector<1x8xf32> to vector<8xf32>
    %724 = vector.shape_cast %721 : vector<8xf32> to vector<1x8xf32>
    tpu.vector_store %arg7[%c18, %c0_990], %724 {strides = array<i32>} : memref<36x64xf32, #tpu.memory_space<vmem>>, vector<1x8xf32>,
    %c0_991 = arith.constant 0 : index
    %c0_992 = arith.constant 0 : index
    %c2_993 = arith.constant 2 : index
    %c2_994 = arith.constant 2 : index
    %c0_995 = arith.constant 0 : index
    %725 = vector.load %arg2[%c0_991, %c0_992, %c2_993, %c2_994, %c0_995] : memref<1x2x4x18x9xf32, #tpu.memory_space<vmem>>, vector<1x1x1x1x8xf32>
    %726 = vector.shape_cast %725 : vector<1x1x1x1x8xf32> to vector<8xf32>
    %c18_996 = arith.constant 18 : index
    %c8_997 = arith.constant 8 : index
    %727 = vector.load %arg7[%c18_996, %c8_997] : memref<36x64xf32, #tpu.memory_space<vmem>>, vector<1x8xf32>
    %728 = vector.shape_cast %727 : vector<1x8xf32> to vector<8xf32>
    %729 = vector.shape_cast %726 : vector<8xf32> to vector<1x8xf32>
    tpu.vector_store %arg7[%c18_996, %c8_997], %729 {strides = array<i32>} : memref<36x64xf32, #tpu.memory_space<vmem>>, vector<1x8xf32>,
    %c0_998 = arith.constant 0 : index
    %c0_999 = arith.constant 0 : index
    %c2_1000 = arith.constant 2 : index
    %c4_1001 = arith.constant 4 : index
    %c0_1002 = arith.constant 0 : index
    %730 = vector.load %arg2[%c0_998, %c0_999, %c2_1000, %c4_1001, %c0_1002] : memref<1x2x4x18x9xf32, #tpu.memory_space<vmem>>, vector<1x1x1x1x8xf32>
    %731 = vector.shape_cast %730 : vector<1x1x1x1x8xf32> to vector<8xf32>
    %c18_1003 = arith.constant 18 : index
    %c16_1004 = arith.constant 16 : index
    %732 = vector.load %arg7[%c18_1003, %c16_1004] : memref<36x64xf32, #tpu.memory_space<vmem>>, vector<1x8xf32>
    %733 = vector.shape_cast %732 : vector<1x8xf32> to vector<8xf32>
    %734 = vector.shape_cast %731 : vector<8xf32> to vector<1x8xf32>
    tpu.vector_store %arg7[%c18_1003, %c16_1004], %734 {strides = array<i32>} : memref<36x64xf32, #tpu.memory_space<vmem>>, vector<1x8xf32>,
    %c0_1005 = arith.constant 0 : index
    %c0_1006 = arith.constant 0 : index
    %c2_1007 = arith.constant 2 : index
    %c6_1008 = arith.constant 6 : index
    %c0_1009 = arith.constant 0 : index
    %735 = vector.load %arg2[%c0_1005, %c0_1006, %c2_1007, %c6_1008, %c0_1009] : memref<1x2x4x18x9xf32, #tpu.memory_space<vmem>>, vector<1x1x1x1x8xf32>
    %736 = vector.shape_cast %735 : vector<1x1x1x1x8xf32> to vector<8xf32>
    %c18_1010 = arith.constant 18 : index
    %c24_1011 = arith.constant 24 : index
    %737 = vector.load %arg7[%c18_1010, %c24_1011] : memref<36x64xf32, #tpu.memory_space<vmem>>, vector<1x8xf32>
    %738 = vector.shape_cast %737 : vector<1x8xf32> to vector<8xf32>
    %739 = vector.shape_cast %736 : vector<8xf32> to vector<1x8xf32>
    tpu.vector_store %arg7[%c18_1010, %c24_1011], %739 {strides = array<i32>} : memref<36x64xf32, #tpu.memory_space<vmem>>, vector<1x8xf32>,
    %c0_1012 = arith.constant 0 : index
    %c0_1013 = arith.constant 0 : index
    %c2_1014 = arith.constant 2 : index
    %c8_1015 = arith.constant 8 : index
    %c0_1016 = arith.constant 0 : index
    %740 = vector.load %arg2[%c0_1012, %c0_1013, %c2_1014, %c8_1015, %c0_1016] : memref<1x2x4x18x9xf32, #tpu.memory_space<vmem>>, vector<1x1x1x1x8xf32>
    %741 = vector.shape_cast %740 : vector<1x1x1x1x8xf32> to vector<8xf32>
    %c18_1017 = arith.constant 18 : index
    %c32_1018 = arith.constant 32 : index
    %742 = vector.load %arg7[%c18_1017, %c32_1018] : memref<36x64xf32, #tpu.memory_space<vmem>>, vector<1x8xf32>
    %743 = vector.shape_cast %742 : vector<1x8xf32> to vector<8xf32>
    %744 = vector.shape_cast %741 : vector<8xf32> to vector<1x8xf32>
    tpu.vector_store %arg7[%c18_1017, %c32_1018], %744 {strides = array<i32>} : memref<36x64xf32, #tpu.memory_space<vmem>>, vector<1x8xf32>,
    %c0_1019 = arith.constant 0 : index
    %c0_1020 = arith.constant 0 : index
    %c2_1021 = arith.constant 2 : index
    %c10_1022 = arith.constant 10 : index
    %c0_1023 = arith.constant 0 : index
    %745 = vector.load %arg2[%c0_1019, %c0_1020, %c2_1021, %c10_1022, %c0_1023] : memref<1x2x4x18x9xf32, #tpu.memory_space<vmem>>, vector<1x1x1x1x8xf32>
    %746 = vector.shape_cast %745 : vector<1x1x1x1x8xf32> to vector<8xf32>
    %c18_1024 = arith.constant 18 : index
    %c40_1025 = arith.constant 40 : index
    %747 = vector.load %arg7[%c18_1024, %c40_1025] : memref<36x64xf32, #tpu.memory_space<vmem>>, vector<1x8xf32>
    %748 = vector.shape_cast %747 : vector<1x8xf32> to vector<8xf32>
    %749 = vector.shape_cast %746 : vector<8xf32> to vector<1x8xf32>
    tpu.vector_store %arg7[%c18_1024, %c40_1025], %749 {strides = array<i32>} : memref<36x64xf32, #tpu.memory_space<vmem>>, vector<1x8xf32>,
    %c0_1026 = arith.constant 0 : index
    %c0_1027 = arith.constant 0 : index
    %c2_1028 = arith.constant 2 : index
    %c12_1029 = arith.constant 12 : index
    %c0_1030 = arith.constant 0 : index
    %750 = vector.load %arg2[%c0_1026, %c0_1027, %c2_1028, %c12_1029, %c0_1030] : memref<1x2x4x18x9xf32, #tpu.memory_space<vmem>>, vector<1x1x1x1x8xf32>
    %751 = vector.shape_cast %750 : vector<1x1x1x1x8xf32> to vector<8xf32>
    %c18_1031 = arith.constant 18 : index
    %c48_1032 = arith.constant 48 : index
    %752 = vector.load %arg7[%c18_1031, %c48_1032] : memref<36x64xf32, #tpu.memory_space<vmem>>, vector<1x8xf32>
    %753 = vector.shape_cast %752 : vector<1x8xf32> to vector<8xf32>
    %754 = vector.shape_cast %751 : vector<8xf32> to vector<1x8xf32>
    tpu.vector_store %arg7[%c18_1031, %c48_1032], %754 {strides = array<i32>} : memref<36x64xf32, #tpu.memory_space<vmem>>, vector<1x8xf32>,
    %c0_1033 = arith.constant 0 : index
    %c0_1034 = arith.constant 0 : index
    %c2_1035 = arith.constant 2 : index
    %c14_1036 = arith.constant 14 : index
    %c0_1037 = arith.constant 0 : index
    %755 = vector.load %arg2[%c0_1033, %c0_1034, %c2_1035, %c14_1036, %c0_1037] : memref<1x2x4x18x9xf32, #tpu.memory_space<vmem>>, vector<1x1x1x1x8xf32>
    %756 = vector.shape_cast %755 : vector<1x1x1x1x8xf32> to vector<8xf32>
    %c18_1038 = arith.constant 18 : index
    %c56_1039 = arith.constant 56 : index
    %757 = vector.load %arg7[%c18_1038, %c56_1039] : memref<36x64xf32, #tpu.memory_space<vmem>>, vector<1x8xf32>
    %758 = vector.shape_cast %757 : vector<1x8xf32> to vector<8xf32>
    %759 = vector.shape_cast %756 : vector<8xf32> to vector<1x8xf32>
    tpu.vector_store %arg7[%c18_1038, %c56_1039], %759 {strides = array<i32>} : memref<36x64xf32, #tpu.memory_space<vmem>>, vector<1x8xf32>,
    %c0_1040 = arith.constant 0 : index
    %c1_1041 = arith.constant 1 : index
    %c2_1042 = arith.constant 2 : index
    %c0_1043 = arith.constant 0 : index
    %c0_1044 = arith.constant 0 : index
    %760 = vector.load %arg2[%c0_1040, %c1_1041, %c2_1042, %c0_1043, %c0_1044] : memref<1x2x4x18x9xf32, #tpu.memory_space<vmem>>, vector<1x1x1x1x8xf32>
    %761 = vector.shape_cast %760 : vector<1x1x1x1x8xf32> to vector<8xf32>
    %c19 = arith.constant 19 : index
    %c0_1045 = arith.constant 0 : index
    %762 = vector.load %arg7[%c19, %c0_1045] : memref<36x64xf32, #tpu.memory_space<vmem>>, vector<1x8xf32>
    %763 = vector.shape_cast %762 : vector<1x8xf32> to vector<8xf32>
    %764 = vector.shape_cast %761 : vector<8xf32> to vector<1x8xf32>
    tpu.vector_store %arg7[%c19, %c0_1045], %764 {strides = array<i32>} : memref<36x64xf32, #tpu.memory_space<vmem>>, vector<1x8xf32>,
    %c0_1046 = arith.constant 0 : index
    %c1_1047 = arith.constant 1 : index
    %c2_1048 = arith.constant 2 : index
    %c2_1049 = arith.constant 2 : index
    %c0_1050 = arith.constant 0 : index
    %765 = vector.load %arg2[%c0_1046, %c1_1047, %c2_1048, %c2_1049, %c0_1050] : memref<1x2x4x18x9xf32, #tpu.memory_space<vmem>>, vector<1x1x1x1x8xf32>
    %766 = vector.shape_cast %765 : vector<1x1x1x1x8xf32> to vector<8xf32>
    %c19_1051 = arith.constant 19 : index
    %c8_1052 = arith.constant 8 : index
    %767 = vector.load %arg7[%c19_1051, %c8_1052] : memref<36x64xf32, #tpu.memory_space<vmem>>, vector<1x8xf32>
    %768 = vector.shape_cast %767 : vector<1x8xf32> to vector<8xf32>
    %769 = vector.shape_cast %766 : vector<8xf32> to vector<1x8xf32>
    tpu.vector_store %arg7[%c19_1051, %c8_1052], %769 {strides = array<i32>} : memref<36x64xf32, #tpu.memory_space<vmem>>, vector<1x8xf32>,
    %c0_1053 = arith.constant 0 : index
    %c1_1054 = arith.constant 1 : index
    %c2_1055 = arith.constant 2 : index
    %c4_1056 = arith.constant 4 : index
    %c0_1057 = arith.constant 0 : index
    %770 = vector.load %arg2[%c0_1053, %c1_1054, %c2_1055, %c4_1056, %c0_1057] : memref<1x2x4x18x9xf32, #tpu.memory_space<vmem>>, vector<1x1x1x1x8xf32>
    %771 = vector.shape_cast %770 : vector<1x1x1x1x8xf32> to vector<8xf32>
    %c19_1058 = arith.constant 19 : index
    %c16_1059 = arith.constant 16 : index
    %772 = vector.load %arg7[%c19_1058, %c16_1059] : memref<36x64xf32, #tpu.memory_space<vmem>>, vector<1x8xf32>
    %773 = vector.shape_cast %772 : vector<1x8xf32> to vector<8xf32>
    %774 = vector.shape_cast %771 : vector<8xf32> to vector<1x8xf32>
    tpu.vector_store %arg7[%c19_1058, %c16_1059], %774 {strides = array<i32>} : memref<36x64xf32, #tpu.memory_space<vmem>>, vector<1x8xf32>,
    %c0_1060 = arith.constant 0 : index
    %c1_1061 = arith.constant 1 : index
    %c2_1062 = arith.constant 2 : index
    %c6_1063 = arith.constant 6 : index
    %c0_1064 = arith.constant 0 : index
    %775 = vector.load %arg2[%c0_1060, %c1_1061, %c2_1062, %c6_1063, %c0_1064] : memref<1x2x4x18x9xf32, #tpu.memory_space<vmem>>, vector<1x1x1x1x8xf32>
    %776 = vector.shape_cast %775 : vector<1x1x1x1x8xf32> to vector<8xf32>
    %c19_1065 = arith.constant 19 : index
    %c24_1066 = arith.constant 24 : index
    %777 = vector.load %arg7[%c19_1065, %c24_1066] : memref<36x64xf32, #tpu.memory_space<vmem>>, vector<1x8xf32>
    %778 = vector.shape_cast %777 : vector<1x8xf32> to vector<8xf32>
    %779 = vector.shape_cast %776 : vector<8xf32> to vector<1x8xf32>
    tpu.vector_store %arg7[%c19_1065, %c24_1066], %779 {strides = array<i32>} : memref<36x64xf32, #tpu.memory_space<vmem>>, vector<1x8xf32>,
    %c0_1067 = arith.constant 0 : index
    %c1_1068 = arith.constant 1 : index
    %c2_1069 = arith.constant 2 : index
    %c8_1070 = arith.constant 8 : index
    %c0_1071 = arith.constant 0 : index
    %780 = vector.load %arg2[%c0_1067, %c1_1068, %c2_1069, %c8_1070, %c0_1071] : memref<1x2x4x18x9xf32, #tpu.memory_space<vmem>>, vector<1x1x1x1x8xf32>
    %781 = vector.shape_cast %780 : vector<1x1x1x1x8xf32> to vector<8xf32>
    %c19_1072 = arith.constant 19 : index
    %c32_1073 = arith.constant 32 : index
    %782 = vector.load %arg7[%c19_1072, %c32_1073] : memref<36x64xf32, #tpu.memory_space<vmem>>, vector<1x8xf32>
    %783 = vector.shape_cast %782 : vector<1x8xf32> to vector<8xf32>
    %784 = vector.shape_cast %781 : vector<8xf32> to vector<1x8xf32>
    tpu.vector_store %arg7[%c19_1072, %c32_1073], %784 {strides = array<i32>} : memref<36x64xf32, #tpu.memory_space<vmem>>, vector<1x8xf32>,
    %c0_1074 = arith.constant 0 : index
    %c1_1075 = arith.constant 1 : index
    %c2_1076 = arith.constant 2 : index
    %c10_1077 = arith.constant 10 : index
    %c0_1078 = arith.constant 0 : index
    %785 = vector.load %arg2[%c0_1074, %c1_1075, %c2_1076, %c10_1077, %c0_1078] : memref<1x2x4x18x9xf32, #tpu.memory_space<vmem>>, vector<1x1x1x1x8xf32>
    %786 = vector.shape_cast %785 : vector<1x1x1x1x8xf32> to vector<8xf32>
    %c19_1079 = arith.constant 19 : index
    %c40_1080 = arith.constant 40 : index
    %787 = vector.load %arg7[%c19_1079, %c40_1080] : memref<36x64xf32, #tpu.memory_space<vmem>>, vector<1x8xf32>
    %788 = vector.shape_cast %787 : vector<1x8xf32> to vector<8xf32>
    %789 = vector.shape_cast %786 : vector<8xf32> to vector<1x8xf32>
    tpu.vector_store %arg7[%c19_1079, %c40_1080], %789 {strides = array<i32>} : memref<36x64xf32, #tpu.memory_space<vmem>>, vector<1x8xf32>,
    %c0_1081 = arith.constant 0 : index
    %c1_1082 = arith.constant 1 : index
    %c2_1083 = arith.constant 2 : index
    %c12_1084 = arith.constant 12 : index
    %c0_1085 = arith.constant 0 : index
    %790 = vector.load %arg2[%c0_1081, %c1_1082, %c2_1083, %c12_1084, %c0_1085] : memref<1x2x4x18x9xf32, #tpu.memory_space<vmem>>, vector<1x1x1x1x8xf32>
    %791 = vector.shape_cast %790 : vector<1x1x1x1x8xf32> to vector<8xf32>
    %c19_1086 = arith.constant 19 : index
    %c48_1087 = arith.constant 48 : index
    %792 = vector.load %arg7[%c19_1086, %c48_1087] : memref<36x64xf32, #tpu.memory_space<vmem>>, vector<1x8xf32>
    %793 = vector.shape_cast %792 : vector<1x8xf32> to vector<8xf32>
    %794 = vector.shape_cast %791 : vector<8xf32> to vector<1x8xf32>
    tpu.vector_store %arg7[%c19_1086, %c48_1087], %794 {strides = array<i32>} : memref<36x64xf32, #tpu.memory_space<vmem>>, vector<1x8xf32>,
    %c0_1088 = arith.constant 0 : index
    %c1_1089 = arith.constant 1 : index
    %c2_1090 = arith.constant 2 : index
    %c14_1091 = arith.constant 14 : index
    %c0_1092 = arith.constant 0 : index
    %795 = vector.load %arg2[%c0_1088, %c1_1089, %c2_1090, %c14_1091, %c0_1092] : memref<1x2x4x18x9xf32, #tpu.memory_space<vmem>>, vector<1x1x1x1x8xf32>
    %796 = vector.shape_cast %795 : vector<1x1x1x1x8xf32> to vector<8xf32>
    %c19_1093 = arith.constant 19 : index
    %c56_1094 = arith.constant 56 : index
    %797 = vector.load %arg7[%c19_1093, %c56_1094] : memref<36x64xf32, #tpu.memory_space<vmem>>, vector<1x8xf32>
    %798 = vector.shape_cast %797 : vector<1x8xf32> to vector<8xf32>
    %799 = vector.shape_cast %796 : vector<8xf32> to vector<1x8xf32>
    tpu.vector_store %arg7[%c19_1093, %c56_1094], %799 {strides = array<i32>} : memref<36x64xf32, #tpu.memory_space<vmem>>, vector<1x8xf32>,
    %c0_1095 = arith.constant 0 : index
    %c0_1096 = arith.constant 0 : index
    %c2_1097 = arith.constant 2 : index
    %c0_1098 = arith.constant 0 : index
    %c1_1099 = arith.constant 1 : index
    %800 = vector.load %arg2[%c0_1095, %c0_1096, %c2_1097, %c0_1098, %c1_1099] : memref<1x2x4x18x9xf32, #tpu.memory_space<vmem>>, vector<1x1x1x1x8xf32>
    %801 = vector.shape_cast %800 : vector<1x1x1x1x8xf32> to vector<8xf32>
    %c20 = arith.constant 20 : index
    %c0_1100 = arith.constant 0 : index
    %802 = vector.load %arg7[%c20, %c0_1100] : memref<36x64xf32, #tpu.memory_space<vmem>>, vector<1x8xf32>
    %803 = vector.shape_cast %802 : vector<1x8xf32> to vector<8xf32>
    %804 = vector.shape_cast %801 : vector<8xf32> to vector<1x8xf32>
    tpu.vector_store %arg7[%c20, %c0_1100], %804 {strides = array<i32>} : memref<36x64xf32, #tpu.memory_space<vmem>>, vector<1x8xf32>,
    %c0_1101 = arith.constant 0 : index
    %c0_1102 = arith.constant 0 : index
    %c2_1103 = arith.constant 2 : index
    %c2_1104 = arith.constant 2 : index
    %c1_1105 = arith.constant 1 : index
    %805 = vector.load %arg2[%c0_1101, %c0_1102, %c2_1103, %c2_1104, %c1_1105] : memref<1x2x4x18x9xf32, #tpu.memory_space<vmem>>, vector<1x1x1x1x8xf32>
    %806 = vector.shape_cast %805 : vector<1x1x1x1x8xf32> to vector<8xf32>
    %c20_1106 = arith.constant 20 : index
    %c8_1107 = arith.constant 8 : index
    %807 = vector.load %arg7[%c20_1106, %c8_1107] : memref<36x64xf32, #tpu.memory_space<vmem>>, vector<1x8xf32>
    %808 = vector.shape_cast %807 : vector<1x8xf32> to vector<8xf32>
    %809 = vector.shape_cast %806 : vector<8xf32> to vector<1x8xf32>
    tpu.vector_store %arg7[%c20_1106, %c8_1107], %809 {strides = array<i32>} : memref<36x64xf32, #tpu.memory_space<vmem>>, vector<1x8xf32>,
    %c0_1108 = arith.constant 0 : index
    %c0_1109 = arith.constant 0 : index
    %c2_1110 = arith.constant 2 : index
    %c4_1111 = arith.constant 4 : index
    %c1_1112 = arith.constant 1 : index
    %810 = vector.load %arg2[%c0_1108, %c0_1109, %c2_1110, %c4_1111, %c1_1112] : memref<1x2x4x18x9xf32, #tpu.memory_space<vmem>>, vector<1x1x1x1x8xf32>
    %811 = vector.shape_cast %810 : vector<1x1x1x1x8xf32> to vector<8xf32>
    %c20_1113 = arith.constant 20 : index
    %c16_1114 = arith.constant 16 : index
    %812 = vector.load %arg7[%c20_1113, %c16_1114] : memref<36x64xf32, #tpu.memory_space<vmem>>, vector<1x8xf32>
    %813 = vector.shape_cast %812 : vector<1x8xf32> to vector<8xf32>
    %814 = vector.shape_cast %811 : vector<8xf32> to vector<1x8xf32>
    tpu.vector_store %arg7[%c20_1113, %c16_1114], %814 {strides = array<i32>} : memref<36x64xf32, #tpu.memory_space<vmem>>, vector<1x8xf32>,
    %c0_1115 = arith.constant 0 : index
    %c0_1116 = arith.constant 0 : index
    %c2_1117 = arith.constant 2 : index
    %c6_1118 = arith.constant 6 : index
    %c1_1119 = arith.constant 1 : index
    %815 = vector.load %arg2[%c0_1115, %c0_1116, %c2_1117, %c6_1118, %c1_1119] : memref<1x2x4x18x9xf32, #tpu.memory_space<vmem>>, vector<1x1x1x1x8xf32>
    %816 = vector.shape_cast %815 : vector<1x1x1x1x8xf32> to vector<8xf32>
    %c20_1120 = arith.constant 20 : index
    %c24_1121 = arith.constant 24 : index
    %817 = vector.load %arg7[%c20_1120, %c24_1121] : memref<36x64xf32, #tpu.memory_space<vmem>>, vector<1x8xf32>
    %818 = vector.shape_cast %817 : vector<1x8xf32> to vector<8xf32>
    %819 = vector.shape_cast %816 : vector<8xf32> to vector<1x8xf32>
    tpu.vector_store %arg7[%c20_1120, %c24_1121], %819 {strides = array<i32>} : memref<36x64xf32, #tpu.memory_space<vmem>>, vector<1x8xf32>,
    %c0_1122 = arith.constant 0 : index
    %c0_1123 = arith.constant 0 : index
    %c2_1124 = arith.constant 2 : index
    %c8_1125 = arith.constant 8 : index
    %c1_1126 = arith.constant 1 : index
    %820 = vector.load %arg2[%c0_1122, %c0_1123, %c2_1124, %c8_1125, %c1_1126] : memref<1x2x4x18x9xf32, #tpu.memory_space<vmem>>, vector<1x1x1x1x8xf32>
    %821 = vector.shape_cast %820 : vector<1x1x1x1x8xf32> to vector<8xf32>
    %c20_1127 = arith.constant 20 : index
    %c32_1128 = arith.constant 32 : index
    %822 = vector.load %arg7[%c20_1127, %c32_1128] : memref<36x64xf32, #tpu.memory_space<vmem>>, vector<1x8xf32>
    %823 = vector.shape_cast %822 : vector<1x8xf32> to vector<8xf32>
    %824 = vector.shape_cast %821 : vector<8xf32> to vector<1x8xf32>
    tpu.vector_store %arg7[%c20_1127, %c32_1128], %824 {strides = array<i32>} : memref<36x64xf32, #tpu.memory_space<vmem>>, vector<1x8xf32>,
    %c0_1129 = arith.constant 0 : index
    %c0_1130 = arith.constant 0 : index
    %c2_1131 = arith.constant 2 : index
    %c10_1132 = arith.constant 10 : index
    %c1_1133 = arith.constant 1 : index
    %825 = vector.load %arg2[%c0_1129, %c0_1130, %c2_1131, %c10_1132, %c1_1133] : memref<1x2x4x18x9xf32, #tpu.memory_space<vmem>>, vector<1x1x1x1x8xf32>
    %826 = vector.shape_cast %825 : vector<1x1x1x1x8xf32> to vector<8xf32>
    %c20_1134 = arith.constant 20 : index
    %c40_1135 = arith.constant 40 : index
    %827 = vector.load %arg7[%c20_1134, %c40_1135] : memref<36x64xf32, #tpu.memory_space<vmem>>, vector<1x8xf32>
    %828 = vector.shape_cast %827 : vector<1x8xf32> to vector<8xf32>
    %829 = vector.shape_cast %826 : vector<8xf32> to vector<1x8xf32>
    tpu.vector_store %arg7[%c20_1134, %c40_1135], %829 {strides = array<i32>} : memref<36x64xf32, #tpu.memory_space<vmem>>, vector<1x8xf32>,
    %c0_1136 = arith.constant 0 : index
    %c0_1137 = arith.constant 0 : index
    %c2_1138 = arith.constant 2 : index
    %c12_1139 = arith.constant 12 : index
    %c1_1140 = arith.constant 1 : index
    %830 = vector.load %arg2[%c0_1136, %c0_1137, %c2_1138, %c12_1139, %c1_1140] : memref<1x2x4x18x9xf32, #tpu.memory_space<vmem>>, vector<1x1x1x1x8xf32>
    %831 = vector.shape_cast %830 : vector<1x1x1x1x8xf32> to vector<8xf32>
    %c20_1141 = arith.constant 20 : index
    %c48_1142 = arith.constant 48 : index
    %832 = vector.load %arg7[%c20_1141, %c48_1142] : memref<36x64xf32, #tpu.memory_space<vmem>>, vector<1x8xf32>
    %833 = vector.shape_cast %832 : vector<1x8xf32> to vector<8xf32>
    %834 = vector.shape_cast %831 : vector<8xf32> to vector<1x8xf32>
    tpu.vector_store %arg7[%c20_1141, %c48_1142], %834 {strides = array<i32>} : memref<36x64xf32, #tpu.memory_space<vmem>>, vector<1x8xf32>,
    %c0_1143 = arith.constant 0 : index
    %c0_1144 = arith.constant 0 : index
    %c2_1145 = arith.constant 2 : index
    %c14_1146 = arith.constant 14 : index
    %c1_1147 = arith.constant 1 : index
    %835 = vector.load %arg2[%c0_1143, %c0_1144, %c2_1145, %c14_1146, %c1_1147] : memref<1x2x4x18x9xf32, #tpu.memory_space<vmem>>, vector<1x1x1x1x8xf32>
    %836 = vector.shape_cast %835 : vector<1x1x1x1x8xf32> to vector<8xf32>
    %c20_1148 = arith.constant 20 : index
    %c56_1149 = arith.constant 56 : index
    %837 = vector.load %arg7[%c20_1148, %c56_1149] : memref<36x64xf32, #tpu.memory_space<vmem>>, vector<1x8xf32>
    %838 = vector.shape_cast %837 : vector<1x8xf32> to vector<8xf32>
    %839 = vector.shape_cast %836 : vector<8xf32> to vector<1x8xf32>
    tpu.vector_store %arg7[%c20_1148, %c56_1149], %839 {strides = array<i32>} : memref<36x64xf32, #tpu.memory_space<vmem>>, vector<1x8xf32>,
    %c0_1150 = arith.constant 0 : index
    %c0_1151 = arith.constant 0 : index
    %c2_1152 = arith.constant 2 : index
    %c1_1153 = arith.constant 1 : index
    %c0_1154 = arith.constant 0 : index
    %840 = vector.load %arg2[%c0_1150, %c0_1151, %c2_1152, %c1_1153, %c0_1154] : memref<1x2x4x18x9xf32, #tpu.memory_space<vmem>>, vector<1x1x1x1x8xf32>
    %841 = vector.shape_cast %840 : vector<1x1x1x1x8xf32> to vector<8xf32>
    %c21 = arith.constant 21 : index
    %c0_1155 = arith.constant 0 : index
    %842 = vector.load %arg7[%c21, %c0_1155] : memref<36x64xf32, #tpu.memory_space<vmem>>, vector<1x8xf32>
    %843 = vector.shape_cast %842 : vector<1x8xf32> to vector<8xf32>
    %844 = vector.shape_cast %841 : vector<8xf32> to vector<1x8xf32>
    tpu.vector_store %arg7[%c21, %c0_1155], %844 {strides = array<i32>} : memref<36x64xf32, #tpu.memory_space<vmem>>, vector<1x8xf32>,
    %c0_1156 = arith.constant 0 : index
    %c0_1157 = arith.constant 0 : index
    %c2_1158 = arith.constant 2 : index
    %c3_1159 = arith.constant 3 : index
    %c0_1160 = arith.constant 0 : index
    %845 = vector.load %arg2[%c0_1156, %c0_1157, %c2_1158, %c3_1159, %c0_1160] : memref<1x2x4x18x9xf32, #tpu.memory_space<vmem>>, vector<1x1x1x1x8xf32>
    %846 = vector.shape_cast %845 : vector<1x1x1x1x8xf32> to vector<8xf32>
    %c21_1161 = arith.constant 21 : index
    %c8_1162 = arith.constant 8 : index
    %847 = vector.load %arg7[%c21_1161, %c8_1162] : memref<36x64xf32, #tpu.memory_space<vmem>>, vector<1x8xf32>
    %848 = vector.shape_cast %847 : vector<1x8xf32> to vector<8xf32>
    %849 = vector.shape_cast %846 : vector<8xf32> to vector<1x8xf32>
    tpu.vector_store %arg7[%c21_1161, %c8_1162], %849 {strides = array<i32>} : memref<36x64xf32, #tpu.memory_space<vmem>>, vector<1x8xf32>,
    %c0_1163 = arith.constant 0 : index
    %c0_1164 = arith.constant 0 : index
    %c2_1165 = arith.constant 2 : index
    %c5_1166 = arith.constant 5 : index
    %c0_1167 = arith.constant 0 : index
    %850 = vector.load %arg2[%c0_1163, %c0_1164, %c2_1165, %c5_1166, %c0_1167] : memref<1x2x4x18x9xf32, #tpu.memory_space<vmem>>, vector<1x1x1x1x8xf32>
    %851 = vector.shape_cast %850 : vector<1x1x1x1x8xf32> to vector<8xf32>
    %c21_1168 = arith.constant 21 : index
    %c16_1169 = arith.constant 16 : index
    %852 = vector.load %arg7[%c21_1168, %c16_1169] : memref<36x64xf32, #tpu.memory_space<vmem>>, vector<1x8xf32>
    %853 = vector.shape_cast %852 : vector<1x8xf32> to vector<8xf32>
    %854 = vector.shape_cast %851 : vector<8xf32> to vector<1x8xf32>
    tpu.vector_store %arg7[%c21_1168, %c16_1169], %854 {strides = array<i32>} : memref<36x64xf32, #tpu.memory_space<vmem>>, vector<1x8xf32>,
    %c0_1170 = arith.constant 0 : index
    %c0_1171 = arith.constant 0 : index
    %c2_1172 = arith.constant 2 : index
    %c7_1173 = arith.constant 7 : index
    %c0_1174 = arith.constant 0 : index
    %855 = vector.load %arg2[%c0_1170, %c0_1171, %c2_1172, %c7_1173, %c0_1174] : memref<1x2x4x18x9xf32, #tpu.memory_space<vmem>>, vector<1x1x1x1x8xf32>
    %856 = vector.shape_cast %855 : vector<1x1x1x1x8xf32> to vector<8xf32>
    %c21_1175 = arith.constant 21 : index
    %c24_1176 = arith.constant 24 : index
    %857 = vector.load %arg7[%c21_1175, %c24_1176] : memref<36x64xf32, #tpu.memory_space<vmem>>, vector<1x8xf32>
    %858 = vector.shape_cast %857 : vector<1x8xf32> to vector<8xf32>
    %859 = vector.shape_cast %856 : vector<8xf32> to vector<1x8xf32>
    tpu.vector_store %arg7[%c21_1175, %c24_1176], %859 {strides = array<i32>} : memref<36x64xf32, #tpu.memory_space<vmem>>, vector<1x8xf32>,
    %c0_1177 = arith.constant 0 : index
    %c0_1178 = arith.constant 0 : index
    %c2_1179 = arith.constant 2 : index
    %c9_1180 = arith.constant 9 : index
    %c0_1181 = arith.constant 0 : index
    %860 = vector.load %arg2[%c0_1177, %c0_1178, %c2_1179, %c9_1180, %c0_1181] : memref<1x2x4x18x9xf32, #tpu.memory_space<vmem>>, vector<1x1x1x1x8xf32>
    %861 = vector.shape_cast %860 : vector<1x1x1x1x8xf32> to vector<8xf32>
    %c21_1182 = arith.constant 21 : index
    %c32_1183 = arith.constant 32 : index
    %862 = vector.load %arg7[%c21_1182, %c32_1183] : memref<36x64xf32, #tpu.memory_space<vmem>>, vector<1x8xf32>
    %863 = vector.shape_cast %862 : vector<1x8xf32> to vector<8xf32>
    %864 = vector.shape_cast %861 : vector<8xf32> to vector<1x8xf32>
    tpu.vector_store %arg7[%c21_1182, %c32_1183], %864 {strides = array<i32>} : memref<36x64xf32, #tpu.memory_space<vmem>>, vector<1x8xf32>,
    %c0_1184 = arith.constant 0 : index
    %c0_1185 = arith.constant 0 : index
    %c2_1186 = arith.constant 2 : index
    %c11_1187 = arith.constant 11 : index
    %c0_1188 = arith.constant 0 : index
    %865 = vector.load %arg2[%c0_1184, %c0_1185, %c2_1186, %c11_1187, %c0_1188] : memref<1x2x4x18x9xf32, #tpu.memory_space<vmem>>, vector<1x1x1x1x8xf32>
    %866 = vector.shape_cast %865 : vector<1x1x1x1x8xf32> to vector<8xf32>
    %c21_1189 = arith.constant 21 : index
    %c40_1190 = arith.constant 40 : index
    %867 = vector.load %arg7[%c21_1189, %c40_1190] : memref<36x64xf32, #tpu.memory_space<vmem>>, vector<1x8xf32>
    %868 = vector.shape_cast %867 : vector<1x8xf32> to vector<8xf32>
    %869 = vector.shape_cast %866 : vector<8xf32> to vector<1x8xf32>
    tpu.vector_store %arg7[%c21_1189, %c40_1190], %869 {strides = array<i32>} : memref<36x64xf32, #tpu.memory_space<vmem>>, vector<1x8xf32>,
    %c0_1191 = arith.constant 0 : index
    %c0_1192 = arith.constant 0 : index
    %c2_1193 = arith.constant 2 : index
    %c13_1194 = arith.constant 13 : index
    %c0_1195 = arith.constant 0 : index
    %870 = vector.load %arg2[%c0_1191, %c0_1192, %c2_1193, %c13_1194, %c0_1195] : memref<1x2x4x18x9xf32, #tpu.memory_space<vmem>>, vector<1x1x1x1x8xf32>
    %871 = vector.shape_cast %870 : vector<1x1x1x1x8xf32> to vector<8xf32>
    %c21_1196 = arith.constant 21 : index
    %c48_1197 = arith.constant 48 : index
    %872 = vector.load %arg7[%c21_1196, %c48_1197] : memref<36x64xf32, #tpu.memory_space<vmem>>, vector<1x8xf32>
    %873 = vector.shape_cast %872 : vector<1x8xf32> to vector<8xf32>
    %874 = vector.shape_cast %871 : vector<8xf32> to vector<1x8xf32>
    tpu.vector_store %arg7[%c21_1196, %c48_1197], %874 {strides = array<i32>} : memref<36x64xf32, #tpu.memory_space<vmem>>, vector<1x8xf32>,
    %c0_1198 = arith.constant 0 : index
    %c0_1199 = arith.constant 0 : index
    %c2_1200 = arith.constant 2 : index
    %c15_1201 = arith.constant 15 : index
    %c0_1202 = arith.constant 0 : index
    %875 = vector.load %arg2[%c0_1198, %c0_1199, %c2_1200, %c15_1201, %c0_1202] : memref<1x2x4x18x9xf32, #tpu.memory_space<vmem>>, vector<1x1x1x1x8xf32>
    %876 = vector.shape_cast %875 : vector<1x1x1x1x8xf32> to vector<8xf32>
    %c21_1203 = arith.constant 21 : index
    %c56_1204 = arith.constant 56 : index
    %877 = vector.load %arg7[%c21_1203, %c56_1204] : memref<36x64xf32, #tpu.memory_space<vmem>>, vector<1x8xf32>
    %878 = vector.shape_cast %877 : vector<1x8xf32> to vector<8xf32>
    %879 = vector.shape_cast %876 : vector<8xf32> to vector<1x8xf32>
    tpu.vector_store %arg7[%c21_1203, %c56_1204], %879 {strides = array<i32>} : memref<36x64xf32, #tpu.memory_space<vmem>>, vector<1x8xf32>,
    %c0_1205 = arith.constant 0 : index
    %c1_1206 = arith.constant 1 : index
    %c2_1207 = arith.constant 2 : index
    %c1_1208 = arith.constant 1 : index
    %c0_1209 = arith.constant 0 : index
    %880 = vector.load %arg2[%c0_1205, %c1_1206, %c2_1207, %c1_1208, %c0_1209] : memref<1x2x4x18x9xf32, #tpu.memory_space<vmem>>, vector<1x1x1x1x8xf32>
    %881 = vector.shape_cast %880 : vector<1x1x1x1x8xf32> to vector<8xf32>
    %c22 = arith.constant 22 : index
    %c0_1210 = arith.constant 0 : index
    %882 = vector.load %arg7[%c22, %c0_1210] : memref<36x64xf32, #tpu.memory_space<vmem>>, vector<1x8xf32>
    %883 = vector.shape_cast %882 : vector<1x8xf32> to vector<8xf32>
    %884 = vector.shape_cast %881 : vector<8xf32> to vector<1x8xf32>
    tpu.vector_store %arg7[%c22, %c0_1210], %884 {strides = array<i32>} : memref<36x64xf32, #tpu.memory_space<vmem>>, vector<1x8xf32>,
    %c0_1211 = arith.constant 0 : index
    %c1_1212 = arith.constant 1 : index
    %c2_1213 = arith.constant 2 : index
    %c3_1214 = arith.constant 3 : index
    %c0_1215 = arith.constant 0 : index
    %885 = vector.load %arg2[%c0_1211, %c1_1212, %c2_1213, %c3_1214, %c0_1215] : memref<1x2x4x18x9xf32, #tpu.memory_space<vmem>>, vector<1x1x1x1x8xf32>
    %886 = vector.shape_cast %885 : vector<1x1x1x1x8xf32> to vector<8xf32>
    %c22_1216 = arith.constant 22 : index
    %c8_1217 = arith.constant 8 : index
    %887 = vector.load %arg7[%c22_1216, %c8_1217] : memref<36x64xf32, #tpu.memory_space<vmem>>, vector<1x8xf32>
    %888 = vector.shape_cast %887 : vector<1x8xf32> to vector<8xf32>
    %889 = vector.shape_cast %886 : vector<8xf32> to vector<1x8xf32>
    tpu.vector_store %arg7[%c22_1216, %c8_1217], %889 {strides = array<i32>} : memref<36x64xf32, #tpu.memory_space<vmem>>, vector<1x8xf32>,
    %c0_1218 = arith.constant 0 : index
    %c1_1219 = arith.constant 1 : index
    %c2_1220 = arith.constant 2 : index
    %c5_1221 = arith.constant 5 : index
    %c0_1222 = arith.constant 0 : index
    %890 = vector.load %arg2[%c0_1218, %c1_1219, %c2_1220, %c5_1221, %c0_1222] : memref<1x2x4x18x9xf32, #tpu.memory_space<vmem>>, vector<1x1x1x1x8xf32>
    %891 = vector.shape_cast %890 : vector<1x1x1x1x8xf32> to vector<8xf32>
    %c22_1223 = arith.constant 22 : index
    %c16_1224 = arith.constant 16 : index
    %892 = vector.load %arg7[%c22_1223, %c16_1224] : memref<36x64xf32, #tpu.memory_space<vmem>>, vector<1x8xf32>
    %893 = vector.shape_cast %892 : vector<1x8xf32> to vector<8xf32>
    %894 = vector.shape_cast %891 : vector<8xf32> to vector<1x8xf32>
    tpu.vector_store %arg7[%c22_1223, %c16_1224], %894 {strides = array<i32>} : memref<36x64xf32, #tpu.memory_space<vmem>>, vector<1x8xf32>,
    %c0_1225 = arith.constant 0 : index
    %c1_1226 = arith.constant 1 : index
    %c2_1227 = arith.constant 2 : index
    %c7_1228 = arith.constant 7 : index
    %c0_1229 = arith.constant 0 : index
    %895 = vector.load %arg2[%c0_1225, %c1_1226, %c2_1227, %c7_1228, %c0_1229] : memref<1x2x4x18x9xf32, #tpu.memory_space<vmem>>, vector<1x1x1x1x8xf32>
    %896 = vector.shape_cast %895 : vector<1x1x1x1x8xf32> to vector<8xf32>
    %c22_1230 = arith.constant 22 : index
    %c24_1231 = arith.constant 24 : index
    %897 = vector.load %arg7[%c22_1230, %c24_1231] : memref<36x64xf32, #tpu.memory_space<vmem>>, vector<1x8xf32>
    %898 = vector.shape_cast %897 : vector<1x8xf32> to vector<8xf32>
    %899 = vector.shape_cast %896 : vector<8xf32> to vector<1x8xf32>
    tpu.vector_store %arg7[%c22_1230, %c24_1231], %899 {strides = array<i32>} : memref<36x64xf32, #tpu.memory_space<vmem>>, vector<1x8xf32>,
    %c0_1232 = arith.constant 0 : index
    %c1_1233 = arith.constant 1 : index
    %c2_1234 = arith.constant 2 : index
    %c9_1235 = arith.constant 9 : index
    %c0_1236 = arith.constant 0 : index
    %900 = vector.load %arg2[%c0_1232, %c1_1233, %c2_1234, %c9_1235, %c0_1236] : memref<1x2x4x18x9xf32, #tpu.memory_space<vmem>>, vector<1x1x1x1x8xf32>
    %901 = vector.shape_cast %900 : vector<1x1x1x1x8xf32> to vector<8xf32>
    %c22_1237 = arith.constant 22 : index
    %c32_1238 = arith.constant 32 : index
    %902 = vector.load %arg7[%c22_1237, %c32_1238] : memref<36x64xf32, #tpu.memory_space<vmem>>, vector<1x8xf32>
    %903 = vector.shape_cast %902 : vector<1x8xf32> to vector<8xf32>
    %904 = vector.shape_cast %901 : vector<8xf32> to vector<1x8xf32>
    tpu.vector_store %arg7[%c22_1237, %c32_1238], %904 {strides = array<i32>} : memref<36x64xf32, #tpu.memory_space<vmem>>, vector<1x8xf32>,
    %c0_1239 = arith.constant 0 : index
    %c1_1240 = arith.constant 1 : index
    %c2_1241 = arith.constant 2 : index
    %c11_1242 = arith.constant 11 : index
    %c0_1243 = arith.constant 0 : index
    %905 = vector.load %arg2[%c0_1239, %c1_1240, %c2_1241, %c11_1242, %c0_1243] : memref<1x2x4x18x9xf32, #tpu.memory_space<vmem>>, vector<1x1x1x1x8xf32>
    %906 = vector.shape_cast %905 : vector<1x1x1x1x8xf32> to vector<8xf32>
    %c22_1244 = arith.constant 22 : index
    %c40_1245 = arith.constant 40 : index
    %907 = vector.load %arg7[%c22_1244, %c40_1245] : memref<36x64xf32, #tpu.memory_space<vmem>>, vector<1x8xf32>
    %908 = vector.shape_cast %907 : vector<1x8xf32> to vector<8xf32>
    %909 = vector.shape_cast %906 : vector<8xf32> to vector<1x8xf32>
    tpu.vector_store %arg7[%c22_1244, %c40_1245], %909 {strides = array<i32>} : memref<36x64xf32, #tpu.memory_space<vmem>>, vector<1x8xf32>,
    %c0_1246 = arith.constant 0 : index
    %c1_1247 = arith.constant 1 : index
    %c2_1248 = arith.constant 2 : index
    %c13_1249 = arith.constant 13 : index
    %c0_1250 = arith.constant 0 : index
    %910 = vector.load %arg2[%c0_1246, %c1_1247, %c2_1248, %c13_1249, %c0_1250] : memref<1x2x4x18x9xf32, #tpu.memory_space<vmem>>, vector<1x1x1x1x8xf32>
    %911 = vector.shape_cast %910 : vector<1x1x1x1x8xf32> to vector<8xf32>
    %c22_1251 = arith.constant 22 : index
    %c48_1252 = arith.constant 48 : index
    %912 = vector.load %arg7[%c22_1251, %c48_1252] : memref<36x64xf32, #tpu.memory_space<vmem>>, vector<1x8xf32>
    %913 = vector.shape_cast %912 : vector<1x8xf32> to vector<8xf32>
    %914 = vector.shape_cast %911 : vector<8xf32> to vector<1x8xf32>
    tpu.vector_store %arg7[%c22_1251, %c48_1252], %914 {strides = array<i32>} : memref<36x64xf32, #tpu.memory_space<vmem>>, vector<1x8xf32>,
    %c0_1253 = arith.constant 0 : index
    %c1_1254 = arith.constant 1 : index
    %c2_1255 = arith.constant 2 : index
    %c15_1256 = arith.constant 15 : index
    %c0_1257 = arith.constant 0 : index
    %915 = vector.load %arg2[%c0_1253, %c1_1254, %c2_1255, %c15_1256, %c0_1257] : memref<1x2x4x18x9xf32, #tpu.memory_space<vmem>>, vector<1x1x1x1x8xf32>
    %916 = vector.shape_cast %915 : vector<1x1x1x1x8xf32> to vector<8xf32>
    %c22_1258 = arith.constant 22 : index
    %c56_1259 = arith.constant 56 : index
    %917 = vector.load %arg7[%c22_1258, %c56_1259] : memref<36x64xf32, #tpu.memory_space<vmem>>, vector<1x8xf32>
    %918 = vector.shape_cast %917 : vector<1x8xf32> to vector<8xf32>
    %919 = vector.shape_cast %916 : vector<8xf32> to vector<1x8xf32>
    tpu.vector_store %arg7[%c22_1258, %c56_1259], %919 {strides = array<i32>} : memref<36x64xf32, #tpu.memory_space<vmem>>, vector<1x8xf32>,
    %c0_1260 = arith.constant 0 : index
    %c0_1261 = arith.constant 0 : index
    %c2_1262 = arith.constant 2 : index
    %c1_1263 = arith.constant 1 : index
    %c1_1264 = arith.constant 1 : index
    %920 = vector.load %arg2[%c0_1260, %c0_1261, %c2_1262, %c1_1263, %c1_1264] : memref<1x2x4x18x9xf32, #tpu.memory_space<vmem>>, vector<1x1x1x1x8xf32>
    %921 = vector.shape_cast %920 : vector<1x1x1x1x8xf32> to vector<8xf32>
    %c23 = arith.constant 23 : index
    %c0_1265 = arith.constant 0 : index
    %922 = vector.load %arg7[%c23, %c0_1265] : memref<36x64xf32, #tpu.memory_space<vmem>>, vector<1x8xf32>
    %923 = vector.shape_cast %922 : vector<1x8xf32> to vector<8xf32>
    %924 = vector.shape_cast %921 : vector<8xf32> to vector<1x8xf32>
    tpu.vector_store %arg7[%c23, %c0_1265], %924 {strides = array<i32>} : memref<36x64xf32, #tpu.memory_space<vmem>>, vector<1x8xf32>,
    %c0_1266 = arith.constant 0 : index
    %c0_1267 = arith.constant 0 : index
    %c2_1268 = arith.constant 2 : index
    %c3_1269 = arith.constant 3 : index
    %c1_1270 = arith.constant 1 : index
    %925 = vector.load %arg2[%c0_1266, %c0_1267, %c2_1268, %c3_1269, %c1_1270] : memref<1x2x4x18x9xf32, #tpu.memory_space<vmem>>, vector<1x1x1x1x8xf32>
    %926 = vector.shape_cast %925 : vector<1x1x1x1x8xf32> to vector<8xf32>
    %c23_1271 = arith.constant 23 : index
    %c8_1272 = arith.constant 8 : index
    %927 = vector.load %arg7[%c23_1271, %c8_1272] : memref<36x64xf32, #tpu.memory_space<vmem>>, vector<1x8xf32>
    %928 = vector.shape_cast %927 : vector<1x8xf32> to vector<8xf32>
    %929 = vector.shape_cast %926 : vector<8xf32> to vector<1x8xf32>
    tpu.vector_store %arg7[%c23_1271, %c8_1272], %929 {strides = array<i32>} : memref<36x64xf32, #tpu.memory_space<vmem>>, vector<1x8xf32>,
    %c0_1273 = arith.constant 0 : index
    %c0_1274 = arith.constant 0 : index
    %c2_1275 = arith.constant 2 : index
    %c5_1276 = arith.constant 5 : index
    %c1_1277 = arith.constant 1 : index
    %930 = vector.load %arg2[%c0_1273, %c0_1274, %c2_1275, %c5_1276, %c1_1277] : memref<1x2x4x18x9xf32, #tpu.memory_space<vmem>>, vector<1x1x1x1x8xf32>
    %931 = vector.shape_cast %930 : vector<1x1x1x1x8xf32> to vector<8xf32>
    %c23_1278 = arith.constant 23 : index
    %c16_1279 = arith.constant 16 : index
    %932 = vector.load %arg7[%c23_1278, %c16_1279] : memref<36x64xf32, #tpu.memory_space<vmem>>, vector<1x8xf32>
    %933 = vector.shape_cast %932 : vector<1x8xf32> to vector<8xf32>
    %934 = vector.shape_cast %931 : vector<8xf32> to vector<1x8xf32>
    tpu.vector_store %arg7[%c23_1278, %c16_1279], %934 {strides = array<i32>} : memref<36x64xf32, #tpu.memory_space<vmem>>, vector<1x8xf32>,
    %c0_1280 = arith.constant 0 : index
    %c0_1281 = arith.constant 0 : index
    %c2_1282 = arith.constant 2 : index
    %c7_1283 = arith.constant 7 : index
    %c1_1284 = arith.constant 1 : index
    %935 = vector.load %arg2[%c0_1280, %c0_1281, %c2_1282, %c7_1283, %c1_1284] : memref<1x2x4x18x9xf32, #tpu.memory_space<vmem>>, vector<1x1x1x1x8xf32>
    %936 = vector.shape_cast %935 : vector<1x1x1x1x8xf32> to vector<8xf32>
    %c23_1285 = arith.constant 23 : index
    %c24_1286 = arith.constant 24 : index
    %937 = vector.load %arg7[%c23_1285, %c24_1286] : memref<36x64xf32, #tpu.memory_space<vmem>>, vector<1x8xf32>
    %938 = vector.shape_cast %937 : vector<1x8xf32> to vector<8xf32>
    %939 = vector.shape_cast %936 : vector<8xf32> to vector<1x8xf32>
    tpu.vector_store %arg7[%c23_1285, %c24_1286], %939 {strides = array<i32>} : memref<36x64xf32, #tpu.memory_space<vmem>>, vector<1x8xf32>,
    %c0_1287 = arith.constant 0 : index
    %c0_1288 = arith.constant 0 : index
    %c2_1289 = arith.constant 2 : index
    %c9_1290 = arith.constant 9 : index
    %c1_1291 = arith.constant 1 : index
    %940 = vector.load %arg2[%c0_1287, %c0_1288, %c2_1289, %c9_1290, %c1_1291] : memref<1x2x4x18x9xf32, #tpu.memory_space<vmem>>, vector<1x1x1x1x8xf32>
    %941 = vector.shape_cast %940 : vector<1x1x1x1x8xf32> to vector<8xf32>
    %c23_1292 = arith.constant 23 : index
    %c32_1293 = arith.constant 32 : index
    %942 = vector.load %arg7[%c23_1292, %c32_1293] : memref<36x64xf32, #tpu.memory_space<vmem>>, vector<1x8xf32>
    %943 = vector.shape_cast %942 : vector<1x8xf32> to vector<8xf32>
    %944 = vector.shape_cast %941 : vector<8xf32> to vector<1x8xf32>
    tpu.vector_store %arg7[%c23_1292, %c32_1293], %944 {strides = array<i32>} : memref<36x64xf32, #tpu.memory_space<vmem>>, vector<1x8xf32>,
    %c0_1294 = arith.constant 0 : index
    %c0_1295 = arith.constant 0 : index
    %c2_1296 = arith.constant 2 : index
    %c11_1297 = arith.constant 11 : index
    %c1_1298 = arith.constant 1 : index
    %945 = vector.load %arg2[%c0_1294, %c0_1295, %c2_1296, %c11_1297, %c1_1298] : memref<1x2x4x18x9xf32, #tpu.memory_space<vmem>>, vector<1x1x1x1x8xf32>
    %946 = vector.shape_cast %945 : vector<1x1x1x1x8xf32> to vector<8xf32>
    %c23_1299 = arith.constant 23 : index
    %c40_1300 = arith.constant 40 : index
    %947 = vector.load %arg7[%c23_1299, %c40_1300] : memref<36x64xf32, #tpu.memory_space<vmem>>, vector<1x8xf32>
    %948 = vector.shape_cast %947 : vector<1x8xf32> to vector<8xf32>
    %949 = vector.shape_cast %946 : vector<8xf32> to vector<1x8xf32>
    tpu.vector_store %arg7[%c23_1299, %c40_1300], %949 {strides = array<i32>} : memref<36x64xf32, #tpu.memory_space<vmem>>, vector<1x8xf32>,
    %c0_1301 = arith.constant 0 : index
    %c0_1302 = arith.constant 0 : index
    %c2_1303 = arith.constant 2 : index
    %c13_1304 = arith.constant 13 : index
    %c1_1305 = arith.constant 1 : index
    %950 = vector.load %arg2[%c0_1301, %c0_1302, %c2_1303, %c13_1304, %c1_1305] : memref<1x2x4x18x9xf32, #tpu.memory_space<vmem>>, vector<1x1x1x1x8xf32>
    %951 = vector.shape_cast %950 : vector<1x1x1x1x8xf32> to vector<8xf32>
    %c23_1306 = arith.constant 23 : index
    %c48_1307 = arith.constant 48 : index
    %952 = vector.load %arg7[%c23_1306, %c48_1307] : memref<36x64xf32, #tpu.memory_space<vmem>>, vector<1x8xf32>
    %953 = vector.shape_cast %952 : vector<1x8xf32> to vector<8xf32>
    %954 = vector.shape_cast %951 : vector<8xf32> to vector<1x8xf32>
    tpu.vector_store %arg7[%c23_1306, %c48_1307], %954 {strides = array<i32>} : memref<36x64xf32, #tpu.memory_space<vmem>>, vector<1x8xf32>,
    %c0_1308 = arith.constant 0 : index
    %c0_1309 = arith.constant 0 : index
    %c2_1310 = arith.constant 2 : index
    %c15_1311 = arith.constant 15 : index
    %c1_1312 = arith.constant 1 : index
    %955 = vector.load %arg2[%c0_1308, %c0_1309, %c2_1310, %c15_1311, %c1_1312] : memref<1x2x4x18x9xf32, #tpu.memory_space<vmem>>, vector<1x1x1x1x8xf32>
    %956 = vector.shape_cast %955 : vector<1x1x1x1x8xf32> to vector<8xf32>
    %c23_1313 = arith.constant 23 : index
    %c56_1314 = arith.constant 56 : index
    %957 = vector.load %arg7[%c23_1313, %c56_1314] : memref<36x64xf32, #tpu.memory_space<vmem>>, vector<1x8xf32>
    %958 = vector.shape_cast %957 : vector<1x8xf32> to vector<8xf32>
    %959 = vector.shape_cast %956 : vector<8xf32> to vector<1x8xf32>
    tpu.vector_store %arg7[%c23_1313, %c56_1314], %959 {strides = array<i32>} : memref<36x64xf32, #tpu.memory_space<vmem>>, vector<1x8xf32>,
    %c0_1315 = arith.constant 0 : index
    %c0_1316 = arith.constant 0 : index
    %c2_1317 = arith.constant 2 : index
    %c2_1318 = arith.constant 2 : index
    %c0_1319 = arith.constant 0 : index
    %960 = vector.load %arg2[%c0_1315, %c0_1316, %c2_1317, %c2_1318, %c0_1319] : memref<1x2x4x18x9xf32, #tpu.memory_space<vmem>>, vector<1x1x1x1x8xf32>
    %961 = vector.shape_cast %960 : vector<1x1x1x1x8xf32> to vector<8xf32>
    %c24_1320 = arith.constant 24 : index
    %c0_1321 = arith.constant 0 : index
    %962 = vector.load %arg7[%c24_1320, %c0_1321] : memref<36x64xf32, #tpu.memory_space<vmem>>, vector<1x8xf32>
    %963 = vector.shape_cast %962 : vector<1x8xf32> to vector<8xf32>
    %964 = vector.shape_cast %961 : vector<8xf32> to vector<1x8xf32>
    tpu.vector_store %arg7[%c24_1320, %c0_1321], %964 {strides = array<i32>} : memref<36x64xf32, #tpu.memory_space<vmem>>, vector<1x8xf32>,
    %c0_1322 = arith.constant 0 : index
    %c0_1323 = arith.constant 0 : index
    %c2_1324 = arith.constant 2 : index
    %c4_1325 = arith.constant 4 : index
    %c0_1326 = arith.constant 0 : index
    %965 = vector.load %arg2[%c0_1322, %c0_1323, %c2_1324, %c4_1325, %c0_1326] : memref<1x2x4x18x9xf32, #tpu.memory_space<vmem>>, vector<1x1x1x1x8xf32>
    %966 = vector.shape_cast %965 : vector<1x1x1x1x8xf32> to vector<8xf32>
    %c24_1327 = arith.constant 24 : index
    %c8_1328 = arith.constant 8 : index
    %967 = vector.load %arg7[%c24_1327, %c8_1328] : memref<36x64xf32, #tpu.memory_space<vmem>>, vector<1x8xf32>
    %968 = vector.shape_cast %967 : vector<1x8xf32> to vector<8xf32>
    %969 = vector.shape_cast %966 : vector<8xf32> to vector<1x8xf32>
    tpu.vector_store %arg7[%c24_1327, %c8_1328], %969 {strides = array<i32>} : memref<36x64xf32, #tpu.memory_space<vmem>>, vector<1x8xf32>,
    %c0_1329 = arith.constant 0 : index
    %c0_1330 = arith.constant 0 : index
    %c2_1331 = arith.constant 2 : index
    %c6_1332 = arith.constant 6 : index
    %c0_1333 = arith.constant 0 : index
    %970 = vector.load %arg2[%c0_1329, %c0_1330, %c2_1331, %c6_1332, %c0_1333] : memref<1x2x4x18x9xf32, #tpu.memory_space<vmem>>, vector<1x1x1x1x8xf32>
    %971 = vector.shape_cast %970 : vector<1x1x1x1x8xf32> to vector<8xf32>
    %c24_1334 = arith.constant 24 : index
    %c16_1335 = arith.constant 16 : index
    %972 = vector.load %arg7[%c24_1334, %c16_1335] : memref<36x64xf32, #tpu.memory_space<vmem>>, vector<1x8xf32>
    %973 = vector.shape_cast %972 : vector<1x8xf32> to vector<8xf32>
    %974 = vector.shape_cast %971 : vector<8xf32> to vector<1x8xf32>
    tpu.vector_store %arg7[%c24_1334, %c16_1335], %974 {strides = array<i32>} : memref<36x64xf32, #tpu.memory_space<vmem>>, vector<1x8xf32>,
    %c0_1336 = arith.constant 0 : index
    %c0_1337 = arith.constant 0 : index
    %c2_1338 = arith.constant 2 : index
    %c8_1339 = arith.constant 8 : index
    %c0_1340 = arith.constant 0 : index
    %975 = vector.load %arg2[%c0_1336, %c0_1337, %c2_1338, %c8_1339, %c0_1340] : memref<1x2x4x18x9xf32, #tpu.memory_space<vmem>>, vector<1x1x1x1x8xf32>
    %976 = vector.shape_cast %975 : vector<1x1x1x1x8xf32> to vector<8xf32>
    %c24_1341 = arith.constant 24 : index
    %c24_1342 = arith.constant 24 : index
    %977 = vector.load %arg7[%c24_1341, %c24_1342] : memref<36x64xf32, #tpu.memory_space<vmem>>, vector<1x8xf32>
    %978 = vector.shape_cast %977 : vector<1x8xf32> to vector<8xf32>
    %979 = vector.shape_cast %976 : vector<8xf32> to vector<1x8xf32>
    tpu.vector_store %arg7[%c24_1341, %c24_1342], %979 {strides = array<i32>} : memref<36x64xf32, #tpu.memory_space<vmem>>, vector<1x8xf32>,
    %c0_1343 = arith.constant 0 : index
    %c0_1344 = arith.constant 0 : index
    %c2_1345 = arith.constant 2 : index
    %c10_1346 = arith.constant 10 : index
    %c0_1347 = arith.constant 0 : index
    %980 = vector.load %arg2[%c0_1343, %c0_1344, %c2_1345, %c10_1346, %c0_1347] : memref<1x2x4x18x9xf32, #tpu.memory_space<vmem>>, vector<1x1x1x1x8xf32>
    %981 = vector.shape_cast %980 : vector<1x1x1x1x8xf32> to vector<8xf32>
    %c24_1348 = arith.constant 24 : index
    %c32_1349 = arith.constant 32 : index
    %982 = vector.load %arg7[%c24_1348, %c32_1349] : memref<36x64xf32, #tpu.memory_space<vmem>>, vector<1x8xf32>
    %983 = vector.shape_cast %982 : vector<1x8xf32> to vector<8xf32>
    %984 = vector.shape_cast %981 : vector<8xf32> to vector<1x8xf32>
    tpu.vector_store %arg7[%c24_1348, %c32_1349], %984 {strides = array<i32>} : memref<36x64xf32, #tpu.memory_space<vmem>>, vector<1x8xf32>,
    %c0_1350 = arith.constant 0 : index
    %c0_1351 = arith.constant 0 : index
    %c2_1352 = arith.constant 2 : index
    %c12_1353 = arith.constant 12 : index
    %c0_1354 = arith.constant 0 : index
    %985 = vector.load %arg2[%c0_1350, %c0_1351, %c2_1352, %c12_1353, %c0_1354] : memref<1x2x4x18x9xf32, #tpu.memory_space<vmem>>, vector<1x1x1x1x8xf32>
    %986 = vector.shape_cast %985 : vector<1x1x1x1x8xf32> to vector<8xf32>
    %c24_1355 = arith.constant 24 : index
    %c40_1356 = arith.constant 40 : index
    %987 = vector.load %arg7[%c24_1355, %c40_1356] : memref<36x64xf32, #tpu.memory_space<vmem>>, vector<1x8xf32>
    %988 = vector.shape_cast %987 : vector<1x8xf32> to vector<8xf32>
    %989 = vector.shape_cast %986 : vector<8xf32> to vector<1x8xf32>
    tpu.vector_store %arg7[%c24_1355, %c40_1356], %989 {strides = array<i32>} : memref<36x64xf32, #tpu.memory_space<vmem>>, vector<1x8xf32>,
    %c0_1357 = arith.constant 0 : index
    %c0_1358 = arith.constant 0 : index
    %c2_1359 = arith.constant 2 : index
    %c14_1360 = arith.constant 14 : index
    %c0_1361 = arith.constant 0 : index
    %990 = vector.load %arg2[%c0_1357, %c0_1358, %c2_1359, %c14_1360, %c0_1361] : memref<1x2x4x18x9xf32, #tpu.memory_space<vmem>>, vector<1x1x1x1x8xf32>
    %991 = vector.shape_cast %990 : vector<1x1x1x1x8xf32> to vector<8xf32>
    %c24_1362 = arith.constant 24 : index
    %c48_1363 = arith.constant 48 : index
    %992 = vector.load %arg7[%c24_1362, %c48_1363] : memref<36x64xf32, #tpu.memory_space<vmem>>, vector<1x8xf32>
    %993 = vector.shape_cast %992 : vector<1x8xf32> to vector<8xf32>
    %994 = vector.shape_cast %991 : vector<8xf32> to vector<1x8xf32>
    tpu.vector_store %arg7[%c24_1362, %c48_1363], %994 {strides = array<i32>} : memref<36x64xf32, #tpu.memory_space<vmem>>, vector<1x8xf32>,
    %c0_1364 = arith.constant 0 : index
    %c0_1365 = arith.constant 0 : index
    %c2_1366 = arith.constant 2 : index
    %c16_1367 = arith.constant 16 : index
    %c0_1368 = arith.constant 0 : index
    %995 = vector.load %arg2[%c0_1364, %c0_1365, %c2_1366, %c16_1367, %c0_1368] : memref<1x2x4x18x9xf32, #tpu.memory_space<vmem>>, vector<1x1x1x1x8xf32>
    %996 = vector.shape_cast %995 : vector<1x1x1x1x8xf32> to vector<8xf32>
    %c24_1369 = arith.constant 24 : index
    %c56_1370 = arith.constant 56 : index
    %997 = vector.load %arg7[%c24_1369, %c56_1370] : memref<36x64xf32, #tpu.memory_space<vmem>>, vector<1x8xf32>
    %998 = vector.shape_cast %997 : vector<1x8xf32> to vector<8xf32>
    %999 = vector.shape_cast %996 : vector<8xf32> to vector<1x8xf32>
    tpu.vector_store %arg7[%c24_1369, %c56_1370], %999 {strides = array<i32>} : memref<36x64xf32, #tpu.memory_space<vmem>>, vector<1x8xf32>,
    %c0_1371 = arith.constant 0 : index
    %c1_1372 = arith.constant 1 : index
    %c2_1373 = arith.constant 2 : index
    %c2_1374 = arith.constant 2 : index
    %c0_1375 = arith.constant 0 : index
    %1000 = vector.load %arg2[%c0_1371, %c1_1372, %c2_1373, %c2_1374, %c0_1375] : memref<1x2x4x18x9xf32, #tpu.memory_space<vmem>>, vector<1x1x1x1x8xf32>
    %1001 = vector.shape_cast %1000 : vector<1x1x1x1x8xf32> to vector<8xf32>
    %c25 = arith.constant 25 : index
    %c0_1376 = arith.constant 0 : index
    %1002 = vector.load %arg7[%c25, %c0_1376] : memref<36x64xf32, #tpu.memory_space<vmem>>, vector<1x8xf32>
    %1003 = vector.shape_cast %1002 : vector<1x8xf32> to vector<8xf32>
    %1004 = vector.shape_cast %1001 : vector<8xf32> to vector<1x8xf32>
    tpu.vector_store %arg7[%c25, %c0_1376], %1004 {strides = array<i32>} : memref<36x64xf32, #tpu.memory_space<vmem>>, vector<1x8xf32>,
    %c0_1377 = arith.constant 0 : index
    %c1_1378 = arith.constant 1 : index
    %c2_1379 = arith.constant 2 : index
    %c4_1380 = arith.constant 4 : index
    %c0_1381 = arith.constant 0 : index
    %1005 = vector.load %arg2[%c0_1377, %c1_1378, %c2_1379, %c4_1380, %c0_1381] : memref<1x2x4x18x9xf32, #tpu.memory_space<vmem>>, vector<1x1x1x1x8xf32>
    %1006 = vector.shape_cast %1005 : vector<1x1x1x1x8xf32> to vector<8xf32>
    %c25_1382 = arith.constant 25 : index
    %c8_1383 = arith.constant 8 : index
    %1007 = vector.load %arg7[%c25_1382, %c8_1383] : memref<36x64xf32, #tpu.memory_space<vmem>>, vector<1x8xf32>
    %1008 = vector.shape_cast %1007 : vector<1x8xf32> to vector<8xf32>
    %1009 = vector.shape_cast %1006 : vector<8xf32> to vector<1x8xf32>
    tpu.vector_store %arg7[%c25_1382, %c8_1383], %1009 {strides = array<i32>} : memref<36x64xf32, #tpu.memory_space<vmem>>, vector<1x8xf32>,
    %c0_1384 = arith.constant 0 : index
    %c1_1385 = arith.constant 1 : index
    %c2_1386 = arith.constant 2 : index
    %c6_1387 = arith.constant 6 : index
    %c0_1388 = arith.constant 0 : index
    %1010 = vector.load %arg2[%c0_1384, %c1_1385, %c2_1386, %c6_1387, %c0_1388] : memref<1x2x4x18x9xf32, #tpu.memory_space<vmem>>, vector<1x1x1x1x8xf32>
    %1011 = vector.shape_cast %1010 : vector<1x1x1x1x8xf32> to vector<8xf32>
    %c25_1389 = arith.constant 25 : index
    %c16_1390 = arith.constant 16 : index
    %1012 = vector.load %arg7[%c25_1389, %c16_1390] : memref<36x64xf32, #tpu.memory_space<vmem>>, vector<1x8xf32>
    %1013 = vector.shape_cast %1012 : vector<1x8xf32> to vector<8xf32>
    %1014 = vector.shape_cast %1011 : vector<8xf32> to vector<1x8xf32>
    tpu.vector_store %arg7[%c25_1389, %c16_1390], %1014 {strides = array<i32>} : memref<36x64xf32, #tpu.memory_space<vmem>>, vector<1x8xf32>,
    %c0_1391 = arith.constant 0 : index
    %c1_1392 = arith.constant 1 : index
    %c2_1393 = arith.constant 2 : index
    %c8_1394 = arith.constant 8 : index
    %c0_1395 = arith.constant 0 : index
    %1015 = vector.load %arg2[%c0_1391, %c1_1392, %c2_1393, %c8_1394, %c0_1395] : memref<1x2x4x18x9xf32, #tpu.memory_space<vmem>>, vector<1x1x1x1x8xf32>
    %1016 = vector.shape_cast %1015 : vector<1x1x1x1x8xf32> to vector<8xf32>
    %c25_1396 = arith.constant 25 : index
    %c24_1397 = arith.constant 24 : index
    %1017 = vector.load %arg7[%c25_1396, %c24_1397] : memref<36x64xf32, #tpu.memory_space<vmem>>, vector<1x8xf32>
    %1018 = vector.shape_cast %1017 : vector<1x8xf32> to vector<8xf32>
    %1019 = vector.shape_cast %1016 : vector<8xf32> to vector<1x8xf32>
    tpu.vector_store %arg7[%c25_1396, %c24_1397], %1019 {strides = array<i32>} : memref<36x64xf32, #tpu.memory_space<vmem>>, vector<1x8xf32>,
    %c0_1398 = arith.constant 0 : index
    %c1_1399 = arith.constant 1 : index
    %c2_1400 = arith.constant 2 : index
    %c10_1401 = arith.constant 10 : index
    %c0_1402 = arith.constant 0 : index
    %1020 = vector.load %arg2[%c0_1398, %c1_1399, %c2_1400, %c10_1401, %c0_1402] : memref<1x2x4x18x9xf32, #tpu.memory_space<vmem>>, vector<1x1x1x1x8xf32>
    %1021 = vector.shape_cast %1020 : vector<1x1x1x1x8xf32> to vector<8xf32>
    %c25_1403 = arith.constant 25 : index
    %c32_1404 = arith.constant 32 : index
    %1022 = vector.load %arg7[%c25_1403, %c32_1404] : memref<36x64xf32, #tpu.memory_space<vmem>>, vector<1x8xf32>
    %1023 = vector.shape_cast %1022 : vector<1x8xf32> to vector<8xf32>
    %1024 = vector.shape_cast %1021 : vector<8xf32> to vector<1x8xf32>
    tpu.vector_store %arg7[%c25_1403, %c32_1404], %1024 {strides = array<i32>} : memref<36x64xf32, #tpu.memory_space<vmem>>, vector<1x8xf32>,
    %c0_1405 = arith.constant 0 : index
    %c1_1406 = arith.constant 1 : index
    %c2_1407 = arith.constant 2 : index
    %c12_1408 = arith.constant 12 : index
    %c0_1409 = arith.constant 0 : index
    %1025 = vector.load %arg2[%c0_1405, %c1_1406, %c2_1407, %c12_1408, %c0_1409] : memref<1x2x4x18x9xf32, #tpu.memory_space<vmem>>, vector<1x1x1x1x8xf32>
    %1026 = vector.shape_cast %1025 : vector<1x1x1x1x8xf32> to vector<8xf32>
    %c25_1410 = arith.constant 25 : index
    %c40_1411 = arith.constant 40 : index
    %1027 = vector.load %arg7[%c25_1410, %c40_1411] : memref<36x64xf32, #tpu.memory_space<vmem>>, vector<1x8xf32>
    %1028 = vector.shape_cast %1027 : vector<1x8xf32> to vector<8xf32>
    %1029 = vector.shape_cast %1026 : vector<8xf32> to vector<1x8xf32>
    tpu.vector_store %arg7[%c25_1410, %c40_1411], %1029 {strides = array<i32>} : memref<36x64xf32, #tpu.memory_space<vmem>>, vector<1x8xf32>,
    %c0_1412 = arith.constant 0 : index
    %c1_1413 = arith.constant 1 : index
    %c2_1414 = arith.constant 2 : index
    %c14_1415 = arith.constant 14 : index
    %c0_1416 = arith.constant 0 : index
    %1030 = vector.load %arg2[%c0_1412, %c1_1413, %c2_1414, %c14_1415, %c0_1416] : memref<1x2x4x18x9xf32, #tpu.memory_space<vmem>>, vector<1x1x1x1x8xf32>
    %1031 = vector.shape_cast %1030 : vector<1x1x1x1x8xf32> to vector<8xf32>
    %c25_1417 = arith.constant 25 : index
    %c48_1418 = arith.constant 48 : index
    %1032 = vector.load %arg7[%c25_1417, %c48_1418] : memref<36x64xf32, #tpu.memory_space<vmem>>, vector<1x8xf32>
    %1033 = vector.shape_cast %1032 : vector<1x8xf32> to vector<8xf32>
    %1034 = vector.shape_cast %1031 : vector<8xf32> to vector<1x8xf32>
    tpu.vector_store %arg7[%c25_1417, %c48_1418], %1034 {strides = array<i32>} : memref<36x64xf32, #tpu.memory_space<vmem>>, vector<1x8xf32>,
    %c0_1419 = arith.constant 0 : index
    %c1_1420 = arith.constant 1 : index
    %c2_1421 = arith.constant 2 : index
    %c16_1422 = arith.constant 16 : index
    %c0_1423 = arith.constant 0 : index
    %1035 = vector.load %arg2[%c0_1419, %c1_1420, %c2_1421, %c16_1422, %c0_1423] : memref<1x2x4x18x9xf32, #tpu.memory_space<vmem>>, vector<1x1x1x1x8xf32>
    %1036 = vector.shape_cast %1035 : vector<1x1x1x1x8xf32> to vector<8xf32>
    %c25_1424 = arith.constant 25 : index
    %c56_1425 = arith.constant 56 : index
    %1037 = vector.load %arg7[%c25_1424, %c56_1425] : memref<36x64xf32, #tpu.memory_space<vmem>>, vector<1x8xf32>
    %1038 = vector.shape_cast %1037 : vector<1x8xf32> to vector<8xf32>
    %1039 = vector.shape_cast %1036 : vector<8xf32> to vector<1x8xf32>
    tpu.vector_store %arg7[%c25_1424, %c56_1425], %1039 {strides = array<i32>} : memref<36x64xf32, #tpu.memory_space<vmem>>, vector<1x8xf32>,
    %c0_1426 = arith.constant 0 : index
    %c0_1427 = arith.constant 0 : index
    %c2_1428 = arith.constant 2 : index
    %c2_1429 = arith.constant 2 : index
    %c1_1430 = arith.constant 1 : index
    %1040 = vector.load %arg2[%c0_1426, %c0_1427, %c2_1428, %c2_1429, %c1_1430] : memref<1x2x4x18x9xf32, #tpu.memory_space<vmem>>, vector<1x1x1x1x8xf32>
    %1041 = vector.shape_cast %1040 : vector<1x1x1x1x8xf32> to vector<8xf32>
    %c26 = arith.constant 26 : index
    %c0_1431 = arith.constant 0 : index
    %1042 = vector.load %arg7[%c26, %c0_1431] : memref<36x64xf32, #tpu.memory_space<vmem>>, vector<1x8xf32>
    %1043 = vector.shape_cast %1042 : vector<1x8xf32> to vector<8xf32>
    %1044 = vector.shape_cast %1041 : vector<8xf32> to vector<1x8xf32>
    tpu.vector_store %arg7[%c26, %c0_1431], %1044 {strides = array<i32>} : memref<36x64xf32, #tpu.memory_space<vmem>>, vector<1x8xf32>,
    %c0_1432 = arith.constant 0 : index
    %c0_1433 = arith.constant 0 : index
    %c2_1434 = arith.constant 2 : index
    %c4_1435 = arith.constant 4 : index
    %c1_1436 = arith.constant 1 : index
    %1045 = vector.load %arg2[%c0_1432, %c0_1433, %c2_1434, %c4_1435, %c1_1436] : memref<1x2x4x18x9xf32, #tpu.memory_space<vmem>>, vector<1x1x1x1x8xf32>
    %1046 = vector.shape_cast %1045 : vector<1x1x1x1x8xf32> to vector<8xf32>
    %c26_1437 = arith.constant 26 : index
    %c8_1438 = arith.constant 8 : index
    %1047 = vector.load %arg7[%c26_1437, %c8_1438] : memref<36x64xf32, #tpu.memory_space<vmem>>, vector<1x8xf32>
    %1048 = vector.shape_cast %1047 : vector<1x8xf32> to vector<8xf32>
    %1049 = vector.shape_cast %1046 : vector<8xf32> to vector<1x8xf32>
    tpu.vector_store %arg7[%c26_1437, %c8_1438], %1049 {strides = array<i32>} : memref<36x64xf32, #tpu.memory_space<vmem>>, vector<1x8xf32>,
    %c0_1439 = arith.constant 0 : index
    %c0_1440 = arith.constant 0 : index
    %c2_1441 = arith.constant 2 : index
    %c6_1442 = arith.constant 6 : index
    %c1_1443 = arith.constant 1 : index
    %1050 = vector.load %arg2[%c0_1439, %c0_1440, %c2_1441, %c6_1442, %c1_1443] : memref<1x2x4x18x9xf32, #tpu.memory_space<vmem>>, vector<1x1x1x1x8xf32>
    %1051 = vector.shape_cast %1050 : vector<1x1x1x1x8xf32> to vector<8xf32>
    %c26_1444 = arith.constant 26 : index
    %c16_1445 = arith.constant 16 : index
    %1052 = vector.load %arg7[%c26_1444, %c16_1445] : memref<36x64xf32, #tpu.memory_space<vmem>>, vector<1x8xf32>
    %1053 = vector.shape_cast %1052 : vector<1x8xf32> to vector<8xf32>
    %1054 = vector.shape_cast %1051 : vector<8xf32> to vector<1x8xf32>
    tpu.vector_store %arg7[%c26_1444, %c16_1445], %1054 {strides = array<i32>} : memref<36x64xf32, #tpu.memory_space<vmem>>, vector<1x8xf32>,
    %c0_1446 = arith.constant 0 : index
    %c0_1447 = arith.constant 0 : index
    %c2_1448 = arith.constant 2 : index
    %c8_1449 = arith.constant 8 : index
    %c1_1450 = arith.constant 1 : index
    %1055 = vector.load %arg2[%c0_1446, %c0_1447, %c2_1448, %c8_1449, %c1_1450] : memref<1x2x4x18x9xf32, #tpu.memory_space<vmem>>, vector<1x1x1x1x8xf32>
    %1056 = vector.shape_cast %1055 : vector<1x1x1x1x8xf32> to vector<8xf32>
    %c26_1451 = arith.constant 26 : index
    %c24_1452 = arith.constant 24 : index
    %1057 = vector.load %arg7[%c26_1451, %c24_1452] : memref<36x64xf32, #tpu.memory_space<vmem>>, vector<1x8xf32>
    %1058 = vector.shape_cast %1057 : vector<1x8xf32> to vector<8xf32>
    %1059 = vector.shape_cast %1056 : vector<8xf32> to vector<1x8xf32>
    tpu.vector_store %arg7[%c26_1451, %c24_1452], %1059 {strides = array<i32>} : memref<36x64xf32, #tpu.memory_space<vmem>>, vector<1x8xf32>,
    %c0_1453 = arith.constant 0 : index
    %c0_1454 = arith.constant 0 : index
    %c2_1455 = arith.constant 2 : index
    %c10_1456 = arith.constant 10 : index
    %c1_1457 = arith.constant 1 : index
    %1060 = vector.load %arg2[%c0_1453, %c0_1454, %c2_1455, %c10_1456, %c1_1457] : memref<1x2x4x18x9xf32, #tpu.memory_space<vmem>>, vector<1x1x1x1x8xf32>
    %1061 = vector.shape_cast %1060 : vector<1x1x1x1x8xf32> to vector<8xf32>
    %c26_1458 = arith.constant 26 : index
    %c32_1459 = arith.constant 32 : index
    %1062 = vector.load %arg7[%c26_1458, %c32_1459] : memref<36x64xf32, #tpu.memory_space<vmem>>, vector<1x8xf32>
    %1063 = vector.shape_cast %1062 : vector<1x8xf32> to vector<8xf32>
    %1064 = vector.shape_cast %1061 : vector<8xf32> to vector<1x8xf32>
    tpu.vector_store %arg7[%c26_1458, %c32_1459], %1064 {strides = array<i32>} : memref<36x64xf32, #tpu.memory_space<vmem>>, vector<1x8xf32>,
    %c0_1460 = arith.constant 0 : index
    %c0_1461 = arith.constant 0 : index
    %c2_1462 = arith.constant 2 : index
    %c12_1463 = arith.constant 12 : index
    %c1_1464 = arith.constant 1 : index
    %1065 = vector.load %arg2[%c0_1460, %c0_1461, %c2_1462, %c12_1463, %c1_1464] : memref<1x2x4x18x9xf32, #tpu.memory_space<vmem>>, vector<1x1x1x1x8xf32>
    %1066 = vector.shape_cast %1065 : vector<1x1x1x1x8xf32> to vector<8xf32>
    %c26_1465 = arith.constant 26 : index
    %c40_1466 = arith.constant 40 : index
    %1067 = vector.load %arg7[%c26_1465, %c40_1466] : memref<36x64xf32, #tpu.memory_space<vmem>>, vector<1x8xf32>
    %1068 = vector.shape_cast %1067 : vector<1x8xf32> to vector<8xf32>
    %1069 = vector.shape_cast %1066 : vector<8xf32> to vector<1x8xf32>
    tpu.vector_store %arg7[%c26_1465, %c40_1466], %1069 {strides = array<i32>} : memref<36x64xf32, #tpu.memory_space<vmem>>, vector<1x8xf32>,
    %c0_1467 = arith.constant 0 : index
    %c0_1468 = arith.constant 0 : index
    %c2_1469 = arith.constant 2 : index
    %c14_1470 = arith.constant 14 : index
    %c1_1471 = arith.constant 1 : index
    %1070 = vector.load %arg2[%c0_1467, %c0_1468, %c2_1469, %c14_1470, %c1_1471] : memref<1x2x4x18x9xf32, #tpu.memory_space<vmem>>, vector<1x1x1x1x8xf32>
    %1071 = vector.shape_cast %1070 : vector<1x1x1x1x8xf32> to vector<8xf32>
    %c26_1472 = arith.constant 26 : index
    %c48_1473 = arith.constant 48 : index
    %1072 = vector.load %arg7[%c26_1472, %c48_1473] : memref<36x64xf32, #tpu.memory_space<vmem>>, vector<1x8xf32>
    %1073 = vector.shape_cast %1072 : vector<1x8xf32> to vector<8xf32>
    %1074 = vector.shape_cast %1071 : vector<8xf32> to vector<1x8xf32>
    tpu.vector_store %arg7[%c26_1472, %c48_1473], %1074 {strides = array<i32>} : memref<36x64xf32, #tpu.memory_space<vmem>>, vector<1x8xf32>,
    %c0_1474 = arith.constant 0 : index
    %c0_1475 = arith.constant 0 : index
    %c2_1476 = arith.constant 2 : index
    %c16_1477 = arith.constant 16 : index
    %c1_1478 = arith.constant 1 : index
    %1075 = vector.load %arg2[%c0_1474, %c0_1475, %c2_1476, %c16_1477, %c1_1478] : memref<1x2x4x18x9xf32, #tpu.memory_space<vmem>>, vector<1x1x1x1x8xf32>
    %1076 = vector.shape_cast %1075 : vector<1x1x1x1x8xf32> to vector<8xf32>
    %c26_1479 = arith.constant 26 : index
    %c56_1480 = arith.constant 56 : index
    %1077 = vector.load %arg7[%c26_1479, %c56_1480] : memref<36x64xf32, #tpu.memory_space<vmem>>, vector<1x8xf32>
    %1078 = vector.shape_cast %1077 : vector<1x8xf32> to vector<8xf32>
    %1079 = vector.shape_cast %1076 : vector<8xf32> to vector<1x8xf32>
    tpu.vector_store %arg7[%c26_1479, %c56_1480], %1079 {strides = array<i32>} : memref<36x64xf32, #tpu.memory_space<vmem>>, vector<1x8xf32>,
    %c0_1481 = arith.constant 0 : index
    %c0_1482 = arith.constant 0 : index
    %c3_1483 = arith.constant 3 : index
    %c0_1484 = arith.constant 0 : index
    %c0_1485 = arith.constant 0 : index
    %1080 = vector.load %arg2[%c0_1481, %c0_1482, %c3_1483, %c0_1484, %c0_1485] : memref<1x2x4x18x9xf32, #tpu.memory_space<vmem>>, vector<1x1x1x1x8xf32>
    %1081 = vector.shape_cast %1080 : vector<1x1x1x1x8xf32> to vector<8xf32>
    %c27 = arith.constant 27 : index
    %c0_1486 = arith.constant 0 : index
    %1082 = vector.load %arg7[%c27, %c0_1486] : memref<36x64xf32, #tpu.memory_space<vmem>>, vector<1x8xf32>
    %1083 = vector.shape_cast %1082 : vector<1x8xf32> to vector<8xf32>
    %1084 = vector.shape_cast %1081 : vector<8xf32> to vector<1x8xf32>
    tpu.vector_store %arg7[%c27, %c0_1486], %1084 {strides = array<i32>} : memref<36x64xf32, #tpu.memory_space<vmem>>, vector<1x8xf32>,
    %c0_1487 = arith.constant 0 : index
    %c0_1488 = arith.constant 0 : index
    %c3_1489 = arith.constant 3 : index
    %c2_1490 = arith.constant 2 : index
    %c0_1491 = arith.constant 0 : index
    %1085 = vector.load %arg2[%c0_1487, %c0_1488, %c3_1489, %c2_1490, %c0_1491] : memref<1x2x4x18x9xf32, #tpu.memory_space<vmem>>, vector<1x1x1x1x8xf32>
    %1086 = vector.shape_cast %1085 : vector<1x1x1x1x8xf32> to vector<8xf32>
    %c27_1492 = arith.constant 27 : index
    %c8_1493 = arith.constant 8 : index
    %1087 = vector.load %arg7[%c27_1492, %c8_1493] : memref<36x64xf32, #tpu.memory_space<vmem>>, vector<1x8xf32>
    %1088 = vector.shape_cast %1087 : vector<1x8xf32> to vector<8xf32>
    %1089 = vector.shape_cast %1086 : vector<8xf32> to vector<1x8xf32>
    tpu.vector_store %arg7[%c27_1492, %c8_1493], %1089 {strides = array<i32>} : memref<36x64xf32, #tpu.memory_space<vmem>>, vector<1x8xf32>,
    %c0_1494 = arith.constant 0 : index
    %c0_1495 = arith.constant 0 : index
    %c3_1496 = arith.constant 3 : index
    %c4_1497 = arith.constant 4 : index
    %c0_1498 = arith.constant 0 : index
    %1090 = vector.load %arg2[%c0_1494, %c0_1495, %c3_1496, %c4_1497, %c0_1498] : memref<1x2x4x18x9xf32, #tpu.memory_space<vmem>>, vector<1x1x1x1x8xf32>
    %1091 = vector.shape_cast %1090 : vector<1x1x1x1x8xf32> to vector<8xf32>
    %c27_1499 = arith.constant 27 : index
    %c16_1500 = arith.constant 16 : index
    %1092 = vector.load %arg7[%c27_1499, %c16_1500] : memref<36x64xf32, #tpu.memory_space<vmem>>, vector<1x8xf32>
    %1093 = vector.shape_cast %1092 : vector<1x8xf32> to vector<8xf32>
    %1094 = vector.shape_cast %1091 : vector<8xf32> to vector<1x8xf32>
    tpu.vector_store %arg7[%c27_1499, %c16_1500], %1094 {strides = array<i32>} : memref<36x64xf32, #tpu.memory_space<vmem>>, vector<1x8xf32>,
    %c0_1501 = arith.constant 0 : index
    %c0_1502 = arith.constant 0 : index
    %c3_1503 = arith.constant 3 : index
    %c6_1504 = arith.constant 6 : index
    %c0_1505 = arith.constant 0 : index
    %1095 = vector.load %arg2[%c0_1501, %c0_1502, %c3_1503, %c6_1504, %c0_1505] : memref<1x2x4x18x9xf32, #tpu.memory_space<vmem>>, vector<1x1x1x1x8xf32>
    %1096 = vector.shape_cast %1095 : vector<1x1x1x1x8xf32> to vector<8xf32>
    %c27_1506 = arith.constant 27 : index
    %c24_1507 = arith.constant 24 : index
    %1097 = vector.load %arg7[%c27_1506, %c24_1507] : memref<36x64xf32, #tpu.memory_space<vmem>>, vector<1x8xf32>
    %1098 = vector.shape_cast %1097 : vector<1x8xf32> to vector<8xf32>
    %1099 = vector.shape_cast %1096 : vector<8xf32> to vector<1x8xf32>
    tpu.vector_store %arg7[%c27_1506, %c24_1507], %1099 {strides = array<i32>} : memref<36x64xf32, #tpu.memory_space<vmem>>, vector<1x8xf32>,
    %c0_1508 = arith.constant 0 : index
    %c0_1509 = arith.constant 0 : index
    %c3_1510 = arith.constant 3 : index
    %c8_1511 = arith.constant 8 : index
    %c0_1512 = arith.constant 0 : index
    %1100 = vector.load %arg2[%c0_1508, %c0_1509, %c3_1510, %c8_1511, %c0_1512] : memref<1x2x4x18x9xf32, #tpu.memory_space<vmem>>, vector<1x1x1x1x8xf32>
    %1101 = vector.shape_cast %1100 : vector<1x1x1x1x8xf32> to vector<8xf32>
    %c27_1513 = arith.constant 27 : index
    %c32_1514 = arith.constant 32 : index
    %1102 = vector.load %arg7[%c27_1513, %c32_1514] : memref<36x64xf32, #tpu.memory_space<vmem>>, vector<1x8xf32>
    %1103 = vector.shape_cast %1102 : vector<1x8xf32> to vector<8xf32>
    %1104 = vector.shape_cast %1101 : vector<8xf32> to vector<1x8xf32>
    tpu.vector_store %arg7[%c27_1513, %c32_1514], %1104 {strides = array<i32>} : memref<36x64xf32, #tpu.memory_space<vmem>>, vector<1x8xf32>,
    %c0_1515 = arith.constant 0 : index
    %c0_1516 = arith.constant 0 : index
    %c3_1517 = arith.constant 3 : index
    %c10_1518 = arith.constant 10 : index
    %c0_1519 = arith.constant 0 : index
    %1105 = vector.load %arg2[%c0_1515, %c0_1516, %c3_1517, %c10_1518, %c0_1519] : memref<1x2x4x18x9xf32, #tpu.memory_space<vmem>>, vector<1x1x1x1x8xf32>
    %1106 = vector.shape_cast %1105 : vector<1x1x1x1x8xf32> to vector<8xf32>
    %c27_1520 = arith.constant 27 : index
    %c40_1521 = arith.constant 40 : index
    %1107 = vector.load %arg7[%c27_1520, %c40_1521] : memref<36x64xf32, #tpu.memory_space<vmem>>, vector<1x8xf32>
    %1108 = vector.shape_cast %1107 : vector<1x8xf32> to vector<8xf32>
    %1109 = vector.shape_cast %1106 : vector<8xf32> to vector<1x8xf32>
    tpu.vector_store %arg7[%c27_1520, %c40_1521], %1109 {strides = array<i32>} : memref<36x64xf32, #tpu.memory_space<vmem>>, vector<1x8xf32>,
    %c0_1522 = arith.constant 0 : index
    %c0_1523 = arith.constant 0 : index
    %c3_1524 = arith.constant 3 : index
    %c12_1525 = arith.constant 12 : index
    %c0_1526 = arith.constant 0 : index
    %1110 = vector.load %arg2[%c0_1522, %c0_1523, %c3_1524, %c12_1525, %c0_1526] : memref<1x2x4x18x9xf32, #tpu.memory_space<vmem>>, vector<1x1x1x1x8xf32>
    %1111 = vector.shape_cast %1110 : vector<1x1x1x1x8xf32> to vector<8xf32>
    %c27_1527 = arith.constant 27 : index
    %c48_1528 = arith.constant 48 : index
    %1112 = vector.load %arg7[%c27_1527, %c48_1528] : memref<36x64xf32, #tpu.memory_space<vmem>>, vector<1x8xf32>
    %1113 = vector.shape_cast %1112 : vector<1x8xf32> to vector<8xf32>
    %1114 = vector.shape_cast %1111 : vector<8xf32> to vector<1x8xf32>
    tpu.vector_store %arg7[%c27_1527, %c48_1528], %1114 {strides = array<i32>} : memref<36x64xf32, #tpu.memory_space<vmem>>, vector<1x8xf32>,
    %c0_1529 = arith.constant 0 : index
    %c0_1530 = arith.constant 0 : index
    %c3_1531 = arith.constant 3 : index
    %c14_1532 = arith.constant 14 : index
    %c0_1533 = arith.constant 0 : index
    %1115 = vector.load %arg2[%c0_1529, %c0_1530, %c3_1531, %c14_1532, %c0_1533] : memref<1x2x4x18x9xf32, #tpu.memory_space<vmem>>, vector<1x1x1x1x8xf32>
    %1116 = vector.shape_cast %1115 : vector<1x1x1x1x8xf32> to vector<8xf32>
    %c27_1534 = arith.constant 27 : index
    %c56_1535 = arith.constant 56 : index
    %1117 = vector.load %arg7[%c27_1534, %c56_1535] : memref<36x64xf32, #tpu.memory_space<vmem>>, vector<1x8xf32>
    %1118 = vector.shape_cast %1117 : vector<1x8xf32> to vector<8xf32>
    %1119 = vector.shape_cast %1116 : vector<8xf32> to vector<1x8xf32>
    tpu.vector_store %arg7[%c27_1534, %c56_1535], %1119 {strides = array<i32>} : memref<36x64xf32, #tpu.memory_space<vmem>>, vector<1x8xf32>,
    %c0_1536 = arith.constant 0 : index
    %c1_1537 = arith.constant 1 : index
    %c3_1538 = arith.constant 3 : index
    %c0_1539 = arith.constant 0 : index
    %c0_1540 = arith.constant 0 : index
    %1120 = vector.load %arg2[%c0_1536, %c1_1537, %c3_1538, %c0_1539, %c0_1540] : memref<1x2x4x18x9xf32, #tpu.memory_space<vmem>>, vector<1x1x1x1x8xf32>
    %1121 = vector.shape_cast %1120 : vector<1x1x1x1x8xf32> to vector<8xf32>
    %c28 = arith.constant 28 : index
    %c0_1541 = arith.constant 0 : index
    %1122 = vector.load %arg7[%c28, %c0_1541] : memref<36x64xf32, #tpu.memory_space<vmem>>, vector<1x8xf32>
    %1123 = vector.shape_cast %1122 : vector<1x8xf32> to vector<8xf32>
    %1124 = vector.shape_cast %1121 : vector<8xf32> to vector<1x8xf32>
    tpu.vector_store %arg7[%c28, %c0_1541], %1124 {strides = array<i32>} : memref<36x64xf32, #tpu.memory_space<vmem>>, vector<1x8xf32>,
    %c0_1542 = arith.constant 0 : index
    %c1_1543 = arith.constant 1 : index
    %c3_1544 = arith.constant 3 : index
    %c2_1545 = arith.constant 2 : index
    %c0_1546 = arith.constant 0 : index
    %1125 = vector.load %arg2[%c0_1542, %c1_1543, %c3_1544, %c2_1545, %c0_1546] : memref<1x2x4x18x9xf32, #tpu.memory_space<vmem>>, vector<1x1x1x1x8xf32>
    %1126 = vector.shape_cast %1125 : vector<1x1x1x1x8xf32> to vector<8xf32>
    %c28_1547 = arith.constant 28 : index
    %c8_1548 = arith.constant 8 : index
    %1127 = vector.load %arg7[%c28_1547, %c8_1548] : memref<36x64xf32, #tpu.memory_space<vmem>>, vector<1x8xf32>
    %1128 = vector.shape_cast %1127 : vector<1x8xf32> to vector<8xf32>
    %1129 = vector.shape_cast %1126 : vector<8xf32> to vector<1x8xf32>
    tpu.vector_store %arg7[%c28_1547, %c8_1548], %1129 {strides = array<i32>} : memref<36x64xf32, #tpu.memory_space<vmem>>, vector<1x8xf32>,
    %c0_1549 = arith.constant 0 : index
    %c1_1550 = arith.constant 1 : index
    %c3_1551 = arith.constant 3 : index
    %c4_1552 = arith.constant 4 : index
    %c0_1553 = arith.constant 0 : index
    %1130 = vector.load %arg2[%c0_1549, %c1_1550, %c3_1551, %c4_1552, %c0_1553] : memref<1x2x4x18x9xf32, #tpu.memory_space<vmem>>, vector<1x1x1x1x8xf32>
    %1131 = vector.shape_cast %1130 : vector<1x1x1x1x8xf32> to vector<8xf32>
    %c28_1554 = arith.constant 28 : index
    %c16_1555 = arith.constant 16 : index
    %1132 = vector.load %arg7[%c28_1554, %c16_1555] : memref<36x64xf32, #tpu.memory_space<vmem>>, vector<1x8xf32>
    %1133 = vector.shape_cast %1132 : vector<1x8xf32> to vector<8xf32>
    %1134 = vector.shape_cast %1131 : vector<8xf32> to vector<1x8xf32>
    tpu.vector_store %arg7[%c28_1554, %c16_1555], %1134 {strides = array<i32>} : memref<36x64xf32, #tpu.memory_space<vmem>>, vector<1x8xf32>,
    %c0_1556 = arith.constant 0 : index
    %c1_1557 = arith.constant 1 : index
    %c3_1558 = arith.constant 3 : index
    %c6_1559 = arith.constant 6 : index
    %c0_1560 = arith.constant 0 : index
    %1135 = vector.load %arg2[%c0_1556, %c1_1557, %c3_1558, %c6_1559, %c0_1560] : memref<1x2x4x18x9xf32, #tpu.memory_space<vmem>>, vector<1x1x1x1x8xf32>
    %1136 = vector.shape_cast %1135 : vector<1x1x1x1x8xf32> to vector<8xf32>
    %c28_1561 = arith.constant 28 : index
    %c24_1562 = arith.constant 24 : index
    %1137 = vector.load %arg7[%c28_1561, %c24_1562] : memref<36x64xf32, #tpu.memory_space<vmem>>, vector<1x8xf32>
    %1138 = vector.shape_cast %1137 : vector<1x8xf32> to vector<8xf32>
    %1139 = vector.shape_cast %1136 : vector<8xf32> to vector<1x8xf32>
    tpu.vector_store %arg7[%c28_1561, %c24_1562], %1139 {strides = array<i32>} : memref<36x64xf32, #tpu.memory_space<vmem>>, vector<1x8xf32>,
    %c0_1563 = arith.constant 0 : index
    %c1_1564 = arith.constant 1 : index
    %c3_1565 = arith.constant 3 : index
    %c8_1566 = arith.constant 8 : index
    %c0_1567 = arith.constant 0 : index
    %1140 = vector.load %arg2[%c0_1563, %c1_1564, %c3_1565, %c8_1566, %c0_1567] : memref<1x2x4x18x9xf32, #tpu.memory_space<vmem>>, vector<1x1x1x1x8xf32>
    %1141 = vector.shape_cast %1140 : vector<1x1x1x1x8xf32> to vector<8xf32>
    %c28_1568 = arith.constant 28 : index
    %c32_1569 = arith.constant 32 : index
    %1142 = vector.load %arg7[%c28_1568, %c32_1569] : memref<36x64xf32, #tpu.memory_space<vmem>>, vector<1x8xf32>
    %1143 = vector.shape_cast %1142 : vector<1x8xf32> to vector<8xf32>
    %1144 = vector.shape_cast %1141 : vector<8xf32> to vector<1x8xf32>
    tpu.vector_store %arg7[%c28_1568, %c32_1569], %1144 {strides = array<i32>} : memref<36x64xf32, #tpu.memory_space<vmem>>, vector<1x8xf32>,
    %c0_1570 = arith.constant 0 : index
    %c1_1571 = arith.constant 1 : index
    %c3_1572 = arith.constant 3 : index
    %c10_1573 = arith.constant 10 : index
    %c0_1574 = arith.constant 0 : index
    %1145 = vector.load %arg2[%c0_1570, %c1_1571, %c3_1572, %c10_1573, %c0_1574] : memref<1x2x4x18x9xf32, #tpu.memory_space<vmem>>, vector<1x1x1x1x8xf32>
    %1146 = vector.shape_cast %1145 : vector<1x1x1x1x8xf32> to vector<8xf32>
    %c28_1575 = arith.constant 28 : index
    %c40_1576 = arith.constant 40 : index
    %1147 = vector.load %arg7[%c28_1575, %c40_1576] : memref<36x64xf32, #tpu.memory_space<vmem>>, vector<1x8xf32>
    %1148 = vector.shape_cast %1147 : vector<1x8xf32> to vector<8xf32>
    %1149 = vector.shape_cast %1146 : vector<8xf32> to vector<1x8xf32>
    tpu.vector_store %arg7[%c28_1575, %c40_1576], %1149 {strides = array<i32>} : memref<36x64xf32, #tpu.memory_space<vmem>>, vector<1x8xf32>,
    %c0_1577 = arith.constant 0 : index
    %c1_1578 = arith.constant 1 : index
    %c3_1579 = arith.constant 3 : index
    %c12_1580 = arith.constant 12 : index
    %c0_1581 = arith.constant 0 : index
    %1150 = vector.load %arg2[%c0_1577, %c1_1578, %c3_1579, %c12_1580, %c0_1581] : memref<1x2x4x18x9xf32, #tpu.memory_space<vmem>>, vector<1x1x1x1x8xf32>
    %1151 = vector.shape_cast %1150 : vector<1x1x1x1x8xf32> to vector<8xf32>
    %c28_1582 = arith.constant 28 : index
    %c48_1583 = arith.constant 48 : index
    %1152 = vector.load %arg7[%c28_1582, %c48_1583] : memref<36x64xf32, #tpu.memory_space<vmem>>, vector<1x8xf32>
    %1153 = vector.shape_cast %1152 : vector<1x8xf32> to vector<8xf32>
    %1154 = vector.shape_cast %1151 : vector<8xf32> to vector<1x8xf32>
    tpu.vector_store %arg7[%c28_1582, %c48_1583], %1154 {strides = array<i32>} : memref<36x64xf32, #tpu.memory_space<vmem>>, vector<1x8xf32>,
    %c0_1584 = arith.constant 0 : index
    %c1_1585 = arith.constant 1 : index
    %c3_1586 = arith.constant 3 : index
    %c14_1587 = arith.constant 14 : index
    %c0_1588 = arith.constant 0 : index
    %1155 = vector.load %arg2[%c0_1584, %c1_1585, %c3_1586, %c14_1587, %c0_1588] : memref<1x2x4x18x9xf32, #tpu.memory_space<vmem>>, vector<1x1x1x1x8xf32>
    %1156 = vector.shape_cast %1155 : vector<1x1x1x1x8xf32> to vector<8xf32>
    %c28_1589 = arith.constant 28 : index
    %c56_1590 = arith.constant 56 : index
    %1157 = vector.load %arg7[%c28_1589, %c56_1590] : memref<36x64xf32, #tpu.memory_space<vmem>>, vector<1x8xf32>
    %1158 = vector.shape_cast %1157 : vector<1x8xf32> to vector<8xf32>
    %1159 = vector.shape_cast %1156 : vector<8xf32> to vector<1x8xf32>
    tpu.vector_store %arg7[%c28_1589, %c56_1590], %1159 {strides = array<i32>} : memref<36x64xf32, #tpu.memory_space<vmem>>, vector<1x8xf32>,
    %c0_1591 = arith.constant 0 : index
    %c0_1592 = arith.constant 0 : index
    %c3_1593 = arith.constant 3 : index
    %c0_1594 = arith.constant 0 : index
    %c1_1595 = arith.constant 1 : index
    %1160 = vector.load %arg2[%c0_1591, %c0_1592, %c3_1593, %c0_1594, %c1_1595] : memref<1x2x4x18x9xf32, #tpu.memory_space<vmem>>, vector<1x1x1x1x8xf32>
    %1161 = vector.shape_cast %1160 : vector<1x1x1x1x8xf32> to vector<8xf32>
    %c29 = arith.constant 29 : index
    %c0_1596 = arith.constant 0 : index
    %1162 = vector.load %arg7[%c29, %c0_1596] : memref<36x64xf32, #tpu.memory_space<vmem>>, vector<1x8xf32>
    %1163 = vector.shape_cast %1162 : vector<1x8xf32> to vector<8xf32>
    %1164 = vector.shape_cast %1161 : vector<8xf32> to vector<1x8xf32>
    tpu.vector_store %arg7[%c29, %c0_1596], %1164 {strides = array<i32>} : memref<36x64xf32, #tpu.memory_space<vmem>>, vector<1x8xf32>,
    %c0_1597 = arith.constant 0 : index
    %c0_1598 = arith.constant 0 : index
    %c3_1599 = arith.constant 3 : index
    %c2_1600 = arith.constant 2 : index
    %c1_1601 = arith.constant 1 : index
    %1165 = vector.load %arg2[%c0_1597, %c0_1598, %c3_1599, %c2_1600, %c1_1601] : memref<1x2x4x18x9xf32, #tpu.memory_space<vmem>>, vector<1x1x1x1x8xf32>
    %1166 = vector.shape_cast %1165 : vector<1x1x1x1x8xf32> to vector<8xf32>
    %c29_1602 = arith.constant 29 : index
    %c8_1603 = arith.constant 8 : index
    %1167 = vector.load %arg7[%c29_1602, %c8_1603] : memref<36x64xf32, #tpu.memory_space<vmem>>, vector<1x8xf32>
    %1168 = vector.shape_cast %1167 : vector<1x8xf32> to vector<8xf32>
    %1169 = vector.shape_cast %1166 : vector<8xf32> to vector<1x8xf32>
    tpu.vector_store %arg7[%c29_1602, %c8_1603], %1169 {strides = array<i32>} : memref<36x64xf32, #tpu.memory_space<vmem>>, vector<1x8xf32>,
    %c0_1604 = arith.constant 0 : index
    %c0_1605 = arith.constant 0 : index
    %c3_1606 = arith.constant 3 : index
    %c4_1607 = arith.constant 4 : index
    %c1_1608 = arith.constant 1 : index
    %1170 = vector.load %arg2[%c0_1604, %c0_1605, %c3_1606, %c4_1607, %c1_1608] : memref<1x2x4x18x9xf32, #tpu.memory_space<vmem>>, vector<1x1x1x1x8xf32>
    %1171 = vector.shape_cast %1170 : vector<1x1x1x1x8xf32> to vector<8xf32>
    %c29_1609 = arith.constant 29 : index
    %c16_1610 = arith.constant 16 : index
    %1172 = vector.load %arg7[%c29_1609, %c16_1610] : memref<36x64xf32, #tpu.memory_space<vmem>>, vector<1x8xf32>
    %1173 = vector.shape_cast %1172 : vector<1x8xf32> to vector<8xf32>
    %1174 = vector.shape_cast %1171 : vector<8xf32> to vector<1x8xf32>
    tpu.vector_store %arg7[%c29_1609, %c16_1610], %1174 {strides = array<i32>} : memref<36x64xf32, #tpu.memory_space<vmem>>, vector<1x8xf32>,
    %c0_1611 = arith.constant 0 : index
    %c0_1612 = arith.constant 0 : index
    %c3_1613 = arith.constant 3 : index
    %c6_1614 = arith.constant 6 : index
    %c1_1615 = arith.constant 1 : index
    %1175 = vector.load %arg2[%c0_1611, %c0_1612, %c3_1613, %c6_1614, %c1_1615] : memref<1x2x4x18x9xf32, #tpu.memory_space<vmem>>, vector<1x1x1x1x8xf32>
    %1176 = vector.shape_cast %1175 : vector<1x1x1x1x8xf32> to vector<8xf32>
    %c29_1616 = arith.constant 29 : index
    %c24_1617 = arith.constant 24 : index
    %1177 = vector.load %arg7[%c29_1616, %c24_1617] : memref<36x64xf32, #tpu.memory_space<vmem>>, vector<1x8xf32>
    %1178 = vector.shape_cast %1177 : vector<1x8xf32> to vector<8xf32>
    %1179 = vector.shape_cast %1176 : vector<8xf32> to vector<1x8xf32>
    tpu.vector_store %arg7[%c29_1616, %c24_1617], %1179 {strides = array<i32>} : memref<36x64xf32, #tpu.memory_space<vmem>>, vector<1x8xf32>,
    %c0_1618 = arith.constant 0 : index
    %c0_1619 = arith.constant 0 : index
    %c3_1620 = arith.constant 3 : index
    %c8_1621 = arith.constant 8 : index
    %c1_1622 = arith.constant 1 : index
    %1180 = vector.load %arg2[%c0_1618, %c0_1619, %c3_1620, %c8_1621, %c1_1622] : memref<1x2x4x18x9xf32, #tpu.memory_space<vmem>>, vector<1x1x1x1x8xf32>
    %1181 = vector.shape_cast %1180 : vector<1x1x1x1x8xf32> to vector<8xf32>
    %c29_1623 = arith.constant 29 : index
    %c32_1624 = arith.constant 32 : index
    %1182 = vector.load %arg7[%c29_1623, %c32_1624] : memref<36x64xf32, #tpu.memory_space<vmem>>, vector<1x8xf32>
    %1183 = vector.shape_cast %1182 : vector<1x8xf32> to vector<8xf32>
    %1184 = vector.shape_cast %1181 : vector<8xf32> to vector<1x8xf32>
    tpu.vector_store %arg7[%c29_1623, %c32_1624], %1184 {strides = array<i32>} : memref<36x64xf32, #tpu.memory_space<vmem>>, vector<1x8xf32>,
    %c0_1625 = arith.constant 0 : index
    %c0_1626 = arith.constant 0 : index
    %c3_1627 = arith.constant 3 : index
    %c10_1628 = arith.constant 10 : index
    %c1_1629 = arith.constant 1 : index
    %1185 = vector.load %arg2[%c0_1625, %c0_1626, %c3_1627, %c10_1628, %c1_1629] : memref<1x2x4x18x9xf32, #tpu.memory_space<vmem>>, vector<1x1x1x1x8xf32>
    %1186 = vector.shape_cast %1185 : vector<1x1x1x1x8xf32> to vector<8xf32>
    %c29_1630 = arith.constant 29 : index
    %c40_1631 = arith.constant 40 : index
    %1187 = vector.load %arg7[%c29_1630, %c40_1631] : memref<36x64xf32, #tpu.memory_space<vmem>>, vector<1x8xf32>
    %1188 = vector.shape_cast %1187 : vector<1x8xf32> to vector<8xf32>
    %1189 = vector.shape_cast %1186 : vector<8xf32> to vector<1x8xf32>
    tpu.vector_store %arg7[%c29_1630, %c40_1631], %1189 {strides = array<i32>} : memref<36x64xf32, #tpu.memory_space<vmem>>, vector<1x8xf32>,
    %c0_1632 = arith.constant 0 : index
    %c0_1633 = arith.constant 0 : index
    %c3_1634 = arith.constant 3 : index
    %c12_1635 = arith.constant 12 : index
    %c1_1636 = arith.constant 1 : index
    %1190 = vector.load %arg2[%c0_1632, %c0_1633, %c3_1634, %c12_1635, %c1_1636] : memref<1x2x4x18x9xf32, #tpu.memory_space<vmem>>, vector<1x1x1x1x8xf32>
    %1191 = vector.shape_cast %1190 : vector<1x1x1x1x8xf32> to vector<8xf32>
    %c29_1637 = arith.constant 29 : index
    %c48_1638 = arith.constant 48 : index
    %1192 = vector.load %arg7[%c29_1637, %c48_1638] : memref<36x64xf32, #tpu.memory_space<vmem>>, vector<1x8xf32>
    %1193 = vector.shape_cast %1192 : vector<1x8xf32> to vector<8xf32>
    %1194 = vector.shape_cast %1191 : vector<8xf32> to vector<1x8xf32>
    tpu.vector_store %arg7[%c29_1637, %c48_1638], %1194 {strides = array<i32>} : memref<36x64xf32, #tpu.memory_space<vmem>>, vector<1x8xf32>,
    %c0_1639 = arith.constant 0 : index
    %c0_1640 = arith.constant 0 : index
    %c3_1641 = arith.constant 3 : index
    %c14_1642 = arith.constant 14 : index
    %c1_1643 = arith.constant 1 : index
    %1195 = vector.load %arg2[%c0_1639, %c0_1640, %c3_1641, %c14_1642, %c1_1643] : memref<1x2x4x18x9xf32, #tpu.memory_space<vmem>>, vector<1x1x1x1x8xf32>
    %1196 = vector.shape_cast %1195 : vector<1x1x1x1x8xf32> to vector<8xf32>
    %c29_1644 = arith.constant 29 : index
    %c56_1645 = arith.constant 56 : index
    %1197 = vector.load %arg7[%c29_1644, %c56_1645] : memref<36x64xf32, #tpu.memory_space<vmem>>, vector<1x8xf32>
    %1198 = vector.shape_cast %1197 : vector<1x8xf32> to vector<8xf32>
    %1199 = vector.shape_cast %1196 : vector<8xf32> to vector<1x8xf32>
    tpu.vector_store %arg7[%c29_1644, %c56_1645], %1199 {strides = array<i32>} : memref<36x64xf32, #tpu.memory_space<vmem>>, vector<1x8xf32>,
    %c0_1646 = arith.constant 0 : index
    %c0_1647 = arith.constant 0 : index
    %c3_1648 = arith.constant 3 : index
    %c1_1649 = arith.constant 1 : index
    %c0_1650 = arith.constant 0 : index
    %1200 = vector.load %arg2[%c0_1646, %c0_1647, %c3_1648, %c1_1649, %c0_1650] : memref<1x2x4x18x9xf32, #tpu.memory_space<vmem>>, vector<1x1x1x1x8xf32>
    %1201 = vector.shape_cast %1200 : vector<1x1x1x1x8xf32> to vector<8xf32>
    %c30 = arith.constant 30 : index
    %c0_1651 = arith.constant 0 : index
    %1202 = vector.load %arg7[%c30, %c0_1651] : memref<36x64xf32, #tpu.memory_space<vmem>>, vector<1x8xf32>
    %1203 = vector.shape_cast %1202 : vector<1x8xf32> to vector<8xf32>
    %1204 = vector.shape_cast %1201 : vector<8xf32> to vector<1x8xf32>
    tpu.vector_store %arg7[%c30, %c0_1651], %1204 {strides = array<i32>} : memref<36x64xf32, #tpu.memory_space<vmem>>, vector<1x8xf32>,
    %c0_1652 = arith.constant 0 : index
    %c0_1653 = arith.constant 0 : index
    %c3_1654 = arith.constant 3 : index
    %c3_1655 = arith.constant 3 : index
    %c0_1656 = arith.constant 0 : index
    %1205 = vector.load %arg2[%c0_1652, %c0_1653, %c3_1654, %c3_1655, %c0_1656] : memref<1x2x4x18x9xf32, #tpu.memory_space<vmem>>, vector<1x1x1x1x8xf32>
    %1206 = vector.shape_cast %1205 : vector<1x1x1x1x8xf32> to vector<8xf32>
    %c30_1657 = arith.constant 30 : index
    %c8_1658 = arith.constant 8 : index
    %1207 = vector.load %arg7[%c30_1657, %c8_1658] : memref<36x64xf32, #tpu.memory_space<vmem>>, vector<1x8xf32>
    %1208 = vector.shape_cast %1207 : vector<1x8xf32> to vector<8xf32>
    %1209 = vector.shape_cast %1206 : vector<8xf32> to vector<1x8xf32>
    tpu.vector_store %arg7[%c30_1657, %c8_1658], %1209 {strides = array<i32>} : memref<36x64xf32, #tpu.memory_space<vmem>>, vector<1x8xf32>,
    %c0_1659 = arith.constant 0 : index
    %c0_1660 = arith.constant 0 : index
    %c3_1661 = arith.constant 3 : index
    %c5_1662 = arith.constant 5 : index
    %c0_1663 = arith.constant 0 : index
    %1210 = vector.load %arg2[%c0_1659, %c0_1660, %c3_1661, %c5_1662, %c0_1663] : memref<1x2x4x18x9xf32, #tpu.memory_space<vmem>>, vector<1x1x1x1x8xf32>
    %1211 = vector.shape_cast %1210 : vector<1x1x1x1x8xf32> to vector<8xf32>
    %c30_1664 = arith.constant 30 : index
    %c16_1665 = arith.constant 16 : index
    %1212 = vector.load %arg7[%c30_1664, %c16_1665] : memref<36x64xf32, #tpu.memory_space<vmem>>, vector<1x8xf32>
    %1213 = vector.shape_cast %1212 : vector<1x8xf32> to vector<8xf32>
    %1214 = vector.shape_cast %1211 : vector<8xf32> to vector<1x8xf32>
    tpu.vector_store %arg7[%c30_1664, %c16_1665], %1214 {strides = array<i32>} : memref<36x64xf32, #tpu.memory_space<vmem>>, vector<1x8xf32>,
    %c0_1666 = arith.constant 0 : index
    %c0_1667 = arith.constant 0 : index
    %c3_1668 = arith.constant 3 : index
    %c7_1669 = arith.constant 7 : index
    %c0_1670 = arith.constant 0 : index
    %1215 = vector.load %arg2[%c0_1666, %c0_1667, %c3_1668, %c7_1669, %c0_1670] : memref<1x2x4x18x9xf32, #tpu.memory_space<vmem>>, vector<1x1x1x1x8xf32>
    %1216 = vector.shape_cast %1215 : vector<1x1x1x1x8xf32> to vector<8xf32>
    %c30_1671 = arith.constant 30 : index
    %c24_1672 = arith.constant 24 : index
    %1217 = vector.load %arg7[%c30_1671, %c24_1672] : memref<36x64xf32, #tpu.memory_space<vmem>>, vector<1x8xf32>
    %1218 = vector.shape_cast %1217 : vector<1x8xf32> to vector<8xf32>
    %1219 = vector.shape_cast %1216 : vector<8xf32> to vector<1x8xf32>
    tpu.vector_store %arg7[%c30_1671, %c24_1672], %1219 {strides = array<i32>} : memref<36x64xf32, #tpu.memory_space<vmem>>, vector<1x8xf32>,
    %c0_1673 = arith.constant 0 : index
    %c0_1674 = arith.constant 0 : index
    %c3_1675 = arith.constant 3 : index
    %c9_1676 = arith.constant 9 : index
    %c0_1677 = arith.constant 0 : index
    %1220 = vector.load %arg2[%c0_1673, %c0_1674, %c3_1675, %c9_1676, %c0_1677] : memref<1x2x4x18x9xf32, #tpu.memory_space<vmem>>, vector<1x1x1x1x8xf32>
    %1221 = vector.shape_cast %1220 : vector<1x1x1x1x8xf32> to vector<8xf32>
    %c30_1678 = arith.constant 30 : index
    %c32_1679 = arith.constant 32 : index
    %1222 = vector.load %arg7[%c30_1678, %c32_1679] : memref<36x64xf32, #tpu.memory_space<vmem>>, vector<1x8xf32>
    %1223 = vector.shape_cast %1222 : vector<1x8xf32> to vector<8xf32>
    %1224 = vector.shape_cast %1221 : vector<8xf32> to vector<1x8xf32>
    tpu.vector_store %arg7[%c30_1678, %c32_1679], %1224 {strides = array<i32>} : memref<36x64xf32, #tpu.memory_space<vmem>>, vector<1x8xf32>,
    %c0_1680 = arith.constant 0 : index
    %c0_1681 = arith.constant 0 : index
    %c3_1682 = arith.constant 3 : index
    %c11_1683 = arith.constant 11 : index
    %c0_1684 = arith.constant 0 : index
    %1225 = vector.load %arg2[%c0_1680, %c0_1681, %c3_1682, %c11_1683, %c0_1684] : memref<1x2x4x18x9xf32, #tpu.memory_space<vmem>>, vector<1x1x1x1x8xf32>
    %1226 = vector.shape_cast %1225 : vector<1x1x1x1x8xf32> to vector<8xf32>
    %c30_1685 = arith.constant 30 : index
    %c40_1686 = arith.constant 40 : index
    %1227 = vector.load %arg7[%c30_1685, %c40_1686] : memref<36x64xf32, #tpu.memory_space<vmem>>, vector<1x8xf32>
    %1228 = vector.shape_cast %1227 : vector<1x8xf32> to vector<8xf32>
    %1229 = vector.shape_cast %1226 : vector<8xf32> to vector<1x8xf32>
    tpu.vector_store %arg7[%c30_1685, %c40_1686], %1229 {strides = array<i32>} : memref<36x64xf32, #tpu.memory_space<vmem>>, vector<1x8xf32>,
    %c0_1687 = arith.constant 0 : index
    %c0_1688 = arith.constant 0 : index
    %c3_1689 = arith.constant 3 : index
    %c13_1690 = arith.constant 13 : index
    %c0_1691 = arith.constant 0 : index
    %1230 = vector.load %arg2[%c0_1687, %c0_1688, %c3_1689, %c13_1690, %c0_1691] : memref<1x2x4x18x9xf32, #tpu.memory_space<vmem>>, vector<1x1x1x1x8xf32>
    %1231 = vector.shape_cast %1230 : vector<1x1x1x1x8xf32> to vector<8xf32>
    %c30_1692 = arith.constant 30 : index
    %c48_1693 = arith.constant 48 : index
    %1232 = vector.load %arg7[%c30_1692, %c48_1693] : memref<36x64xf32, #tpu.memory_space<vmem>>, vector<1x8xf32>
    %1233 = vector.shape_cast %1232 : vector<1x8xf32> to vector<8xf32>
    %1234 = vector.shape_cast %1231 : vector<8xf32> to vector<1x8xf32>
    tpu.vector_store %arg7[%c30_1692, %c48_1693], %1234 {strides = array<i32>} : memref<36x64xf32, #tpu.memory_space<vmem>>, vector<1x8xf32>,
    %c0_1694 = arith.constant 0 : index
    %c0_1695 = arith.constant 0 : index
    %c3_1696 = arith.constant 3 : index
    %c15_1697 = arith.constant 15 : index
    %c0_1698 = arith.constant 0 : index
    %1235 = vector.load %arg2[%c0_1694, %c0_1695, %c3_1696, %c15_1697, %c0_1698] : memref<1x2x4x18x9xf32, #tpu.memory_space<vmem>>, vector<1x1x1x1x8xf32>
    %1236 = vector.shape_cast %1235 : vector<1x1x1x1x8xf32> to vector<8xf32>
    %c30_1699 = arith.constant 30 : index
    %c56_1700 = arith.constant 56 : index
    %1237 = vector.load %arg7[%c30_1699, %c56_1700] : memref<36x64xf32, #tpu.memory_space<vmem>>, vector<1x8xf32>
    %1238 = vector.shape_cast %1237 : vector<1x8xf32> to vector<8xf32>
    %1239 = vector.shape_cast %1236 : vector<8xf32> to vector<1x8xf32>
    tpu.vector_store %arg7[%c30_1699, %c56_1700], %1239 {strides = array<i32>} : memref<36x64xf32, #tpu.memory_space<vmem>>, vector<1x8xf32>,
    %c0_1701 = arith.constant 0 : index
    %c1_1702 = arith.constant 1 : index
    %c3_1703 = arith.constant 3 : index
    %c1_1704 = arith.constant 1 : index
    %c0_1705 = arith.constant 0 : index
    %1240 = vector.load %arg2[%c0_1701, %c1_1702, %c3_1703, %c1_1704, %c0_1705] : memref<1x2x4x18x9xf32, #tpu.memory_space<vmem>>, vector<1x1x1x1x8xf32>
    %1241 = vector.shape_cast %1240 : vector<1x1x1x1x8xf32> to vector<8xf32>
    %c31 = arith.constant 31 : index
    %c0_1706 = arith.constant 0 : index
    %1242 = vector.load %arg7[%c31, %c0_1706] : memref<36x64xf32, #tpu.memory_space<vmem>>, vector<1x8xf32>
    %1243 = vector.shape_cast %1242 : vector<1x8xf32> to vector<8xf32>
    %1244 = vector.shape_cast %1241 : vector<8xf32> to vector<1x8xf32>
    tpu.vector_store %arg7[%c31, %c0_1706], %1244 {strides = array<i32>} : memref<36x64xf32, #tpu.memory_space<vmem>>, vector<1x8xf32>,
    %c0_1707 = arith.constant 0 : index
    %c1_1708 = arith.constant 1 : index
    %c3_1709 = arith.constant 3 : index
    %c3_1710 = arith.constant 3 : index
    %c0_1711 = arith.constant 0 : index
    %1245 = vector.load %arg2[%c0_1707, %c1_1708, %c3_1709, %c3_1710, %c0_1711] : memref<1x2x4x18x9xf32, #tpu.memory_space<vmem>>, vector<1x1x1x1x8xf32>
    %1246 = vector.shape_cast %1245 : vector<1x1x1x1x8xf32> to vector<8xf32>
    %c31_1712 = arith.constant 31 : index
    %c8_1713 = arith.constant 8 : index
    %1247 = vector.load %arg7[%c31_1712, %c8_1713] : memref<36x64xf32, #tpu.memory_space<vmem>>, vector<1x8xf32>
    %1248 = vector.shape_cast %1247 : vector<1x8xf32> to vector<8xf32>
    %1249 = vector.shape_cast %1246 : vector<8xf32> to vector<1x8xf32>
    tpu.vector_store %arg7[%c31_1712, %c8_1713], %1249 {strides = array<i32>} : memref<36x64xf32, #tpu.memory_space<vmem>>, vector<1x8xf32>,
    %c0_1714 = arith.constant 0 : index
    %c1_1715 = arith.constant 1 : index
    %c3_1716 = arith.constant 3 : index
    %c5_1717 = arith.constant 5 : index
    %c0_1718 = arith.constant 0 : index
    %1250 = vector.load %arg2[%c0_1714, %c1_1715, %c3_1716, %c5_1717, %c0_1718] : memref<1x2x4x18x9xf32, #tpu.memory_space<vmem>>, vector<1x1x1x1x8xf32>
    %1251 = vector.shape_cast %1250 : vector<1x1x1x1x8xf32> to vector<8xf32>
    %c31_1719 = arith.constant 31 : index
    %c16_1720 = arith.constant 16 : index
    %1252 = vector.load %arg7[%c31_1719, %c16_1720] : memref<36x64xf32, #tpu.memory_space<vmem>>, vector<1x8xf32>
    %1253 = vector.shape_cast %1252 : vector<1x8xf32> to vector<8xf32>
    %1254 = vector.shape_cast %1251 : vector<8xf32> to vector<1x8xf32>
    tpu.vector_store %arg7[%c31_1719, %c16_1720], %1254 {strides = array<i32>} : memref<36x64xf32, #tpu.memory_space<vmem>>, vector<1x8xf32>,
    %c0_1721 = arith.constant 0 : index
    %c1_1722 = arith.constant 1 : index
    %c3_1723 = arith.constant 3 : index
    %c7_1724 = arith.constant 7 : index
    %c0_1725 = arith.constant 0 : index
    %1255 = vector.load %arg2[%c0_1721, %c1_1722, %c3_1723, %c7_1724, %c0_1725] : memref<1x2x4x18x9xf32, #tpu.memory_space<vmem>>, vector<1x1x1x1x8xf32>
    %1256 = vector.shape_cast %1255 : vector<1x1x1x1x8xf32> to vector<8xf32>
    %c31_1726 = arith.constant 31 : index
    %c24_1727 = arith.constant 24 : index
    %1257 = vector.load %arg7[%c31_1726, %c24_1727] : memref<36x64xf32, #tpu.memory_space<vmem>>, vector<1x8xf32>
    %1258 = vector.shape_cast %1257 : vector<1x8xf32> to vector<8xf32>
    %1259 = vector.shape_cast %1256 : vector<8xf32> to vector<1x8xf32>
    tpu.vector_store %arg7[%c31_1726, %c24_1727], %1259 {strides = array<i32>} : memref<36x64xf32, #tpu.memory_space<vmem>>, vector<1x8xf32>,
    %c0_1728 = arith.constant 0 : index
    %c1_1729 = arith.constant 1 : index
    %c3_1730 = arith.constant 3 : index
    %c9_1731 = arith.constant 9 : index
    %c0_1732 = arith.constant 0 : index
    %1260 = vector.load %arg2[%c0_1728, %c1_1729, %c3_1730, %c9_1731, %c0_1732] : memref<1x2x4x18x9xf32, #tpu.memory_space<vmem>>, vector<1x1x1x1x8xf32>
    %1261 = vector.shape_cast %1260 : vector<1x1x1x1x8xf32> to vector<8xf32>
    %c31_1733 = arith.constant 31 : index
    %c32_1734 = arith.constant 32 : index
    %1262 = vector.load %arg7[%c31_1733, %c32_1734] : memref<36x64xf32, #tpu.memory_space<vmem>>, vector<1x8xf32>
    %1263 = vector.shape_cast %1262 : vector<1x8xf32> to vector<8xf32>
    %1264 = vector.shape_cast %1261 : vector<8xf32> to vector<1x8xf32>
    tpu.vector_store %arg7[%c31_1733, %c32_1734], %1264 {strides = array<i32>} : memref<36x64xf32, #tpu.memory_space<vmem>>, vector<1x8xf32>,
    %c0_1735 = arith.constant 0 : index
    %c1_1736 = arith.constant 1 : index
    %c3_1737 = arith.constant 3 : index
    %c11_1738 = arith.constant 11 : index
    %c0_1739 = arith.constant 0 : index
    %1265 = vector.load %arg2[%c0_1735, %c1_1736, %c3_1737, %c11_1738, %c0_1739] : memref<1x2x4x18x9xf32, #tpu.memory_space<vmem>>, vector<1x1x1x1x8xf32>
    %1266 = vector.shape_cast %1265 : vector<1x1x1x1x8xf32> to vector<8xf32>
    %c31_1740 = arith.constant 31 : index
    %c40_1741 = arith.constant 40 : index
    %1267 = vector.load %arg7[%c31_1740, %c40_1741] : memref<36x64xf32, #tpu.memory_space<vmem>>, vector<1x8xf32>
    %1268 = vector.shape_cast %1267 : vector<1x8xf32> to vector<8xf32>
    %1269 = vector.shape_cast %1266 : vector<8xf32> to vector<1x8xf32>
    tpu.vector_store %arg7[%c31_1740, %c40_1741], %1269 {strides = array<i32>} : memref<36x64xf32, #tpu.memory_space<vmem>>, vector<1x8xf32>,
    %c0_1742 = arith.constant 0 : index
    %c1_1743 = arith.constant 1 : index
    %c3_1744 = arith.constant 3 : index
    %c13_1745 = arith.constant 13 : index
    %c0_1746 = arith.constant 0 : index
    %1270 = vector.load %arg2[%c0_1742, %c1_1743, %c3_1744, %c13_1745, %c0_1746] : memref<1x2x4x18x9xf32, #tpu.memory_space<vmem>>, vector<1x1x1x1x8xf32>
    %1271 = vector.shape_cast %1270 : vector<1x1x1x1x8xf32> to vector<8xf32>
    %c31_1747 = arith.constant 31 : index
    %c48_1748 = arith.constant 48 : index
    %1272 = vector.load %arg7[%c31_1747, %c48_1748] : memref<36x64xf32, #tpu.memory_space<vmem>>, vector<1x8xf32>
    %1273 = vector.shape_cast %1272 : vector<1x8xf32> to vector<8xf32>
    %1274 = vector.shape_cast %1271 : vector<8xf32> to vector<1x8xf32>
    tpu.vector_store %arg7[%c31_1747, %c48_1748], %1274 {strides = array<i32>} : memref<36x64xf32, #tpu.memory_space<vmem>>, vector<1x8xf32>,
    %c0_1749 = arith.constant 0 : index
    %c1_1750 = arith.constant 1 : index
    %c3_1751 = arith.constant 3 : index
    %c15_1752 = arith.constant 15 : index
    %c0_1753 = arith.constant 0 : index
    %1275 = vector.load %arg2[%c0_1749, %c1_1750, %c3_1751, %c15_1752, %c0_1753] : memref<1x2x4x18x9xf32, #tpu.memory_space<vmem>>, vector<1x1x1x1x8xf32>
    %1276 = vector.shape_cast %1275 : vector<1x1x1x1x8xf32> to vector<8xf32>
    %c31_1754 = arith.constant 31 : index
    %c56_1755 = arith.constant 56 : index
    %1277 = vector.load %arg7[%c31_1754, %c56_1755] : memref<36x64xf32, #tpu.memory_space<vmem>>, vector<1x8xf32>
    %1278 = vector.shape_cast %1277 : vector<1x8xf32> to vector<8xf32>
    %1279 = vector.shape_cast %1276 : vector<8xf32> to vector<1x8xf32>
    tpu.vector_store %arg7[%c31_1754, %c56_1755], %1279 {strides = array<i32>} : memref<36x64xf32, #tpu.memory_space<vmem>>, vector<1x8xf32>,
    %c0_1756 = arith.constant 0 : index
    %c0_1757 = arith.constant 0 : index
    %c3_1758 = arith.constant 3 : index
    %c1_1759 = arith.constant 1 : index
    %c1_1760 = arith.constant 1 : index
    %1280 = vector.load %arg2[%c0_1756, %c0_1757, %c3_1758, %c1_1759, %c1_1760] : memref<1x2x4x18x9xf32, #tpu.memory_space<vmem>>, vector<1x1x1x1x8xf32>
    %1281 = vector.shape_cast %1280 : vector<1x1x1x1x8xf32> to vector<8xf32>
    %c32_1761 = arith.constant 32 : index
    %c0_1762 = arith.constant 0 : index
    %1282 = vector.load %arg7[%c32_1761, %c0_1762] : memref<36x64xf32, #tpu.memory_space<vmem>>, vector<1x8xf32>
    %1283 = vector.shape_cast %1282 : vector<1x8xf32> to vector<8xf32>
    %1284 = vector.shape_cast %1281 : vector<8xf32> to vector<1x8xf32>
    tpu.vector_store %arg7[%c32_1761, %c0_1762], %1284 {strides = array<i32>} : memref<36x64xf32, #tpu.memory_space<vmem>>, vector<1x8xf32>,
    %c0_1763 = arith.constant 0 : index
    %c0_1764 = arith.constant 0 : index
    %c3_1765 = arith.constant 3 : index
    %c3_1766 = arith.constant 3 : index
    %c1_1767 = arith.constant 1 : index
    %1285 = vector.load %arg2[%c0_1763, %c0_1764, %c3_1765, %c3_1766, %c1_1767] : memref<1x2x4x18x9xf32, #tpu.memory_space<vmem>>, vector<1x1x1x1x8xf32>
    %1286 = vector.shape_cast %1285 : vector<1x1x1x1x8xf32> to vector<8xf32>
    %c32_1768 = arith.constant 32 : index
    %c8_1769 = arith.constant 8 : index
    %1287 = vector.load %arg7[%c32_1768, %c8_1769] : memref<36x64xf32, #tpu.memory_space<vmem>>, vector<1x8xf32>
    %1288 = vector.shape_cast %1287 : vector<1x8xf32> to vector<8xf32>
    %1289 = vector.shape_cast %1286 : vector<8xf32> to vector<1x8xf32>
    tpu.vector_store %arg7[%c32_1768, %c8_1769], %1289 {strides = array<i32>} : memref<36x64xf32, #tpu.memory_space<vmem>>, vector<1x8xf32>,
    %c0_1770 = arith.constant 0 : index
    %c0_1771 = arith.constant 0 : index
    %c3_1772 = arith.constant 3 : index
    %c5_1773 = arith.constant 5 : index
    %c1_1774 = arith.constant 1 : index
    %1290 = vector.load %arg2[%c0_1770, %c0_1771, %c3_1772, %c5_1773, %c1_1774] : memref<1x2x4x18x9xf32, #tpu.memory_space<vmem>>, vector<1x1x1x1x8xf32>
    %1291 = vector.shape_cast %1290 : vector<1x1x1x1x8xf32> to vector<8xf32>
    %c32_1775 = arith.constant 32 : index
    %c16_1776 = arith.constant 16 : index
    %1292 = vector.load %arg7[%c32_1775, %c16_1776] : memref<36x64xf32, #tpu.memory_space<vmem>>, vector<1x8xf32>
    %1293 = vector.shape_cast %1292 : vector<1x8xf32> to vector<8xf32>
    %1294 = vector.shape_cast %1291 : vector<8xf32> to vector<1x8xf32>
    tpu.vector_store %arg7[%c32_1775, %c16_1776], %1294 {strides = array<i32>} : memref<36x64xf32, #tpu.memory_space<vmem>>, vector<1x8xf32>,
    %c0_1777 = arith.constant 0 : index
    %c0_1778 = arith.constant 0 : index
    %c3_1779 = arith.constant 3 : index
    %c7_1780 = arith.constant 7 : index
    %c1_1781 = arith.constant 1 : index
    %1295 = vector.load %arg2[%c0_1777, %c0_1778, %c3_1779, %c7_1780, %c1_1781] : memref<1x2x4x18x9xf32, #tpu.memory_space<vmem>>, vector<1x1x1x1x8xf32>
    %1296 = vector.shape_cast %1295 : vector<1x1x1x1x8xf32> to vector<8xf32>
    %c32_1782 = arith.constant 32 : index
    %c24_1783 = arith.constant 24 : index
    %1297 = vector.load %arg7[%c32_1782, %c24_1783] : memref<36x64xf32, #tpu.memory_space<vmem>>, vector<1x8xf32>
    %1298 = vector.shape_cast %1297 : vector<1x8xf32> to vector<8xf32>
    %1299 = vector.shape_cast %1296 : vector<8xf32> to vector<1x8xf32>
    tpu.vector_store %arg7[%c32_1782, %c24_1783], %1299 {strides = array<i32>} : memref<36x64xf32, #tpu.memory_space<vmem>>, vector<1x8xf32>,
    %c0_1784 = arith.constant 0 : index
    %c0_1785 = arith.constant 0 : index
    %c3_1786 = arith.constant 3 : index
    %c9_1787 = arith.constant 9 : index
    %c1_1788 = arith.constant 1 : index
    %1300 = vector.load %arg2[%c0_1784, %c0_1785, %c3_1786, %c9_1787, %c1_1788] : memref<1x2x4x18x9xf32, #tpu.memory_space<vmem>>, vector<1x1x1x1x8xf32>
    %1301 = vector.shape_cast %1300 : vector<1x1x1x1x8xf32> to vector<8xf32>
    %c32_1789 = arith.constant 32 : index
    %c32_1790 = arith.constant 32 : index
    %1302 = vector.load %arg7[%c32_1789, %c32_1790] : memref<36x64xf32, #tpu.memory_space<vmem>>, vector<1x8xf32>
    %1303 = vector.shape_cast %1302 : vector<1x8xf32> to vector<8xf32>
    %1304 = vector.shape_cast %1301 : vector<8xf32> to vector<1x8xf32>
    tpu.vector_store %arg7[%c32_1789, %c32_1790], %1304 {strides = array<i32>} : memref<36x64xf32, #tpu.memory_space<vmem>>, vector<1x8xf32>,
    %c0_1791 = arith.constant 0 : index
    %c0_1792 = arith.constant 0 : index
    %c3_1793 = arith.constant 3 : index
    %c11_1794 = arith.constant 11 : index
    %c1_1795 = arith.constant 1 : index
    %1305 = vector.load %arg2[%c0_1791, %c0_1792, %c3_1793, %c11_1794, %c1_1795] : memref<1x2x4x18x9xf32, #tpu.memory_space<vmem>>, vector<1x1x1x1x8xf32>
    %1306 = vector.shape_cast %1305 : vector<1x1x1x1x8xf32> to vector<8xf32>
    %c32_1796 = arith.constant 32 : index
    %c40_1797 = arith.constant 40 : index
    %1307 = vector.load %arg7[%c32_1796, %c40_1797] : memref<36x64xf32, #tpu.memory_space<vmem>>, vector<1x8xf32>
    %1308 = vector.shape_cast %1307 : vector<1x8xf32> to vector<8xf32>
    %1309 = vector.shape_cast %1306 : vector<8xf32> to vector<1x8xf32>
    tpu.vector_store %arg7[%c32_1796, %c40_1797], %1309 {strides = array<i32>} : memref<36x64xf32, #tpu.memory_space<vmem>>, vector<1x8xf32>,
    %c0_1798 = arith.constant 0 : index
    %c0_1799 = arith.constant 0 : index
    %c3_1800 = arith.constant 3 : index
    %c13_1801 = arith.constant 13 : index
    %c1_1802 = arith.constant 1 : index
    %1310 = vector.load %arg2[%c0_1798, %c0_1799, %c3_1800, %c13_1801, %c1_1802] : memref<1x2x4x18x9xf32, #tpu.memory_space<vmem>>, vector<1x1x1x1x8xf32>
    %1311 = vector.shape_cast %1310 : vector<1x1x1x1x8xf32> to vector<8xf32>
    %c32_1803 = arith.constant 32 : index
    %c48_1804 = arith.constant 48 : index
    %1312 = vector.load %arg7[%c32_1803, %c48_1804] : memref<36x64xf32, #tpu.memory_space<vmem>>, vector<1x8xf32>
    %1313 = vector.shape_cast %1312 : vector<1x8xf32> to vector<8xf32>
    %1314 = vector.shape_cast %1311 : vector<8xf32> to vector<1x8xf32>
    tpu.vector_store %arg7[%c32_1803, %c48_1804], %1314 {strides = array<i32>} : memref<36x64xf32, #tpu.memory_space<vmem>>, vector<1x8xf32>,
    %c0_1805 = arith.constant 0 : index
    %c0_1806 = arith.constant 0 : index
    %c3_1807 = arith.constant 3 : index
    %c15_1808 = arith.constant 15 : index
    %c1_1809 = arith.constant 1 : index
    %1315 = vector.load %arg2[%c0_1805, %c0_1806, %c3_1807, %c15_1808, %c1_1809] : memref<1x2x4x18x9xf32, #tpu.memory_space<vmem>>, vector<1x1x1x1x8xf32>
    %1316 = vector.shape_cast %1315 : vector<1x1x1x1x8xf32> to vector<8xf32>
    %c32_1810 = arith.constant 32 : index
    %c56_1811 = arith.constant 56 : index
    %1317 = vector.load %arg7[%c32_1810, %c56_1811] : memref<36x64xf32, #tpu.memory_space<vmem>>, vector<1x8xf32>
    %1318 = vector.shape_cast %1317 : vector<1x8xf32> to vector<8xf32>
    %1319 = vector.shape_cast %1316 : vector<8xf32> to vector<1x8xf32>
    tpu.vector_store %arg7[%c32_1810, %c56_1811], %1319 {strides = array<i32>} : memref<36x64xf32, #tpu.memory_space<vmem>>, vector<1x8xf32>,
    %c0_1812 = arith.constant 0 : index
    %c0_1813 = arith.constant 0 : index
    %c3_1814 = arith.constant 3 : index
    %c2_1815 = arith.constant 2 : index
    %c0_1816 = arith.constant 0 : index
    %1320 = vector.load %arg2[%c0_1812, %c0_1813, %c3_1814, %c2_1815, %c0_1816] : memref<1x2x4x18x9xf32, #tpu.memory_space<vmem>>, vector<1x1x1x1x8xf32>
    %1321 = vector.shape_cast %1320 : vector<1x1x1x1x8xf32> to vector<8xf32>
    %c33 = arith.constant 33 : index
    %c0_1817 = arith.constant 0 : index
    %1322 = vector.load %arg7[%c33, %c0_1817] : memref<36x64xf32, #tpu.memory_space<vmem>>, vector<1x8xf32>
    %1323 = vector.shape_cast %1322 : vector<1x8xf32> to vector<8xf32>
    %1324 = vector.shape_cast %1321 : vector<8xf32> to vector<1x8xf32>
    tpu.vector_store %arg7[%c33, %c0_1817], %1324 {strides = array<i32>} : memref<36x64xf32, #tpu.memory_space<vmem>>, vector<1x8xf32>,
    %c0_1818 = arith.constant 0 : index
    %c0_1819 = arith.constant 0 : index
    %c3_1820 = arith.constant 3 : index
    %c4_1821 = arith.constant 4 : index
    %c0_1822 = arith.constant 0 : index
    %1325 = vector.load %arg2[%c0_1818, %c0_1819, %c3_1820, %c4_1821, %c0_1822] : memref<1x2x4x18x9xf32, #tpu.memory_space<vmem>>, vector<1x1x1x1x8xf32>
    %1326 = vector.shape_cast %1325 : vector<1x1x1x1x8xf32> to vector<8xf32>
    %c33_1823 = arith.constant 33 : index
    %c8_1824 = arith.constant 8 : index
    %1327 = vector.load %arg7[%c33_1823, %c8_1824] : memref<36x64xf32, #tpu.memory_space<vmem>>, vector<1x8xf32>
    %1328 = vector.shape_cast %1327 : vector<1x8xf32> to vector<8xf32>
    %1329 = vector.shape_cast %1326 : vector<8xf32> to vector<1x8xf32>
    tpu.vector_store %arg7[%c33_1823, %c8_1824], %1329 {strides = array<i32>} : memref<36x64xf32, #tpu.memory_space<vmem>>, vector<1x8xf32>,
    %c0_1825 = arith.constant 0 : index
    %c0_1826 = arith.constant 0 : index
    %c3_1827 = arith.constant 3 : index
    %c6_1828 = arith.constant 6 : index
    %c0_1829 = arith.constant 0 : index
    %1330 = vector.load %arg2[%c0_1825, %c0_1826, %c3_1827, %c6_1828, %c0_1829] : memref<1x2x4x18x9xf32, #tpu.memory_space<vmem>>, vector<1x1x1x1x8xf32>
    %1331 = vector.shape_cast %1330 : vector<1x1x1x1x8xf32> to vector<8xf32>
    %c33_1830 = arith.constant 33 : index
    %c16_1831 = arith.constant 16 : index
    %1332 = vector.load %arg7[%c33_1830, %c16_1831] : memref<36x64xf32, #tpu.memory_space<vmem>>, vector<1x8xf32>
    %1333 = vector.shape_cast %1332 : vector<1x8xf32> to vector<8xf32>
    %1334 = vector.shape_cast %1331 : vector<8xf32> to vector<1x8xf32>
    tpu.vector_store %arg7[%c33_1830, %c16_1831], %1334 {strides = array<i32>} : memref<36x64xf32, #tpu.memory_space<vmem>>, vector<1x8xf32>,
    %c0_1832 = arith.constant 0 : index
    %c0_1833 = arith.constant 0 : index
    %c3_1834 = arith.constant 3 : index
    %c8_1835 = arith.constant 8 : index
    %c0_1836 = arith.constant 0 : index
    %1335 = vector.load %arg2[%c0_1832, %c0_1833, %c3_1834, %c8_1835, %c0_1836] : memref<1x2x4x18x9xf32, #tpu.memory_space<vmem>>, vector<1x1x1x1x8xf32>
    %1336 = vector.shape_cast %1335 : vector<1x1x1x1x8xf32> to vector<8xf32>
    %c33_1837 = arith.constant 33 : index
    %c24_1838 = arith.constant 24 : index
    %1337 = vector.load %arg7[%c33_1837, %c24_1838] : memref<36x64xf32, #tpu.memory_space<vmem>>, vector<1x8xf32>
    %1338 = vector.shape_cast %1337 : vector<1x8xf32> to vector<8xf32>
    %1339 = vector.shape_cast %1336 : vector<8xf32> to vector<1x8xf32>
    tpu.vector_store %arg7[%c33_1837, %c24_1838], %1339 {strides = array<i32>} : memref<36x64xf32, #tpu.memory_space<vmem>>, vector<1x8xf32>,
    %c0_1839 = arith.constant 0 : index
    %c0_1840 = arith.constant 0 : index
    %c3_1841 = arith.constant 3 : index
    %c10_1842 = arith.constant 10 : index
    %c0_1843 = arith.constant 0 : index
    %1340 = vector.load %arg2[%c0_1839, %c0_1840, %c3_1841, %c10_1842, %c0_1843] : memref<1x2x4x18x9xf32, #tpu.memory_space<vmem>>, vector<1x1x1x1x8xf32>
    %1341 = vector.shape_cast %1340 : vector<1x1x1x1x8xf32> to vector<8xf32>
    %c33_1844 = arith.constant 33 : index
    %c32_1845 = arith.constant 32 : index
    %1342 = vector.load %arg7[%c33_1844, %c32_1845] : memref<36x64xf32, #tpu.memory_space<vmem>>, vector<1x8xf32>
    %1343 = vector.shape_cast %1342 : vector<1x8xf32> to vector<8xf32>
    %1344 = vector.shape_cast %1341 : vector<8xf32> to vector<1x8xf32>
    tpu.vector_store %arg7[%c33_1844, %c32_1845], %1344 {strides = array<i32>} : memref<36x64xf32, #tpu.memory_space<vmem>>, vector<1x8xf32>,
    %c0_1846 = arith.constant 0 : index
    %c0_1847 = arith.constant 0 : index
    %c3_1848 = arith.constant 3 : index
    %c12_1849 = arith.constant 12 : index
    %c0_1850 = arith.constant 0 : index
    %1345 = vector.load %arg2[%c0_1846, %c0_1847, %c3_1848, %c12_1849, %c0_1850] : memref<1x2x4x18x9xf32, #tpu.memory_space<vmem>>, vector<1x1x1x1x8xf32>
    %1346 = vector.shape_cast %1345 : vector<1x1x1x1x8xf32> to vector<8xf32>
    %c33_1851 = arith.constant 33 : index
    %c40_1852 = arith.constant 40 : index
    %1347 = vector.load %arg7[%c33_1851, %c40_1852] : memref<36x64xf32, #tpu.memory_space<vmem>>, vector<1x8xf32>
    %1348 = vector.shape_cast %1347 : vector<1x8xf32> to vector<8xf32>
    %1349 = vector.shape_cast %1346 : vector<8xf32> to vector<1x8xf32>
    tpu.vector_store %arg7[%c33_1851, %c40_1852], %1349 {strides = array<i32>} : memref<36x64xf32, #tpu.memory_space<vmem>>, vector<1x8xf32>,
    %c0_1853 = arith.constant 0 : index
    %c0_1854 = arith.constant 0 : index
    %c3_1855 = arith.constant 3 : index
    %c14_1856 = arith.constant 14 : index
    %c0_1857 = arith.constant 0 : index
    %1350 = vector.load %arg2[%c0_1853, %c0_1854, %c3_1855, %c14_1856, %c0_1857] : memref<1x2x4x18x9xf32, #tpu.memory_space<vmem>>, vector<1x1x1x1x8xf32>
    %1351 = vector.shape_cast %1350 : vector<1x1x1x1x8xf32> to vector<8xf32>
    %c33_1858 = arith.constant 33 : index
    %c48_1859 = arith.constant 48 : index
    %1352 = vector.load %arg7[%c33_1858, %c48_1859] : memref<36x64xf32, #tpu.memory_space<vmem>>, vector<1x8xf32>
    %1353 = vector.shape_cast %1352 : vector<1x8xf32> to vector<8xf32>
    %1354 = vector.shape_cast %1351 : vector<8xf32> to vector<1x8xf32>
    tpu.vector_store %arg7[%c33_1858, %c48_1859], %1354 {strides = array<i32>} : memref<36x64xf32, #tpu.memory_space<vmem>>, vector<1x8xf32>,
    %c0_1860 = arith.constant 0 : index
    %c0_1861 = arith.constant 0 : index
    %c3_1862 = arith.constant 3 : index
    %c16_1863 = arith.constant 16 : index
    %c0_1864 = arith.constant 0 : index
    %1355 = vector.load %arg2[%c0_1860, %c0_1861, %c3_1862, %c16_1863, %c0_1864] : memref<1x2x4x18x9xf32, #tpu.memory_space<vmem>>, vector<1x1x1x1x8xf32>
    %1356 = vector.shape_cast %1355 : vector<1x1x1x1x8xf32> to vector<8xf32>
    %c33_1865 = arith.constant 33 : index
    %c56_1866 = arith.constant 56 : index
    %1357 = vector.load %arg7[%c33_1865, %c56_1866] : memref<36x64xf32, #tpu.memory_space<vmem>>, vector<1x8xf32>
    %1358 = vector.shape_cast %1357 : vector<1x8xf32> to vector<8xf32>
    %1359 = vector.shape_cast %1356 : vector<8xf32> to vector<1x8xf32>
    tpu.vector_store %arg7[%c33_1865, %c56_1866], %1359 {strides = array<i32>} : memref<36x64xf32, #tpu.memory_space<vmem>>, vector<1x8xf32>,
    %c0_1867 = arith.constant 0 : index
    %c1_1868 = arith.constant 1 : index
    %c3_1869 = arith.constant 3 : index
    %c2_1870 = arith.constant 2 : index
    %c0_1871 = arith.constant 0 : index
    %1360 = vector.load %arg2[%c0_1867, %c1_1868, %c3_1869, %c2_1870, %c0_1871] : memref<1x2x4x18x9xf32, #tpu.memory_space<vmem>>, vector<1x1x1x1x8xf32>
    %1361 = vector.shape_cast %1360 : vector<1x1x1x1x8xf32> to vector<8xf32>
    %c34 = arith.constant 34 : index
    %c0_1872 = arith.constant 0 : index
    %1362 = vector.load %arg7[%c34, %c0_1872] : memref<36x64xf32, #tpu.memory_space<vmem>>, vector<1x8xf32>
    %1363 = vector.shape_cast %1362 : vector<1x8xf32> to vector<8xf32>
    %1364 = vector.shape_cast %1361 : vector<8xf32> to vector<1x8xf32>
    tpu.vector_store %arg7[%c34, %c0_1872], %1364 {strides = array<i32>} : memref<36x64xf32, #tpu.memory_space<vmem>>, vector<1x8xf32>,
    %c0_1873 = arith.constant 0 : index
    %c1_1874 = arith.constant 1 : index
    %c3_1875 = arith.constant 3 : index
    %c4_1876 = arith.constant 4 : index
    %c0_1877 = arith.constant 0 : index
    %1365 = vector.load %arg2[%c0_1873, %c1_1874, %c3_1875, %c4_1876, %c0_1877] : memref<1x2x4x18x9xf32, #tpu.memory_space<vmem>>, vector<1x1x1x1x8xf32>
    %1366 = vector.shape_cast %1365 : vector<1x1x1x1x8xf32> to vector<8xf32>
    %c34_1878 = arith.constant 34 : index
    %c8_1879 = arith.constant 8 : index
    %1367 = vector.load %arg7[%c34_1878, %c8_1879] : memref<36x64xf32, #tpu.memory_space<vmem>>, vector<1x8xf32>
    %1368 = vector.shape_cast %1367 : vector<1x8xf32> to vector<8xf32>
    %1369 = vector.shape_cast %1366 : vector<8xf32> to vector<1x8xf32>
    tpu.vector_store %arg7[%c34_1878, %c8_1879], %1369 {strides = array<i32>} : memref<36x64xf32, #tpu.memory_space<vmem>>, vector<1x8xf32>,
    %c0_1880 = arith.constant 0 : index
    %c1_1881 = arith.constant 1 : index
    %c3_1882 = arith.constant 3 : index
    %c6_1883 = arith.constant 6 : index
    %c0_1884 = arith.constant 0 : index
    %1370 = vector.load %arg2[%c0_1880, %c1_1881, %c3_1882, %c6_1883, %c0_1884] : memref<1x2x4x18x9xf32, #tpu.memory_space<vmem>>, vector<1x1x1x1x8xf32>
    %1371 = vector.shape_cast %1370 : vector<1x1x1x1x8xf32> to vector<8xf32>
    %c34_1885 = arith.constant 34 : index
    %c16_1886 = arith.constant 16 : index
    %1372 = vector.load %arg7[%c34_1885, %c16_1886] : memref<36x64xf32, #tpu.memory_space<vmem>>, vector<1x8xf32>
    %1373 = vector.shape_cast %1372 : vector<1x8xf32> to vector<8xf32>
    %1374 = vector.shape_cast %1371 : vector<8xf32> to vector<1x8xf32>
    tpu.vector_store %arg7[%c34_1885, %c16_1886], %1374 {strides = array<i32>} : memref<36x64xf32, #tpu.memory_space<vmem>>, vector<1x8xf32>,
    %c0_1887 = arith.constant 0 : index
    %c1_1888 = arith.constant 1 : index
    %c3_1889 = arith.constant 3 : index
    %c8_1890 = arith.constant 8 : index
    %c0_1891 = arith.constant 0 : index
    %1375 = vector.load %arg2[%c0_1887, %c1_1888, %c3_1889, %c8_1890, %c0_1891] : memref<1x2x4x18x9xf32, #tpu.memory_space<vmem>>, vector<1x1x1x1x8xf32>
    %1376 = vector.shape_cast %1375 : vector<1x1x1x1x8xf32> to vector<8xf32>
    %c34_1892 = arith.constant 34 : index
    %c24_1893 = arith.constant 24 : index
    %1377 = vector.load %arg7[%c34_1892, %c24_1893] : memref<36x64xf32, #tpu.memory_space<vmem>>, vector<1x8xf32>
    %1378 = vector.shape_cast %1377 : vector<1x8xf32> to vector<8xf32>
    %1379 = vector.shape_cast %1376 : vector<8xf32> to vector<1x8xf32>
    tpu.vector_store %arg7[%c34_1892, %c24_1893], %1379 {strides = array<i32>} : memref<36x64xf32, #tpu.memory_space<vmem>>, vector<1x8xf32>,
    %c0_1894 = arith.constant 0 : index
    %c1_1895 = arith.constant 1 : index
    %c3_1896 = arith.constant 3 : index
    %c10_1897 = arith.constant 10 : index
    %c0_1898 = arith.constant 0 : index
    %1380 = vector.load %arg2[%c0_1894, %c1_1895, %c3_1896, %c10_1897, %c0_1898] : memref<1x2x4x18x9xf32, #tpu.memory_space<vmem>>, vector<1x1x1x1x8xf32>
    %1381 = vector.shape_cast %1380 : vector<1x1x1x1x8xf32> to vector<8xf32>
    %c34_1899 = arith.constant 34 : index
    %c32_1900 = arith.constant 32 : index
    %1382 = vector.load %arg7[%c34_1899, %c32_1900] : memref<36x64xf32, #tpu.memory_space<vmem>>, vector<1x8xf32>
    %1383 = vector.shape_cast %1382 : vector<1x8xf32> to vector<8xf32>
    %1384 = vector.shape_cast %1381 : vector<8xf32> to vector<1x8xf32>
    tpu.vector_store %arg7[%c34_1899, %c32_1900], %1384 {strides = array<i32>} : memref<36x64xf32, #tpu.memory_space<vmem>>, vector<1x8xf32>,
    %c0_1901 = arith.constant 0 : index
    %c1_1902 = arith.constant 1 : index
    %c3_1903 = arith.constant 3 : index
    %c12_1904 = arith.constant 12 : index
    %c0_1905 = arith.constant 0 : index
    %1385 = vector.load %arg2[%c0_1901, %c1_1902, %c3_1903, %c12_1904, %c0_1905] : memref<1x2x4x18x9xf32, #tpu.memory_space<vmem>>, vector<1x1x1x1x8xf32>
    %1386 = vector.shape_cast %1385 : vector<1x1x1x1x8xf32> to vector<8xf32>
    %c34_1906 = arith.constant 34 : index
    %c40_1907 = arith.constant 40 : index
    %1387 = vector.load %arg7[%c34_1906, %c40_1907] : memref<36x64xf32, #tpu.memory_space<vmem>>, vector<1x8xf32>
    %1388 = vector.shape_cast %1387 : vector<1x8xf32> to vector<8xf32>
    %1389 = vector.shape_cast %1386 : vector<8xf32> to vector<1x8xf32>
    tpu.vector_store %arg7[%c34_1906, %c40_1907], %1389 {strides = array<i32>} : memref<36x64xf32, #tpu.memory_space<vmem>>, vector<1x8xf32>,
    %c0_1908 = arith.constant 0 : index
    %c1_1909 = arith.constant 1 : index
    %c3_1910 = arith.constant 3 : index
    %c14_1911 = arith.constant 14 : index
    %c0_1912 = arith.constant 0 : index
    %1390 = vector.load %arg2[%c0_1908, %c1_1909, %c3_1910, %c14_1911, %c0_1912] : memref<1x2x4x18x9xf32, #tpu.memory_space<vmem>>, vector<1x1x1x1x8xf32>
    %1391 = vector.shape_cast %1390 : vector<1x1x1x1x8xf32> to vector<8xf32>
    %c34_1913 = arith.constant 34 : index
    %c48_1914 = arith.constant 48 : index
    %1392 = vector.load %arg7[%c34_1913, %c48_1914] : memref<36x64xf32, #tpu.memory_space<vmem>>, vector<1x8xf32>
    %1393 = vector.shape_cast %1392 : vector<1x8xf32> to vector<8xf32>
    %1394 = vector.shape_cast %1391 : vector<8xf32> to vector<1x8xf32>
    tpu.vector_store %arg7[%c34_1913, %c48_1914], %1394 {strides = array<i32>} : memref<36x64xf32, #tpu.memory_space<vmem>>, vector<1x8xf32>,
    %c0_1915 = arith.constant 0 : index
    %c1_1916 = arith.constant 1 : index
    %c3_1917 = arith.constant 3 : index
    %c16_1918 = arith.constant 16 : index
    %c0_1919 = arith.constant 0 : index
    %1395 = vector.load %arg2[%c0_1915, %c1_1916, %c3_1917, %c16_1918, %c0_1919] : memref<1x2x4x18x9xf32, #tpu.memory_space<vmem>>, vector<1x1x1x1x8xf32>
    %1396 = vector.shape_cast %1395 : vector<1x1x1x1x8xf32> to vector<8xf32>
    %c34_1920 = arith.constant 34 : index
    %c56_1921 = arith.constant 56 : index
    %1397 = vector.load %arg7[%c34_1920, %c56_1921] : memref<36x64xf32, #tpu.memory_space<vmem>>, vector<1x8xf32>
    %1398 = vector.shape_cast %1397 : vector<1x8xf32> to vector<8xf32>
    %1399 = vector.shape_cast %1396 : vector<8xf32> to vector<1x8xf32>
    tpu.vector_store %arg7[%c34_1920, %c56_1921], %1399 {strides = array<i32>} : memref<36x64xf32, #tpu.memory_space<vmem>>, vector<1x8xf32>,
    %c0_1922 = arith.constant 0 : index
    %c0_1923 = arith.constant 0 : index
    %c3_1924 = arith.constant 3 : index
    %c2_1925 = arith.constant 2 : index
    %c1_1926 = arith.constant 1 : index
    %1400 = vector.load %arg2[%c0_1922, %c0_1923, %c3_1924, %c2_1925, %c1_1926] : memref<1x2x4x18x9xf32, #tpu.memory_space<vmem>>, vector<1x1x1x1x8xf32>
    %1401 = vector.shape_cast %1400 : vector<1x1x1x1x8xf32> to vector<8xf32>
    %c35 = arith.constant 35 : index
    %c0_1927 = arith.constant 0 : index
    %1402 = vector.load %arg7[%c35, %c0_1927] : memref<36x64xf32, #tpu.memory_space<vmem>>, vector<1x8xf32>
    %1403 = vector.shape_cast %1402 : vector<1x8xf32> to vector<8xf32>
    %1404 = vector.shape_cast %1401 : vector<8xf32> to vector<1x8xf32>
    tpu.vector_store %arg7[%c35, %c0_1927], %1404 {strides = array<i32>} : memref<36x64xf32, #tpu.memory_space<vmem>>, vector<1x8xf32>,
    %c0_1928 = arith.constant 0 : index
    %c0_1929 = arith.constant 0 : index
    %c3_1930 = arith.constant 3 : index
    %c4_1931 = arith.constant 4 : index
    %c1_1932 = arith.constant 1 : index
    %1405 = vector.load %arg2[%c0_1928, %c0_1929, %c3_1930, %c4_1931, %c1_1932] : memref<1x2x4x18x9xf32, #tpu.memory_space<vmem>>, vector<1x1x1x1x8xf32>
    %1406 = vector.shape_cast %1405 : vector<1x1x1x1x8xf32> to vector<8xf32>
    %c35_1933 = arith.constant 35 : index
    %c8_1934 = arith.constant 8 : index
    %1407 = vector.load %arg7[%c35_1933, %c8_1934] : memref<36x64xf32, #tpu.memory_space<vmem>>, vector<1x8xf32>
    %1408 = vector.shape_cast %1407 : vector<1x8xf32> to vector<8xf32>
    %1409 = vector.shape_cast %1406 : vector<8xf32> to vector<1x8xf32>
    tpu.vector_store %arg7[%c35_1933, %c8_1934], %1409 {strides = array<i32>} : memref<36x64xf32, #tpu.memory_space<vmem>>, vector<1x8xf32>,
    %c0_1935 = arith.constant 0 : index
    %c0_1936 = arith.constant 0 : index
    %c3_1937 = arith.constant 3 : index
    %c6_1938 = arith.constant 6 : index
    %c1_1939 = arith.constant 1 : index
    %1410 = vector.load %arg2[%c0_1935, %c0_1936, %c3_1937, %c6_1938, %c1_1939] : memref<1x2x4x18x9xf32, #tpu.memory_space<vmem>>, vector<1x1x1x1x8xf32>
    %1411 = vector.shape_cast %1410 : vector<1x1x1x1x8xf32> to vector<8xf32>
    %c35_1940 = arith.constant 35 : index
    %c16_1941 = arith.constant 16 : index
    %1412 = vector.load %arg7[%c35_1940, %c16_1941] : memref<36x64xf32, #tpu.memory_space<vmem>>, vector<1x8xf32>
    %1413 = vector.shape_cast %1412 : vector<1x8xf32> to vector<8xf32>
    %1414 = vector.shape_cast %1411 : vector<8xf32> to vector<1x8xf32>
    tpu.vector_store %arg7[%c35_1940, %c16_1941], %1414 {strides = array<i32>} : memref<36x64xf32, #tpu.memory_space<vmem>>, vector<1x8xf32>,
    %c0_1942 = arith.constant 0 : index
    %c0_1943 = arith.constant 0 : index
    %c3_1944 = arith.constant 3 : index
    %c8_1945 = arith.constant 8 : index
    %c1_1946 = arith.constant 1 : index
    %1415 = vector.load %arg2[%c0_1942, %c0_1943, %c3_1944, %c8_1945, %c1_1946] : memref<1x2x4x18x9xf32, #tpu.memory_space<vmem>>, vector<1x1x1x1x8xf32>
    %1416 = vector.shape_cast %1415 : vector<1x1x1x1x8xf32> to vector<8xf32>
    %c35_1947 = arith.constant 35 : index
    %c24_1948 = arith.constant 24 : index
    %1417 = vector.load %arg7[%c35_1947, %c24_1948] : memref<36x64xf32, #tpu.memory_space<vmem>>, vector<1x8xf32>
    %1418 = vector.shape_cast %1417 : vector<1x8xf32> to vector<8xf32>
    %1419 = vector.shape_cast %1416 : vector<8xf32> to vector<1x8xf32>
    tpu.vector_store %arg7[%c35_1947, %c24_1948], %1419 {strides = array<i32>} : memref<36x64xf32, #tpu.memory_space<vmem>>, vector<1x8xf32>,
    %c0_1949 = arith.constant 0 : index
    %c0_1950 = arith.constant 0 : index
    %c3_1951 = arith.constant 3 : index
    %c10_1952 = arith.constant 10 : index
    %c1_1953 = arith.constant 1 : index
    %1420 = vector.load %arg2[%c0_1949, %c0_1950, %c3_1951, %c10_1952, %c1_1953] : memref<1x2x4x18x9xf32, #tpu.memory_space<vmem>>, vector<1x1x1x1x8xf32>
    %1421 = vector.shape_cast %1420 : vector<1x1x1x1x8xf32> to vector<8xf32>
    %c35_1954 = arith.constant 35 : index
    %c32_1955 = arith.constant 32 : index
    %1422 = vector.load %arg7[%c35_1954, %c32_1955] : memref<36x64xf32, #tpu.memory_space<vmem>>, vector<1x8xf32>
    %1423 = vector.shape_cast %1422 : vector<1x8xf32> to vector<8xf32>
    %1424 = vector.shape_cast %1421 : vector<8xf32> to vector<1x8xf32>
    tpu.vector_store %arg7[%c35_1954, %c32_1955], %1424 {strides = array<i32>} : memref<36x64xf32, #tpu.memory_space<vmem>>, vector<1x8xf32>,
    %c0_1956 = arith.constant 0 : index
    %c0_1957 = arith.constant 0 : index
    %c3_1958 = arith.constant 3 : index
    %c12_1959 = arith.constant 12 : index
    %c1_1960 = arith.constant 1 : index
    %1425 = vector.load %arg2[%c0_1956, %c0_1957, %c3_1958, %c12_1959, %c1_1960] : memref<1x2x4x18x9xf32, #tpu.memory_space<vmem>>, vector<1x1x1x1x8xf32>
    %1426 = vector.shape_cast %1425 : vector<1x1x1x1x8xf32> to vector<8xf32>
    %c35_1961 = arith.constant 35 : index
    %c40_1962 = arith.constant 40 : index
    %1427 = vector.load %arg7[%c35_1961, %c40_1962] : memref<36x64xf32, #tpu.memory_space<vmem>>, vector<1x8xf32>
    %1428 = vector.shape_cast %1427 : vector<1x8xf32> to vector<8xf32>
    %1429 = vector.shape_cast %1426 : vector<8xf32> to vector<1x8xf32>
    tpu.vector_store %arg7[%c35_1961, %c40_1962], %1429 {strides = array<i32>} : memref<36x64xf32, #tpu.memory_space<vmem>>, vector<1x8xf32>,
    %c0_1963 = arith.constant 0 : index
    %c0_1964 = arith.constant 0 : index
    %c3_1965 = arith.constant 3 : index
    %c14_1966 = arith.constant 14 : index
    %c1_1967 = arith.constant 1 : index
    %1430 = vector.load %arg2[%c0_1963, %c0_1964, %c3_1965, %c14_1966, %c1_1967] : memref<1x2x4x18x9xf32, #tpu.memory_space<vmem>>, vector<1x1x1x1x8xf32>
    %1431 = vector.shape_cast %1430 : vector<1x1x1x1x8xf32> to vector<8xf32>
    %c35_1968 = arith.constant 35 : index
    %c48_1969 = arith.constant 48 : index
    %1432 = vector.load %arg7[%c35_1968, %c48_1969] : memref<36x64xf32, #tpu.memory_space<vmem>>, vector<1x8xf32>
    %1433 = vector.shape_cast %1432 : vector<1x8xf32> to vector<8xf32>
    %1434 = vector.shape_cast %1431 : vector<8xf32> to vector<1x8xf32>
    tpu.vector_store %arg7[%c35_1968, %c48_1969], %1434 {strides = array<i32>} : memref<36x64xf32, #tpu.memory_space<vmem>>, vector<1x8xf32>,
    %c0_1970 = arith.constant 0 : index
    %c0_1971 = arith.constant 0 : index
    %c3_1972 = arith.constant 3 : index
    %c16_1973 = arith.constant 16 : index
    %c1_1974 = arith.constant 1 : index
    %1435 = vector.load %arg2[%c0_1970, %c0_1971, %c3_1972, %c16_1973, %c1_1974] : memref<1x2x4x18x9xf32, #tpu.memory_space<vmem>>, vector<1x1x1x1x8xf32>
    %1436 = vector.shape_cast %1435 : vector<1x1x1x1x8xf32> to vector<8xf32>
    %c35_1975 = arith.constant 35 : index
    %c56_1976 = arith.constant 56 : index
    %1437 = vector.load %arg7[%c35_1975, %c56_1976] : memref<36x64xf32, #tpu.memory_space<vmem>>, vector<1x8xf32>
    %1438 = vector.shape_cast %1437 : vector<1x8xf32> to vector<8xf32>
    %1439 = vector.shape_cast %1436 : vector<8xf32> to vector<1x8xf32>
    tpu.vector_store %arg7[%c35_1975, %c56_1976], %1439 {strides = array<i32>} : memref<36x64xf32, #tpu.memory_space<vmem>>, vector<1x8xf32>,
    %c0_1977 = arith.constant 0 : index
    %c0_1978 = arith.constant 0 : index
    %1440 = vector.load %arg3[%c0_1977, %c0_1978] : memref<8x36xbf16, #tpu.memory_space<vmem>>, vector<8x36xbf16>
    %c0_1979 = arith.constant 0 : index
    %c0_1980 = arith.constant 0 : index
    %1441 = vector.load %arg7[%c0_1979, %c0_1980] : memref<36x64xf32, #tpu.memory_space<vmem>>, vector<36x64xf32>
    %1442 = arith.truncf %1441 : vector<36x64xf32> to vector<36x64xbf16>
    %cst = arith.constant dense<0.000000e+00> : vector<8x64xf32>
    %1443 = tpu.matmul %1440, %1442, %cst {dimension_numbers = #tpu.dot_dimension_numbers<[1], [0], [0], [1], [0, 0, 1, 1], [], []>} : vector<8x36xbf16>, vector<36x64xbf16>, vector<8x64xf32> -> vector<8x64xf32>
    %c0_1981 = arith.constant 0 : index
    %c0_1982 = arith.constant 0 : index
    %1444 = vector.load %arg4[%c0_1981, %c0_1982] : memref<8x1xf32, #tpu.memory_space<vmem>>, vector<8x1xf32>
    %1445 = vector.broadcast %1444 : vector<8x1xf32> to vector<8x64xf32>
    %1446 = arith.addf %1443, %1445 : vector<8x64xf32>
    %cst_1983 = arith.constant 0.000000e+00 : f32
    %cst_1984 = arith.constant 2.000000e+01 : f32
    %1447 = vector.broadcast %cst_1983 : f32 to vector<8x64xf32>
    %1448 = arith.maximumf %1447, %1446 : vector<8x64xf32>
    %1449 = vector.broadcast %cst_1984 : f32 to vector<8x64xf32>
    %1450 = arith.minimumf %1449, %1448 : vector<8x64xf32>
    %1451 = arith.index_cast %arg0 : i32 to index
    %1452 = memref.load %arg1[%1451] : memref<2xi32, #tpu.memory_space<smem>>
    %c0_1985 = arith.constant 0 : index
    %c0_1986 = arith.constant 0 : index
    %1453 = vector.load %arg5[%c0_1985, %c0_1986] : memref<1x64xi32, #tpu.memory_space<vmem>>, vector<1x64xi32>
    %1454 = vector.broadcast %1452 : i32 to vector<1x64xi32>
    %1455 = arith.cmpi slt, %1453, %1454 : vector<1x64xi32>
    %cst_1987 = arith.constant 0.000000e+00 : f32
    %1456 = vector.shape_cast %1455 : vector<1x64xi1> to vector<1x64xi1>
    %1457 = vector.broadcast %1456 : vector<1x64xi1> to vector<8x64xi1>
    %1458 = vector.broadcast %cst_1987 : f32 to vector<8x64xf32>
    %1459 = arith.select %1457, %1450, %1458 : vector<8x64xi1>, vector<8x64xf32>
    %c0_1988 = arith.constant 0 : index
    %c0_1989 = arith.constant 0 : index
    %c0_1990 = arith.constant 0 : index
    %1460 = vector.load %arg6[%c0_1988, %c0_1989, %c0_1990] : memref<1x8x64xf32, #tpu.memory_space<vmem>>, vector<1x8x64xf32>
    %1461 = vector.shape_cast %1460 : vector<1x8x64xf32> to vector<8x64xf32>
    %1462 = vector.shape_cast %1459 : vector<8x64xf32> to vector<1x8x64xf32>
    tpu.vector_store %arg6[%c0_1988, %c0_1989, %c0_1990], %1462 {strides = array<i32>} : memref<1x8x64xf32, #tpu.memory_space<vmem>>, vector<1x8x64xf32>,
    return
  }
  func.func @transform_0(%arg0: i32, %arg1: memref<2xi32, #tpu.memory_space<smem>>) -> (i32, i32, i32, i32, i32) {
    %c0_i32 = arith.constant 0 : i32
    %c0_i32_0 = arith.constant 0 : i32
    %c0_i32_1 = arith.constant 0 : i32
    %c0_i32_2 = arith.constant 0 : i32
    %c0_i32_3 = arith.constant 0 : i32
    return %arg0, %c0_i32, %c0_i32_0, %c0_i32_1, %c0_i32_2 : i32, i32, i32, i32, i32
  }
  func.func @transform_1(%arg0: i32, %arg1: memref<2xi32, #tpu.memory_space<smem>>) -> (i32, i32) {
    %c0_i32 = arith.constant 0 : i32
    %c0_i32_0 = arith.constant 0 : i32
    %c0_i32_1 = arith.constant 0 : i32
    return %c0_i32, %c0_i32_0 : i32, i32
  }
  func.func @transform_2(%arg0: i32, %arg1: memref<2xi32, #tpu.memory_space<smem>>) -> (i32, i32) {
    %c0_i32 = arith.constant 0 : i32
    %c0_i32_0 = arith.constant 0 : i32
    %c0_i32_1 = arith.constant 0 : i32
    return %c0_i32, %c0_i32_0 : i32, i32
  }
  func.func @transform_3(%arg0: i32, %arg1: memref<2xi32, #tpu.memory_space<smem>>) -> (i32, i32) {
    %c0_i32 = arith.constant 0 : i32
    %c0_i32_0 = arith.constant 0 : i32
    %c0_i32_1 = arith.constant 0 : i32
    return %c0_i32, %c0_i32_0 : i32, i32
  }
  func.func @transform_4(%arg0: i32, %arg1: memref<2xi32, #tpu.memory_space<smem>>) -> (i32, i32, i32) {
    %c0_i32 = arith.constant 0 : i32
    %c0_i32_0 = arith.constant 0 : i32
    %c0_i32_1 = arith.constant 0 : i32
    return %arg0, %c0_i32, %c0_i32_0 : i32, i32, i32
  }
}

</mosaic_0001>

<llo_original>
// kernel: tpu_custom_call.1
$region0: #{tpu_custom_call.1}
  #allocation0 [shape = 'u32[]', space=smem, size = 0x4, offset = 0x4, fixed_abs, tag = 'smem constant byte address 0x4 - core index']
  #allocation1 [shape = 'u32[144,128]{1,0:T(1,128)}', space=vmem, size = 0x12000, scoped, tag = 'internal scratch']
  #allocation2 [shape = 'f32[36,64]{1,0:T(8,128)}', space=vmem, size = 0x5000, scoped, tag = 'scratch operand']
  #allocation3 [shape = 's32[1]{0}', space=sflag, size = 0x4, scoped, tag = 'scoped memory for tpu_custom_call.1']
  #allocation4 [shape = 'u8[512]{0}', space=smem, size = 0x200, scoped, tag = 'prefetched SMEM operand 0']
  %s0 = inlined_call_operand.vmem [shape: s32[2], index: 0, kind: input, shape index: {}]
  %s1 = inlined_call_operand.vmem [shape: f32[2,2,4,18,9], index: 1, kind: input, shape index: {}]
  %s2 = inlined_call_operand.vmem [shape: bf16[8,36], index: 2, kind: input, shape index: {}]
  %s3 = inlined_call_operand.vmem [shape: f32[8,1], index: 3, kind: input, shape index: {}]
  %s4 = inlined_call_operand.vmem [shape: s32[1,64], index: 4, kind: input, shape index: {}]
  %s5 = inlined_call_operand.hbm [shape: f32[2,8,64], index: 5, kind: output, shape index: {}]
  %s6 = sld [smem:[#allocation0]]
  $region49: #{tpu_custom_call.1} parent=0
    _
  %s8 = ssub.s32 1, %s6
  %s9 = scalar_select 0, %s8, %s6
  %s10 = sshll.u32 %s0, 4
  %s11 = int_to_ptr.vmem [resolvable:$true] %s10
  %13 = dma.vmem_to_smem %s11, 16, [#allocation4], [#allocation3]
  %14 = dma.done [#allocation3], 16
  %15 = sfence
  $region1: #{tpu_custom_call.1} parent=0
    #allocation5 [shape = 'u8[8192]{0}', space=vmem, size = 0x2000, scoped, tag = 'output window, operand 0']
    #allocation6 [shape = 's32[2]{0}', space=sflag, size = 0x8, scoped, tag = 'scoped memory for tpu_custom_call.1']
    %16 = vsyncpa [#allocation6], 0
    %s17 = scalar_lea.sflag [#allocation6], 1
    %18 = vsyncpa %s17, 0
    loop: start=0, step=1, limit=4
    $region2: #{tpu_custom_call.1} parent=1 // loop_pre_header
      _
    $region3: #{tpu_custom_call.1} parent=1 // loop_header
      %s20 = sphi 0, %s24
      %p21 = scmp.ge.s32.totalorder %s20, 4
      %s30 = sphi 0, %s32
      %s33 = sphi 0, %s30
      %s34 = sphi 0, %s33
      %s50 = sphi 0, %s34
      %s54 = sphi 0, %s54
      %s56 = sphi 0, %s54
      %s57 = sphi 0, %s56
      %s71 = sphi 0, %s57
      %s75 = sphi 0, %s75
      %s77 = sphi 0, %s75
      %s78 = sphi 0, %s77
      %s92 = sphi 0, %s78
      %s96 = sphi 0, %s96
      %s98 = sphi 0, %s96
      %s99 = sphi 0, %s98
      %s113 = sphi 0, %s99
      %s119 = sphi 0, %s121
      %s122 = sphi 0, %s119
      %s123 = sphi 0, %s122
      %s139 = sphi 0, %s123
    $region4: #{tpu_custom_call.1} parent=1 // loop_header_branch
      %23 = sbr.rel (%p21) target = $region8
    $region5: #{tpu_custom_call.1} parent=1 // loop_body
      %s25 = ssub.s32 %s20, 1
      %s26 = ssub.s32 %s20, 2
      %s27 = sadd.s32 %s20, 1
      %s28 = ssub.s32 %s20, %s27
      %p29 = scmp.eq.s32.totalorder %s28, 0
      %s31 = sadd.s32 %s30, 1
      %s32 = scalar_select %p29, %s30, %s31
      %p35 = pneg %p29
      %p36 = scmp.eq.s32.totalorder %s20, 1
      %p37 = por %p35, %p36
      %p38 = scmp.ne.s32.totalorder %s30, %s33
      %p39 = scmp.eq.s32.totalorder %s20, 0
      %p40 = por %p38, %p39
      %p41 = scmp.ne.s32.totalorder %s30, %s33
      %p42 = scmp.eq.s32.totalorder %s25, 1
      %p43 = por %p41, %p42
      %p44 = scmp.ne.s32.totalorder %s33, %s34
      %p45 = scmp.eq.s32.totalorder %s25, 0
      %p46 = por %p44, %p45
      %p47 = scmp.ne.s32.totalorder %s33, %s34
      %p48 = scmp.eq.s32.totalorder %s26, 1
      %p49 = por %p47, %p48
      %p51 = scmp.ne.s32.totalorder %s34, %s50
      %p52 = scmp.eq.s32.totalorder %s26, 0
      %p53 = por %p51, %p52
      %s55 = sadd.s32 %s54, 1
      %p58 = scmp.eq.s32.totalorder %s20, 1
      %p59 = scmp.ne.s32.totalorder %s54, %s56
      %p60 = scmp.eq.s32.totalorder %s20, 0
      %p61 = por %p59, %p60
      %p62 = scmp.ne.s32.totalorder %s54, %s56
      %p63 = scmp.eq.s32.totalorder %s25, 1
      %p64 = por %p62, %p63
      %p65 = scmp.ne.s32.totalorder %s56, %s57
      %p66 = scmp.eq.s32.totalorder %s25, 0
      %p67 = por %p65, %p66
      %p68 = scmp.ne.s32.totalorder %s56, %s57
      %p69 = scmp.eq.s32.totalorder %s26, 1
      %p70 = por %p68, %p69
      %p72 = scmp.ne.s32.totalorder %s57, %s71
      %p73 = scmp.eq.s32.totalorder %s26, 0
      %p74 = por %p72, %p73
      %s76 = sadd.s32 %s75, 1
      %p79 = scmp.eq.s32.totalorder %s20, 1
      %p80 = scmp.ne.s32.totalorder %s75, %s77
      %p81 = scmp.eq.s32.totalorder %s20, 0
      %p82 = por %p80, %p81
      %p83 = scmp.ne.s32.totalorder %s75, %s77
      %p84 = scmp.eq.s32.totalorder %s25, 1
      %p85 = por %p83, %p84
      %p86 = scmp.ne.s32.totalorder %s77, %s78
      %p87 = scmp.eq.s32.totalorder %s25, 0
      %p88 = por %p86, %p87
      %p89 = scmp.ne.s32.totalorder %s77, %s78
      %p90 = scmp.eq.s32.totalorder %s26, 1
      %p91 = por %p89, %p90
      %p93 = scmp.ne.s32.totalorder %s78, %s92
      %p94 = scmp.eq.s32.totalorder %s26, 0
      %p95 = por %p93, %p94
      %s97 = sadd.s32 %s96, 1
      %p100 = scmp.eq.s32.totalorder %s20, 1
      %p101 = scmp.ne.s32.totalorder %s96, %s98
      %p102 = scmp.eq.s32.totalorder %s20, 0
      %p103 = por %p101, %p102
      %p104 = scmp.ne.s32.totalorder %s96, %s98
      %p105 = scmp.eq.s32.totalorder %s25, 1
      %p106 = por %p104, %p105
      %p107 = scmp.ne.s32.totalorder %s98, %s99
      %p108 = scmp.eq.s32.totalorder %s25, 0
      %p109 = por %p107, %p108
      %p110 = scmp.ne.s32.totalorder %s98, %s99
      %p111 = scmp.eq.s32.totalorder %s26, 1
      %p112 = por %p110, %p111
      %p114 = scmp.ne.s32.totalorder %s99, %s113
      %p115 = scmp.eq.s32.totalorder %s26, 0
      %p116 = por %p114, %p115
      %s117 = ssub.s32 %s20, %s27
      %p118 = scmp.eq.s32.totalorder %s117, 0
      %s120 = sadd.s32 %s119, 1
      %s121 = scalar_select %p118, %s119, %s120
      %p124 = pneg %p118
      %p125 = scmp.eq.s32.totalorder %s20, 1
      %p126 = por %p124, %p125
      %p127 = scmp.ne.s32.totalorder %s119, %s122
      %p128 = scmp.eq.s32.totalorder %s20, 0
      %p129 = por %p127, %p128
      %p130 = scmp.ne.s32.totalorder %s119, %s122
      %p131 = scmp.eq.s32.totalorder %s25, 1
      %p132 = por %p130, %p131
      %p133 = scmp.ne.s32.totalorder %s122, %s123
      %p134 = scmp.eq.s32.totalorder %s25, 0
      %p135 = por %p133, %p134
      %p136 = scmp.ne.s32.totalorder %s122, %s123
      %p137 = scmp.eq.s32.totalorder %s26, 1
      %p138 = por %p136, %p137
      %p140 = scmp.ne.s32.totalorder %s123, %s139
      %p141 = scmp.eq.s32.totalorder %s26, 0
      %p142 = por %p140, %p141
      %p143 = scmp.le.s32.totalorder 1, %s20
      %p144 = scmp.lt.s32.totalorder %s20, 3
      %p145 = pnand %p143, %p144
      %p146 = pneg %p145
      // Predicated region
      $region9: #{tpu_custom_call.1} parent=5 // pred_check
        _
      $region10: #{tpu_custom_call.1} parent=5 // pred_check_branch
        %148 = sbr.rel (%p145) target = $region12
      $region11: #{tpu_custom_call.1} parent=5 // pred_region
        %s149 = ssub.s32 %s20, 1
        // Predicated region
        $region13: #{tpu_custom_call.1} parent=11 // pred_check
          %p150 = pneg %p67
        $region14: #{tpu_custom_call.1} parent=11 // pred_check_branch
          %152 = sbr.rel (%p150) target = $region16
        $region15: #{tpu_custom_call.1} parent=11 // pred_region
          _
        $region16: #{tpu_custom_call.1} parent=11 // pred_fallthru
          _
        // Predicated region
        $region17: #{tpu_custom_call.1} parent=11 // pred_check
          %p153 = pneg %p88
        $region18: #{tpu_custom_call.1} parent=11 // pred_check_branch
          %155 = sbr.rel (%p153) target = $region20
        $region19: #{tpu_custom_call.1} parent=11 // pred_region
          _
        $region20: #{tpu_custom_call.1} parent=11 // pred_fallthru
          _
        // Predicated region
        $region21: #{tpu_custom_call.1} parent=11 // pred_check
          %p156 = pneg %p109
        $region22: #{tpu_custom_call.1} parent=11 // pred_check_branch
          %158 = sbr.rel (%p156) target = $region24
        $region23: #{tpu_custom_call.1} parent=11 // pred_region
          _
        $region24: #{tpu_custom_call.1} parent=11 // pred_fallthru
          _
      $region12: #{tpu_custom_call.1} parent=5 // pred_fallthru
        _
      %p159 = scmp.lt.s32.totalorder %s20, 2
      // Predicated region
      $region25: #{tpu_custom_call.1} parent=5 // pred_check
        %p160 = pneg %p159
      $region26: #{tpu_custom_call.1} parent=5 // pred_check_branch
        %162 = sbr.rel (%p160) target = $region28
      $region27: #{tpu_custom_call.1} parent=5 // pred_region
        // Predicated region
        $region29: #{tpu_custom_call.1} parent=27 // pred_check
          %p163 = pneg %p40
        $region30: #{tpu_custom_call.1} parent=27 // pred_check_branch
          %165 = sbr.rel (%p163) target = $region32
        $region31: #{tpu_custom_call.1} parent=27 // pred_region
          %p166 = scmp.lt.s32.totalorder %s20, 1
          %s167 = scalar_select %p166, %s20, 1
          %s168 = smul.addr %s167, 24
          %s169 = smul.addr %s168, 8
          %s170 = scalar_lea.vmem %s1, %s169
        $region32: #{tpu_custom_call.1} parent=27 // pred_fallthru
          _
      $region28: #{tpu_custom_call.1} parent=5 // pred_fallthru
        _
      %p171 = scmp.le.s32.totalorder 1, %s20
      %p172 = scmp.lt.s32.totalorder %s20, 3
      %p173 = pnand %p171, %p172
      %p174 = pneg %p173
      // Predicated region
      $region33: #{tpu_custom_call.1} parent=5 // pred_check
        _
      $region34: #{tpu_custom_call.1} parent=5 // pred_check_branch
        %176 = sbr.rel (%p173) target = $region36
      $region35: #{tpu_custom_call.1} parent=5 // pred_region
        %s177 = ssub.s32 %s20, 1
        %p178 = scmp.lt.s32.totalorder %s25, 1
        %s179 = scalar_select %p178, %s25, 1
        %s180 = smul.addr %s179, 24
        %s181 = smul.addr %s180, 8
        %s182 = scalar_lea.vmem %s1, %s181
        %p183 = pneg %p46
        %p184 = pneg %p43
        %p185 = pneg %p67
        %p186 = pneg %p64
        %p187 = pneg %p88
        %p188 = pneg %p85
        %p189 = pneg %p109
        %p190 = pneg %p106
        %p191 = pneg %p135
        %p192 = pneg %p132
        %s193 = sand.u32 %s122, 1
        %s194 = scalar_lea.sflag [#allocation6], %s193
        %s195 = sand.u32 %s122, 1
        %s196 = smul.addr %s195, 8
        %s197 = scalar_lea.vmem [#allocation5], %s196
        %p198 = scmp.lt.s32.totalorder %s25, 1
        %s199 = scalar_select %p198, %s25, 1
        %s200 = smul.addr %s199, 24
        %s201 = smul.addr %s200, 8
        %s202 = scalar_lea.vmem %s1, %s201
        %v204 = vld [vmem:[%s202] sm:$0x1]
        %vm205 = vcmask 57344
        %206 = vst.msk [vmem:[#allocation2] sm:$0x1] %vm205, %v204
        %v207 = vld [vmem:[%s202 + $0x2] sm:$0x1]
        %209 = vrot.lane.b32.xlu0 %v207, 8
        %v210 = vpop.permute.xlu0 %209
        %vm212 = vcmask 122944
        %213 = vst.msk [vmem:[#allocation2] sm:$0x1] %vm212, %v210
        %v214 = vld [vmem:[%s202 + $0x4] sm:$0x1]
        %216 = vrot.lane.b32.xlu0 %v214, 16
        %v217 = vpop.permute.xlu0 %216
        %vm219 = vcmask 188544
        %220 = vst.msk [vmem:[#allocation2] sm:$0x1] %vm219, %v217
        %v221 = vld [vmem:[%s202 + $0x6] sm:$0x1]
        %223 = vrot.lane.b32.xlu0 %v221, 24
        %v224 = vpop.permute.xlu0 %223
        %vm226 = vcmask 254144
        %227 = vst.msk [vmem:[#allocation2] sm:$0x1] %vm226, %v224
        %v228 = vld [vmem:[%s202 + $0x8] sm:$0x1]
        %230 = vrot.lane.b32.xlu0 %v228, 32
        %v231 = vpop.permute.xlu0 %230
        %vm233 = vcmask 319744
        %234 = vst.msk [vmem:[#allocation2] sm:$0x1] %vm233, %v231
        %v235 = vld [vmem:[%s202 + $0xa] sm:$0x1]
        %237 = vrot.lane.b32.xlu0 %v235, 40
        %v238 = vpop.permute.xlu0 %237
        %vm240 = vcmask 385344
        %241 = vst.msk [vmem:[#allocation2] sm:$0x1] %vm240, %v238
        %v242 = vld [vmem:[%s202 + $0xc] sm:$0x1]
        %244 = vrot.lane.b32.xlu0 %v242, 48
        %v245 = vpop.permute.xlu0 %244
        %vm247 = vcmask 450944
        %248 = vst.msk [vmem:[#allocation2] sm:$0x1] %vm247, %v245
        %v249 = vld [vmem:[%s202 + $0xe] sm:$0x1]
        %251 = vrot.lane.b32.xlu0 %v249, 56
        %v252 = vpop.permute.xlu0 %251
        %vm254 = vcmask 516544
        %255 = vst.msk [vmem:[#allocation2] sm:$0x1] %vm254, %v252
        %s256 = scalar_lea.vmem %s202, 96
        %v257 = vld [vmem:[%s256] sm:$0x1]
        %258 = vst.msk [vmem:[#allocation2 + $0x1] sm:$0x1] %vm205, %v257
        %v259 = vld [vmem:[%s256 + $0x2] sm:$0x1]
        %261 = vrot.lane.b32.xlu0 %v259, 8
        %v262 = vpop.permute.xlu0 %261
        %264 = vst.msk [vmem:[#allocation2 + $0x1] sm:$0x1] %vm212, %v262
        %v265 = vld [vmem:[%s256 + $0x4] sm:$0x1]
        %267 = vrot.lane.b32.xlu0 %v265, 16
        %v268 = vpop.permute.xlu0 %267
        %270 = vst.msk [vmem:[#allocation2 + $0x1] sm:$0x1] %vm219, %v268
        %v271 = vld [vmem:[%s256 + $0x6] sm:$0x1]
        %273 = vrot.lane.b32.xlu0 %v271, 24
        %v274 = vpop.permute.xlu0 %273
        %276 = vst.msk [vmem:[#allocation2 + $0x1] sm:$0x1] %vm226, %v274
        %v277 = vld [vmem:[%s256 + $0x8] sm:$0x1]
        %279 = vrot.lane.b32.xlu0 %v277, 32
        %v280 = vpop.permute.xlu0 %279
        %282 = vst.msk [vmem:[#allocation2 + $0x1] sm:$0x1] %vm233, %v280
        %v283 = vld [vmem:[%s256 + $0xa] sm:$0x1]
        %285 = vrot.lane.b32.xlu0 %v283, 40
        %v286 = vpop.permute.xlu0 %285
        %288 = vst.msk [vmem:[#allocation2 + $0x1] sm:$0x1] %vm240, %v286
        %v289 = vld [vmem:[%s256 + $0xc] sm:$0x1]
        %291 = vrot.lane.b32.xlu0 %v289, 48
        %v292 = vpop.permute.xlu0 %291
        %294 = vst.msk [vmem:[#allocation2 + $0x1] sm:$0x1] %vm247, %v292
        %v295 = vld [vmem:[%s256 + $0xe] sm:$0x1]
        %297 = vrot.lane.b32.xlu0 %v295, 56
        %v298 = vpop.permute.xlu0 %297
        %300 = vst.msk [vmem:[#allocation2 + $0x1] sm:$0x1] %vm254, %v298
        %v301 = vld [vmem:[%s202] sm:$0x1]
        %303 = vrot.lane.b32.xlu0 %v301, 127
        %v304 = vpop.permute.xlu0 %303
        %306 = vst.msk [vmem:[#allocation2 + $0x2] sm:$0x1] %vm205, %v304
        %v307 = vld [vmem:[%s202 + $0x2] sm:$0x1]
        %309 = vrot.lane.b32.xlu0 %v307, 7
        %v310 = vpop.permute.xlu0 %309
        %312 = vst.msk [vmem:[#allocation2 + $0x2] sm:$0x1] %vm212, %v310
        %v313 = vld [vmem:[%s202 + $0x4] sm:$0x1]
        %315 = vrot.lane.b32.xlu0 %v313, 15
        %v316 = vpop.permute.xlu0 %315
        %318 = vst.msk [vmem:[#allocation2 + $0x2] sm:$0x1] %vm219, %v316
        %v319 = vld [vmem:[%s202 + $0x6] sm:$0x1]
        %321 = vrot.lane.b32.xlu0 %v319, 23
        %v322 = vpop.permute.xlu0 %321
        %324 = vst.msk [vmem:[#allocation2 + $0x2] sm:$0x1] %vm226, %v322
        %v325 = vld [vmem:[%s202 + $0x8] sm:$0x1]
        %327 = vrot.lane.b32.xlu0 %v325, 31
        %v328 = vpop.permute.xlu0 %327
        %330 = vst.msk [vmem:[#allocation2 + $0x2] sm:$0x1] %vm233, %v328
        %v331 = vld [vmem:[%s202 + $0xa] sm:$0x1]
        %333 = vrot.lane.b32.xlu0 %v331, 39
        %v334 = vpop.permute.xlu0 %333
        %336 = vst.msk [vmem:[#allocation2 + $0x2] sm:$0x1] %vm240, %v334
        %v337 = vld [vmem:[%s202 + $0xc] sm:$0x1]
        %339 = vrot.lane.b32.xlu0 %v337, 47
        %v340 = vpop.permute.xlu0 %339
        %342 = vst.msk [vmem:[#allocation2 + $0x2] sm:$0x1] %vm247, %v340
        %v343 = vld [vmem:[%s202 + $0xe] sm:$0x1]
        %345 = vrot.lane.b32.xlu0 %v343, 55
        %v346 = vpop.permute.xlu0 %345
        %348 = vst.msk [vmem:[#allocation2 + $0x2] sm:$0x1] %vm254, %v346
        %v349 = vld [vmem:[%s202 + $0x1] sm:$0x1]
        %350 = vst.msk [vmem:[#allocation2 + $0x3] sm:$0x1] %vm205, %v349
        %v351 = vld [vmem:[%s202 + $0x3] sm:$0x1]
        %353 = vrot.lane.b32.xlu0 %v351, 8
        %v354 = vpop.permute.xlu0 %353
        %356 = vst.msk [vmem:[#allocation2 + $0x3] sm:$0x1] %vm212, %v354
        %v357 = vld [vmem:[%s202 + $0x5] sm:$0x1]
        %359 = vrot.lane.b32.xlu0 %v357, 16
        %v360 = vpop.permute.xlu0 %359
        %362 = vst.msk [vmem:[#allocation2 + $0x3] sm:$0x1] %vm219, %v360
        %v363 = vld [vmem:[%s202 + $0x7] sm:$0x1]
        %365 = vrot.lane.b32.xlu0 %v363, 24
        %v366 = vpop.permute.xlu0 %365
        %368 = vst.msk [vmem:[#allocation2 + $0x3] sm:$0x1] %vm226, %v366
        %v369 = vld [vmem:[%s202 + $0x9] sm:$0x1]
        %371 = vrot.lane.b32.xlu0 %v369, 32
        %v372 = vpop.permute.xlu0 %371
        %374 = vst.msk [vmem:[#allocation2 + $0x3] sm:$0x1] %vm233, %v372
        %v375 = vld [vmem:[%s202 + $0xb] sm:$0x1]
        %377 = vrot.lane.b32.xlu0 %v375, 40
        %v378 = vpop.permute.xlu0 %377
        %380 = vst.msk [vmem:[#allocation2 + $0x3] sm:$0x1] %vm240, %v378
        %v381 = vld [vmem:[%s202 + $0xd] sm:$0x1]
        %383 = vrot.lane.b32.xlu0 %v381, 48
        %v384 = vpop.permute.xlu0 %383
        %386 = vst.msk [vmem:[#allocation2 + $0x3] sm:$0x1] %vm247, %v384
        %v387 = vld [vmem:[%s202 + $0xf] sm:$0x1]
        %389 = vrot.lane.b32.xlu0 %v387, 56
        %v390 = vpop.permute.xlu0 %389
        %392 = vst.msk [vmem:[#allocation2 + $0x3] sm:$0x1] %vm254, %v390
        %v393 = vld [vmem:[%s256 + $0x1] sm:$0x1]
        %394 = vst.msk [vmem:[#allocation2 + $0x4] sm:$0x1] %vm205, %v393
        %v395 = vld [vmem:[%s256 + $0x3] sm:$0x1]
        %397 = vrot.lane.b32.xlu0 %v395, 8
        %v398 = vpop.permute.xlu0 %397
        %400 = vst.msk [vmem:[#allocation2 + $0x4] sm:$0x1] %vm212, %v398
        %v401 = vld [vmem:[%s256 + $0x5] sm:$0x1]
        %403 = vrot.lane.b32.xlu0 %v401, 16
        %v404 = vpop.permute.xlu0 %403
        %406 = vst.msk [vmem:[#allocation2 + $0x4] sm:$0x1] %vm219, %v404
        %v407 = vld [vmem:[%s256 + $0x7] sm:$0x1]
        %409 = vrot.lane.b32.xlu0 %v407, 24
        %v410 = vpop.permute.xlu0 %409
        %412 = vst.msk [vmem:[#allocation2 + $0x4] sm:$0x1] %vm226, %v410
        %v413 = vld [vmem:[%s256 + $0x9] sm:$0x1]
        %415 = vrot.lane.b32.xlu0 %v413, 32
        %v416 = vpop.permute.xlu0 %415
        %418 = vst.msk [vmem:[#allocation2 + $0x4] sm:$0x1] %vm233, %v416
        %v419 = vld [vmem:[%s256 + $0xb] sm:$0x1]
        %421 = vrot.lane.b32.xlu0 %v419, 40
        %v422 = vpop.permute.xlu0 %421
        %424 = vst.msk [vmem:[#allocation2 + $0x4] sm:$0x1] %vm240, %v422
        %v425 = vld [vmem:[%s256 + $0xd] sm:$0x1]
        %427 = vrot.lane.b32.xlu0 %v425, 48
        %v428 = vpop.permute.xlu0 %427
        %430 = vst.msk [vmem:[#allocation2 + $0x4] sm:$0x1] %vm247, %v428
        %v431 = vld [vmem:[%s256 + $0xf] sm:$0x1]
        %433 = vrot.lane.b32.xlu0 %v431, 56
        %v434 = vpop.permute.xlu0 %433
        %436 = vst.msk [vmem:[#allocation2 + $0x4] sm:$0x1] %vm254, %v434
        %v437 = vld [vmem:[%s202 + $0x1] sm:$0x1]
        %439 = vrot.lane.b32.xlu0 %v437, 127
        %v440 = vpop.permute.xlu0 %439
        %442 = vst.msk [vmem:[#allocation2 + $0x5] sm:$0x1] %vm205, %v440
        %v443 = vld [vmem:[%s202 + $0x3] sm:$0x1]
        %445 = vrot.lane.b32.xlu0 %v443, 7
        %v446 = vpop.permute.xlu0 %445
        %448 = vst.msk [vmem:[#allocation2 + $0x5] sm:$0x1] %vm212, %v446
        %v449 = vld [vmem:[%s202 + $0x5] sm:$0x1]
        %451 = vrot.lane.b32.xlu0 %v449, 15
        %v452 = vpop.permute.xlu0 %451
        %454 = vst.msk [vmem:[#allocation2 + $0x5] sm:$0x1] %vm219, %v452
        %v455 = vld [vmem:[%s202 + $0x7] sm:$0x1]
        %457 = vrot.lane.b32.xlu0 %v455, 23
        %v458 = vpop.permute.xlu0 %457
        %460 = vst.msk [vmem:[#allocation2 + $0x5] sm:$0x1] %vm226, %v458
        %v461 = vld [vmem:[%s202 + $0x9] sm:$0x1]
        %463 = vrot.lane.b32.xlu0 %v461, 31
        %v464 = vpop.permute.xlu0 %463
        %466 = vst.msk [vmem:[#allocation2 + $0x5] sm:$0x1] %vm233, %v464
        %v467 = vld [vmem:[%s202 + $0xb] sm:$0x1]
        %469 = vrot.lane.b32.xlu0 %v467, 39
        %v470 = vpop.permute.xlu0 %469
        %472 = vst.msk [vmem:[#allocation2 + $0x5] sm:$0x1] %vm240, %v470
        %v473 = vld [vmem:[%s202 + $0xd] sm:$0x1]
        %475 = vrot.lane.b32.xlu0 %v473, 47
        %v476 = vpop.permute.xlu0 %475
        %478 = vst.msk [vmem:[#allocation2 + $0x5] sm:$0x1] %vm247, %v476
        %v479 = vld [vmem:[%s202 + $0xf] sm:$0x1]
        %481 = vrot.lane.b32.xlu0 %v479, 55
        %v482 = vpop.permute.xlu0 %481
        %484 = vst.msk [vmem:[#allocation2 + $0x5] sm:$0x1] %vm254, %v482
        %v485 = vld [vmem:[%s202 + $0x2] sm:$0x1]
        %486 = vst.msk [vmem:[#allocation2 + $0x6] sm:$0x1] %vm205, %v485
        %v487 = vld [vmem:[%s202 + $0x4] sm:$0x1]
        %489 = vrot.lane.b32.xlu0 %v487, 8
        %v490 = vpop.permute.xlu0 %489
        %492 = vst.msk [vmem:[#allocation2 + $0x6] sm:$0x1] %vm212, %v490
        %v493 = vld [vmem:[%s202 + $0x6] sm:$0x1]
        %495 = vrot.lane.b32.xlu0 %v493, 16
        %v496 = vpop.permute.xlu0 %495
        %498 = vst.msk [vmem:[#allocation2 + $0x6] sm:$0x1] %vm219, %v496
        %v499 = vld [vmem:[%s202 + $0x8] sm:$0x1]
        %501 = vrot.lane.b32.xlu0 %v499, 24
        %v502 = vpop.permute.xlu0 %501
        %504 = vst.msk [vmem:[#allocation2 + $0x6] sm:$0x1] %vm226, %v502
        %v505 = vld [vmem:[%s202 + $0xa] sm:$0x1]
        %507 = vrot.lane.b32.xlu0 %v505, 32
        %v508 = vpop.permute.xlu0 %507
        %510 = vst.msk [vmem:[#allocation2 + $0x6] sm:$0x1] %vm233, %v508
        %v511 = vld [vmem:[%s202 + $0xc] sm:$0x1]
        %513 = vrot.lane.b32.xlu0 %v511, 40
        %v514 = vpop.permute.xlu0 %513
        %516 = vst.msk [vmem:[#allocation2 + $0x6] sm:$0x1] %vm240, %v514
        %v517 = vld [vmem:[%s202 + $0xe] sm:$0x1]
        %519 = vrot.lane.b32.xlu0 %v517, 48
        %v520 = vpop.permute.xlu0 %519
        %522 = vst.msk [vmem:[#allocation2 + $0x6] sm:$0x1] %vm247, %v520
        %v523 = vld [vmem:[%s202 + $0x10] sm:$0x1]
        %525 = vrot.lane.b32.xlu0 %v523, 56
        %v526 = vpop.permute.xlu0 %525
        %528 = vst.msk [vmem:[#allocation2 + $0x6] sm:$0x1] %vm254, %v526
        %v529 = vld [vmem:[%s256 + $0x2] sm:$0x1]
        %530 = vst.msk [vmem:[#allocation2 + $0x7] sm:$0x1] %vm205, %v529
        %v531 = vld [vmem:[%s256 + $0x4] sm:$0x1]
        %533 = vrot.lane.b32.xlu0 %v531, 8
        %v534 = vpop.permute.xlu0 %533
        %536 = vst.msk [vmem:[#allocation2 + $0x7] sm:$0x1] %vm212, %v534
        %v537 = vld [vmem:[%s256 + $0x6] sm:$0x1]
        %539 = vrot.lane.b32.xlu0 %v537, 16
        %v540 = vpop.permute.xlu0 %539
        %542 = vst.msk [vmem:[#allocation2 + $0x7] sm:$0x1] %vm219, %v540
        %v543 = vld [vmem:[%s256 + $0x8] sm:$0x1]
        %545 = vrot.lane.b32.xlu0 %v543, 24
        %v546 = vpop.permute.xlu0 %545
        %548 = vst.msk [vmem:[#allocation2 + $0x7] sm:$0x1] %vm226, %v546
        %v549 = vld [vmem:[%s256 + $0xa] sm:$0x1]
        %551 = vrot.lane.b32.xlu0 %v549, 32
        %v552 = vpop.permute.xlu0 %551
        %554 = vst.msk [vmem:[#allocation2 + $0x7] sm:$0x1] %vm233, %v552
        %v555 = vld [vmem:[%s256 + $0xc] sm:$0x1]
        %557 = vrot.lane.b32.xlu0 %v555, 40
        %v558 = vpop.permute.xlu0 %557
        %560 = vst.msk [vmem:[#allocation2 + $0x7] sm:$0x1] %vm240, %v558
        %v561 = vld [vmem:[%s256 + $0xe] sm:$0x1]
        %563 = vrot.lane.b32.xlu0 %v561, 48
        %v564 = vpop.permute.xlu0 %563
        %566 = vst.msk [vmem:[#allocation2 + $0x7] sm:$0x1] %vm247, %v564
        %v567 = vld [vmem:[%s256 + $0x10] sm:$0x1]
        %569 = vrot.lane.b32.xlu0 %v567, 56
        %v570 = vpop.permute.xlu0 %569
        %572 = vst.msk [vmem:[#allocation2 + $0x7] sm:$0x1] %vm254, %v570
        %v573 = vld [vmem:[%s202 + $0x2] sm:$0x1]
        %575 = vrot.lane.b32.xlu0 %v573, 127
        %v576 = vpop.permute.xlu0 %575
        %578 = vst.msk [vmem:[#allocation2 + $0x8] sm:$0x1] %vm205, %v576
        %v579 = vld [vmem:[%s202 + $0x4] sm:$0x1]
        %581 = vrot.lane.b32.xlu0 %v579, 7
        %v582 = vpop.permute.xlu0 %581
        %584 = vst.msk [vmem:[#allocation2 + $0x8] sm:$0x1] %vm212, %v582
        %v585 = vld [vmem:[%s202 + $0x6] sm:$0x1]
        %587 = vrot.lane.b32.xlu0 %v585, 15
        %v588 = vpop.permute.xlu0 %587
        %590 = vst.msk [vmem:[#allocation2 + $0x8] sm:$0x1] %vm219, %v588
        %v591 = vld [vmem:[%s202 + $0x8] sm:$0x1]
        %593 = vrot.lane.b32.xlu0 %v591, 23
        %v594 = vpop.permute.xlu0 %593
        %596 = vst.msk [vmem:[#allocation2 + $0x8] sm:$0x1] %vm226, %v594
        %v597 = vld [vmem:[%s202 + $0xa] sm:$0x1]
        %599 = vrot.lane.b32.xlu0 %v597, 31
        %v600 = vpop.permute.xlu0 %599
        %602 = vst.msk [vmem:[#allocation2 + $0x8] sm:$0x1] %vm233, %v600
        %v603 = vld [vmem:[%s202 + $0xc] sm:$0x1]
        %605 = vrot.lane.b32.xlu0 %v603, 39
        %v606 = vpop.permute.xlu0 %605
        %608 = vst.msk [vmem:[#allocation2 + $0x8] sm:$0x1] %vm240, %v606
        %v609 = vld [vmem:[%s202 + $0xe] sm:$0x1]
        %611 = vrot.lane.b32.xlu0 %v609, 47
        %v612 = vpop.permute.xlu0 %611
        %614 = vst.msk [vmem:[#allocation2 + $0x8] sm:$0x1] %vm247, %v612
        %v615 = vld [vmem:[%s202 + $0x10] sm:$0x1]
        %617 = vrot.lane.b32.xlu0 %v615, 55
        %v618 = vpop.permute.xlu0 %617
        %620 = vst.msk [vmem:[#allocation2 + $0x8] sm:$0x1] %vm254, %v618
        %s621 = scalar_lea.vmem %s202, 24
        %v622 = vld [vmem:[%s621] sm:$0x1]
        %623 = vst.msk [vmem:[#allocation2 + $0x9] sm:$0x1] %vm205, %v622
        %v624 = vld [vmem:[%s621 + $0x2] sm:$0x1]
        %626 = vrot.lane.b32.xlu0 %v624, 8
        %v627 = vpop.permute.xlu0 %626
        %629 = vst.msk [vmem:[#allocation2 + $0x9] sm:$0x1] %vm212, %v627
        %v630 = vld [vmem:[%s621 + $0x4] sm:$0x1]
        %632 = vrot.lane.b32.xlu0 %v630, 16
        %v633 = vpop.permute.xlu0 %632
        %635 = vst.msk [vmem:[#allocation2 + $0x9] sm:$0x1] %vm219, %v633
        %v636 = vld [vmem:[%s621 + $0x6] sm:$0x1]
        %638 = vrot.lane.b32.xlu0 %v636, 24
        %v639 = vpop.permute.xlu0 %638
        %641 = vst.msk [vmem:[#allocation2 + $0x9] sm:$0x1] %vm226, %v639
        %v642 = vld [vmem:[%s621 + $0x8] sm:$0x1]
        %644 = vrot.lane.b32.xlu0 %v642, 32
        %v645 = vpop.permute.xlu0 %644
        %647 = vst.msk [vmem:[#allocation2 + $0x9] sm:$0x1] %vm233, %v645
        %v648 = vld [vmem:[%s621 + $0xa] sm:$0x1]
        %650 = vrot.lane.b32.xlu0 %v648, 40
        %v651 = vpop.permute.xlu0 %650
        %653 = vst.msk [vmem:[#allocation2 + $0x9] sm:$0x1] %vm240, %v651
        %v654 = vld [vmem:[%s621 + $0xc] sm:$0x1]
        %656 = vrot.lane.b32.xlu0 %v654, 48
        %v657 = vpop.permute.xlu0 %656
        %659 = vst.msk [vmem:[#allocation2 + $0x9] sm:$0x1] %vm247, %v657
        %v660 = vld [vmem:[%s621 + $0xe] sm:$0x1]
        %662 = vrot.lane.b32.xlu0 %v660, 56
        %v663 = vpop.permute.xlu0 %662
        %665 = vst.msk [vmem:[#allocation2 + $0x9] sm:$0x1] %vm254, %v663
        %s666 = scalar_lea.vmem %s202, 120
        %v667 = vld [vmem:[%s666] sm:$0x1]
        %668 = vst.msk [vmem:[#allocation2 + $0xa] sm:$0x1] %vm205, %v667
        %v669 = vld [vmem:[%s666 + $0x2] sm:$0x1]
        %671 = vrot.lane.b32.xlu0 %v669, 8
        %v672 = vpop.permute.xlu0 %671
        %674 = vst.msk [vmem:[#allocation2 + $0xa] sm:$0x1] %vm212, %v672
        %v675 = vld [vmem:[%s666 + $0x4] sm:$0x1]
        %677 = vrot.lane.b32.xlu0 %v675, 16
        %v678 = vpop.permute.xlu0 %677
        %680 = vst.msk [vmem:[#allocation2 + $0xa] sm:$0x1] %vm219, %v678
        %v681 = vld [vmem:[%s666 + $0x6] sm:$0x1]
        %683 = vrot.lane.b32.xlu0 %v681, 24
        %v684 = vpop.permute.xlu0 %683
        %686 = vst.msk [vmem:[#allocation2 + $0xa] sm:$0x1] %vm226, %v684
        %v687 = vld [vmem:[%s666 + $0x8] sm:$0x1]
        %689 = vrot.lane.b32.xlu0 %v687, 32
        %v690 = vpop.permute.xlu0 %689
        %692 = vst.msk [vmem:[#allocation2 + $0xa] sm:$0x1] %vm233, %v690
        %v693 = vld [vmem:[%s666 + $0xa] sm:$0x1]
        %695 = vrot.lane.b32.xlu0 %v693, 40
        %v696 = vpop.permute.xlu0 %695
        %698 = vst.msk [vmem:[#allocation2 + $0xa] sm:$0x1] %vm240, %v696
        %v699 = vld [vmem:[%s666 + $0xc] sm:$0x1]
        %701 = vrot.lane.b32.xlu0 %v699, 48
        %v702 = vpop.permute.xlu0 %701
        %704 = vst.msk [vmem:[#allocation2 + $0xa] sm:$0x1] %vm247, %v702
        %v705 = vld [vmem:[%s666 + $0xe] sm:$0x1]
        %707 = vrot.lane.b32.xlu0 %v705, 56
        %v708 = vpop.permute.xlu0 %707
        %710 = vst.msk [vmem:[#allocation2 + $0xa] sm:$0x1] %vm254, %v708
        %v711 = vld [vmem:[%s621] sm:$0x1]
        %713 = vrot.lane.b32.xlu0 %v711, 127
        %v714 = vpop.permute.xlu0 %713
        %716 = vst.msk [vmem:[#allocation2 + $0xb] sm:$0x1] %vm205, %v714
        %v717 = vld [vmem:[%s621 + $0x2] sm:$0x1]
        %719 = vrot.lane.b32.xlu0 %v717, 7
        %v720 = vpop.permute.xlu0 %719
        %722 = vst.msk [vmem:[#allocation2 + $0xb] sm:$0x1] %vm212, %v720
        %v723 = vld [vmem:[%s621 + $0x4] sm:$0x1]
        %725 = vrot.lane.b32.xlu0 %v723, 15
        %v726 = vpop.permute.xlu0 %725
        %728 = vst.msk [vmem:[#allocation2 + $0xb] sm:$0x1] %vm219, %v726
        %v729 = vld [vmem:[%s621 + $0x6] sm:$0x1]
        %731 = vrot.lane.b32.xlu0 %v729, 23
        %v732 = vpop.permute.xlu0 %731
        %734 = vst.msk [vmem:[#allocation2 + $0xb] sm:$0x1] %vm226, %v732
        %v735 = vld [vmem:[%s621 + $0x8] sm:$0x1]
        %737 = vrot.lane.b32.xlu0 %v735, 31
        %v738 = vpop.permute.xlu0 %737
        %740 = vst.msk [vmem:[#allocation2 + $0xb] sm:$0x1] %vm233, %v738
        %v741 = vld [vmem:[%s621 + $0xa] sm:$0x1]
        %743 = vrot.lane.b32.xlu0 %v741, 39
        %v744 = vpop.permute.xlu0 %743
        %746 = vst.msk [vmem:[#allocation2 + $0xb] sm:$0x1] %vm240, %v744
        %v747 = vld [vmem:[%s621 + $0xc] sm:$0x1]
        %749 = vrot.lane.b32.xlu0 %v747, 47
        %v750 = vpop.permute.xlu0 %749
        %752 = vst.msk [vmem:[#allocation2 + $0xb] sm:$0x1] %vm247, %v750
        %v753 = vld [vmem:[%s621 + $0xe] sm:$0x1]
        %755 = vrot.lane.b32.xlu0 %v753, 55
        %v756 = vpop.permute.xlu0 %755
        %758 = vst.msk [vmem:[#allocation2 + $0xb] sm:$0x1] %vm254, %v756
        %v759 = vld [vmem:[%s621 + $0x1] sm:$0x1]
        %760 = vst.msk [vmem:[#allocation2 + $0xc] sm:$0x1] %vm205, %v759
        %v761 = vld [vmem:[%s621 + $0x3] sm:$0x1]
        %763 = vrot.lane.b32.xlu0 %v761, 8
        %v764 = vpop.permute.xlu0 %763
        %766 = vst.msk [vmem:[#allocation2 + $0xc] sm:$0x1] %vm212, %v764
        %v767 = vld [vmem:[%s621 + $0x5] sm:$0x1]
        %769 = vrot.lane.b32.xlu0 %v767, 16
        %v770 = vpop.permute.xlu0 %769
        %772 = vst.msk [vmem:[#allocation2 + $0xc] sm:$0x1] %vm219, %v770
        %v773 = vld [vmem:[%s621 + $0x7] sm:$0x1]
        %775 = vrot.lane.b32.xlu0 %v773, 24
        %v776 = vpop.permute.xlu0 %775
        %778 = vst.msk [vmem:[#allocation2 + $0xc] sm:$0x1] %vm226, %v776
        %v779 = vld [vmem:[%s621 + $0x9] sm:$0x1]
        %781 = vrot.lane.b32.xlu0 %v779, 32
        %v782 = vpop.permute.xlu0 %781
        %784 = vst.msk [vmem:[#allocation2 + $0xc] sm:$0x1] %vm233, %v782
        %v785 = vld [vmem:[%s621 + $0xb] sm:$0x1]
        %787 = vrot.lane.b32.xlu0 %v785, 40
        %v788 = vpop.permute.xlu0 %787
        %790 = vst.msk [vmem:[#allocation2 + $0xc] sm:$0x1] %vm240, %v788
        %v791 = vld [vmem:[%s621 + $0xd] sm:$0x1]
        %793 = vrot.lane.b32.xlu0 %v791, 48
        %v794 = vpop.permute.xlu0 %793
        %796 = vst.msk [vmem:[#allocation2 + $0xc] sm:$0x1] %vm247, %v794
        %v797 = vld [vmem:[%s621 + $0xf] sm:$0x1]
        %799 = vrot.lane.b32.xlu0 %v797, 56
        %v800 = vpop.permute.xlu0 %799
        %802 = vst.msk [vmem:[#allocation2 + $0xc] sm:$0x1] %vm254, %v800
        %v803 = vld [vmem:[%s666 + $0x1] sm:$0x1]
        %804 = vst.msk [vmem:[#allocation2 + $0xd] sm:$0x1] %vm205, %v803
        %v805 = vld [vmem:[%s666 + $0x3] sm:$0x1]
        %807 = vrot.lane.b32.xlu0 %v805, 8
        %v808 = vpop.permute.xlu0 %807
        %810 = vst.msk [vmem:[#allocation2 + $0xd] sm:$0x1] %vm212, %v808
        %v811 = vld [vmem:[%s666 + $0x5] sm:$0x1]
        %813 = vrot.lane.b32.xlu0 %v811, 16
        %v814 = vpop.permute.xlu0 %813
        %816 = vst.msk [vmem:[#allocation2 + $0xd] sm:$0x1] %vm219, %v814
        %v817 = vld [vmem:[%s666 + $0x7] sm:$0x1]
        %819 = vrot.lane.b32.xlu0 %v817, 24
        %v820 = vpop.permute.xlu0 %819
        %822 = vst.msk [vmem:[#allocation2 + $0xd] sm:$0x1] %vm226, %v820
        %v823 = vld [vmem:[%s666 + $0x9] sm:$0x1]
        %825 = vrot.lane.b32.xlu0 %v823, 32
        %v826 = vpop.permute.xlu0 %825
        %828 = vst.msk [vmem:[#allocation2 + $0xd] sm:$0x1] %vm233, %v826
        %v829 = vld [vmem:[%s666 + $0xb] sm:$0x1]
        %831 = vrot.lane.b32.xlu0 %v829, 40
        %v832 = vpop.permute.xlu0 %831
        %834 = vst.msk [vmem:[#allocation2 + $0xd] sm:$0x1] %vm240, %v832
        %v835 = vld [vmem:[%s666 + $0xd] sm:$0x1]
        %837 = vrot.lane.b32.xlu0 %v835, 48
        %v838 = vpop.permute.xlu0 %837
        %840 = vst.msk [vmem:[#allocation2 + $0xd] sm:$0x1] %vm247, %v838
        %v841 = vld [vmem:[%s666 + $0xf] sm:$0x1]
        %843 = vrot.lane.b32.xlu0 %v841, 56
        %v844 = vpop.permute.xlu0 %843
        %846 = vst.msk [vmem:[#allocation2 + $0xd] sm:$0x1] %vm254, %v844
        %v847 = vld [vmem:[%s621 + $0x1] sm:$0x1]
        %849 = vrot.lane.b32.xlu0 %v847, 127
        %v850 = vpop.permute.xlu0 %849
        %852 = vst.msk [vmem:[#allocation2 + $0xe] sm:$0x1] %vm205, %v850
        %v853 = vld [vmem:[%s621 + $0x3] sm:$0x1]
        %855 = vrot.lane.b32.xlu0 %v853, 7
        %v856 = vpop.permute.xlu0 %855
        %858 = vst.msk [vmem:[#allocation2 + $0xe] sm:$0x1] %vm212, %v856
        %v859 = vld [vmem:[%s621 + $0x5] sm:$0x1]
        %861 = vrot.lane.b32.xlu0 %v859, 15
        %v862 = vpop.permute.xlu0 %861
        %864 = vst.msk [vmem:[#allocation2 + $0xe] sm:$0x1] %vm219, %v862
        %v865 = vld [vmem:[%s621 + $0x7] sm:$0x1]
        %867 = vrot.lane.b32.xlu0 %v865, 23
        %v868 = vpop.permute.xlu0 %867
        %870 = vst.msk [vmem:[#allocation2 + $0xe] sm:$0x1] %vm226, %v868
        %v871 = vld [vmem:[%s621 + $0x9] sm:$0x1]
        %873 = vrot.lane.b32.xlu0 %v871, 31
        %v874 = vpop.permute.xlu0 %873
        %876 = vst.msk [vmem:[#allocation2 + $0xe] sm:$0x1] %vm233, %v874
        %v877 = vld [vmem:[%s621 + $0xb] sm:$0x1]
        %879 = vrot.lane.b32.xlu0 %v877, 39
        %v880 = vpop.permute.xlu0 %879
        %882 = vst.msk [vmem:[#allocation2 + $0xe] sm:$0x1] %vm240, %v880
        %v883 = vld [vmem:[%s621 + $0xd] sm:$0x1]
        %885 = vrot.lane.b32.xlu0 %v883, 47
        %v886 = vpop.permute.xlu0 %885
        %888 = vst.msk [vmem:[#allocation2 + $0xe] sm:$0x1] %vm247, %v886
        %v889 = vld [vmem:[%s621 + $0xf] sm:$0x1]
        %891 = vrot.lane.b32.xlu0 %v889, 55
        %v892 = vpop.permute.xlu0 %891
        %894 = vst.msk [vmem:[#allocation2 + $0xe] sm:$0x1] %vm254, %v892
        %v895 = vld [vmem:[%s621 + $0x2] sm:$0x1]
        %896 = vst.msk [vmem:[#allocation2 + $0xf] sm:$0x1] %vm205, %v895
        %v897 = vld [vmem:[%s621 + $0x4] sm:$0x1]
        %899 = vrot.lane.b32.xlu0 %v897, 8
        %v900 = vpop.permute.xlu0 %899
        %902 = vst.msk [vmem:[#allocation2 + $0xf] sm:$0x1] %vm212, %v900
        %v903 = vld [vmem:[%s621 + $0x6] sm:$0x1]
        %905 = vrot.lane.b32.xlu0 %v903, 16
        %v906 = vpop.permute.xlu0 %905
        %908 = vst.msk [vmem:[#allocation2 + $0xf] sm:$0x1] %vm219, %v906
        %v909 = vld [vmem:[%s621 + $0x8] sm:$0x1]
        %911 = vrot.lane.b32.xlu0 %v909, 24
        %v912 = vpop.permute.xlu0 %911
        %914 = vst.msk [vmem:[#allocation2 + $0xf] sm:$0x1] %vm226, %v912
        %v915 = vld [vmem:[%s621 + $0xa] sm:$0x1]
        %917 = vrot.lane.b32.xlu0 %v915, 32
        %v918 = vpop.permute.xlu0 %917
        %920 = vst.msk [vmem:[#allocation2 + $0xf] sm:$0x1] %vm233, %v918
        %v921 = vld [vmem:[%s621 + $0xc] sm:$0x1]
        %923 = vrot.lane.b32.xlu0 %v921, 40
        %v924 = vpop.permute.xlu0 %923
        %926 = vst.msk [vmem:[#allocation2 + $0xf] sm:$0x1] %vm240, %v924
        %v927 = vld [vmem:[%s621 + $0xe] sm:$0x1]
        %929 = vrot.lane.b32.xlu0 %v927, 48
        %v930 = vpop.permute.xlu0 %929
        %932 = vst.msk [vmem:[#allocation2 + $0xf] sm:$0x1] %vm247, %v930
        %v933 = vld [vmem:[%s621 + $0x10] sm:$0x1]
        %935 = vrot.lane.b32.xlu0 %v933, 56
        %v936 = vpop.permute.xlu0 %935
        %938 = vst.msk [vmem:[#allocation2 + $0xf] sm:$0x1] %vm254, %v936
        %v939 = vld [vmem:[%s666 + $0x2] sm:$0x1]
        %940 = vst.msk [vmem:[#allocation2 + $0x10] sm:$0x1] %vm205, %v939
        %v941 = vld [vmem:[%s666 + $0x4] sm:$0x1]
        %943 = vrot.lane.b32.xlu0 %v941, 8
        %v944 = vpop.permute.xlu0 %943
        %946 = vst.msk [vmem:[#allocation2 + $0x10] sm:$0x1] %vm212, %v944
        %v947 = vld [vmem:[%s666 + $0x6] sm:$0x1]
        %949 = vrot.lane.b32.xlu0 %v947, 16
        %v950 = vpop.permute.xlu0 %949
        %952 = vst.msk [vmem:[#allocation2 + $0x10] sm:$0x1] %vm219, %v950
        %v953 = vld [vmem:[%s666 + $0x8] sm:$0x1]
        %955 = vrot.lane.b32.xlu0 %v953, 24
        %v956 = vpop.permute.xlu0 %955
        %958 = vst.msk [vmem:[#allocation2 + $0x10] sm:$0x1] %vm226, %v956
        %v959 = vld [vmem:[%s666 + $0xa] sm:$0x1]
        %961 = vrot.lane.b32.xlu0 %v959, 32
        %v962 = vpop.permute.xlu0 %961
        %964 = vst.msk [vmem:[#allocation2 + $0x10] sm:$0x1] %vm233, %v962
        %v965 = vld [vmem:[%s666 + $0xc] sm:$0x1]
        %967 = vrot.lane.b32.xlu0 %v965, 40
        %v968 = vpop.permute.xlu0 %967
        %970 = vst.msk [vmem:[#allocation2 + $0x10] sm:$0x1] %vm240, %v968
        %v971 = vld [vmem:[%s666 + $0xe] sm:$0x1]
        %973 = vrot.lane.b32.xlu0 %v971, 48
        %v974 = vpop.permute.xlu0 %973
        %976 = vst.msk [vmem:[#allocation2 + $0x10] sm:$0x1] %vm247, %v974
        %v977 = vld [vmem:[%s666 + $0x10] sm:$0x1]
        %979 = vrot.lane.b32.xlu0 %v977, 56
        %v980 = vpop.permute.xlu0 %979
        %982 = vst.msk [vmem:[#allocation2 + $0x10] sm:$0x1] %vm254, %v980
        %v983 = vld [vmem:[%s621 + $0x2] sm:$0x1]
        %985 = vrot.lane.b32.xlu0 %v983, 127
        %v986 = vpop.permute.xlu0 %985
        %988 = vst.msk [vmem:[#allocation2 + $0x11] sm:$0x1] %vm205, %v986
        %v989 = vld [vmem:[%s621 + $0x4] sm:$0x1]
        %991 = vrot.lane.b32.xlu0 %v989, 7
        %v992 = vpop.permute.xlu0 %991
        %994 = vst.msk [vmem:[#allocation2 + $0x11] sm:$0x1] %vm212, %v992
        %v995 = vld [vmem:[%s621 + $0x6] sm:$0x1]
        %997 = vrot.lane.b32.xlu0 %v995, 15
        %v998 = vpop.permute.xlu0 %997
        %1000 = vst.msk [vmem:[#allocation2 + $0x11] sm:$0x1] %vm219, %v998
        %v1001 = vld [vmem:[%s621 + $0x8] sm:$0x1]
        %1003 = vrot.lane.b32.xlu0 %v1001, 23
        %v1004 = vpop.permute.xlu0 %1003
        %1006 = vst.msk [vmem:[#allocation2 + $0x11] sm:$0x1] %vm226, %v1004
        %v1007 = vld [vmem:[%s621 + $0xa] sm:$0x1]
        %1009 = vrot.lane.b32.xlu0 %v1007, 31
        %v1010 = vpop.permute.xlu0 %1009
        %1012 = vst.msk [vmem:[#allocation2 + $0x11] sm:$0x1] %vm233, %v1010
        %v1013 = vld [vmem:[%s621 + $0xc] sm:$0x1]
        %1015 = vrot.lane.b32.xlu0 %v1013, 39
        %v1016 = vpop.permute.xlu0 %1015
        %1018 = vst.msk [vmem:[#allocation2 + $0x11] sm:$0x1] %vm240, %v1016
        %v1019 = vld [vmem:[%s621 + $0xe] sm:$0x1]
        %1021 = vrot.lane.b32.xlu0 %v1019, 47
        %v1022 = vpop.permute.xlu0 %1021
        %1024 = vst.msk [vmem:[#allocation2 + $0x11] sm:$0x1] %vm247, %v1022
        %v1025 = vld [vmem:[%s621 + $0x10] sm:$0x1]
        %1027 = vrot.lane.b32.xlu0 %v1025, 55
        %v1028 = vpop.permute.xlu0 %1027
        %1030 = vst.msk [vmem:[#allocation2 + $0x11] sm:$0x1] %vm254, %v1028
        %s1031 = scalar_lea.vmem %s202, 48
        %v1032 = vld [vmem:[%s1031] sm:$0x1]
        %1033 = vst.msk [vmem:[#allocation2 + $0x12] sm:$0x1] %vm205, %v1032
        %v1034 = vld [vmem:[%s1031 + $0x2] sm:$0x1]
        %1036 = vrot.lane.b32.xlu0 %v1034, 8
        %v1037 = vpop.permute.xlu0 %1036
        %1039 = vst.msk [vmem:[#allocation2 + $0x12] sm:$0x1] %vm212, %v1037
        %v1040 = vld [vmem:[%s1031 + $0x4] sm:$0x1]
        %1042 = vrot.lane.b32.xlu0 %v1040, 16
        %v1043 = vpop.permute.xlu0 %1042
        %1045 = vst.msk [vmem:[#allocation2 + $0x12] sm:$0x1] %vm219, %v1043
        %v1046 = vld [vmem:[%s1031 + $0x6] sm:$0x1]
        %1048 = vrot.lane.b32.xlu0 %v1046, 24
        %v1049 = vpop.permute.xlu0 %1048
        %1051 = vst.msk [vmem:[#allocation2 + $0x12] sm:$0x1] %vm226, %v1049
        %v1052 = vld [vmem:[%s1031 + $0x8] sm:$0x1]
        %1054 = vrot.lane.b32.xlu0 %v1052, 32
        %v1055 = vpop.permute.xlu0 %1054
        %1057 = vst.msk [vmem:[#allocation2 + $0x12] sm:$0x1] %vm233, %v1055
        %v1058 = vld [vmem:[%s1031 + $0xa] sm:$0x1]
        %1060 = vrot.lane.b32.xlu0 %v1058, 40
        %v1061 = vpop.permute.xlu0 %1060
        %1063 = vst.msk [vmem:[#allocation2 + $0x12] sm:$0x1] %vm240, %v1061
        %v1064 = vld [vmem:[%s1031 + $0xc] sm:$0x1]
        %1066 = vrot.lane.b32.xlu0 %v1064, 48
        %v1067 = vpop.permute.xlu0 %1066
        %1069 = vst.msk [vmem:[#allocation2 + $0x12] sm:$0x1] %vm247, %v1067
        %v1070 = vld [vmem:[%s1031 + $0xe] sm:$0x1]
        %1072 = vrot.lane.b32.xlu0 %v1070, 56
        %v1073 = vpop.permute.xlu0 %1072
        %1075 = vst.msk [vmem:[#allocation2 + $0x12] sm:$0x1] %vm254, %v1073
        %s1076 = scalar_lea.vmem %s202, 144
        %v1077 = vld [vmem:[%s1076] sm:$0x1]
        %1078 = vst.msk [vmem:[#allocation2 + $0x13] sm:$0x1] %vm205, %v1077
        %v1079 = vld [vmem:[%s1076 + $0x2] sm:$0x1]
        %1081 = vrot.lane.b32.xlu0 %v1079, 8
        %v1082 = vpop.permute.xlu0 %1081
        %1084 = vst.msk [vmem:[#allocation2 + $0x13] sm:$0x1] %vm212, %v1082
        %v1085 = vld [vmem:[%s1076 + $0x4] sm:$0x1]
        %1087 = vrot.lane.b32.xlu0 %v1085, 16
        %v1088 = vpop.permute.xlu0 %1087
        %1090 = vst.msk [vmem:[#allocation2 + $0x13] sm:$0x1] %vm219, %v1088
        %v1091 = vld [vmem:[%s1076 + $0x6] sm:$0x1]
        %1093 = vrot.lane.b32.xlu0 %v1091, 24
        %v1094 = vpop.permute.xlu0 %1093
        %1096 = vst.msk [vmem:[#allocation2 + $0x13] sm:$0x1] %vm226, %v1094
        %v1097 = vld [vmem:[%s1076 + $0x8] sm:$0x1]
        %1099 = vrot.lane.b32.xlu0 %v1097, 32
        %v1100 = vpop.permute.xlu0 %1099
        %1102 = vst.msk [vmem:[#allocation2 + $0x13] sm:$0x1] %vm233, %v1100
        %v1103 = vld [vmem:[%s1076 + $0xa] sm:$0x1]
        %1105 = vrot.lane.b32.xlu0 %v1103, 40
        %v1106 = vpop.permute.xlu0 %1105
        %1108 = vst.msk [vmem:[#allocation2 + $0x13] sm:$0x1] %vm240, %v1106
        %v1109 = vld [vmem:[%s1076 + $0xc] sm:$0x1]
        %1111 = vrot.lane.b32.xlu0 %v1109, 48
        %v1112 = vpop.permute.xlu0 %1111
        %1114 = vst.msk [vmem:[#allocation2 + $0x13] sm:$0x1] %vm247, %v1112
        %v1115 = vld [vmem:[%s1076 + $0xe] sm:$0x1]
        %1117 = vrot.lane.b32.xlu0 %v1115, 56
        %v1118 = vpop.permute.xlu0 %1117
        %1120 = vst.msk [vmem:[#allocation2 + $0x13] sm:$0x1] %vm254, %v1118
        %v1121 = vld [vmem:[%s1031] sm:$0x1]
        %1123 = vrot.lane.b32.xlu0 %v1121, 127
        %v1124 = vpop.permute.xlu0 %1123
        %1126 = vst.msk [vmem:[#allocation2 + $0x14] sm:$0x1] %vm205, %v1124
        %v1127 = vld [vmem:[%s1031 + $0x2] sm:$0x1]
        %1129 = vrot.lane.b32.xlu0 %v1127, 7
        %v1130 = vpop.permute.xlu0 %1129
        %1132 = vst.msk [vmem:[#allocation2 + $0x14] sm:$0x1] %vm212, %v1130
        %v1133 = vld [vmem:[%s1031 + $0x4] sm:$0x1]
        %1135 = vrot.lane.b32.xlu0 %v1133, 15
        %v1136 = vpop.permute.xlu0 %1135
        %1138 = vst.msk [vmem:[#allocation2 + $0x14] sm:$0x1] %vm219, %v1136
        %v1139 = vld [vmem:[%s1031 + $0x6] sm:$0x1]
        %1141 = vrot.lane.b32.xlu0 %v1139, 23
        %v1142 = vpop.permute.xlu0 %1141
        %1144 = vst.msk [vmem:[#allocation2 + $0x14] sm:$0x1] %vm226, %v1142
        %v1145 = vld [vmem:[%s1031 + $0x8] sm:$0x1]
        %1147 = vrot.lane.b32.xlu0 %v1145, 31
        %v1148 = vpop.permute.xlu0 %1147
        %1150 = vst.msk [vmem:[#allocation2 + $0x14] sm:$0x1] %vm233, %v1148
        %v1151 = vld [vmem:[%s1031 + $0xa] sm:$0x1]
        %1153 = vrot.lane.b32.xlu0 %v1151, 39
        %v1154 = vpop.permute.xlu0 %1153
        %1156 = vst.msk [vmem:[#allocation2 + $0x14] sm:$0x1] %vm240, %v1154
        %v1157 = vld [vmem:[%s1031 + $0xc] sm:$0x1]
        %1159 = vrot.lane.b32.xlu0 %v1157, 47
        %v1160 = vpop.permute.xlu0 %1159
        %1162 = vst.msk [vmem:[#allocation2 + $0x14] sm:$0x1] %vm247, %v1160
        %v1163 = vld [vmem:[%s1031 + $0xe] sm:$0x1]
        %1165 = vrot.lane.b32.xlu0 %v1163, 55
        %v1166 = vpop.permute.xlu0 %1165
        %1168 = vst.msk [vmem:[#allocation2 + $0x14] sm:$0x1] %vm254, %v1166
        %v1169 = vld [vmem:[%s1031 + $0x1] sm:$0x1]
        %1170 = vst.msk [vmem:[#allocation2 + $0x15] sm:$0x1] %vm205, %v1169
        %v1171 = vld [vmem:[%s1031 + $0x3] sm:$0x1]
        %1173 = vrot.lane.b32.xlu0 %v1171, 8
        %v1174 = vpop.permute.xlu0 %1173
        %1176 = vst.msk [vmem:[#allocation2 + $0x15] sm:$0x1] %vm212, %v1174
        %v1177 = vld [vmem:[%s1031 + $0x5] sm:$0x1]
        %1179 = vrot.lane.b32.xlu0 %v1177, 16
        %v1180 = vpop.permute.xlu0 %1179
        %1182 = vst.msk [vmem:[#allocation2 + $0x15] sm:$0x1] %vm219, %v1180
        %v1183 = vld [vmem:[%s1031 + $0x7] sm:$0x1]
        %1185 = vrot.lane.b32.xlu0 %v1183, 24
        %v1186 = vpop.permute.xlu0 %1185
        %1188 = vst.msk [vmem:[#allocation2 + $0x15] sm:$0x1] %vm226, %v1186
        %v1189 = vld [vmem:[%s1031 + $0x9] sm:$0x1]
        %1191 = vrot.lane.b32.xlu0 %v1189, 32
        %v1192 = vpop.permute.xlu0 %1191
        %1194 = vst.msk [vmem:[#allocation2 + $0x15] sm:$0x1] %vm233, %v1192
        %v1195 = vld [vmem:[%s1031 + $0xb] sm:$0x1]
        %1197 = vrot.lane.b32.xlu0 %v1195, 40
        %v1198 = vpop.permute.xlu0 %1197
        %1200 = vst.msk [vmem:[#allocation2 + $0x15] sm:$0x1] %vm240, %v1198
        %v1201 = vld [vmem:[%s1031 + $0xd] sm:$0x1]
        %1203 = vrot.lane.b32.xlu0 %v1201, 48
        %v1204 = vpop.permute.xlu0 %1203
        %1206 = vst.msk [vmem:[#allocation2 + $0x15] sm:$0x1] %vm247, %v1204
        %v1207 = vld [vmem:[%s1031 + $0xf] sm:$0x1]
        %1209 = vrot.lane.b32.xlu0 %v1207, 56
        %v1210 = vpop.permute.xlu0 %1209
        %1212 = vst.msk [vmem:[#allocation2 + $0x15] sm:$0x1] %vm254, %v1210
        %v1213 = vld [vmem:[%s1076 + $0x1] sm:$0x1]
        %1214 = vst.msk [vmem:[#allocation2 + $0x16] sm:$0x1] %vm205, %v1213
        %v1215 = vld [vmem:[%s1076 + $0x3] sm:$0x1]
        %1217 = vrot.lane.b32.xlu0 %v1215, 8
        %v1218 = vpop.permute.xlu0 %1217
        %1220 = vst.msk [vmem:[#allocation2 + $0x16] sm:$0x1] %vm212, %v1218
        %v1221 = vld [vmem:[%s1076 + $0x5] sm:$0x1]
        %1223 = vrot.lane.b32.xlu0 %v1221, 16
        %v1224 = vpop.permute.xlu0 %1223
        %1226 = vst.msk [vmem:[#allocation2 + $0x16] sm:$0x1] %vm219, %v1224
        %v1227 = vld [vmem:[%s1076 + $0x7] sm:$0x1]
        %1229 = vrot.lane.b32.xlu0 %v1227, 24
        %v1230 = vpop.permute.xlu0 %1229
        %1232 = vst.msk [vmem:[#allocation2 + $0x16] sm:$0x1] %vm226, %v1230
        %v1233 = vld [vmem:[%s1076 + $0x9] sm:$0x1]
        %1235 = vrot.lane.b32.xlu0 %v1233, 32
        %v1236 = vpop.permute.xlu0 %1235
        %1238 = vst.msk [vmem:[#allocation2 + $0x16] sm:$0x1] %vm233, %v1236
        %v1239 = vld [vmem:[%s1076 + $0xb] sm:$0x1]
        %1241 = vrot.lane.b32.xlu0 %v1239, 40
        %v1242 = vpop.permute.xlu0 %1241
        %1244 = vst.msk [vmem:[#allocation2 + $0x16] sm:$0x1] %vm240, %v1242
        %v1245 = vld [vmem:[%s1076 + $0xd] sm:$0x1]
        %1247 = vrot.lane.b32.xlu0 %v1245, 48
        %v1248 = vpop.permute.xlu0 %1247
        %1250 = vst.msk [vmem:[#allocation2 + $0x16] sm:$0x1] %vm247, %v1248
        %v1251 = vld [vmem:[%s1076 + $0xf] sm:$0x1]
        %1253 = vrot.lane.b32.xlu0 %v1251, 56
        %v1254 = vpop.permute.xlu0 %1253
        %1256 = vst.msk [vmem:[#allocation2 + $0x16] sm:$0x1] %vm254, %v1254
        %v1257 = vld [vmem:[%s1031 + $0x1] sm:$0x1]
        %1259 = vrot.lane.b32.xlu0 %v1257, 127
        %v1260 = vpop.permute.xlu0 %1259
        %1262 = vst.msk [vmem:[#allocation2 + $0x17] sm:$0x1] %vm205, %v1260
        %v1263 = vld [vmem:[%s1031 + $0x3] sm:$0x1]
        %1265 = vrot.lane.b32.xlu0 %v1263, 7
        %v1266 = vpop.permute.xlu0 %1265
        %1268 = vst.msk [vmem:[#allocation2 + $0x17] sm:$0x1] %vm212, %v1266
        %v1269 = vld [vmem:[%s1031 + $0x5] sm:$0x1]
        %1271 = vrot.lane.b32.xlu0 %v1269, 15
        %v1272 = vpop.permute.xlu0 %1271
        %1274 = vst.msk [vmem:[#allocation2 + $0x17] sm:$0x1] %vm219, %v1272
        %v1275 = vld [vmem:[%s1031 + $0x7] sm:$0x1]
        %1277 = vrot.lane.b32.xlu0 %v1275, 23
        %v1278 = vpop.permute.xlu0 %1277
        %1280 = vst.msk [vmem:[#allocation2 + $0x17] sm:$0x1] %vm226, %v1278
        %v1281 = vld [vmem:[%s1031 + $0x9] sm:$0x1]
        %1283 = vrot.lane.b32.xlu0 %v1281, 31
        %v1284 = vpop.permute.xlu0 %1283
        %1286 = vst.msk [vmem:[#allocation2 + $0x17] sm:$0x1] %vm233, %v1284
        %v1287 = vld [vmem:[%s1031 + $0xb] sm:$0x1]
        %1289 = vrot.lane.b32.xlu0 %v1287, 39
        %v1290 = vpop.permute.xlu0 %1289
        %1292 = vst.msk [vmem:[#allocation2 + $0x17] sm:$0x1] %vm240, %v1290
        %v1293 = vld [vmem:[%s1031 + $0xd] sm:$0x1]
        %1295 = vrot.lane.b32.xlu0 %v1293, 47
        %v1296 = vpop.permute.xlu0 %1295
        %1298 = vst.msk [vmem:[#allocation2 + $0x17] sm:$0x1] %vm247, %v1296
        %v1299 = vld [vmem:[%s1031 + $0xf] sm:$0x1]
        %1301 = vrot.lane.b32.xlu0 %v1299, 55
        %v1302 = vpop.permute.xlu0 %1301
        %1304 = vst.msk [vmem:[#allocation2 + $0x17] sm:$0x1] %vm254, %v1302
        %v1305 = vld [vmem:[%s1031 + $0x2] sm:$0x1]
        %1306 = vst.msk [vmem:[#allocation2 + $0x18] sm:$0x1] %vm205, %v1305
        %v1307 = vld [vmem:[%s1031 + $0x4] sm:$0x1]
        %1309 = vrot.lane.b32.xlu0 %v1307, 8
        %v1310 = vpop.permute.xlu0 %1309
        %1312 = vst.msk [vmem:[#allocation2 + $0x18] sm:$0x1] %vm212, %v1310
        %v1313 = vld [vmem:[%s1031 + $0x6] sm:$0x1]
        %1315 = vrot.lane.b32.xlu0 %v1313, 16
        %v1316 = vpop.permute.xlu0 %1315
        %1318 = vst.msk [vmem:[#allocation2 + $0x18] sm:$0x1] %vm219, %v1316
        %v1319 = vld [vmem:[%s1031 + $0x8] sm:$0x1]
        %1321 = vrot.lane.b32.xlu0 %v1319, 24
        %v1322 = vpop.permute.xlu0 %1321
        %1324 = vst.msk [vmem:[#allocation2 + $0x18] sm:$0x1] %vm226, %v1322
        %v1325 = vld [vmem:[%s1031 + $0xa] sm:$0x1]
        %1327 = vrot.lane.b32.xlu0 %v1325, 32
        %v1328 = vpop.permute.xlu0 %1327
        %1330 = vst.msk [vmem:[#allocation2 + $0x18] sm:$0x1] %vm233, %v1328
        %v1331 = vld [vmem:[%s1031 + $0xc] sm:$0x1]
        %1333 = vrot.lane.b32.xlu0 %v1331, 40
        %v1334 = vpop.permute.xlu0 %1333
        %1336 = vst.msk [vmem:[#allocation2 + $0x18] sm:$0x1] %vm240, %v1334
        %v1337 = vld [vmem:[%s1031 + $0xe] sm:$0x1]
        %1339 = vrot.lane.b32.xlu0 %v1337, 48
        %v1340 = vpop.permute.xlu0 %1339
        %1342 = vst.msk [vmem:[#allocation2 + $0x18] sm:$0x1] %vm247, %v1340
        %v1343 = vld [vmem:[%s1031 + $0x10] sm:$0x1]
        %1345 = vrot.lane.b32.xlu0 %v1343, 56
        %v1346 = vpop.permute.xlu0 %1345
        %1348 = vst.msk [vmem:[#allocation2 + $0x18] sm:$0x1] %vm254, %v1346
        %v1349 = vld [vmem:[%s1076 + $0x2] sm:$0x1]
        %1350 = vst.msk [vmem:[#allocation2 + $0x19] sm:$0x1] %vm205, %v1349
        %v1351 = vld [vmem:[%s1076 + $0x4] sm:$0x1]
        %1353 = vrot.lane.b32.xlu0 %v1351, 8
        %v1354 = vpop.permute.xlu0 %1353
        %1356 = vst.msk [vmem:[#allocation2 + $0x19] sm:$0x1] %vm212, %v1354
        %v1357 = vld [vmem:[%s1076 + $0x6] sm:$0x1]
        %1359 = vrot.lane.b32.xlu0 %v1357, 16
        %v1360 = vpop.permute.xlu0 %1359
        %1362 = vst.msk [vmem:[#allocation2 + $0x19] sm:$0x1] %vm219, %v1360
        %v1363 = vld [vmem:[%s1076 + $0x8] sm:$0x1]
        %1365 = vrot.lane.b32.xlu0 %v1363, 24
        %v1366 = vpop.permute.xlu0 %1365
        %1368 = vst.msk [vmem:[#allocation2 + $0x19] sm:$0x1] %vm226, %v1366
        %v1369 = vld [vmem:[%s1076 + $0xa] sm:$0x1]
        %1371 = vrot.lane.b32.xlu0 %v1369, 32
        %v1372 = vpop.permute.xlu0 %1371
        %1374 = vst.msk [vmem:[#allocation2 + $0x19] sm:$0x1] %vm233, %v1372
        %v1375 = vld [vmem:[%s1076 + $0xc] sm:$0x1]
        %1377 = vrot.lane.b32.xlu0 %v1375, 40
        %v1378 = vpop.permute.xlu0 %1377
        %1380 = vst.msk [vmem:[#allocation2 + $0x19] sm:$0x1] %vm240, %v1378
        %v1381 = vld [vmem:[%s1076 + $0xe] sm:$0x1]
        %1383 = vrot.lane.b32.xlu0 %v1381, 48
        %v1384 = vpop.permute.xlu0 %1383
        %1386 = vst.msk [vmem:[#allocation2 + $0x19] sm:$0x1] %vm247, %v1384
        %v1387 = vld [vmem:[%s1076 + $0x10] sm:$0x1]
        %1389 = vrot.lane.b32.xlu0 %v1387, 56
        %v1390 = vpop.permute.xlu0 %1389
        %1392 = vst.msk [vmem:[#allocation2 + $0x19] sm:$0x1] %vm254, %v1390
        %v1393 = vld [vmem:[%s1031 + $0x2] sm:$0x1]
        %1395 = vrot.lane.b32.xlu0 %v1393, 127
        %v1396 = vpop.permute.xlu0 %1395
        %1398 = vst.msk [vmem:[#allocation2 + $0x1a] sm:$0x1] %vm205, %v1396
        %v1399 = vld [vmem:[%s1031 + $0x4] sm:$0x1]
        %1401 = vrot.lane.b32.xlu0 %v1399, 7
        %v1402 = vpop.permute.xlu0 %1401
        %1404 = vst.msk [vmem:[#allocation2 + $0x1a] sm:$0x1] %vm212, %v1402
        %v1405 = vld [vmem:[%s1031 + $0x6] sm:$0x1]
        %1407 = vrot.lane.b32.xlu0 %v1405, 15
        %v1408 = vpop.permute.xlu0 %1407
        %1410 = vst.msk [vmem:[#allocation2 + $0x1a] sm:$0x1] %vm219, %v1408
        %v1411 = vld [vmem:[%s1031 + $0x8] sm:$0x1]
        %1413 = vrot.lane.b32.xlu0 %v1411, 23
        %v1414 = vpop.permute.xlu0 %1413
        %1416 = vst.msk [vmem:[#allocation2 + $0x1a] sm:$0x1] %vm226, %v1414
        %v1417 = vld [vmem:[%s1031 + $0xa] sm:$0x1]
        %1419 = vrot.lane.b32.xlu0 %v1417, 31
        %v1420 = vpop.permute.xlu0 %1419
        %1422 = vst.msk [vmem:[#allocation2 + $0x1a] sm:$0x1] %vm233, %v1420
        %v1423 = vld [vmem:[%s1031 + $0xc] sm:$0x1]
        %1425 = vrot.lane.b32.xlu0 %v1423, 39
        %v1426 = vpop.permute.xlu0 %1425
        %1428 = vst.msk [vmem:[#allocation2 + $0x1a] sm:$0x1] %vm240, %v1426
        %v1429 = vld [vmem:[%s1031 + $0xe] sm:$0x1]
        %1431 = vrot.lane.b32.xlu0 %v1429, 47
        %v1432 = vpop.permute.xlu0 %1431
        %1434 = vst.msk [vmem:[#allocation2 + $0x1a] sm:$0x1] %vm247, %v1432
        %v1435 = vld [vmem:[%s1031 + $0x10] sm:$0x1]
        %1437 = vrot.lane.b32.xlu0 %v1435, 55
        %v1438 = vpop.permute.xlu0 %1437
        %1440 = vst.msk [vmem:[#allocation2 + $0x1a] sm:$0x1] %vm254, %v1438
        %s1441 = scalar_lea.vmem %s202, 72
        %v1442 = vld [vmem:[%s1441] sm:$0x1]
        %1443 = vst.msk [vmem:[#allocation2 + $0x1b] sm:$0x1] %vm205, %v1442
        %v1444 = vld [vmem:[%s1441 + $0x2] sm:$0x1]
        %1446 = vrot.lane.b32.xlu0 %v1444, 8
        %v1447 = vpop.permute.xlu0 %1446
        %1449 = vst.msk [vmem:[#allocation2 + $0x1b] sm:$0x1] %vm212, %v1447
        %v1450 = vld [vmem:[%s1441 + $0x4] sm:$0x1]
        %1452 = vrot.lane.b32.xlu0 %v1450, 16
        %v1453 = vpop.permute.xlu0 %1452
        %1455 = vst.msk [vmem:[#allocation2 + $0x1b] sm:$0x1] %vm219, %v1453
        %v1456 = vld [vmem:[%s1441 + $0x6] sm:$0x1]
        %1458 = vrot.lane.b32.xlu0 %v1456, 24
        %v1459 = vpop.permute.xlu0 %1458
        %1461 = vst.msk [vmem:[#allocation2 + $0x1b] sm:$0x1] %vm226, %v1459
        %v1462 = vld [vmem:[%s1441 + $0x8] sm:$0x1]
        %1464 = vrot.lane.b32.xlu0 %v1462, 32
        %v1465 = vpop.permute.xlu0 %1464
        %1467 = vst.msk [vmem:[#allocation2 + $0x1b] sm:$0x1] %vm233, %v1465
        %v1468 = vld [vmem:[%s1441 + $0xa] sm:$0x1]
        %1470 = vrot.lane.b32.xlu0 %v1468, 40
        %v1471 = vpop.permute.xlu0 %1470
        %1473 = vst.msk [vmem:[#allocation2 + $0x1b] sm:$0x1] %vm240, %v1471
        %v1474 = vld [vmem:[%s1441 + $0xc] sm:$0x1]
        %1476 = vrot.lane.b32.xlu0 %v1474, 48
        %v1477 = vpop.permute.xlu0 %1476
        %1479 = vst.msk [vmem:[#allocation2 + $0x1b] sm:$0x1] %vm247, %v1477
        %v1480 = vld [vmem:[%s1441 + $0xe] sm:$0x1]
        %1482 = vrot.lane.b32.xlu0 %v1480, 56
        %v1483 = vpop.permute.xlu0 %1482
        %1485 = vst.msk [vmem:[#allocation2 + $0x1b] sm:$0x1] %vm254, %v1483
        %s1486 = scalar_lea.vmem %s202, 168
        %v1487 = vld [vmem:[%s1486] sm:$0x1]
        %1488 = vst.msk [vmem:[#allocation2 + $0x1c] sm:$0x1] %vm205, %v1487
        %v1489 = vld [vmem:[%s1486 + $0x2] sm:$0x1]
        %1491 = vrot.lane.b32.xlu0 %v1489, 8
        %v1492 = vpop.permute.xlu0 %1491
        %1494 = vst.msk [vmem:[#allocation2 + $0x1c] sm:$0x1] %vm212, %v1492
        %v1495 = vld [vmem:[%s1486 + $0x4] sm:$0x1]
        %1497 = vrot.lane.b32.xlu0 %v1495, 16
        %v1498 = vpop.permute.xlu0 %1497
        %1500 = vst.msk [vmem:[#allocation2 + $0x1c] sm:$0x1] %vm219, %v1498
        %v1501 = vld [vmem:[%s1486 + $0x6] sm:$0x1]
        %1503 = vrot.lane.b32.xlu0 %v1501, 24
        %v1504 = vpop.permute.xlu0 %1503
        %1506 = vst.msk [vmem:[#allocation2 + $0x1c] sm:$0x1] %vm226, %v1504
        %v1507 = vld [vmem:[%s1486 + $0x8] sm:$0x1]
        %1509 = vrot.lane.b32.xlu0 %v1507, 32
        %v1510 = vpop.permute.xlu0 %1509
        %1512 = vst.msk [vmem:[#allocation2 + $0x1c] sm:$0x1] %vm233, %v1510
        %v1513 = vld [vmem:[%s1486 + $0xa] sm:$0x1]
        %1515 = vrot.lane.b32.xlu0 %v1513, 40
        %v1516 = vpop.permute.xlu0 %1515
        %1518 = vst.msk [vmem:[#allocation2 + $0x1c] sm:$0x1] %vm240, %v1516
        %v1519 = vld [vmem:[%s1486 + $0xc] sm:$0x1]
        %1521 = vrot.lane.b32.xlu0 %v1519, 48
        %v1522 = vpop.permute.xlu0 %1521
        %1524 = vst.msk [vmem:[#allocation2 + $0x1c] sm:$0x1] %vm247, %v1522
        %v1525 = vld [vmem:[%s1486 + $0xe] sm:$0x1]
        %1527 = vrot.lane.b32.xlu0 %v1525, 56
        %v1528 = vpop.permute.xlu0 %1527
        %1530 = vst.msk [vmem:[#allocation2 + $0x1c] sm:$0x1] %vm254, %v1528
        %v1531 = vld [vmem:[%s1441] sm:$0x1]
        %1533 = vrot.lane.b32.xlu0 %v1531, 127
        %v1534 = vpop.permute.xlu0 %1533
        %1536 = vst.msk [vmem:[#allocation2 + $0x1d] sm:$0x1] %vm205, %v1534
        %v1537 = vld [vmem:[%s1441 + $0x2] sm:$0x1]
        %1539 = vrot.lane.b32.xlu0 %v1537, 7
        %v1540 = vpop.permute.xlu0 %1539
        %1542 = vst.msk [vmem:[#allocation2 + $0x1d] sm:$0x1] %vm212, %v1540
        %v1543 = vld [vmem:[%s1441 + $0x4] sm:$0x1]
        %1545 = vrot.lane.b32.xlu0 %v1543, 15
        %v1546 = vpop.permute.xlu0 %1545
        %1548 = vst.msk [vmem:[#allocation2 + $0x1d] sm:$0x1] %vm219, %v1546
        %v1549 = vld [vmem:[%s1441 + $0x6] sm:$0x1]
        %1551 = vrot.lane.b32.xlu0 %v1549, 23
        %v1552 = vpop.permute.xlu0 %1551
        %1554 = vst.msk [vmem:[#allocation2 + $0x1d] sm:$0x1] %vm226, %v1552
        %v1555 = vld [vmem:[%s1441 + $0x8] sm:$0x1]
        %1557 = vrot.lane.b32.xlu0 %v1555, 31
        %v1558 = vpop.permute.xlu0 %1557
        %1560 = vst.msk [vmem:[#allocation2 + $0x1d] sm:$0x1] %vm233, %v1558
        %v1561 = vld [vmem:[%s1441 + $0xa] sm:$0x1]
        %1563 = vrot.lane.b32.xlu0 %v1561, 39
        %v1564 = vpop.permute.xlu0 %1563
        %1566 = vst.msk [vmem:[#allocation2 + $0x1d] sm:$0x1] %vm240, %v1564
        %v1567 = vld [vmem:[%s1441 + $0xc] sm:$0x1]
        %1569 = vrot.lane.b32.xlu0 %v1567, 47
        %v1570 = vpop.permute.xlu0 %1569
        %1572 = vst.msk [vmem:[#allocation2 + $0x1d] sm:$0x1] %vm247, %v1570
        %v1573 = vld [vmem:[%s1441 + $0xe] sm:$0x1]
        %1575 = vrot.lane.b32.xlu0 %v1573, 55
        %v1576 = vpop.permute.xlu0 %1575
        %1578 = vst.msk [vmem:[#allocation2 + $0x1d] sm:$0x1] %vm254, %v1576
        %v1579 = vld [vmem:[%s1441 + $0x1] sm:$0x1]
        %1580 = vst.msk [vmem:[#allocation2 + $0x1e] sm:$0x1] %vm205, %v1579
        %v1581 = vld [vmem:[%s1441 + $0x3] sm:$0x1]
        %1583 = vrot.lane.b32.xlu0 %v1581, 8
        %v1584 = vpop.permute.xlu0 %1583
        %1586 = vst.msk [vmem:[#allocation2 + $0x1e] sm:$0x1] %vm212, %v1584
        %v1587 = vld [vmem:[%s1441 + $0x5] sm:$0x1]
        %1589 = vrot.lane.b32.xlu0 %v1587, 16
        %v1590 = vpop.permute.xlu0 %1589
        %1592 = vst.msk [vmem:[#allocation2 + $0x1e] sm:$0x1] %vm219, %v1590
        %v1593 = vld [vmem:[%s1441 + $0x7] sm:$0x1]
        %1595 = vrot.lane.b32.xlu0 %v1593, 24
        %v1596 = vpop.permute.xlu0 %1595
        %1598 = vst.msk [vmem:[#allocation2 + $0x1e] sm:$0x1] %vm226, %v1596
        %v1599 = vld [vmem:[%s1441 + $0x9] sm:$0x1]
        %1601 = vrot.lane.b32.xlu0 %v1599, 32
        %v1602 = vpop.permute.xlu0 %1601
        %1604 = vst.msk [vmem:[#allocation2 + $0x1e] sm:$0x1] %vm233, %v1602
        %v1605 = vld [vmem:[%s1441 + $0xb] sm:$0x1]
        %1607 = vrot.lane.b32.xlu0 %v1605, 40
        %v1608 = vpop.permute.xlu0 %1607
        %1610 = vst.msk [vmem:[#allocation2 + $0x1e] sm:$0x1] %vm240, %v1608
        %v1611 = vld [vmem:[%s1441 + $0xd] sm:$0x1]
        %1613 = vrot.lane.b32.xlu0 %v1611, 48
        %v1614 = vpop.permute.xlu0 %1613
        %1616 = vst.msk [vmem:[#allocation2 + $0x1e] sm:$0x1] %vm247, %v1614
        %v1617 = vld [vmem:[%s1441 + $0xf] sm:$0x1]
        %1619 = vrot.lane.b32.xlu0 %v1617, 56
        %v1620 = vpop.permute.xlu0 %1619
        %1622 = vst.msk [vmem:[#allocation2 + $0x1e] sm:$0x1] %vm254, %v1620
        %v1623 = vld [vmem:[%s1486 + $0x1] sm:$0x1]
        %1624 = vst.msk [vmem:[#allocation2 + $0x1f] sm:$0x1] %vm205, %v1623
        %v1625 = vld [vmem:[%s1486 + $0x3] sm:$0x1]
        %1627 = vrot.lane.b32.xlu0 %v1625, 8
        %v1628 = vpop.permute.xlu0 %1627
        %1630 = vst.msk [vmem:[#allocation2 + $0x1f] sm:$0x1] %vm212, %v1628
        %v1631 = vld [vmem:[%s1486 + $0x5] sm:$0x1]
        %1633 = vrot.lane.b32.xlu0 %v1631, 16
        %v1634 = vpop.permute.xlu0 %1633
        %1636 = vst.msk [vmem:[#allocation2 + $0x1f] sm:$0x1] %vm219, %v1634
        %v1637 = vld [vmem:[%s1486 + $0x7] sm:$0x1]
        %1639 = vrot.lane.b32.xlu0 %v1637, 24
        %v1640 = vpop.permute.xlu0 %1639
        %1642 = vst.msk [vmem:[#allocation2 + $0x1f] sm:$0x1] %vm226, %v1640
        %v1643 = vld [vmem:[%s1486 + $0x9] sm:$0x1]
        %1645 = vrot.lane.b32.xlu0 %v1643, 32
        %v1646 = vpop.permute.xlu0 %1645
        %1648 = vst.msk [vmem:[#allocation2 + $0x1f] sm:$0x1] %vm233, %v1646
        %v1649 = vld [vmem:[%s1486 + $0xb] sm:$0x1]
        %1651 = vrot.lane.b32.xlu0 %v1649, 40
        %v1652 = vpop.permute.xlu0 %1651
        %1654 = vst.msk [vmem:[#allocation2 + $0x1f] sm:$0x1] %vm240, %v1652
        %v1655 = vld [vmem:[%s1486 + $0xd] sm:$0x1]
        %1657 = vrot.lane.b32.xlu0 %v1655, 48
        %v1658 = vpop.permute.xlu0 %1657
        %1660 = vst.msk [vmem:[#allocation2 + $0x1f] sm:$0x1] %vm247, %v1658
        %v1661 = vld [vmem:[%s1486 + $0xf] sm:$0x1]
        %1663 = vrot.lane.b32.xlu0 %v1661, 56
        %v1664 = vpop.permute.xlu0 %1663
        %1666 = vst.msk [vmem:[#allocation2 + $0x1f] sm:$0x1] %vm254, %v1664
        %v1667 = vld [vmem:[%s1441 + $0x1] sm:$0x1]
        %1669 = vrot.lane.b32.xlu0 %v1667, 127
        %v1670 = vpop.permute.xlu0 %1669
        %1672 = vst.msk [vmem:[#allocation2 + $0x20] sm:$0x1] %vm205, %v1670
        %v1673 = vld [vmem:[%s1441 + $0x3] sm:$0x1]
        %1675 = vrot.lane.b32.xlu0 %v1673, 7
        %v1676 = vpop.permute.xlu0 %1675
        %1678 = vst.msk [vmem:[#allocation2 + $0x20] sm:$0x1] %vm212, %v1676
        %v1679 = vld [vmem:[%s1441 + $0x5] sm:$0x1]
        %1681 = vrot.lane.b32.xlu0 %v1679, 15
        %v1682 = vpop.permute.xlu0 %1681
        %1684 = vst.msk [vmem:[#allocation2 + $0x20] sm:$0x1] %vm219, %v1682
        %v1685 = vld [vmem:[%s1441 + $0x7] sm:$0x1]
        %1687 = vrot.lane.b32.xlu0 %v1685, 23
        %v1688 = vpop.permute.xlu0 %1687
        %1690 = vst.msk [vmem:[#allocation2 + $0x20] sm:$0x1] %vm226, %v1688
        %v1691 = vld [vmem:[%s1441 + $0x9] sm:$0x1]
        %1693 = vrot.lane.b32.xlu0 %v1691, 31
        %v1694 = vpop.permute.xlu0 %1693
        %1696 = vst.msk [vmem:[#allocation2 + $0x20] sm:$0x1] %vm233, %v1694
        %v1697 = vld [vmem:[%s1441 + $0xb] sm:$0x1]
        %1699 = vrot.lane.b32.xlu0 %v1697, 39
        %v1700 = vpop.permute.xlu0 %1699
        %1702 = vst.msk [vmem:[#allocation2 + $0x20] sm:$0x1] %vm240, %v1700
        %v1703 = vld [vmem:[%s1441 + $0xd] sm:$0x1]
        %1705 = vrot.lane.b32.xlu0 %v1703, 47
        %v1706 = vpop.permute.xlu0 %1705
        %1708 = vst.msk [vmem:[#allocation2 + $0x20] sm:$0x1] %vm247, %v1706
        %v1709 = vld [vmem:[%s1441 + $0xf] sm:$0x1]
        %1711 = vrot.lane.b32.xlu0 %v1709, 55
        %v1712 = vpop.permute.xlu0 %1711
        %1714 = vst.msk [vmem:[#allocation2 + $0x20] sm:$0x1] %vm254, %v1712
        %v1715 = vld [vmem:[%s1441 + $0x2] sm:$0x1]
        %1716 = vst.msk [vmem:[#allocation2 + $0x21] sm:$0x1] %vm205, %v1715
        %v1717 = vld [vmem:[%s1441 + $0x4] sm:$0x1]
        %1719 = vrot.lane.b32.xlu0 %v1717, 8
        %v1720 = vpop.permute.xlu0 %1719
        %1722 = vst.msk [vmem:[#allocation2 + $0x21] sm:$0x1] %vm212, %v1720
        %v1723 = vld [vmem:[%s1441 + $0x6] sm:$0x1]
        %1725 = vrot.lane.b32.xlu0 %v1723, 16
        %v1726 = vpop.permute.xlu0 %1725
        %1728 = vst.msk [vmem:[#allocation2 + $0x21] sm:$0x1] %vm219, %v1726
        %v1729 = vld [vmem:[%s1441 + $0x8] sm:$0x1]
        %1731 = vrot.lane.b32.xlu0 %v1729, 24
        %v1732 = vpop.permute.xlu0 %1731
        %1734 = vst.msk [vmem:[#allocation2 + $0x21] sm:$0x1] %vm226, %v1732
        %v1735 = vld [vmem:[%s1441 + $0xa] sm:$0x1]
        %1737 = vrot.lane.b32.xlu0 %v1735, 32
        %v1738 = vpop.permute.xlu0 %1737
        %1740 = vst.msk [vmem:[#allocation2 + $0x21] sm:$0x1] %vm233, %v1738
        %v1741 = vld [vmem:[%s1441 + $0xc] sm:$0x1]
        %1743 = vrot.lane.b32.xlu0 %v1741, 40
        %v1744 = vpop.permute.xlu0 %1743
        %1746 = vst.msk [vmem:[#allocation2 + $0x21] sm:$0x1] %vm240, %v1744
        %v1747 = vld [vmem:[%s1441 + $0xe] sm:$0x1]
        %1749 = vrot.lane.b32.xlu0 %v1747, 48
        %v1750 = vpop.permute.xlu0 %1749
        %1752 = vst.msk [vmem:[#allocation2 + $0x21] sm:$0x1] %vm247, %v1750
        %v1753 = vld [vmem:[%s1441 + $0x10] sm:$0x1]
        %1755 = vrot.lane.b32.xlu0 %v1753, 56
        %v1756 = vpop.permute.xlu0 %1755
        %1758 = vst.msk [vmem:[#allocation2 + $0x21] sm:$0x1] %vm254, %v1756
        %v1759 = vld [vmem:[%s1486 + $0x2] sm:$0x1]
        %1760 = vst.msk [vmem:[#allocation2 + $0x22] sm:$0x1] %vm205, %v1759
        %v1761 = vld [vmem:[%s1486 + $0x4] sm:$0x1]
        %1763 = vrot.lane.b32.xlu0 %v1761, 8
        %v1764 = vpop.permute.xlu0 %1763
        %1766 = vst.msk [vmem:[#allocation2 + $0x22] sm:$0x1] %vm212, %v1764
        %v1767 = vld [vmem:[%s1486 + $0x6] sm:$0x1]
        %1769 = vrot.lane.b32.xlu0 %v1767, 16
        %v1770 = vpop.permute.xlu0 %1769
        %1772 = vst.msk [vmem:[#allocation2 + $0x22] sm:$0x1] %vm219, %v1770
        %v1773 = vld [vmem:[%s1486 + $0x8] sm:$0x1]
        %1775 = vrot.lane.b32.xlu0 %v1773, 24
        %v1776 = vpop.permute.xlu0 %1775
        %1778 = vst.msk [vmem:[#allocation2 + $0x22] sm:$0x1] %vm226, %v1776
        %v1779 = vld [vmem:[%s1486 + $0xa] sm:$0x1]
        %1781 = vrot.lane.b32.xlu0 %v1779, 32
        %v1782 = vpop.permute.xlu0 %1781
        %1784 = vst.msk [vmem:[#allocation2 + $0x22] sm:$0x1] %vm233, %v1782
        %v1785 = vld [vmem:[%s1486 + $0xc] sm:$0x1]
        %1787 = vrot.lane.b32.xlu0 %v1785, 40
        %v1788 = vpop.permute.xlu0 %1787
        %1790 = vst.msk [vmem:[#allocation2 + $0x22] sm:$0x1] %vm240, %v1788
        %v1791 = vld [vmem:[%s1486 + $0xe] sm:$0x1]
        %1793 = vrot.lane.b32.xlu0 %v1791, 48
        %v1794 = vpop.permute.xlu0 %1793
        %1796 = vst.msk [vmem:[#allocation2 + $0x22] sm:$0x1] %vm247, %v1794
        %v1797 = vld [vmem:[%s1486 + $0x10] sm:$0x1]
        %1799 = vrot.lane.b32.xlu0 %v1797, 56
        %v1800 = vpop.permute.xlu0 %1799
        %1802 = vst.msk [vmem:[#allocation2 + $0x22] sm:$0x1] %vm254, %v1800
        %v1803 = vld [vmem:[%s1441 + $0x2] sm:$0x1]
        %1805 = vrot.lane.b32.xlu0 %v1803, 127
        %v1806 = vpop.permute.xlu0 %1805
        %1808 = vst.msk [vmem:[#allocation2 + $0x23] sm:$0x1] %vm205, %v1806
        %v1809 = vld [vmem:[%s1441 + $0x4] sm:$0x1]
        %1811 = vrot.lane.b32.xlu0 %v1809, 7
        %v1812 = vpop.permute.xlu0 %1811
        %1814 = vst.msk [vmem:[#allocation2 + $0x23] sm:$0x1] %vm212, %v1812
        %v1815 = vld [vmem:[%s1441 + $0x6] sm:$0x1]
        %1817 = vrot.lane.b32.xlu0 %v1815, 15
        %v1818 = vpop.permute.xlu0 %1817
        %1820 = vst.msk [vmem:[#allocation2 + $0x23] sm:$0x1] %vm219, %v1818
        %v1821 = vld [vmem:[%s1441 + $0x8] sm:$0x1]
        %1823 = vrot.lane.b32.xlu0 %v1821, 23
        %v1824 = vpop.permute.xlu0 %1823
        %1826 = vst.msk [vmem:[#allocation2 + $0x23] sm:$0x1] %vm226, %v1824
        %v1827 = vld [vmem:[%s1441 + $0xa] sm:$0x1]
        %1829 = vrot.lane.b32.xlu0 %v1827, 31
        %v1830 = vpop.permute.xlu0 %1829
        %1832 = vst.msk [vmem:[#allocation2 + $0x23] sm:$0x1] %vm233, %v1830
        %v1833 = vld [vmem:[%s1441 + $0xc] sm:$0x1]
        %1835 = vrot.lane.b32.xlu0 %v1833, 39
        %v1836 = vpop.permute.xlu0 %1835
        %1838 = vst.msk [vmem:[#allocation2 + $0x23] sm:$0x1] %vm240, %v1836
        %v1839 = vld [vmem:[%s1441 + $0xe] sm:$0x1]
        %1841 = vrot.lane.b32.xlu0 %v1839, 47
        %v1842 = vpop.permute.xlu0 %1841
        %1844 = vst.msk [vmem:[#allocation2 + $0x23] sm:$0x1] %vm247, %v1842
        %v1845 = vld [vmem:[%s1441 + $0x10] sm:$0x1]
        %1847 = vrot.lane.b32.xlu0 %v1845, 55
        %v1848 = vpop.permute.xlu0 %1847
        %1850 = vst.msk [vmem:[#allocation2 + $0x23] sm:$0x1] %vm254, %v1848
        %v1851 = vld [vmem:[%s2] sm:$0xf]
        %v1852 = vld [vmem:[#allocation2] sm:$0xff]
        %v1853 = vld [vmem:[#allocation2 + $0x8] sm:$0xff]
        %v1854 = vld [vmem:[#allocation2 + $0x10] sm:$0xff]
        %v1855 = vld [vmem:[#allocation2 + $0x18] sm:$0xff]
        %v1856 = vld [vmem:[#allocation2 + $0x20] sm:$0xf]
        %v1857 = vpack.c.bf16 %v1853, %v1852
        %v1858 = vpack.c.bf16 %v1855, %v1854
        %v1859 = vpack.c.bf16 %v1856, %v1856
        %v1860 = vld [vmem:[%s3] sm:$0xff]
        %1862 = vset.pattern.permute.xlu0 0
        %1863 = vperm.xlu0 %1862, %v1860
        %v1864 = vpop.permute.xlu0 %1863
        %vm1866 = vcmask 293888
        %v1868 = vsel %vm1866, %v1851, 0
        %vm1870 = vcmask 1041408
        %v1872 = vsel %vm1870, %v1859, 0
        %1874 = vmatprep.subr.bf16.mxu0 0
        %1875 = vmatpush1.bf16.msra.mxu0 %v1857
        %1876 = vmatprep.subr.bf16.mxu0 0
        %1877 = vmatpush1.bf16.msra.mxu0 %v1858
        %1878 = vmatprep.subr.bf16.mxu0 0
        %1879 = vmatpush1.bf16.msra.mxu0 %v1872
        %1880 = vmatprep.subr.bf16.mxu0 0
        %1881 = vmatpush1.bf16.msra.mxu0 0
        %1882 = vmatprep.subr.bf16.mxu0 0
        %1883 = vmatpush1.bf16.msra.mxu0 0
        %1884 = vmatprep.subr.bf16.mxu0 0
        %1885 = vmatpush1.bf16.msra.mxu0 0
        %1886 = vmatprep.subr.bf16.mxu0 0
        %1887 = vmatpush1.bf16.msra.mxu0 0
        %1888 = vmatprep.subr.bf16.mxu0 0
        %1889 = vmatpush1.bf16.msra.mxu0 0
        %1890 = vmatprep.subr.bf16.mxu0 0
        %1891 = vmatpush1.bf16.msra.mxu0 0
        %1892 = vmatprep.subr.bf16.mxu0 0
        %1893 = vmatpush1.bf16.msra.mxu0 0
        %1894 = vmatprep.subr.bf16.mxu0 0
        %1895 = vmatpush1.bf16.msra.mxu0 0
        %1896 = vmatprep.subr.bf16.mxu0 0
        %1897 = vmatpush1.bf16.msra.mxu0 0
        %1898 = vmatprep.subr.bf16.mxu0 0
        %1899 = vmatpush1.bf16.msra.mxu0 0
        %1900 = vmatprep.subr.bf16.mxu0 0
        %1901 = vmatpush1.bf16.msra.mxu0 0
        %1902 = vmatprep.subr.bf16.mxu0 0
        %1903 = vmatpush1.bf16.msra.mxu0 0
        %1904 = vmatprep.subr.bf16.mxu0 0
        %1905 = vmatpush1.bf16.msra.mxu0 0
        %1906 = vmatprep.mubr.bf16.mxu0 0
        %1907 = vmatmul.mubr.bf16.gmra.mrb[0].mxu0 %v1868
        %v1908 = vpop.f32.mrb[0].mxu0
        %v1909 = vadd.f32 %v1864, %v1908
        %v1910 = vpop.f32.mrb[0].mxu0
        %v1911 = vpop.f32.mrb[0].mxu0
        %v1912 = vpop.f32.mrb[0].mxu0
        %1913 = vdwg.mxu0
        %v1914 = vmax.f32 %v1909, 0.0
        %v1915 = vmin.f32 %v1914, 20.0
        %s1916 = sld [smem:[#allocation4 + %s25]]
        %v1917 = vld [vmem:[%s4] sm:$0x1]
        %v1918 = vstv %s1916
        %vm1919 = vcmp.lt.s32.totalorder %v1917, %v1918
        %v1920 = vsel %vm1919, 1, 0
        %v1921 = vlaneseq
        %v1922 = vshrl.u32 %v1921, 7
        %v1923 = vsub.s32 0, %v1922
        %v1924 = vrot.slane %v1920, %v1923
        %vm1925 = vcmp.eq.s32.totalorder %v1924, 1
        %v1926 = vsel %vm1925, %v1915, 0.0
        %vm1927 = vcmask 523264
        %1928 = vst.msk [vmem:[%s197] sm:$0xff] %vm1927, %v1926
        %s1929 = sand.u32 %s122, 1
        %s1930 = scalar_lea.sflag [#allocation6], %s1929
        %s1931 = sand.u32 %s122, 1
        %s1932 = smul.addr %s1931, 8
        %s1933 = scalar_lea.vmem [#allocation5], %s1932
        // Predicated region
        $region37: #{tpu_custom_call.1} parent=35 // pred_check
          %p1934 = pneg %p132
        $region38: #{tpu_custom_call.1} parent=35 // pred_check_branch
          %1936 = sbr.rel (%p1934) target = $region40
        $region39: #{tpu_custom_call.1} parent=35 // pred_region
          %s1938 = ssub.s32 128, 128
          %1939 = vsyncadd %s1930, %s1938
          %s1940 = smul.addr %s25, 128
          %s1941 = scalar_lea.hbm %s5, %s1940
          %s1943 = sshll.u32 %s1933, 4
          %s1944 = int_to_ptr.vmem [resolvable:$true] %s1943
          %1946 = dma.vmem_to_hbm [thread:$0]  %s1944, 128, %s1941, %s1930
        $region40: #{tpu_custom_call.1} parent=35 // pred_fallthru
          _
      $region36: #{tpu_custom_call.1} parent=5 // pred_fallthru
        _
      %p1947 = scmp.le.s32.totalorder 2, %s20
      // Predicated region
      $region41: #{tpu_custom_call.1} parent=5 // pred_check
        %p1948 = pneg %p1947
      $region42: #{tpu_custom_call.1} parent=5 // pred_check_branch
        %1950 = sbr.rel (%p1948) target = $region44
      $region43: #{tpu_custom_call.1} parent=5 // pred_region
        %s1951 = ssub.s32 %s20, 2
        // Predicated region
        $region45: #{tpu_custom_call.1} parent=43 // pred_check
          %p1952 = pneg %p138
        $region46: #{tpu_custom_call.1} parent=43 // pred_check_branch
          %1954 = sbr.rel (%p1952) target = $region48
        $region47: #{tpu_custom_call.1} parent=43 // pred_region
          %s1955 = sand.u32 %s123, 1
          %s1956 = scalar_lea.sflag [#allocation6], %s1955
          %s1957 = sand.u32 %s123, 1
          %s1958 = smul.addr %s1957, 8
          %s1959 = scalar_lea.vmem [#allocation5], %s1958
          %1960 = dma.done %s1956, 128
        $region48: #{tpu_custom_call.1} parent=43 // pred_fallthru
          _
      $region44: #{tpu_custom_call.1} parent=5 // pred_fallthru
        _
    $region6: #{tpu_custom_call.1} parent=1 // loop_footer
      %s24 = sadd.s32 1, %s20
    $region7: #{tpu_custom_call.1} parent=1 // loop_footer_branch
      %19 = sbr.rel target = $region3
    $region8: #{tpu_custom_call.1} parent=1 // loop_exit
      _
    %1961 = vsyncpa [#allocation6], 1
    %s1962 = scalar_lea.sflag [#allocation6], 1
    %1963 = vsyncpa %s1962, 1

</llo_original>
